<compile_context>
chip_gen: v6e
topology: v6e:2x2x1
jax: 0.10.0
libtpu: 0.0.40
codegen_flags: <defaults>
</compile_context>

<pallas_src>
import jax
import jax.numpy as jnp
from jax import lax
from jax.experimental import pallas as pl
from jax.experimental.pallas import tpu as pltpu


def bilstm_linear_kernel(x_ref,
                         wih_f_ref, b_f_ref, whh_f_ref,
                         wih_b_ref, b_b_ref, whh_b_ref,
                         wa_ref, wb_ref, bout_ref,
                         out_ref,
                         gif, gff, ggf, gof,
                         gib, gfb, ggb, gob,
                         hf_ref, hb_ref):
    T, BB, nIn = x_ref.shape
    H = whh_f_ref.shape[1]
    nOutP = wa_ref.shape[1]

    # ---- input projections: one big MXU matmul per direction (time-major) ----
    x2 = x_ref[...].reshape(T * BB, nIn)
    proj_f = (jnp.dot(x2, wih_f_ref[...], preferred_element_type=jnp.float32)
              + b_f_ref[...]).reshape(T, BB, 4 * H)
    proj_b = (jnp.dot(x2, wih_b_ref[...], preferred_element_type=jnp.float32)
              + b_b_ref[...]).reshape(T, BB, 4 * H)

    # One-time gate split into contiguous per-gate slabs so the serial recurrence
    # never slices sub-vreg lane chunks inside the loop.
    pf = (gif, gff, ggf, gof)
    pb = (gib, gfb, ggb, gob)
    for g in range(4):
        pf[g][...] = proj_f[:, :, g * H:(g + 1) * H]
        pb[g][...] = proj_b[:, :, g * H:(g + 1) * H]

    whh_f = whh_f_ref[...]          # (4, H, H), pre-transposed per gate in wrapper
    whh_b = whh_b_ref[...]

    def lstm_step(pre, t, h, c, whh):
        i = jax.nn.sigmoid(pre[0][t] + jnp.dot(h, whh[0],
                                               preferred_element_type=jnp.float32))
        f = jax.nn.sigmoid(pre[1][t] + jnp.dot(h, whh[1],
                                               preferred_element_type=jnp.float32))
        gg = jnp.tanh(pre[2][t] + jnp.dot(h, whh[2],
                                          preferred_element_type=jnp.float32))
        o = jax.nn.sigmoid(pre[3][t] + jnp.dot(h, whh[3],
                                               preferred_element_type=jnp.float32))
        c_new = f * c + i * gg
        h_new = o * jnp.tanh(c_new)
        return h_new, c_new

    h0 = jnp.zeros((BB, H), jnp.float32)
    c0 = jnp.zeros((BB, H), jnp.float32)

    # ---- fused fwd/bwd recurrence: step s computes fwd t=s and bwd t=T-1-s ----
    def step(s, carry):
        h_f, c_f, h_b, c_b = carry
        tb = T - 1 - s
        h_f, c_f = lstm_step(pf, s, h_f, c_f, whh_f)
        hf_ref[s] = h_f
        h_b, c_b = lstm_step(pb, tb, h_b, c_b, whh_b)
        hb_ref[tb] = h_b
        return (h_f, c_f, h_b, c_b)

    unroll = True if T <= 16 else 4
    lax.fori_loop(0, T, step, (h0, c0, h0, c0), unroll=unroll)

    # ---- output Linear: two accumulated matmuls instead of concat + matmul ----
    y = (jnp.dot(hf_ref[...].reshape(T * BB, H), wa_ref[...],
                 preferred_element_type=jnp.float32)
         + jnp.dot(hb_ref[...].reshape(T * BB, H), wb_ref[...],
                   preferred_element_type=jnp.float32)
         + bout_ref[...])
    out_ref[...] = y.reshape(T, BB, nOutP).astype(out_ref.dtype)


def rnn_forward(x, params):
    B, T, nIn = x.shape
    H = params["whh_f"].shape[1]
    nOut = params["wout"].shape[0]

    # ---- wrapper-side layout plumbing (free vs. doing it inside the kernel) ----
    Bp = max(8, ((B + 7) // 8) * 8)           # pad batch to >= 8 sublanes
    BB = min(Bp, 64)                          # batch tile per grid step
    Bp = ((Bp + BB - 1) // BB) * BB
    nOutP = ((nOut + 127) // 128) * 128       # lane-dense output (>=128)

    x_p = jnp.pad(x.astype(jnp.float32), ((0, Bp - B), (0, 0), (0, 0)))
    x_tm = jnp.transpose(x_p, (1, 0, 2))      # time-major (T, Bp, nIn)

    def prep_dir(wih, whh, bih, bhh):
        wih_t = jnp.transpose(wih).astype(jnp.float32)                # (nIn, 4H)
        b = (bih + bhh).reshape(1, 4 * H).astype(jnp.float32)
        whh4 = jnp.transpose(whh.reshape(4, H, H), (0, 2, 1)).astype(jnp.float32)
        return wih_t, b, whh4                                         # h @ whh4[g]

    wih_f_t, b_f, whh4_f = prep_dir(params["wih_f"], params["whh_f"],
                                    params["bih_f"], params["bhh_f"])
    wih_b_t, b_b, whh4_b = prep_dir(params["wih_b"], params["whh_b"],
                                    params["bih_b"], params["bhh_b"])

    wout_t = jnp.zeros((2 * H, nOutP), jnp.float32).at[:, :nOut].set(
        jnp.transpose(params["wout"]).astype(jnp.float32))
    wa, wb = wout_t[:H], wout_t[H:]                                   # (H, nOutP) each
    bout_p = jnp.zeros((1, nOutP), jnp.float32).at[:, :nOut].set(
        params["bout"].reshape(1, nOut).astype(jnp.float32))

    # VMEM budget (explicit, instead of relying on the default scoped limit)
    f32b = 4
    scratch_bytes = 10 * T * BB * H * f32b
    weight_bytes = (2 * (nIn * 4 * H + 4 * H + 4 * H * H)
                    + 2 * H * nOutP + nOutP) * f32b
    io_bytes = 2 * (T * BB * nIn + T * BB * nOutP) * f32b
    vmem_limit = 2 * (scratch_bytes + 2 * weight_bytes + io_bytes) + (4 << 20)
    vmem_limit = int(min(max(vmem_limit, 16 << 20), 64 << 20))

    out_tm = pl.pallas_call(
        bilstm_linear_kernel,
        out_shape=jax.ShapeDtypeStruct((T, Bp, nOutP), jnp.float32),
        grid_spec=pltpu.PrefetchScalarGridSpec(
            num_scalar_prefetch=0,
            grid=(Bp // BB,),
            in_specs=[
                pl.BlockSpec((T, BB, nIn), lambda b: (0, b, 0)),      # x (time-major)
                pl.BlockSpec((nIn, 4 * H), lambda b: (0, 0)),         # wih fwd (pre-T)
                pl.BlockSpec((1, 4 * H), lambda b: (0, 0)),           # bias fwd
                pl.BlockSpec((4, H, H), lambda b: (0, 0, 0)),         # whh fwd per-gate
                pl.BlockSpec((nIn, 4 * H), lambda b: (0, 0)),         # wih bwd
                pl.BlockSpec((1, 4 * H), lambda b: (0, 0)),           # bias bwd
                pl.BlockSpec((4, H, H), lambda b: (0, 0, 0)),         # whh bwd per-gate
                pl.BlockSpec((H, nOutP), lambda b: (0, 0)),           # wout fwd half
                pl.BlockSpec((H, nOutP), lambda b: (0, 0)),           # wout bwd half
                pl.BlockSpec((1, nOutP), lambda b: (0, 0)),           # bout (padded)
            ],
            out_specs=pl.BlockSpec((T, BB, nOutP), lambda b: (0, b, 0)),
            scratch_shapes=[pltpu.VMEM((T, BB, H), jnp.float32)
                            for _ in range(10)],   # 8 gate slabs + hf + hb
        ),
        compiler_params=pltpu.CompilerParams(
            dimension_semantics=("parallel",),
            vmem_limit_bytes=vmem_limit),
    )(x_tm, wih_f_t, b_f, whh4_f, wih_b_t, b_b, whh4_b, wa, wb, bout_p)

    # back to batch-first, drop batch / lane padding
    return jnp.transpose(out_tm, (1, 0, 2))[:B, :, :nOut]


# ---------- pure-JAX reference (mirrors PyTorch LSTM + Linear semantics) ----------
def rnn_reference(x, params):
    B, T, nIn = x.shape
    H = params["whh_f"].shape[1]

    def run_dir(wih, whh, bih, bhh, reverse):
        h = jnp.zeros((B, H), jnp.float32)
        c = jnp.zeros((B, H), jnp.float32)
        ts = range(T - 1, -1, -1) if reverse else range(T)
        outs = [None] * T
        for t in ts:
            g = x[:, t, :] @ wih.T + bih + h @ whh.T + bhh
            i = jax.nn.sigmoid(g[:, 0 * H:1 * H])
            f = jax.nn.sigmoid(g[:, 1 * H:2 * H])
            gg = jnp.tanh(g[:, 2 * H:3 * H])
            o = jax.nn.sigmoid(g[:, 3 * H:4 * H])
            c = f * c + i * gg
            h = o * jnp.tanh(c)
            outs[t] = h
        return jnp.stack(outs, axis=1)                                  # (B, T, H)

    hf = run_dir(params["wih_f"], params["whh_f"],
                 params["bih_f"], params["bhh_f"], reverse=False)
    hb = run_dir(params["wih_b"], params["whh_b"],
                 params["bih_b"], params["bhh_b"], reverse=True)
    out = jnp.concatenate([hf, hb], axis=-1)
    return out @ params["wout"].T + params["bout"]


if __name__ == "__main__":
    B, T, nIn, H, nOut = 2, 8, 16, 32, 10

    key = jax.random.PRNGKey(0)
    keys = jax.random.split(key, 12)
    s = 1.0 / jnp.sqrt(H)  # PyTorch-style uniform(-1/sqrt(H), 1/sqrt(H)) scale

    def u(k, shape):
        return jax.random.uniform(k, shape, jnp.float32, -s, s)

    params = {
        "wih_f": u(keys[0], (4 * H, nIn)),
        "whh_f": u(keys[1], (4 * H, H)),
        "bih_f": u(keys[2], (4 * H,)),
        "bhh_f": u(keys[3], (4 * H,)),
        "wih_b": u(keys[4], (4 * H, nIn)),
        "whh_b": u(keys[5], (4 * H, H)),
        "bih_b": u(keys[6], (4 * H,)),
        "bhh_b": u(keys[7], (4 * H,)),
        "wout":  u(keys[8], (nOut, 2 * H)),
        "bout":  u(keys[9], (nOut,)),
    }

    x = jax.random.normal(keys[10], (B, T, nIn), jnp.float32)

    out = jax.block_until_ready(rnn_forward(x, params))
    ref = jax.block_until_ready(rnn_reference(x, params))

    assert out.shape == (B, T, nOut), out.shape
    assert jnp.allclose(out, ref, rtol=1e-4, atol=1e-4), \
        float(jnp.max(jnp.abs(out - ref)))
    print("KERNEL_OK")
</pallas_src>

<mosaic_0001>
module attributes {stable_mosaic.version = 11 : i64} {
  func.func @bilstm_linear_kernel(%arg0: i32, %arg1: memref<8x8x16xf32, #tpu.memory_space<vmem>>, %arg2: memref<16x128xf32, #tpu.memory_space<vmem>>, %arg3: memref<1x128xf32, #tpu.memory_space<vmem>>, %arg4: memref<4x32x32xf32, #tpu.memory_space<vmem>>, %arg5: memref<16x128xf32, #tpu.memory_space<vmem>>, %arg6: memref<1x128xf32, #tpu.memory_space<vmem>>, %arg7: memref<4x32x32xf32, #tpu.memory_space<vmem>>, %arg8: memref<32x128xf32, #tpu.memory_space<vmem>>, %arg9: memref<32x128xf32, #tpu.memory_space<vmem>>, %arg10: memref<1x128xf32, #tpu.memory_space<vmem>>, %arg11: memref<8x8x128xf32, #tpu.memory_space<vmem>>, %arg12: memref<8x8x32xf32, #tpu.memory_space<vmem>>, %arg13: memref<8x8x32xf32, #tpu.memory_space<vmem>>, %arg14: memref<8x8x32xf32, #tpu.memory_space<vmem>>, %arg15: memref<8x8x32xf32, #tpu.memory_space<vmem>>, %arg16: memref<8x8x32xf32, #tpu.memory_space<vmem>>, %arg17: memref<8x8x32xf32, #tpu.memory_space<vmem>>, %arg18: memref<8x8x32xf32, #tpu.memory_space<vmem>>, %arg19: memref<8x8x32xf32, #tpu.memory_space<vmem>>, %arg20: memref<8x8x32xf32, #tpu.memory_space<vmem>>, %arg21: memref<8x8x32xf32, #tpu.memory_space<vmem>>) attributes {dimension_semantics = [#tpu.dimension_semantics<parallel>], iteration_bounds = array<i64: 1>, scalar_prefetch = 0 : i64, scratch_operands = 10 : i64, tpu.core_type = #tpu.core_type<tc>, window_params = [{transform_indices = @transform_0, window_bounds = array<i64: 8, 8, 16>}, {pipeline_mode = #tpu.pipeline_mode<synchronous>, transform_indices = @transform_1, window_bounds = array<i64: 16, 128>}, {pipeline_mode = #tpu.pipeline_mode<synchronous>, transform_indices = @transform_2, window_bounds = array<i64: 1, 128>}, {pipeline_mode = #tpu.pipeline_mode<synchronous>, transform_indices = @transform_3, window_bounds = array<i64: 4, 32, 32>}, {pipeline_mode = #tpu.pipeline_mode<synchronous>, transform_indices = @transform_4, window_bounds = array<i64: 16, 128>}, {pipeline_mode = #tpu.pipeline_mode<synchronous>, transform_indices = @transform_5, window_bounds = array<i64: 1, 128>}, {pipeline_mode = #tpu.pipeline_mode<synchronous>, transform_indices = @transform_6, window_bounds = array<i64: 4, 32, 32>}, {pipeline_mode = #tpu.pipeline_mode<synchronous>, transform_indices = @transform_7, window_bounds = array<i64: 32, 128>}, {pipeline_mode = #tpu.pipeline_mode<synchronous>, transform_indices = @transform_8, window_bounds = array<i64: 32, 128>}, {pipeline_mode = #tpu.pipeline_mode<synchronous>, transform_indices = @transform_9, window_bounds = array<i64: 1, 128>}, {transform_indices = @transform_10, window_bounds = array<i64: 8, 8, 128>}]} {
    %c0 = arith.constant 0 : index
    %c0_0 = arith.constant 0 : index
    %c0_1 = arith.constant 0 : index
    %0 = vector.load %arg1[%c0, %c0_0, %c0_1] : memref<8x8x16xf32, #tpu.memory_space<vmem>>, vector<8x8x16xf32>
    %1 = vector.shape_cast %0 : vector<8x8x16xf32> to vector<64x16xf32>
    %c0_2 = arith.constant 0 : index
    %c0_3 = arith.constant 0 : index
    %2 = vector.load %arg2[%c0_2, %c0_3] : memref<16x128xf32, #tpu.memory_space<vmem>>, vector<16x128xf32>
    %cst = arith.constant dense<0.000000e+00> : vector<64x128xf32>
    %3 = tpu.matmul %1, %2, %cst {dimension_numbers = #tpu.dot_dimension_numbers<[1], [0], [0], [1], [0, 0, 1, 1], [], []>} : vector<64x16xf32>, vector<16x128xf32>, vector<64x128xf32> -> vector<64x128xf32>
    %c0_4 = arith.constant 0 : index
    %c0_5 = arith.constant 0 : index
    %4 = vector.load %arg3[%c0_4, %c0_5] : memref<1x128xf32, #tpu.memory_space<vmem>>, vector<1x128xf32>
    %5 = vector.broadcast %4 : vector<1x128xf32> to vector<64x128xf32>
    %6 = arith.addf %3, %5 : vector<64x128xf32>
    %7 = vector.shape_cast %6 : vector<64x128xf32> to vector<8x8x128xf32>
    %c0_6 = arith.constant 0 : index
    %c0_7 = arith.constant 0 : index
    %8 = vector.load %arg5[%c0_6, %c0_7] : memref<16x128xf32, #tpu.memory_space<vmem>>, vector<16x128xf32>
    %cst_8 = arith.constant dense<0.000000e+00> : vector<64x128xf32>
    %9 = tpu.matmul %1, %8, %cst_8 {dimension_numbers = #tpu.dot_dimension_numbers<[1], [0], [0], [1], [0, 0, 1, 1], [], []>} : vector<64x16xf32>, vector<16x128xf32>, vector<64x128xf32> -> vector<64x128xf32>
    %c0_9 = arith.constant 0 : index
    %c0_10 = arith.constant 0 : index
    %10 = vector.load %arg6[%c0_9, %c0_10] : memref<1x128xf32, #tpu.memory_space<vmem>>, vector<1x128xf32>
    %11 = vector.broadcast %10 : vector<1x128xf32> to vector<64x128xf32>
    %12 = arith.addf %9, %11 : vector<64x128xf32>
    %13 = vector.shape_cast %12 : vector<64x128xf32> to vector<8x8x128xf32>
    %14 = vector.extract_strided_slice %7 {offsets = [0, 0, 0], sizes = [8, 8, 32], strides = [1, 1, 1]} : vector<8x8x128xf32> to vector<8x8x32xf32>
    %c0_11 = arith.constant 0 : index
    %c0_12 = arith.constant 0 : index
    %c0_13 = arith.constant 0 : index
    %15 = vector.load %arg12[%c0_11, %c0_12, %c0_13] : memref<8x8x32xf32, #tpu.memory_space<vmem>>, vector<8x8x32xf32>
    tpu.vector_store %arg12[%c0_11, %c0_12, %c0_13], %14 {strides = array<i32>} : memref<8x8x32xf32, #tpu.memory_space<vmem>>, vector<8x8x32xf32>,
    %16 = vector.extract_strided_slice %13 {offsets = [0, 0, 0], sizes = [8, 8, 32], strides = [1, 1, 1]} : vector<8x8x128xf32> to vector<8x8x32xf32>
    %c0_14 = arith.constant 0 : index
    %c0_15 = arith.constant 0 : index
    %c0_16 = arith.constant 0 : index
    %17 = vector.load %arg16[%c0_14, %c0_15, %c0_16] : memref<8x8x32xf32, #tpu.memory_space<vmem>>, vector<8x8x32xf32>
    tpu.vector_store %arg16[%c0_14, %c0_15, %c0_16], %16 {strides = array<i32>} : memref<8x8x32xf32, #tpu.memory_space<vmem>>, vector<8x8x32xf32>,
    %18 = vector.extract_strided_slice %7 {offsets = [0, 0, 32], sizes = [8, 8, 32], strides = [1, 1, 1]} : vector<8x8x128xf32> to vector<8x8x32xf32>
    %c0_17 = arith.constant 0 : index
    %c0_18 = arith.constant 0 : index
    %c0_19 = arith.constant 0 : index
    %19 = vector.load %arg13[%c0_17, %c0_18, %c0_19] : memref<8x8x32xf32, #tpu.memory_space<vmem>>, vector<8x8x32xf32>
    tpu.vector_store %arg13[%c0_17, %c0_18, %c0_19], %18 {strides = array<i32>} : memref<8x8x32xf32, #tpu.memory_space<vmem>>, vector<8x8x32xf32>,
    %20 = vector.extract_strided_slice %13 {offsets = [0, 0, 32], sizes = [8, 8, 32], strides = [1, 1, 1]} : vector<8x8x128xf32> to vector<8x8x32xf32>
    %c0_20 = arith.constant 0 : index
    %c0_21 = arith.constant 0 : index
    %c0_22 = arith.constant 0 : index
    %21 = vector.load %arg17[%c0_20, %c0_21, %c0_22] : memref<8x8x32xf32, #tpu.memory_space<vmem>>, vector<8x8x32xf32>
    tpu.vector_store %arg17[%c0_20, %c0_21, %c0_22], %20 {strides = array<i32>} : memref<8x8x32xf32, #tpu.memory_space<vmem>>, vector<8x8x32xf32>,
    %22 = vector.extract_strided_slice %7 {offsets = [0, 0, 64], sizes = [8, 8, 32], strides = [1, 1, 1]} : vector<8x8x128xf32> to vector<8x8x32xf32>
    %c0_23 = arith.constant 0 : index
    %c0_24 = arith.constant 0 : index
    %c0_25 = arith.constant 0 : index
    %23 = vector.load %arg14[%c0_23, %c0_24, %c0_25] : memref<8x8x32xf32, #tpu.memory_space<vmem>>, vector<8x8x32xf32>
    tpu.vector_store %arg14[%c0_23, %c0_24, %c0_25], %22 {strides = array<i32>} : memref<8x8x32xf32, #tpu.memory_space<vmem>>, vector<8x8x32xf32>,
    %24 = vector.extract_strided_slice %13 {offsets = [0, 0, 64], sizes = [8, 8, 32], strides = [1, 1, 1]} : vector<8x8x128xf32> to vector<8x8x32xf32>
    %c0_26 = arith.constant 0 : index
    %c0_27 = arith.constant 0 : index
    %c0_28 = arith.constant 0 : index
    %25 = vector.load %arg18[%c0_26, %c0_27, %c0_28] : memref<8x8x32xf32, #tpu.memory_space<vmem>>, vector<8x8x32xf32>
    tpu.vector_store %arg18[%c0_26, %c0_27, %c0_28], %24 {strides = array<i32>} : memref<8x8x32xf32, #tpu.memory_space<vmem>>, vector<8x8x32xf32>,
    %26 = vector.extract_strided_slice %7 {offsets = [0, 0, 96], sizes = [8, 8, 32], strides = [1, 1, 1]} : vector<8x8x128xf32> to vector<8x8x32xf32>
    %c0_29 = arith.constant 0 : index
    %c0_30 = arith.constant 0 : index
    %c0_31 = arith.constant 0 : index
    %27 = vector.load %arg15[%c0_29, %c0_30, %c0_31] : memref<8x8x32xf32, #tpu.memory_space<vmem>>, vector<8x8x32xf32>
    tpu.vector_store %arg15[%c0_29, %c0_30, %c0_31], %26 {strides = array<i32>} : memref<8x8x32xf32, #tpu.memory_space<vmem>>, vector<8x8x32xf32>,
    %28 = vector.extract_strided_slice %13 {offsets = [0, 0, 96], sizes = [8, 8, 32], strides = [1, 1, 1]} : vector<8x8x128xf32> to vector<8x8x32xf32>
    %c0_32 = arith.constant 0 : index
    %c0_33 = arith.constant 0 : index
    %c0_34 = arith.constant 0 : index
    %29 = vector.load %arg19[%c0_32, %c0_33, %c0_34] : memref<8x8x32xf32, #tpu.memory_space<vmem>>, vector<8x8x32xf32>
    tpu.vector_store %arg19[%c0_32, %c0_33, %c0_34], %28 {strides = array<i32>} : memref<8x8x32xf32, #tpu.memory_space<vmem>>, vector<8x8x32xf32>,
    %c0_35 = arith.constant 0 : index
    %c0_36 = arith.constant 0 : index
    %c0_37 = arith.constant 0 : index
    %30 = vector.load %arg4[%c0_35, %c0_36, %c0_37] : memref<4x32x32xf32, #tpu.memory_space<vmem>>, vector<4x32x32xf32>
    %c0_38 = arith.constant 0 : index
    %c0_39 = arith.constant 0 : index
    %c0_40 = arith.constant 0 : index
    %31 = vector.load %arg7[%c0_38, %c0_39, %c0_40] : memref<4x32x32xf32, #tpu.memory_space<vmem>>, vector<4x32x32xf32>
    %cst_41 = arith.constant 0.000000e+00 : f32
    %32 = vector.broadcast %cst_41 : f32 to vector<8x32xf32>
    %cst_42 = arith.constant 0.000000e+00 : f32
    %33 = vector.broadcast %cst_42 : f32 to vector<8x32xf32>
    %c0_i32 = arith.constant 0 : i32
    %c7_i32 = arith.constant 7 : i32
    %34 = arith.subi %c7_i32, %c0_i32 : i32
    %35 = arith.index_cast %c0_i32 : i32 to index
    %c0_43 = arith.constant 0 : index
    %c0_44 = arith.constant 0 : index
    %36 = vector.load %arg12[%35, %c0_43, %c0_44] : memref<8x8x32xf32, #tpu.memory_space<vmem>>, vector<1x8x32xf32>
    %37 = vector.shape_cast %36 : vector<1x8x32xf32> to vector<8x32xf32>
    %38 = vector.extract_strided_slice %30 {offsets = [0, 0, 0], sizes = [1, 32, 32], strides = [1, 1, 1]} : vector<4x32x32xf32> to vector<1x32x32xf32>
    %39 = vector.shape_cast %38 : vector<1x32x32xf32> to vector<32x32xf32>
    %cst_45 = arith.constant dense<0.000000e+00> : vector<8x32xf32>
    %40 = tpu.matmul %32, %39, %cst_45 {dimension_numbers = #tpu.dot_dimension_numbers<[1], [0], [0], [1], [0, 0, 1, 1], [], []>} : vector<8x32xf32>, vector<32x32xf32>, vector<8x32xf32> -> vector<8x32xf32>
    %41 = arith.addf %37, %40 : vector<8x32xf32>
    %42 = arith.negf %41 : vector<8x32xf32>
    %43 = math.exp %42 : vector<8x32xf32>
    %cst_46 = arith.constant 1.000000e+00 : f32
    %44 = vector.broadcast %cst_46 : f32 to vector<8x32xf32>
    %45 = arith.addf %44, %43 : vector<8x32xf32>
    %46 = arith.divf %44, %45 : vector<8x32xf32>
    %47 = arith.index_cast %c0_i32 : i32 to index
    %c0_47 = arith.constant 0 : index
    %c0_48 = arith.constant 0 : index
    %48 = vector.load %arg13[%47, %c0_47, %c0_48] : memref<8x8x32xf32, #tpu.memory_space<vmem>>, vector<1x8x32xf32>
    %49 = vector.shape_cast %48 : vector<1x8x32xf32> to vector<8x32xf32>
    %50 = vector.extract_strided_slice %30 {offsets = [1, 0, 0], sizes = [1, 32, 32], strides = [1, 1, 1]} : vector<4x32x32xf32> to vector<1x32x32xf32>
    %51 = vector.shape_cast %50 : vector<1x32x32xf32> to vector<32x32xf32>
    %cst_49 = arith.constant dense<0.000000e+00> : vector<8x32xf32>
    %52 = tpu.matmul %32, %51, %cst_49 {dimension_numbers = #tpu.dot_dimension_numbers<[1], [0], [0], [1], [0, 0, 1, 1], [], []>} : vector<8x32xf32>, vector<32x32xf32>, vector<8x32xf32> -> vector<8x32xf32>
    %53 = arith.addf %49, %52 : vector<8x32xf32>
    %54 = arith.negf %53 : vector<8x32xf32>
    %55 = math.exp %54 : vector<8x32xf32>
    %cst_50 = arith.constant 1.000000e+00 : f32
    %56 = vector.broadcast %cst_50 : f32 to vector<8x32xf32>
    %57 = arith.addf %56, %55 : vector<8x32xf32>
    %58 = arith.divf %56, %57 : vector<8x32xf32>
    %59 = arith.index_cast %c0_i32 : i32 to index
    %c0_51 = arith.constant 0 : index
    %c0_52 = arith.constant 0 : index
    %60 = vector.load %arg14[%59, %c0_51, %c0_52] : memref<8x8x32xf32, #tpu.memory_space<vmem>>, vector<1x8x32xf32>
    %61 = vector.shape_cast %60 : vector<1x8x32xf32> to vector<8x32xf32>
    %62 = vector.extract_strided_slice %30 {offsets = [2, 0, 0], sizes = [1, 32, 32], strides = [1, 1, 1]} : vector<4x32x32xf32> to vector<1x32x32xf32>
    %63 = vector.shape_cast %62 : vector<1x32x32xf32> to vector<32x32xf32>
    %cst_53 = arith.constant dense<0.000000e+00> : vector<8x32xf32>
    %64 = tpu.matmul %32, %63, %cst_53 {dimension_numbers = #tpu.dot_dimension_numbers<[1], [0], [0], [1], [0, 0, 1, 1], [], []>} : vector<8x32xf32>, vector<32x32xf32>, vector<8x32xf32> -> vector<8x32xf32>
    %65 = arith.addf %61, %64 : vector<8x32xf32>
    %66 = math.tanh %65 : vector<8x32xf32>
    %67 = arith.index_cast %c0_i32 : i32 to index
    %c0_54 = arith.constant 0 : index
    %c0_55 = arith.constant 0 : index
    %68 = vector.load %arg15[%67, %c0_54, %c0_55] : memref<8x8x32xf32, #tpu.memory_space<vmem>>, vector<1x8x32xf32>
    %69 = vector.shape_cast %68 : vector<1x8x32xf32> to vector<8x32xf32>
    %70 = vector.extract_strided_slice %30 {offsets = [3, 0, 0], sizes = [1, 32, 32], strides = [1, 1, 1]} : vector<4x32x32xf32> to vector<1x32x32xf32>
    %71 = vector.shape_cast %70 : vector<1x32x32xf32> to vector<32x32xf32>
    %cst_56 = arith.constant dense<0.000000e+00> : vector<8x32xf32>
    %72 = tpu.matmul %32, %71, %cst_56 {dimension_numbers = #tpu.dot_dimension_numbers<[1], [0], [0], [1], [0, 0, 1, 1], [], []>} : vector<8x32xf32>, vector<32x32xf32>, vector<8x32xf32> -> vector<8x32xf32>
    %73 = arith.addf %69, %72 : vector<8x32xf32>
    %74 = arith.negf %73 : vector<8x32xf32>
    %75 = math.exp %74 : vector<8x32xf32>
    %cst_57 = arith.constant 1.000000e+00 : f32
    %76 = vector.broadcast %cst_57 : f32 to vector<8x32xf32>
    %77 = arith.addf %76, %75 : vector<8x32xf32>
    %78 = arith.divf %76, %77 : vector<8x32xf32>
    %79 = arith.mulf %58, %33 : vector<8x32xf32>
    %80 = arith.mulf %46, %66 : vector<8x32xf32>
    %81 = arith.addf %79, %80 : vector<8x32xf32>
    %82 = math.tanh %81 : vector<8x32xf32>
    %83 = arith.mulf %78, %82 : vector<8x32xf32>
    %84 = arith.index_cast %c0_i32 : i32 to index
    %c0_58 = arith.constant 0 : index
    %c0_59 = arith.constant 0 : index
    %85 = vector.load %arg20[%84, %c0_58, %c0_59] : memref<8x8x32xf32, #tpu.memory_space<vmem>>, vector<1x8x32xf32>
    %86 = vector.shape_cast %85 : vector<1x8x32xf32> to vector<8x32xf32>
    %87 = vector.shape_cast %83 : vector<8x32xf32> to vector<1x8x32xf32>
    tpu.vector_store %arg20[%84, %c0_58, %c0_59], %87 {strides = array<i32>} : memref<8x8x32xf32, #tpu.memory_space<vmem>>, vector<1x8x32xf32>,
    %88 = arith.index_cast %34 : i32 to index
    %c0_60 = arith.constant 0 : index
    %c0_61 = arith.constant 0 : index
    %89 = vector.load %arg16[%88, %c0_60, %c0_61] : memref<8x8x32xf32, #tpu.memory_space<vmem>>, vector<1x8x32xf32>
    %90 = vector.shape_cast %89 : vector<1x8x32xf32> to vector<8x32xf32>
    %91 = vector.extract_strided_slice %31 {offsets = [0, 0, 0], sizes = [1, 32, 32], strides = [1, 1, 1]} : vector<4x32x32xf32> to vector<1x32x32xf32>
    %92 = vector.shape_cast %91 : vector<1x32x32xf32> to vector<32x32xf32>
    %cst_62 = arith.constant dense<0.000000e+00> : vector<8x32xf32>
    %93 = tpu.matmul %32, %92, %cst_62 {dimension_numbers = #tpu.dot_dimension_numbers<[1], [0], [0], [1], [0, 0, 1, 1], [], []>} : vector<8x32xf32>, vector<32x32xf32>, vector<8x32xf32> -> vector<8x32xf32>
    %94 = arith.addf %90, %93 : vector<8x32xf32>
    %95 = arith.negf %94 : vector<8x32xf32>
    %96 = math.exp %95 : vector<8x32xf32>
    %cst_63 = arith.constant 1.000000e+00 : f32
    %97 = vector.broadcast %cst_63 : f32 to vector<8x32xf32>
    %98 = arith.addf %97, %96 : vector<8x32xf32>
    %99 = arith.divf %97, %98 : vector<8x32xf32>
    %100 = arith.index_cast %34 : i32 to index
    %c0_64 = arith.constant 0 : index
    %c0_65 = arith.constant 0 : index
    %101 = vector.load %arg17[%100, %c0_64, %c0_65] : memref<8x8x32xf32, #tpu.memory_space<vmem>>, vector<1x8x32xf32>
    %102 = vector.shape_cast %101 : vector<1x8x32xf32> to vector<8x32xf32>
    %103 = vector.extract_strided_slice %31 {offsets = [1, 0, 0], sizes = [1, 32, 32], strides = [1, 1, 1]} : vector<4x32x32xf32> to vector<1x32x32xf32>
    %104 = vector.shape_cast %103 : vector<1x32x32xf32> to vector<32x32xf32>
    %cst_66 = arith.constant dense<0.000000e+00> : vector<8x32xf32>
    %105 = tpu.matmul %32, %104, %cst_66 {dimension_numbers = #tpu.dot_dimension_numbers<[1], [0], [0], [1], [0, 0, 1, 1], [], []>} : vector<8x32xf32>, vector<32x32xf32>, vector<8x32xf32> -> vector<8x32xf32>
    %106 = arith.addf %102, %105 : vector<8x32xf32>
    %107 = arith.negf %106 : vector<8x32xf32>
    %108 = math.exp %107 : vector<8x32xf32>
    %cst_67 = arith.constant 1.000000e+00 : f32
    %109 = vector.broadcast %cst_67 : f32 to vector<8x32xf32>
    %110 = arith.addf %109, %108 : vector<8x32xf32>
    %111 = arith.divf %109, %110 : vector<8x32xf32>
    %112 = arith.index_cast %34 : i32 to index
    %c0_68 = arith.constant 0 : index
    %c0_69 = arith.constant 0 : index
    %113 = vector.load %arg18[%112, %c0_68, %c0_69] : memref<8x8x32xf32, #tpu.memory_space<vmem>>, vector<1x8x32xf32>
    %114 = vector.shape_cast %113 : vector<1x8x32xf32> to vector<8x32xf32>
    %115 = vector.extract_strided_slice %31 {offsets = [2, 0, 0], sizes = [1, 32, 32], strides = [1, 1, 1]} : vector<4x32x32xf32> to vector<1x32x32xf32>
    %116 = vector.shape_cast %115 : vector<1x32x32xf32> to vector<32x32xf32>
    %cst_70 = arith.constant dense<0.000000e+00> : vector<8x32xf32>
    %117 = tpu.matmul %32, %116, %cst_70 {dimension_numbers = #tpu.dot_dimension_numbers<[1], [0], [0], [1], [0, 0, 1, 1], [], []>} : vector<8x32xf32>, vector<32x32xf32>, vector<8x32xf32> -> vector<8x32xf32>
    %118 = arith.addf %114, %117 : vector<8x32xf32>
    %119 = math.tanh %118 : vector<8x32xf32>
    %120 = arith.index_cast %34 : i32 to index
    %c0_71 = arith.constant 0 : index
    %c0_72 = arith.constant 0 : index
    %121 = vector.load %arg19[%120, %c0_71, %c0_72] : memref<8x8x32xf32, #tpu.memory_space<vmem>>, vector<1x8x32xf32>
    %122 = vector.shape_cast %121 : vector<1x8x32xf32> to vector<8x32xf32>
    %123 = vector.extract_strided_slice %31 {offsets = [3, 0, 0], sizes = [1, 32, 32], strides = [1, 1, 1]} : vector<4x32x32xf32> to vector<1x32x32xf32>
    %124 = vector.shape_cast %123 : vector<1x32x32xf32> to vector<32x32xf32>
    %cst_73 = arith.constant dense<0.000000e+00> : vector<8x32xf32>
    %125 = tpu.matmul %32, %124, %cst_73 {dimension_numbers = #tpu.dot_dimension_numbers<[1], [0], [0], [1], [0, 0, 1, 1], [], []>} : vector<8x32xf32>, vector<32x32xf32>, vector<8x32xf32> -> vector<8x32xf32>
    %126 = arith.addf %122, %125 : vector<8x32xf32>
    %127 = arith.negf %126 : vector<8x32xf32>
    %128 = math.exp %127 : vector<8x32xf32>
    %cst_74 = arith.constant 1.000000e+00 : f32
    %129 = vector.broadcast %cst_74 : f32 to vector<8x32xf32>
    %130 = arith.addf %129, %128 : vector<8x32xf32>
    %131 = arith.divf %129, %130 : vector<8x32xf32>
    %132 = arith.mulf %111, %33 : vector<8x32xf32>
    %133 = arith.mulf %99, %119 : vector<8x32xf32>
    %134 = arith.addf %132, %133 : vector<8x32xf32>
    %135 = math.tanh %134 : vector<8x32xf32>
    %136 = arith.mulf %131, %135 : vector<8x32xf32>
    %137 = arith.index_cast %34 : i32 to index
    %c0_75 = arith.constant 0 : index
    %c0_76 = arith.constant 0 : index
    %138 = vector.load %arg21[%137, %c0_75, %c0_76] : memref<8x8x32xf32, #tpu.memory_space<vmem>>, vector<1x8x32xf32>
    %139 = vector.shape_cast %138 : vector<1x8x32xf32> to vector<8x32xf32>
    %140 = vector.shape_cast %136 : vector<8x32xf32> to vector<1x8x32xf32>
    tpu.vector_store %arg21[%137, %c0_75, %c0_76], %140 {strides = array<i32>} : memref<8x8x32xf32, #tpu.memory_space<vmem>>, vector<1x8x32xf32>,
    %c1_i32 = arith.constant 1 : i32
    %c7_i32_77 = arith.constant 7 : i32
    %141 = arith.subi %c7_i32_77, %c1_i32 : i32
    %142 = arith.index_cast %c1_i32 : i32 to index
    %c0_78 = arith.constant 0 : index
    %c0_79 = arith.constant 0 : index
    %143 = vector.load %arg12[%142, %c0_78, %c0_79] : memref<8x8x32xf32, #tpu.memory_space<vmem>>, vector<1x8x32xf32>
    %144 = vector.shape_cast %143 : vector<1x8x32xf32> to vector<8x32xf32>
    %145 = vector.extract_strided_slice %30 {offsets = [0, 0, 0], sizes = [1, 32, 32], strides = [1, 1, 1]} : vector<4x32x32xf32> to vector<1x32x32xf32>
    %146 = vector.shape_cast %145 : vector<1x32x32xf32> to vector<32x32xf32>
    %cst_80 = arith.constant dense<0.000000e+00> : vector<8x32xf32>
    %147 = tpu.matmul %83, %146, %cst_80 {dimension_numbers = #tpu.dot_dimension_numbers<[1], [0], [0], [1], [0, 0, 1, 1], [], []>} : vector<8x32xf32>, vector<32x32xf32>, vector<8x32xf32> -> vector<8x32xf32>
    %148 = arith.addf %144, %147 : vector<8x32xf32>
    %149 = arith.negf %148 : vector<8x32xf32>
    %150 = math.exp %149 : vector<8x32xf32>
    %cst_81 = arith.constant 1.000000e+00 : f32
    %151 = vector.broadcast %cst_81 : f32 to vector<8x32xf32>
    %152 = arith.addf %151, %150 : vector<8x32xf32>
    %153 = arith.divf %151, %152 : vector<8x32xf32>
    %154 = arith.index_cast %c1_i32 : i32 to index
    %c0_82 = arith.constant 0 : index
    %c0_83 = arith.constant 0 : index
    %155 = vector.load %arg13[%154, %c0_82, %c0_83] : memref<8x8x32xf32, #tpu.memory_space<vmem>>, vector<1x8x32xf32>
    %156 = vector.shape_cast %155 : vector<1x8x32xf32> to vector<8x32xf32>
    %157 = vector.extract_strided_slice %30 {offsets = [1, 0, 0], sizes = [1, 32, 32], strides = [1, 1, 1]} : vector<4x32x32xf32> to vector<1x32x32xf32>
    %158 = vector.shape_cast %157 : vector<1x32x32xf32> to vector<32x32xf32>
    %cst_84 = arith.constant dense<0.000000e+00> : vector<8x32xf32>
    %159 = tpu.matmul %83, %158, %cst_84 {dimension_numbers = #tpu.dot_dimension_numbers<[1], [0], [0], [1], [0, 0, 1, 1], [], []>} : vector<8x32xf32>, vector<32x32xf32>, vector<8x32xf32> -> vector<8x32xf32>
    %160 = arith.addf %156, %159 : vector<8x32xf32>
    %161 = arith.negf %160 : vector<8x32xf32>
    %162 = math.exp %161 : vector<8x32xf32>
    %cst_85 = arith.constant 1.000000e+00 : f32
    %163 = vector.broadcast %cst_85 : f32 to vector<8x32xf32>
    %164 = arith.addf %163, %162 : vector<8x32xf32>
    %165 = arith.divf %163, %164 : vector<8x32xf32>
    %166 = arith.index_cast %c1_i32 : i32 to index
    %c0_86 = arith.constant 0 : index
    %c0_87 = arith.constant 0 : index
    %167 = vector.load %arg14[%166, %c0_86, %c0_87] : memref<8x8x32xf32, #tpu.memory_space<vmem>>, vector<1x8x32xf32>
    %168 = vector.shape_cast %167 : vector<1x8x32xf32> to vector<8x32xf32>
    %169 = vector.extract_strided_slice %30 {offsets = [2, 0, 0], sizes = [1, 32, 32], strides = [1, 1, 1]} : vector<4x32x32xf32> to vector<1x32x32xf32>
    %170 = vector.shape_cast %169 : vector<1x32x32xf32> to vector<32x32xf32>
    %cst_88 = arith.constant dense<0.000000e+00> : vector<8x32xf32>
    %171 = tpu.matmul %83, %170, %cst_88 {dimension_numbers = #tpu.dot_dimension_numbers<[1], [0], [0], [1], [0, 0, 1, 1], [], []>} : vector<8x32xf32>, vector<32x32xf32>, vector<8x32xf32> -> vector<8x32xf32>
    %172 = arith.addf %168, %171 : vector<8x32xf32>
    %173 = math.tanh %172 : vector<8x32xf32>
    %174 = arith.index_cast %c1_i32 : i32 to index
    %c0_89 = arith.constant 0 : index
    %c0_90 = arith.constant 0 : index
    %175 = vector.load %arg15[%174, %c0_89, %c0_90] : memref<8x8x32xf32, #tpu.memory_space<vmem>>, vector<1x8x32xf32>
    %176 = vector.shape_cast %175 : vector<1x8x32xf32> to vector<8x32xf32>
    %177 = vector.extract_strided_slice %30 {offsets = [3, 0, 0], sizes = [1, 32, 32], strides = [1, 1, 1]} : vector<4x32x32xf32> to vector<1x32x32xf32>
    %178 = vector.shape_cast %177 : vector<1x32x32xf32> to vector<32x32xf32>
    %cst_91 = arith.constant dense<0.000000e+00> : vector<8x32xf32>
    %179 = tpu.matmul %83, %178, %cst_91 {dimension_numbers = #tpu.dot_dimension_numbers<[1], [0], [0], [1], [0, 0, 1, 1], [], []>} : vector<8x32xf32>, vector<32x32xf32>, vector<8x32xf32> -> vector<8x32xf32>
    %180 = arith.addf %176, %179 : vector<8x32xf32>
    %181 = arith.negf %180 : vector<8x32xf32>
    %182 = math.exp %181 : vector<8x32xf32>
    %cst_92 = arith.constant 1.000000e+00 : f32
    %183 = vector.broadcast %cst_92 : f32 to vector<8x32xf32>
    %184 = arith.addf %183, %182 : vector<8x32xf32>
    %185 = arith.divf %183, %184 : vector<8x32xf32>
    %186 = arith.mulf %165, %81 : vector<8x32xf32>
    %187 = arith.mulf %153, %173 : vector<8x32xf32>
    %188 = arith.addf %186, %187 : vector<8x32xf32>
    %189 = math.tanh %188 : vector<8x32xf32>
    %190 = arith.mulf %185, %189 : vector<8x32xf32>
    %191 = arith.index_cast %c1_i32 : i32 to index
    %c0_93 = arith.constant 0 : index
    %c0_94 = arith.constant 0 : index
    %192 = vector.load %arg20[%191, %c0_93, %c0_94] : memref<8x8x32xf32, #tpu.memory_space<vmem>>, vector<1x8x32xf32>
    %193 = vector.shape_cast %192 : vector<1x8x32xf32> to vector<8x32xf32>
    %194 = vector.shape_cast %190 : vector<8x32xf32> to vector<1x8x32xf32>
    tpu.vector_store %arg20[%191, %c0_93, %c0_94], %194 {strides = array<i32>} : memref<8x8x32xf32, #tpu.memory_space<vmem>>, vector<1x8x32xf32>,
    %195 = arith.index_cast %141 : i32 to index
    %c0_95 = arith.constant 0 : index
    %c0_96 = arith.constant 0 : index
    %196 = vector.load %arg16[%195, %c0_95, %c0_96] : memref<8x8x32xf32, #tpu.memory_space<vmem>>, vector<1x8x32xf32>
    %197 = vector.shape_cast %196 : vector<1x8x32xf32> to vector<8x32xf32>
    %198 = vector.extract_strided_slice %31 {offsets = [0, 0, 0], sizes = [1, 32, 32], strides = [1, 1, 1]} : vector<4x32x32xf32> to vector<1x32x32xf32>
    %199 = vector.shape_cast %198 : vector<1x32x32xf32> to vector<32x32xf32>
    %cst_97 = arith.constant dense<0.000000e+00> : vector<8x32xf32>
    %200 = tpu.matmul %136, %199, %cst_97 {dimension_numbers = #tpu.dot_dimension_numbers<[1], [0], [0], [1], [0, 0, 1, 1], [], []>} : vector<8x32xf32>, vector<32x32xf32>, vector<8x32xf32> -> vector<8x32xf32>
    %201 = arith.addf %197, %200 : vector<8x32xf32>
    %202 = arith.negf %201 : vector<8x32xf32>
    %203 = math.exp %202 : vector<8x32xf32>
    %cst_98 = arith.constant 1.000000e+00 : f32
    %204 = vector.broadcast %cst_98 : f32 to vector<8x32xf32>
    %205 = arith.addf %204, %203 : vector<8x32xf32>
    %206 = arith.divf %204, %205 : vector<8x32xf32>
    %207 = arith.index_cast %141 : i32 to index
    %c0_99 = arith.constant 0 : index
    %c0_100 = arith.constant 0 : index
    %208 = vector.load %arg17[%207, %c0_99, %c0_100] : memref<8x8x32xf32, #tpu.memory_space<vmem>>, vector<1x8x32xf32>
    %209 = vector.shape_cast %208 : vector<1x8x32xf32> to vector<8x32xf32>
    %210 = vector.extract_strided_slice %31 {offsets = [1, 0, 0], sizes = [1, 32, 32], strides = [1, 1, 1]} : vector<4x32x32xf32> to vector<1x32x32xf32>
    %211 = vector.shape_cast %210 : vector<1x32x32xf32> to vector<32x32xf32>
    %cst_101 = arith.constant dense<0.000000e+00> : vector<8x32xf32>
    %212 = tpu.matmul %136, %211, %cst_101 {dimension_numbers = #tpu.dot_dimension_numbers<[1], [0], [0], [1], [0, 0, 1, 1], [], []>} : vector<8x32xf32>, vector<32x32xf32>, vector<8x32xf32> -> vector<8x32xf32>
    %213 = arith.addf %209, %212 : vector<8x32xf32>
    %214 = arith.negf %213 : vector<8x32xf32>
    %215 = math.exp %214 : vector<8x32xf32>
    %cst_102 = arith.constant 1.000000e+00 : f32
    %216 = vector.broadcast %cst_102 : f32 to vector<8x32xf32>
    %217 = arith.addf %216, %215 : vector<8x32xf32>
    %218 = arith.divf %216, %217 : vector<8x32xf32>
    %219 = arith.index_cast %141 : i32 to index
    %c0_103 = arith.constant 0 : index
    %c0_104 = arith.constant 0 : index
    %220 = vector.load %arg18[%219, %c0_103, %c0_104] : memref<8x8x32xf32, #tpu.memory_space<vmem>>, vector<1x8x32xf32>
    %221 = vector.shape_cast %220 : vector<1x8x32xf32> to vector<8x32xf32>
    %222 = vector.extract_strided_slice %31 {offsets = [2, 0, 0], sizes = [1, 32, 32], strides = [1, 1, 1]} : vector<4x32x32xf32> to vector<1x32x32xf32>
    %223 = vector.shape_cast %222 : vector<1x32x32xf32> to vector<32x32xf32>
    %cst_105 = arith.constant dense<0.000000e+00> : vector<8x32xf32>
    %224 = tpu.matmul %136, %223, %cst_105 {dimension_numbers = #tpu.dot_dimension_numbers<[1], [0], [0], [1], [0, 0, 1, 1], [], []>} : vector<8x32xf32>, vector<32x32xf32>, vector<8x32xf32> -> vector<8x32xf32>
    %225 = arith.addf %221, %224 : vector<8x32xf32>
    %226 = math.tanh %225 : vector<8x32xf32>
    %227 = arith.index_cast %141 : i32 to index
    %c0_106 = arith.constant 0 : index
    %c0_107 = arith.constant 0 : index
    %228 = vector.load %arg19[%227, %c0_106, %c0_107] : memref<8x8x32xf32, #tpu.memory_space<vmem>>, vector<1x8x32xf32>
    %229 = vector.shape_cast %228 : vector<1x8x32xf32> to vector<8x32xf32>
    %230 = vector.extract_strided_slice %31 {offsets = [3, 0, 0], sizes = [1, 32, 32], strides = [1, 1, 1]} : vector<4x32x32xf32> to vector<1x32x32xf32>
    %231 = vector.shape_cast %230 : vector<1x32x32xf32> to vector<32x32xf32>
    %cst_108 = arith.constant dense<0.000000e+00> : vector<8x32xf32>
    %232 = tpu.matmul %136, %231, %cst_108 {dimension_numbers = #tpu.dot_dimension_numbers<[1], [0], [0], [1], [0, 0, 1, 1], [], []>} : vector<8x32xf32>, vector<32x32xf32>, vector<8x32xf32> -> vector<8x32xf32>
    %233 = arith.addf %229, %232 : vector<8x32xf32>
    %234 = arith.negf %233 : vector<8x32xf32>
    %235 = math.exp %234 : vector<8x32xf32>
    %cst_109 = arith.constant 1.000000e+00 : f32
    %236 = vector.broadcast %cst_109 : f32 to vector<8x32xf32>
    %237 = arith.addf %236, %235 : vector<8x32xf32>
    %238 = arith.divf %236, %237 : vector<8x32xf32>
    %239 = arith.mulf %218, %134 : vector<8x32xf32>
    %240 = arith.mulf %206, %226 : vector<8x32xf32>
    %241 = arith.addf %239, %240 : vector<8x32xf32>
    %242 = math.tanh %241 : vector<8x32xf32>
    %243 = arith.mulf %238, %242 : vector<8x32xf32>
    %244 = arith.index_cast %141 : i32 to index
    %c0_110 = arith.constant 0 : index
    %c0_111 = arith.constant 0 : index
    %245 = vector.load %arg21[%244, %c0_110, %c0_111] : memref<8x8x32xf32, #tpu.memory_space<vmem>>, vector<1x8x32xf32>
    %246 = vector.shape_cast %245 : vector<1x8x32xf32> to vector<8x32xf32>
    %247 = vector.shape_cast %243 : vector<8x32xf32> to vector<1x8x32xf32>
    tpu.vector_store %arg21[%244, %c0_110, %c0_111], %247 {strides = array<i32>} : memref<8x8x32xf32, #tpu.memory_space<vmem>>, vector<1x8x32xf32>,
    %c2_i32 = arith.constant 2 : i32
    %c7_i32_112 = arith.constant 7 : i32
    %248 = arith.subi %c7_i32_112, %c2_i32 : i32
    %249 = arith.index_cast %c2_i32 : i32 to index
    %c0_113 = arith.constant 0 : index
    %c0_114 = arith.constant 0 : index
    %250 = vector.load %arg12[%249, %c0_113, %c0_114] : memref<8x8x32xf32, #tpu.memory_space<vmem>>, vector<1x8x32xf32>
    %251 = vector.shape_cast %250 : vector<1x8x32xf32> to vector<8x32xf32>
    %252 = vector.extract_strided_slice %30 {offsets = [0, 0, 0], sizes = [1, 32, 32], strides = [1, 1, 1]} : vector<4x32x32xf32> to vector<1x32x32xf32>
    %253 = vector.shape_cast %252 : vector<1x32x32xf32> to vector<32x32xf32>
    %cst_115 = arith.constant dense<0.000000e+00> : vector<8x32xf32>
    %254 = tpu.matmul %190, %253, %cst_115 {dimension_numbers = #tpu.dot_dimension_numbers<[1], [0], [0], [1], [0, 0, 1, 1], [], []>} : vector<8x32xf32>, vector<32x32xf32>, vector<8x32xf32> -> vector<8x32xf32>
    %255 = arith.addf %251, %254 : vector<8x32xf32>
    %256 = arith.negf %255 : vector<8x32xf32>
    %257 = math.exp %256 : vector<8x32xf32>
    %cst_116 = arith.constant 1.000000e+00 : f32
    %258 = vector.broadcast %cst_116 : f32 to vector<8x32xf32>
    %259 = arith.addf %258, %257 : vector<8x32xf32>
    %260 = arith.divf %258, %259 : vector<8x32xf32>
    %261 = arith.index_cast %c2_i32 : i32 to index
    %c0_117 = arith.constant 0 : index
    %c0_118 = arith.constant 0 : index
    %262 = vector.load %arg13[%261, %c0_117, %c0_118] : memref<8x8x32xf32, #tpu.memory_space<vmem>>, vector<1x8x32xf32>
    %263 = vector.shape_cast %262 : vector<1x8x32xf32> to vector<8x32xf32>
    %264 = vector.extract_strided_slice %30 {offsets = [1, 0, 0], sizes = [1, 32, 32], strides = [1, 1, 1]} : vector<4x32x32xf32> to vector<1x32x32xf32>
    %265 = vector.shape_cast %264 : vector<1x32x32xf32> to vector<32x32xf32>
    %cst_119 = arith.constant dense<0.000000e+00> : vector<8x32xf32>
    %266 = tpu.matmul %190, %265, %cst_119 {dimension_numbers = #tpu.dot_dimension_numbers<[1], [0], [0], [1], [0, 0, 1, 1], [], []>} : vector<8x32xf32>, vector<32x32xf32>, vector<8x32xf32> -> vector<8x32xf32>
    %267 = arith.addf %263, %266 : vector<8x32xf32>
    %268 = arith.negf %267 : vector<8x32xf32>
    %269 = math.exp %268 : vector<8x32xf32>
    %cst_120 = arith.constant 1.000000e+00 : f32
    %270 = vector.broadcast %cst_120 : f32 to vector<8x32xf32>
    %271 = arith.addf %270, %269 : vector<8x32xf32>
    %272 = arith.divf %270, %271 : vector<8x32xf32>
    %273 = arith.index_cast %c2_i32 : i32 to index
    %c0_121 = arith.constant 0 : index
    %c0_122 = arith.constant 0 : index
    %274 = vector.load %arg14[%273, %c0_121, %c0_122] : memref<8x8x32xf32, #tpu.memory_space<vmem>>, vector<1x8x32xf32>
    %275 = vector.shape_cast %274 : vector<1x8x32xf32> to vector<8x32xf32>
    %276 = vector.extract_strided_slice %30 {offsets = [2, 0, 0], sizes = [1, 32, 32], strides = [1, 1, 1]} : vector<4x32x32xf32> to vector<1x32x32xf32>
    %277 = vector.shape_cast %276 : vector<1x32x32xf32> to vector<32x32xf32>
    %cst_123 = arith.constant dense<0.000000e+00> : vector<8x32xf32>
    %278 = tpu.matmul %190, %277, %cst_123 {dimension_numbers = #tpu.dot_dimension_numbers<[1], [0], [0], [1], [0, 0, 1, 1], [], []>} : vector<8x32xf32>, vector<32x32xf32>, vector<8x32xf32> -> vector<8x32xf32>
    %279 = arith.addf %275, %278 : vector<8x32xf32>
    %280 = math.tanh %279 : vector<8x32xf32>
    %281 = arith.index_cast %c2_i32 : i32 to index
    %c0_124 = arith.constant 0 : index
    %c0_125 = arith.constant 0 : index
    %282 = vector.load %arg15[%281, %c0_124, %c0_125] : memref<8x8x32xf32, #tpu.memory_space<vmem>>, vector<1x8x32xf32>
    %283 = vector.shape_cast %282 : vector<1x8x32xf32> to vector<8x32xf32>
    %284 = vector.extract_strided_slice %30 {offsets = [3, 0, 0], sizes = [1, 32, 32], strides = [1, 1, 1]} : vector<4x32x32xf32> to vector<1x32x32xf32>
    %285 = vector.shape_cast %284 : vector<1x32x32xf32> to vector<32x32xf32>
    %cst_126 = arith.constant dense<0.000000e+00> : vector<8x32xf32>
    %286 = tpu.matmul %190, %285, %cst_126 {dimension_numbers = #tpu.dot_dimension_numbers<[1], [0], [0], [1], [0, 0, 1, 1], [], []>} : vector<8x32xf32>, vector<32x32xf32>, vector<8x32xf32> -> vector<8x32xf32>
    %287 = arith.addf %283, %286 : vector<8x32xf32>
    %288 = arith.negf %287 : vector<8x32xf32>
    %289 = math.exp %288 : vector<8x32xf32>
    %cst_127 = arith.constant 1.000000e+00 : f32
    %290 = vector.broadcast %cst_127 : f32 to vector<8x32xf32>
    %291 = arith.addf %290, %289 : vector<8x32xf32>
    %292 = arith.divf %290, %291 : vector<8x32xf32>
    %293 = arith.mulf %272, %188 : vector<8x32xf32>
    %294 = arith.mulf %260, %280 : vector<8x32xf32>
    %295 = arith.addf %293, %294 : vector<8x32xf32>
    %296 = math.tanh %295 : vector<8x32xf32>
    %297 = arith.mulf %292, %296 : vector<8x32xf32>
    %298 = arith.index_cast %c2_i32 : i32 to index
    %c0_128 = arith.constant 0 : index
    %c0_129 = arith.constant 0 : index
    %299 = vector.load %arg20[%298, %c0_128, %c0_129] : memref<8x8x32xf32, #tpu.memory_space<vmem>>, vector<1x8x32xf32>
    %300 = vector.shape_cast %299 : vector<1x8x32xf32> to vector<8x32xf32>
    %301 = vector.shape_cast %297 : vector<8x32xf32> to vector<1x8x32xf32>
    tpu.vector_store %arg20[%298, %c0_128, %c0_129], %301 {strides = array<i32>} : memref<8x8x32xf32, #tpu.memory_space<vmem>>, vector<1x8x32xf32>,
    %302 = arith.index_cast %248 : i32 to index
    %c0_130 = arith.constant 0 : index
    %c0_131 = arith.constant 0 : index
    %303 = vector.load %arg16[%302, %c0_130, %c0_131] : memref<8x8x32xf32, #tpu.memory_space<vmem>>, vector<1x8x32xf32>
    %304 = vector.shape_cast %303 : vector<1x8x32xf32> to vector<8x32xf32>
    %305 = vector.extract_strided_slice %31 {offsets = [0, 0, 0], sizes = [1, 32, 32], strides = [1, 1, 1]} : vector<4x32x32xf32> to vector<1x32x32xf32>
    %306 = vector.shape_cast %305 : vector<1x32x32xf32> to vector<32x32xf32>
    %cst_132 = arith.constant dense<0.000000e+00> : vector<8x32xf32>
    %307 = tpu.matmul %243, %306, %cst_132 {dimension_numbers = #tpu.dot_dimension_numbers<[1], [0], [0], [1], [0, 0, 1, 1], [], []>} : vector<8x32xf32>, vector<32x32xf32>, vector<8x32xf32> -> vector<8x32xf32>
    %308 = arith.addf %304, %307 : vector<8x32xf32>
    %309 = arith.negf %308 : vector<8x32xf32>
    %310 = math.exp %309 : vector<8x32xf32>
    %cst_133 = arith.constant 1.000000e+00 : f32
    %311 = vector.broadcast %cst_133 : f32 to vector<8x32xf32>
    %312 = arith.addf %311, %310 : vector<8x32xf32>
    %313 = arith.divf %311, %312 : vector<8x32xf32>
    %314 = arith.index_cast %248 : i32 to index
    %c0_134 = arith.constant 0 : index
    %c0_135 = arith.constant 0 : index
    %315 = vector.load %arg17[%314, %c0_134, %c0_135] : memref<8x8x32xf32, #tpu.memory_space<vmem>>, vector<1x8x32xf32>
    %316 = vector.shape_cast %315 : vector<1x8x32xf32> to vector<8x32xf32>
    %317 = vector.extract_strided_slice %31 {offsets = [1, 0, 0], sizes = [1, 32, 32], strides = [1, 1, 1]} : vector<4x32x32xf32> to vector<1x32x32xf32>
    %318 = vector.shape_cast %317 : vector<1x32x32xf32> to vector<32x32xf32>
    %cst_136 = arith.constant dense<0.000000e+00> : vector<8x32xf32>
    %319 = tpu.matmul %243, %318, %cst_136 {dimension_numbers = #tpu.dot_dimension_numbers<[1], [0], [0], [1], [0, 0, 1, 1], [], []>} : vector<8x32xf32>, vector<32x32xf32>, vector<8x32xf32> -> vector<8x32xf32>
    %320 = arith.addf %316, %319 : vector<8x32xf32>
    %321 = arith.negf %320 : vector<8x32xf32>
    %322 = math.exp %321 : vector<8x32xf32>
    %cst_137 = arith.constant 1.000000e+00 : f32
    %323 = vector.broadcast %cst_137 : f32 to vector<8x32xf32>
    %324 = arith.addf %323, %322 : vector<8x32xf32>
    %325 = arith.divf %323, %324 : vector<8x32xf32>
    %326 = arith.index_cast %248 : i32 to index
    %c0_138 = arith.constant 0 : index
    %c0_139 = arith.constant 0 : index
    %327 = vector.load %arg18[%326, %c0_138, %c0_139] : memref<8x8x32xf32, #tpu.memory_space<vmem>>, vector<1x8x32xf32>
    %328 = vector.shape_cast %327 : vector<1x8x32xf32> to vector<8x32xf32>
    %329 = vector.extract_strided_slice %31 {offsets = [2, 0, 0], sizes = [1, 32, 32], strides = [1, 1, 1]} : vector<4x32x32xf32> to vector<1x32x32xf32>
    %330 = vector.shape_cast %329 : vector<1x32x32xf32> to vector<32x32xf32>
    %cst_140 = arith.constant dense<0.000000e+00> : vector<8x32xf32>
    %331 = tpu.matmul %243, %330, %cst_140 {dimension_numbers = #tpu.dot_dimension_numbers<[1], [0], [0], [1], [0, 0, 1, 1], [], []>} : vector<8x32xf32>, vector<32x32xf32>, vector<8x32xf32> -> vector<8x32xf32>
    %332 = arith.addf %328, %331 : vector<8x32xf32>
    %333 = math.tanh %332 : vector<8x32xf32>
    %334 = arith.index_cast %248 : i32 to index
    %c0_141 = arith.constant 0 : index
    %c0_142 = arith.constant 0 : index
    %335 = vector.load %arg19[%334, %c0_141, %c0_142] : memref<8x8x32xf32, #tpu.memory_space<vmem>>, vector<1x8x32xf32>
    %336 = vector.shape_cast %335 : vector<1x8x32xf32> to vector<8x32xf32>
    %337 = vector.extract_strided_slice %31 {offsets = [3, 0, 0], sizes = [1, 32, 32], strides = [1, 1, 1]} : vector<4x32x32xf32> to vector<1x32x32xf32>
    %338 = vector.shape_cast %337 : vector<1x32x32xf32> to vector<32x32xf32>
    %cst_143 = arith.constant dense<0.000000e+00> : vector<8x32xf32>
    %339 = tpu.matmul %243, %338, %cst_143 {dimension_numbers = #tpu.dot_dimension_numbers<[1], [0], [0], [1], [0, 0, 1, 1], [], []>} : vector<8x32xf32>, vector<32x32xf32>, vector<8x32xf32> -> vector<8x32xf32>
    %340 = arith.addf %336, %339 : vector<8x32xf32>
    %341 = arith.negf %340 : vector<8x32xf32>
    %342 = math.exp %341 : vector<8x32xf32>
    %cst_144 = arith.constant 1.000000e+00 : f32
    %343 = vector.broadcast %cst_144 : f32 to vector<8x32xf32>
    %344 = arith.addf %343, %342 : vector<8x32xf32>
    %345 = arith.divf %343, %344 : vector<8x32xf32>
    %346 = arith.mulf %325, %241 : vector<8x32xf32>
    %347 = arith.mulf %313, %333 : vector<8x32xf32>
    %348 = arith.addf %346, %347 : vector<8x32xf32>
    %349 = math.tanh %348 : vector<8x32xf32>
    %350 = arith.mulf %345, %349 : vector<8x32xf32>
    %351 = arith.index_cast %248 : i32 to index
    %c0_145 = arith.constant 0 : index
    %c0_146 = arith.constant 0 : index
    %352 = vector.load %arg21[%351, %c0_145, %c0_146] : memref<8x8x32xf32, #tpu.memory_space<vmem>>, vector<1x8x32xf32>
    %353 = vector.shape_cast %352 : vector<1x8x32xf32> to vector<8x32xf32>
    %354 = vector.shape_cast %350 : vector<8x32xf32> to vector<1x8x32xf32>
    tpu.vector_store %arg21[%351, %c0_145, %c0_146], %354 {strides = array<i32>} : memref<8x8x32xf32, #tpu.memory_space<vmem>>, vector<1x8x32xf32>,
    %c3_i32 = arith.constant 3 : i32
    %c7_i32_147 = arith.constant 7 : i32
    %355 = arith.subi %c7_i32_147, %c3_i32 : i32
    %356 = arith.index_cast %c3_i32 : i32 to index
    %c0_148 = arith.constant 0 : index
    %c0_149 = arith.constant 0 : index
    %357 = vector.load %arg12[%356, %c0_148, %c0_149] : memref<8x8x32xf32, #tpu.memory_space<vmem>>, vector<1x8x32xf32>
    %358 = vector.shape_cast %357 : vector<1x8x32xf32> to vector<8x32xf32>
    %359 = vector.extract_strided_slice %30 {offsets = [0, 0, 0], sizes = [1, 32, 32], strides = [1, 1, 1]} : vector<4x32x32xf32> to vector<1x32x32xf32>
    %360 = vector.shape_cast %359 : vector<1x32x32xf32> to vector<32x32xf32>
    %cst_150 = arith.constant dense<0.000000e+00> : vector<8x32xf32>
    %361 = tpu.matmul %297, %360, %cst_150 {dimension_numbers = #tpu.dot_dimension_numbers<[1], [0], [0], [1], [0, 0, 1, 1], [], []>} : vector<8x32xf32>, vector<32x32xf32>, vector<8x32xf32> -> vector<8x32xf32>
    %362 = arith.addf %358, %361 : vector<8x32xf32>
    %363 = arith.negf %362 : vector<8x32xf32>
    %364 = math.exp %363 : vector<8x32xf32>
    %cst_151 = arith.constant 1.000000e+00 : f32
    %365 = vector.broadcast %cst_151 : f32 to vector<8x32xf32>
    %366 = arith.addf %365, %364 : vector<8x32xf32>
    %367 = arith.divf %365, %366 : vector<8x32xf32>
    %368 = arith.index_cast %c3_i32 : i32 to index
    %c0_152 = arith.constant 0 : index
    %c0_153 = arith.constant 0 : index
    %369 = vector.load %arg13[%368, %c0_152, %c0_153] : memref<8x8x32xf32, #tpu.memory_space<vmem>>, vector<1x8x32xf32>
    %370 = vector.shape_cast %369 : vector<1x8x32xf32> to vector<8x32xf32>
    %371 = vector.extract_strided_slice %30 {offsets = [1, 0, 0], sizes = [1, 32, 32], strides = [1, 1, 1]} : vector<4x32x32xf32> to vector<1x32x32xf32>
    %372 = vector.shape_cast %371 : vector<1x32x32xf32> to vector<32x32xf32>
    %cst_154 = arith.constant dense<0.000000e+00> : vector<8x32xf32>
    %373 = tpu.matmul %297, %372, %cst_154 {dimension_numbers = #tpu.dot_dimension_numbers<[1], [0], [0], [1], [0, 0, 1, 1], [], []>} : vector<8x32xf32>, vector<32x32xf32>, vector<8x32xf32> -> vector<8x32xf32>
    %374 = arith.addf %370, %373 : vector<8x32xf32>
    %375 = arith.negf %374 : vector<8x32xf32>
    %376 = math.exp %375 : vector<8x32xf32>
    %cst_155 = arith.constant 1.000000e+00 : f32
    %377 = vector.broadcast %cst_155 : f32 to vector<8x32xf32>
    %378 = arith.addf %377, %376 : vector<8x32xf32>
    %379 = arith.divf %377, %378 : vector<8x32xf32>
    %380 = arith.index_cast %c3_i32 : i32 to index
    %c0_156 = arith.constant 0 : index
    %c0_157 = arith.constant 0 : index
    %381 = vector.load %arg14[%380, %c0_156, %c0_157] : memref<8x8x32xf32, #tpu.memory_space<vmem>>, vector<1x8x32xf32>
    %382 = vector.shape_cast %381 : vector<1x8x32xf32> to vector<8x32xf32>
    %383 = vector.extract_strided_slice %30 {offsets = [2, 0, 0], sizes = [1, 32, 32], strides = [1, 1, 1]} : vector<4x32x32xf32> to vector<1x32x32xf32>
    %384 = vector.shape_cast %383 : vector<1x32x32xf32> to vector<32x32xf32>
    %cst_158 = arith.constant dense<0.000000e+00> : vector<8x32xf32>
    %385 = tpu.matmul %297, %384, %cst_158 {dimension_numbers = #tpu.dot_dimension_numbers<[1], [0], [0], [1], [0, 0, 1, 1], [], []>} : vector<8x32xf32>, vector<32x32xf32>, vector<8x32xf32> -> vector<8x32xf32>
    %386 = arith.addf %382, %385 : vector<8x32xf32>
    %387 = math.tanh %386 : vector<8x32xf32>
    %388 = arith.index_cast %c3_i32 : i32 to index
    %c0_159 = arith.constant 0 : index
    %c0_160 = arith.constant 0 : index
    %389 = vector.load %arg15[%388, %c0_159, %c0_160] : memref<8x8x32xf32, #tpu.memory_space<vmem>>, vector<1x8x32xf32>
    %390 = vector.shape_cast %389 : vector<1x8x32xf32> to vector<8x32xf32>
    %391 = vector.extract_strided_slice %30 {offsets = [3, 0, 0], sizes = [1, 32, 32], strides = [1, 1, 1]} : vector<4x32x32xf32> to vector<1x32x32xf32>
    %392 = vector.shape_cast %391 : vector<1x32x32xf32> to vector<32x32xf32>
    %cst_161 = arith.constant dense<0.000000e+00> : vector<8x32xf32>
    %393 = tpu.matmul %297, %392, %cst_161 {dimension_numbers = #tpu.dot_dimension_numbers<[1], [0], [0], [1], [0, 0, 1, 1], [], []>} : vector<8x32xf32>, vector<32x32xf32>, vector<8x32xf32> -> vector<8x32xf32>
    %394 = arith.addf %390, %393 : vector<8x32xf32>
    %395 = arith.negf %394 : vector<8x32xf32>
    %396 = math.exp %395 : vector<8x32xf32>
    %cst_162 = arith.constant 1.000000e+00 : f32
    %397 = vector.broadcast %cst_162 : f32 to vector<8x32xf32>
    %398 = arith.addf %397, %396 : vector<8x32xf32>
    %399 = arith.divf %397, %398 : vector<8x32xf32>
    %400 = arith.mulf %379, %295 : vector<8x32xf32>
    %401 = arith.mulf %367, %387 : vector<8x32xf32>
    %402 = arith.addf %400, %401 : vector<8x32xf32>
    %403 = math.tanh %402 : vector<8x32xf32>
    %404 = arith.mulf %399, %403 : vector<8x32xf32>
    %405 = arith.index_cast %c3_i32 : i32 to index
    %c0_163 = arith.constant 0 : index
    %c0_164 = arith.constant 0 : index
    %406 = vector.load %arg20[%405, %c0_163, %c0_164] : memref<8x8x32xf32, #tpu.memory_space<vmem>>, vector<1x8x32xf32>
    %407 = vector.shape_cast %406 : vector<1x8x32xf32> to vector<8x32xf32>
    %408 = vector.shape_cast %404 : vector<8x32xf32> to vector<1x8x32xf32>
    tpu.vector_store %arg20[%405, %c0_163, %c0_164], %408 {strides = array<i32>} : memref<8x8x32xf32, #tpu.memory_space<vmem>>, vector<1x8x32xf32>,
    %409 = arith.index_cast %355 : i32 to index
    %c0_165 = arith.constant 0 : index
    %c0_166 = arith.constant 0 : index
    %410 = vector.load %arg16[%409, %c0_165, %c0_166] : memref<8x8x32xf32, #tpu.memory_space<vmem>>, vector<1x8x32xf32>
    %411 = vector.shape_cast %410 : vector<1x8x32xf32> to vector<8x32xf32>
    %412 = vector.extract_strided_slice %31 {offsets = [0, 0, 0], sizes = [1, 32, 32], strides = [1, 1, 1]} : vector<4x32x32xf32> to vector<1x32x32xf32>
    %413 = vector.shape_cast %412 : vector<1x32x32xf32> to vector<32x32xf32>
    %cst_167 = arith.constant dense<0.000000e+00> : vector<8x32xf32>
    %414 = tpu.matmul %350, %413, %cst_167 {dimension_numbers = #tpu.dot_dimension_numbers<[1], [0], [0], [1], [0, 0, 1, 1], [], []>} : vector<8x32xf32>, vector<32x32xf32>, vector<8x32xf32> -> vector<8x32xf32>
    %415 = arith.addf %411, %414 : vector<8x32xf32>
    %416 = arith.negf %415 : vector<8x32xf32>
    %417 = math.exp %416 : vector<8x32xf32>
    %cst_168 = arith.constant 1.000000e+00 : f32
    %418 = vector.broadcast %cst_168 : f32 to vector<8x32xf32>
    %419 = arith.addf %418, %417 : vector<8x32xf32>
    %420 = arith.divf %418, %419 : vector<8x32xf32>
    %421 = arith.index_cast %355 : i32 to index
    %c0_169 = arith.constant 0 : index
    %c0_170 = arith.constant 0 : index
    %422 = vector.load %arg17[%421, %c0_169, %c0_170] : memref<8x8x32xf32, #tpu.memory_space<vmem>>, vector<1x8x32xf32>
    %423 = vector.shape_cast %422 : vector<1x8x32xf32> to vector<8x32xf32>
    %424 = vector.extract_strided_slice %31 {offsets = [1, 0, 0], sizes = [1, 32, 32], strides = [1, 1, 1]} : vector<4x32x32xf32> to vector<1x32x32xf32>
    %425 = vector.shape_cast %424 : vector<1x32x32xf32> to vector<32x32xf32>
    %cst_171 = arith.constant dense<0.000000e+00> : vector<8x32xf32>
    %426 = tpu.matmul %350, %425, %cst_171 {dimension_numbers = #tpu.dot_dimension_numbers<[1], [0], [0], [1], [0, 0, 1, 1], [], []>} : vector<8x32xf32>, vector<32x32xf32>, vector<8x32xf32> -> vector<8x32xf32>
    %427 = arith.addf %423, %426 : vector<8x32xf32>
    %428 = arith.negf %427 : vector<8x32xf32>
    %429 = math.exp %428 : vector<8x32xf32>
    %cst_172 = arith.constant 1.000000e+00 : f32
    %430 = vector.broadcast %cst_172 : f32 to vector<8x32xf32>
    %431 = arith.addf %430, %429 : vector<8x32xf32>
    %432 = arith.divf %430, %431 : vector<8x32xf32>
    %433 = arith.index_cast %355 : i32 to index
    %c0_173 = arith.constant 0 : index
    %c0_174 = arith.constant 0 : index
    %434 = vector.load %arg18[%433, %c0_173, %c0_174] : memref<8x8x32xf32, #tpu.memory_space<vmem>>, vector<1x8x32xf32>
    %435 = vector.shape_cast %434 : vector<1x8x32xf32> to vector<8x32xf32>
    %436 = vector.extract_strided_slice %31 {offsets = [2, 0, 0], sizes = [1, 32, 32], strides = [1, 1, 1]} : vector<4x32x32xf32> to vector<1x32x32xf32>
    %437 = vector.shape_cast %436 : vector<1x32x32xf32> to vector<32x32xf32>
    %cst_175 = arith.constant dense<0.000000e+00> : vector<8x32xf32>
    %438 = tpu.matmul %350, %437, %cst_175 {dimension_numbers = #tpu.dot_dimension_numbers<[1], [0], [0], [1], [0, 0, 1, 1], [], []>} : vector<8x32xf32>, vector<32x32xf32>, vector<8x32xf32> -> vector<8x32xf32>
    %439 = arith.addf %435, %438 : vector<8x32xf32>
    %440 = math.tanh %439 : vector<8x32xf32>
    %441 = arith.index_cast %355 : i32 to index
    %c0_176 = arith.constant 0 : index
    %c0_177 = arith.constant 0 : index
    %442 = vector.load %arg19[%441, %c0_176, %c0_177] : memref<8x8x32xf32, #tpu.memory_space<vmem>>, vector<1x8x32xf32>
    %443 = vector.shape_cast %442 : vector<1x8x32xf32> to vector<8x32xf32>
    %444 = vector.extract_strided_slice %31 {offsets = [3, 0, 0], sizes = [1, 32, 32], strides = [1, 1, 1]} : vector<4x32x32xf32> to vector<1x32x32xf32>
    %445 = vector.shape_cast %444 : vector<1x32x32xf32> to vector<32x32xf32>
    %cst_178 = arith.constant dense<0.000000e+00> : vector<8x32xf32>
    %446 = tpu.matmul %350, %445, %cst_178 {dimension_numbers = #tpu.dot_dimension_numbers<[1], [0], [0], [1], [0, 0, 1, 1], [], []>} : vector<8x32xf32>, vector<32x32xf32>, vector<8x32xf32> -> vector<8x32xf32>
    %447 = arith.addf %443, %446 : vector<8x32xf32>
    %448 = arith.negf %447 : vector<8x32xf32>
    %449 = math.exp %448 : vector<8x32xf32>
    %cst_179 = arith.constant 1.000000e+00 : f32
    %450 = vector.broadcast %cst_179 : f32 to vector<8x32xf32>
    %451 = arith.addf %450, %449 : vector<8x32xf32>
    %452 = arith.divf %450, %451 : vector<8x32xf32>
    %453 = arith.mulf %432, %348 : vector<8x32xf32>
    %454 = arith.mulf %420, %440 : vector<8x32xf32>
    %455 = arith.addf %453, %454 : vector<8x32xf32>
    %456 = math.tanh %455 : vector<8x32xf32>
    %457 = arith.mulf %452, %456 : vector<8x32xf32>
    %458 = arith.index_cast %355 : i32 to index
    %c0_180 = arith.constant 0 : index
    %c0_181 = arith.constant 0 : index
    %459 = vector.load %arg21[%458, %c0_180, %c0_181] : memref<8x8x32xf32, #tpu.memory_space<vmem>>, vector<1x8x32xf32>
    %460 = vector.shape_cast %459 : vector<1x8x32xf32> to vector<8x32xf32>
    %461 = vector.shape_cast %457 : vector<8x32xf32> to vector<1x8x32xf32>
    tpu.vector_store %arg21[%458, %c0_180, %c0_181], %461 {strides = array<i32>} : memref<8x8x32xf32, #tpu.memory_space<vmem>>, vector<1x8x32xf32>,
    %c4_i32 = arith.constant 4 : i32
    %c7_i32_182 = arith.constant 7 : i32
    %462 = arith.subi %c7_i32_182, %c4_i32 : i32
    %463 = arith.index_cast %c4_i32 : i32 to index
    %c0_183 = arith.constant 0 : index
    %c0_184 = arith.constant 0 : index
    %464 = vector.load %arg12[%463, %c0_183, %c0_184] : memref<8x8x32xf32, #tpu.memory_space<vmem>>, vector<1x8x32xf32>
    %465 = vector.shape_cast %464 : vector<1x8x32xf32> to vector<8x32xf32>
    %466 = vector.extract_strided_slice %30 {offsets = [0, 0, 0], sizes = [1, 32, 32], strides = [1, 1, 1]} : vector<4x32x32xf32> to vector<1x32x32xf32>
    %467 = vector.shape_cast %466 : vector<1x32x32xf32> to vector<32x32xf32>
    %cst_185 = arith.constant dense<0.000000e+00> : vector<8x32xf32>
    %468 = tpu.matmul %404, %467, %cst_185 {dimension_numbers = #tpu.dot_dimension_numbers<[1], [0], [0], [1], [0, 0, 1, 1], [], []>} : vector<8x32xf32>, vector<32x32xf32>, vector<8x32xf32> -> vector<8x32xf32>
    %469 = arith.addf %465, %468 : vector<8x32xf32>
    %470 = arith.negf %469 : vector<8x32xf32>
    %471 = math.exp %470 : vector<8x32xf32>
    %cst_186 = arith.constant 1.000000e+00 : f32
    %472 = vector.broadcast %cst_186 : f32 to vector<8x32xf32>
    %473 = arith.addf %472, %471 : vector<8x32xf32>
    %474 = arith.divf %472, %473 : vector<8x32xf32>
    %475 = arith.index_cast %c4_i32 : i32 to index
    %c0_187 = arith.constant 0 : index
    %c0_188 = arith.constant 0 : index
    %476 = vector.load %arg13[%475, %c0_187, %c0_188] : memref<8x8x32xf32, #tpu.memory_space<vmem>>, vector<1x8x32xf32>
    %477 = vector.shape_cast %476 : vector<1x8x32xf32> to vector<8x32xf32>
    %478 = vector.extract_strided_slice %30 {offsets = [1, 0, 0], sizes = [1, 32, 32], strides = [1, 1, 1]} : vector<4x32x32xf32> to vector<1x32x32xf32>
    %479 = vector.shape_cast %478 : vector<1x32x32xf32> to vector<32x32xf32>
    %cst_189 = arith.constant dense<0.000000e+00> : vector<8x32xf32>
    %480 = tpu.matmul %404, %479, %cst_189 {dimension_numbers = #tpu.dot_dimension_numbers<[1], [0], [0], [1], [0, 0, 1, 1], [], []>} : vector<8x32xf32>, vector<32x32xf32>, vector<8x32xf32> -> vector<8x32xf32>
    %481 = arith.addf %477, %480 : vector<8x32xf32>
    %482 = arith.negf %481 : vector<8x32xf32>
    %483 = math.exp %482 : vector<8x32xf32>
    %cst_190 = arith.constant 1.000000e+00 : f32
    %484 = vector.broadcast %cst_190 : f32 to vector<8x32xf32>
    %485 = arith.addf %484, %483 : vector<8x32xf32>
    %486 = arith.divf %484, %485 : vector<8x32xf32>
    %487 = arith.index_cast %c4_i32 : i32 to index
    %c0_191 = arith.constant 0 : index
    %c0_192 = arith.constant 0 : index
    %488 = vector.load %arg14[%487, %c0_191, %c0_192] : memref<8x8x32xf32, #tpu.memory_space<vmem>>, vector<1x8x32xf32>
    %489 = vector.shape_cast %488 : vector<1x8x32xf32> to vector<8x32xf32>
    %490 = vector.extract_strided_slice %30 {offsets = [2, 0, 0], sizes = [1, 32, 32], strides = [1, 1, 1]} : vector<4x32x32xf32> to vector<1x32x32xf32>
    %491 = vector.shape_cast %490 : vector<1x32x32xf32> to vector<32x32xf32>
    %cst_193 = arith.constant dense<0.000000e+00> : vector<8x32xf32>
    %492 = tpu.matmul %404, %491, %cst_193 {dimension_numbers = #tpu.dot_dimension_numbers<[1], [0], [0], [1], [0, 0, 1, 1], [], []>} : vector<8x32xf32>, vector<32x32xf32>, vector<8x32xf32> -> vector<8x32xf32>
    %493 = arith.addf %489, %492 : vector<8x32xf32>
    %494 = math.tanh %493 : vector<8x32xf32>
    %495 = arith.index_cast %c4_i32 : i32 to index
    %c0_194 = arith.constant 0 : index
    %c0_195 = arith.constant 0 : index
    %496 = vector.load %arg15[%495, %c0_194, %c0_195] : memref<8x8x32xf32, #tpu.memory_space<vmem>>, vector<1x8x32xf32>
    %497 = vector.shape_cast %496 : vector<1x8x32xf32> to vector<8x32xf32>
    %498 = vector.extract_strided_slice %30 {offsets = [3, 0, 0], sizes = [1, 32, 32], strides = [1, 1, 1]} : vector<4x32x32xf32> to vector<1x32x32xf32>
    %499 = vector.shape_cast %498 : vector<1x32x32xf32> to vector<32x32xf32>
    %cst_196 = arith.constant dense<0.000000e+00> : vector<8x32xf32>
    %500 = tpu.matmul %404, %499, %cst_196 {dimension_numbers = #tpu.dot_dimension_numbers<[1], [0], [0], [1], [0, 0, 1, 1], [], []>} : vector<8x32xf32>, vector<32x32xf32>, vector<8x32xf32> -> vector<8x32xf32>
    %501 = arith.addf %497, %500 : vector<8x32xf32>
    %502 = arith.negf %501 : vector<8x32xf32>
    %503 = math.exp %502 : vector<8x32xf32>
    %cst_197 = arith.constant 1.000000e+00 : f32
    %504 = vector.broadcast %cst_197 : f32 to vector<8x32xf32>
    %505 = arith.addf %504, %503 : vector<8x32xf32>
    %506 = arith.divf %504, %505 : vector<8x32xf32>
    %507 = arith.mulf %486, %402 : vector<8x32xf32>
    %508 = arith.mulf %474, %494 : vector<8x32xf32>
    %509 = arith.addf %507, %508 : vector<8x32xf32>
    %510 = math.tanh %509 : vector<8x32xf32>
    %511 = arith.mulf %506, %510 : vector<8x32xf32>
    %512 = arith.index_cast %c4_i32 : i32 to index
    %c0_198 = arith.constant 0 : index
    %c0_199 = arith.constant 0 : index
    %513 = vector.load %arg20[%512, %c0_198, %c0_199] : memref<8x8x32xf32, #tpu.memory_space<vmem>>, vector<1x8x32xf32>
    %514 = vector.shape_cast %513 : vector<1x8x32xf32> to vector<8x32xf32>
    %515 = vector.shape_cast %511 : vector<8x32xf32> to vector<1x8x32xf32>
    tpu.vector_store %arg20[%512, %c0_198, %c0_199], %515 {strides = array<i32>} : memref<8x8x32xf32, #tpu.memory_space<vmem>>, vector<1x8x32xf32>,
    %516 = arith.index_cast %462 : i32 to index
    %c0_200 = arith.constant 0 : index
    %c0_201 = arith.constant 0 : index
    %517 = vector.load %arg16[%516, %c0_200, %c0_201] : memref<8x8x32xf32, #tpu.memory_space<vmem>>, vector<1x8x32xf32>
    %518 = vector.shape_cast %517 : vector<1x8x32xf32> to vector<8x32xf32>
    %519 = vector.extract_strided_slice %31 {offsets = [0, 0, 0], sizes = [1, 32, 32], strides = [1, 1, 1]} : vector<4x32x32xf32> to vector<1x32x32xf32>
    %520 = vector.shape_cast %519 : vector<1x32x32xf32> to vector<32x32xf32>
    %cst_202 = arith.constant dense<0.000000e+00> : vector<8x32xf32>
    %521 = tpu.matmul %457, %520, %cst_202 {dimension_numbers = #tpu.dot_dimension_numbers<[1], [0], [0], [1], [0, 0, 1, 1], [], []>} : vector<8x32xf32>, vector<32x32xf32>, vector<8x32xf32> -> vector<8x32xf32>
    %522 = arith.addf %518, %521 : vector<8x32xf32>
    %523 = arith.negf %522 : vector<8x32xf32>
    %524 = math.exp %523 : vector<8x32xf32>
    %cst_203 = arith.constant 1.000000e+00 : f32
    %525 = vector.broadcast %cst_203 : f32 to vector<8x32xf32>
    %526 = arith.addf %525, %524 : vector<8x32xf32>
    %527 = arith.divf %525, %526 : vector<8x32xf32>
    %528 = arith.index_cast %462 : i32 to index
    %c0_204 = arith.constant 0 : index
    %c0_205 = arith.constant 0 : index
    %529 = vector.load %arg17[%528, %c0_204, %c0_205] : memref<8x8x32xf32, #tpu.memory_space<vmem>>, vector<1x8x32xf32>
    %530 = vector.shape_cast %529 : vector<1x8x32xf32> to vector<8x32xf32>
    %531 = vector.extract_strided_slice %31 {offsets = [1, 0, 0], sizes = [1, 32, 32], strides = [1, 1, 1]} : vector<4x32x32xf32> to vector<1x32x32xf32>
    %532 = vector.shape_cast %531 : vector<1x32x32xf32> to vector<32x32xf32>
    %cst_206 = arith.constant dense<0.000000e+00> : vector<8x32xf32>
    %533 = tpu.matmul %457, %532, %cst_206 {dimension_numbers = #tpu.dot_dimension_numbers<[1], [0], [0], [1], [0, 0, 1, 1], [], []>} : vector<8x32xf32>, vector<32x32xf32>, vector<8x32xf32> -> vector<8x32xf32>
    %534 = arith.addf %530, %533 : vector<8x32xf32>
    %535 = arith.negf %534 : vector<8x32xf32>
    %536 = math.exp %535 : vector<8x32xf32>
    %cst_207 = arith.constant 1.000000e+00 : f32
    %537 = vector.broadcast %cst_207 : f32 to vector<8x32xf32>
    %538 = arith.addf %537, %536 : vector<8x32xf32>
    %539 = arith.divf %537, %538 : vector<8x32xf32>
    %540 = arith.index_cast %462 : i32 to index
    %c0_208 = arith.constant 0 : index
    %c0_209 = arith.constant 0 : index
    %541 = vector.load %arg18[%540, %c0_208, %c0_209] : memref<8x8x32xf32, #tpu.memory_space<vmem>>, vector<1x8x32xf32>
    %542 = vector.shape_cast %541 : vector<1x8x32xf32> to vector<8x32xf32>
    %543 = vector.extract_strided_slice %31 {offsets = [2, 0, 0], sizes = [1, 32, 32], strides = [1, 1, 1]} : vector<4x32x32xf32> to vector<1x32x32xf32>
    %544 = vector.shape_cast %543 : vector<1x32x32xf32> to vector<32x32xf32>
    %cst_210 = arith.constant dense<0.000000e+00> : vector<8x32xf32>
    %545 = tpu.matmul %457, %544, %cst_210 {dimension_numbers = #tpu.dot_dimension_numbers<[1], [0], [0], [1], [0, 0, 1, 1], [], []>} : vector<8x32xf32>, vector<32x32xf32>, vector<8x32xf32> -> vector<8x32xf32>
    %546 = arith.addf %542, %545 : vector<8x32xf32>
    %547 = math.tanh %546 : vector<8x32xf32>
    %548 = arith.index_cast %462 : i32 to index
    %c0_211 = arith.constant 0 : index
    %c0_212 = arith.constant 0 : index
    %549 = vector.load %arg19[%548, %c0_211, %c0_212] : memref<8x8x32xf32, #tpu.memory_space<vmem>>, vector<1x8x32xf32>
    %550 = vector.shape_cast %549 : vector<1x8x32xf32> to vector<8x32xf32>
    %551 = vector.extract_strided_slice %31 {offsets = [3, 0, 0], sizes = [1, 32, 32], strides = [1, 1, 1]} : vector<4x32x32xf32> to vector<1x32x32xf32>
    %552 = vector.shape_cast %551 : vector<1x32x32xf32> to vector<32x32xf32>
    %cst_213 = arith.constant dense<0.000000e+00> : vector<8x32xf32>
    %553 = tpu.matmul %457, %552, %cst_213 {dimension_numbers = #tpu.dot_dimension_numbers<[1], [0], [0], [1], [0, 0, 1, 1], [], []>} : vector<8x32xf32>, vector<32x32xf32>, vector<8x32xf32> -> vector<8x32xf32>
    %554 = arith.addf %550, %553 : vector<8x32xf32>
    %555 = arith.negf %554 : vector<8x32xf32>
    %556 = math.exp %555 : vector<8x32xf32>
    %cst_214 = arith.constant 1.000000e+00 : f32
    %557 = vector.broadcast %cst_214 : f32 to vector<8x32xf32>
    %558 = arith.addf %557, %556 : vector<8x32xf32>
    %559 = arith.divf %557, %558 : vector<8x32xf32>
    %560 = arith.mulf %539, %455 : vector<8x32xf32>
    %561 = arith.mulf %527, %547 : vector<8x32xf32>
    %562 = arith.addf %560, %561 : vector<8x32xf32>
    %563 = math.tanh %562 : vector<8x32xf32>
    %564 = arith.mulf %559, %563 : vector<8x32xf32>
    %565 = arith.index_cast %462 : i32 to index
    %c0_215 = arith.constant 0 : index
    %c0_216 = arith.constant 0 : index
    %566 = vector.load %arg21[%565, %c0_215, %c0_216] : memref<8x8x32xf32, #tpu.memory_space<vmem>>, vector<1x8x32xf32>
    %567 = vector.shape_cast %566 : vector<1x8x32xf32> to vector<8x32xf32>
    %568 = vector.shape_cast %564 : vector<8x32xf32> to vector<1x8x32xf32>
    tpu.vector_store %arg21[%565, %c0_215, %c0_216], %568 {strides = array<i32>} : memref<8x8x32xf32, #tpu.memory_space<vmem>>, vector<1x8x32xf32>,
    %c5_i32 = arith.constant 5 : i32
    %c7_i32_217 = arith.constant 7 : i32
    %569 = arith.subi %c7_i32_217, %c5_i32 : i32
    %570 = arith.index_cast %c5_i32 : i32 to index
    %c0_218 = arith.constant 0 : index
    %c0_219 = arith.constant 0 : index
    %571 = vector.load %arg12[%570, %c0_218, %c0_219] : memref<8x8x32xf32, #tpu.memory_space<vmem>>, vector<1x8x32xf32>
    %572 = vector.shape_cast %571 : vector<1x8x32xf32> to vector<8x32xf32>
    %573 = vector.extract_strided_slice %30 {offsets = [0, 0, 0], sizes = [1, 32, 32], strides = [1, 1, 1]} : vector<4x32x32xf32> to vector<1x32x32xf32>
    %574 = vector.shape_cast %573 : vector<1x32x32xf32> to vector<32x32xf32>
    %cst_220 = arith.constant dense<0.000000e+00> : vector<8x32xf32>
    %575 = tpu.matmul %511, %574, %cst_220 {dimension_numbers = #tpu.dot_dimension_numbers<[1], [0], [0], [1], [0, 0, 1, 1], [], []>} : vector<8x32xf32>, vector<32x32xf32>, vector<8x32xf32> -> vector<8x32xf32>
    %576 = arith.addf %572, %575 : vector<8x32xf32>
    %577 = arith.negf %576 : vector<8x32xf32>
    %578 = math.exp %577 : vector<8x32xf32>
    %cst_221 = arith.constant 1.000000e+00 : f32
    %579 = vector.broadcast %cst_221 : f32 to vector<8x32xf32>
    %580 = arith.addf %579, %578 : vector<8x32xf32>
    %581 = arith.divf %579, %580 : vector<8x32xf32>
    %582 = arith.index_cast %c5_i32 : i32 to index
    %c0_222 = arith.constant 0 : index
    %c0_223 = arith.constant 0 : index
    %583 = vector.load %arg13[%582, %c0_222, %c0_223] : memref<8x8x32xf32, #tpu.memory_space<vmem>>, vector<1x8x32xf32>
    %584 = vector.shape_cast %583 : vector<1x8x32xf32> to vector<8x32xf32>
    %585 = vector.extract_strided_slice %30 {offsets = [1, 0, 0], sizes = [1, 32, 32], strides = [1, 1, 1]} : vector<4x32x32xf32> to vector<1x32x32xf32>
    %586 = vector.shape_cast %585 : vector<1x32x32xf32> to vector<32x32xf32>
    %cst_224 = arith.constant dense<0.000000e+00> : vector<8x32xf32>
    %587 = tpu.matmul %511, %586, %cst_224 {dimension_numbers = #tpu.dot_dimension_numbers<[1], [0], [0], [1], [0, 0, 1, 1], [], []>} : vector<8x32xf32>, vector<32x32xf32>, vector<8x32xf32> -> vector<8x32xf32>
    %588 = arith.addf %584, %587 : vector<8x32xf32>
    %589 = arith.negf %588 : vector<8x32xf32>
    %590 = math.exp %589 : vector<8x32xf32>
    %cst_225 = arith.constant 1.000000e+00 : f32
    %591 = vector.broadcast %cst_225 : f32 to vector<8x32xf32>
    %592 = arith.addf %591, %590 : vector<8x32xf32>
    %593 = arith.divf %591, %592 : vector<8x32xf32>
    %594 = arith.index_cast %c5_i32 : i32 to index
    %c0_226 = arith.constant 0 : index
    %c0_227 = arith.constant 0 : index
    %595 = vector.load %arg14[%594, %c0_226, %c0_227] : memref<8x8x32xf32, #tpu.memory_space<vmem>>, vector<1x8x32xf32>
    %596 = vector.shape_cast %595 : vector<1x8x32xf32> to vector<8x32xf32>
    %597 = vector.extract_strided_slice %30 {offsets = [2, 0, 0], sizes = [1, 32, 32], strides = [1, 1, 1]} : vector<4x32x32xf32> to vector<1x32x32xf32>
    %598 = vector.shape_cast %597 : vector<1x32x32xf32> to vector<32x32xf32>
    %cst_228 = arith.constant dense<0.000000e+00> : vector<8x32xf32>
    %599 = tpu.matmul %511, %598, %cst_228 {dimension_numbers = #tpu.dot_dimension_numbers<[1], [0], [0], [1], [0, 0, 1, 1], [], []>} : vector<8x32xf32>, vector<32x32xf32>, vector<8x32xf32> -> vector<8x32xf32>
    %600 = arith.addf %596, %599 : vector<8x32xf32>
    %601 = math.tanh %600 : vector<8x32xf32>
    %602 = arith.index_cast %c5_i32 : i32 to index
    %c0_229 = arith.constant 0 : index
    %c0_230 = arith.constant 0 : index
    %603 = vector.load %arg15[%602, %c0_229, %c0_230] : memref<8x8x32xf32, #tpu.memory_space<vmem>>, vector<1x8x32xf32>
    %604 = vector.shape_cast %603 : vector<1x8x32xf32> to vector<8x32xf32>
    %605 = vector.extract_strided_slice %30 {offsets = [3, 0, 0], sizes = [1, 32, 32], strides = [1, 1, 1]} : vector<4x32x32xf32> to vector<1x32x32xf32>
    %606 = vector.shape_cast %605 : vector<1x32x32xf32> to vector<32x32xf32>
    %cst_231 = arith.constant dense<0.000000e+00> : vector<8x32xf32>
    %607 = tpu.matmul %511, %606, %cst_231 {dimension_numbers = #tpu.dot_dimension_numbers<[1], [0], [0], [1], [0, 0, 1, 1], [], []>} : vector<8x32xf32>, vector<32x32xf32>, vector<8x32xf32> -> vector<8x32xf32>
    %608 = arith.addf %604, %607 : vector<8x32xf32>
    %609 = arith.negf %608 : vector<8x32xf32>
    %610 = math.exp %609 : vector<8x32xf32>
    %cst_232 = arith.constant 1.000000e+00 : f32
    %611 = vector.broadcast %cst_232 : f32 to vector<8x32xf32>
    %612 = arith.addf %611, %610 : vector<8x32xf32>
    %613 = arith.divf %611, %612 : vector<8x32xf32>
    %614 = arith.mulf %593, %509 : vector<8x32xf32>
    %615 = arith.mulf %581, %601 : vector<8x32xf32>
    %616 = arith.addf %614, %615 : vector<8x32xf32>
    %617 = math.tanh %616 : vector<8x32xf32>
    %618 = arith.mulf %613, %617 : vector<8x32xf32>
    %619 = arith.index_cast %c5_i32 : i32 to index
    %c0_233 = arith.constant 0 : index
    %c0_234 = arith.constant 0 : index
    %620 = vector.load %arg20[%619, %c0_233, %c0_234] : memref<8x8x32xf32, #tpu.memory_space<vmem>>, vector<1x8x32xf32>
    %621 = vector.shape_cast %620 : vector<1x8x32xf32> to vector<8x32xf32>
    %622 = vector.shape_cast %618 : vector<8x32xf32> to vector<1x8x32xf32>
    tpu.vector_store %arg20[%619, %c0_233, %c0_234], %622 {strides = array<i32>} : memref<8x8x32xf32, #tpu.memory_space<vmem>>, vector<1x8x32xf32>,
    %623 = arith.index_cast %569 : i32 to index
    %c0_235 = arith.constant 0 : index
    %c0_236 = arith.constant 0 : index
    %624 = vector.load %arg16[%623, %c0_235, %c0_236] : memref<8x8x32xf32, #tpu.memory_space<vmem>>, vector<1x8x32xf32>
    %625 = vector.shape_cast %624 : vector<1x8x32xf32> to vector<8x32xf32>
    %626 = vector.extract_strided_slice %31 {offsets = [0, 0, 0], sizes = [1, 32, 32], strides = [1, 1, 1]} : vector<4x32x32xf32> to vector<1x32x32xf32>
    %627 = vector.shape_cast %626 : vector<1x32x32xf32> to vector<32x32xf32>
    %cst_237 = arith.constant dense<0.000000e+00> : vector<8x32xf32>
    %628 = tpu.matmul %564, %627, %cst_237 {dimension_numbers = #tpu.dot_dimension_numbers<[1], [0], [0], [1], [0, 0, 1, 1], [], []>} : vector<8x32xf32>, vector<32x32xf32>, vector<8x32xf32> -> vector<8x32xf32>
    %629 = arith.addf %625, %628 : vector<8x32xf32>
    %630 = arith.negf %629 : vector<8x32xf32>
    %631 = math.exp %630 : vector<8x32xf32>
    %cst_238 = arith.constant 1.000000e+00 : f32
    %632 = vector.broadcast %cst_238 : f32 to vector<8x32xf32>
    %633 = arith.addf %632, %631 : vector<8x32xf32>
    %634 = arith.divf %632, %633 : vector<8x32xf32>
    %635 = arith.index_cast %569 : i32 to index
    %c0_239 = arith.constant 0 : index
    %c0_240 = arith.constant 0 : index
    %636 = vector.load %arg17[%635, %c0_239, %c0_240] : memref<8x8x32xf32, #tpu.memory_space<vmem>>, vector<1x8x32xf32>
    %637 = vector.shape_cast %636 : vector<1x8x32xf32> to vector<8x32xf32>
    %638 = vector.extract_strided_slice %31 {offsets = [1, 0, 0], sizes = [1, 32, 32], strides = [1, 1, 1]} : vector<4x32x32xf32> to vector<1x32x32xf32>
    %639 = vector.shape_cast %638 : vector<1x32x32xf32> to vector<32x32xf32>
    %cst_241 = arith.constant dense<0.000000e+00> : vector<8x32xf32>
    %640 = tpu.matmul %564, %639, %cst_241 {dimension_numbers = #tpu.dot_dimension_numbers<[1], [0], [0], [1], [0, 0, 1, 1], [], []>} : vector<8x32xf32>, vector<32x32xf32>, vector<8x32xf32> -> vector<8x32xf32>
    %641 = arith.addf %637, %640 : vector<8x32xf32>
    %642 = arith.negf %641 : vector<8x32xf32>
    %643 = math.exp %642 : vector<8x32xf32>
    %cst_242 = arith.constant 1.000000e+00 : f32
    %644 = vector.broadcast %cst_242 : f32 to vector<8x32xf32>
    %645 = arith.addf %644, %643 : vector<8x32xf32>
    %646 = arith.divf %644, %645 : vector<8x32xf32>
    %647 = arith.index_cast %569 : i32 to index
    %c0_243 = arith.constant 0 : index
    %c0_244 = arith.constant 0 : index
    %648 = vector.load %arg18[%647, %c0_243, %c0_244] : memref<8x8x32xf32, #tpu.memory_space<vmem>>, vector<1x8x32xf32>
    %649 = vector.shape_cast %648 : vector<1x8x32xf32> to vector<8x32xf32>
    %650 = vector.extract_strided_slice %31 {offsets = [2, 0, 0], sizes = [1, 32, 32], strides = [1, 1, 1]} : vector<4x32x32xf32> to vector<1x32x32xf32>
    %651 = vector.shape_cast %650 : vector<1x32x32xf32> to vector<32x32xf32>
    %cst_245 = arith.constant dense<0.000000e+00> : vector<8x32xf32>
    %652 = tpu.matmul %564, %651, %cst_245 {dimension_numbers = #tpu.dot_dimension_numbers<[1], [0], [0], [1], [0, 0, 1, 1], [], []>} : vector<8x32xf32>, vector<32x32xf32>, vector<8x32xf32> -> vector<8x32xf32>
    %653 = arith.addf %649, %652 : vector<8x32xf32>
    %654 = math.tanh %653 : vector<8x32xf32>
    %655 = arith.index_cast %569 : i32 to index
    %c0_246 = arith.constant 0 : index
    %c0_247 = arith.constant 0 : index
    %656 = vector.load %arg19[%655, %c0_246, %c0_247] : memref<8x8x32xf32, #tpu.memory_space<vmem>>, vector<1x8x32xf32>
    %657 = vector.shape_cast %656 : vector<1x8x32xf32> to vector<8x32xf32>
    %658 = vector.extract_strided_slice %31 {offsets = [3, 0, 0], sizes = [1, 32, 32], strides = [1, 1, 1]} : vector<4x32x32xf32> to vector<1x32x32xf32>
    %659 = vector.shape_cast %658 : vector<1x32x32xf32> to vector<32x32xf32>
    %cst_248 = arith.constant dense<0.000000e+00> : vector<8x32xf32>
    %660 = tpu.matmul %564, %659, %cst_248 {dimension_numbers = #tpu.dot_dimension_numbers<[1], [0], [0], [1], [0, 0, 1, 1], [], []>} : vector<8x32xf32>, vector<32x32xf32>, vector<8x32xf32> -> vector<8x32xf32>
    %661 = arith.addf %657, %660 : vector<8x32xf32>
    %662 = arith.negf %661 : vector<8x32xf32>
    %663 = math.exp %662 : vector<8x32xf32>
    %cst_249 = arith.constant 1.000000e+00 : f32
    %664 = vector.broadcast %cst_249 : f32 to vector<8x32xf32>
    %665 = arith.addf %664, %663 : vector<8x32xf32>
    %666 = arith.divf %664, %665 : vector<8x32xf32>
    %667 = arith.mulf %646, %562 : vector<8x32xf32>
    %668 = arith.mulf %634, %654 : vector<8x32xf32>
    %669 = arith.addf %667, %668 : vector<8x32xf32>
    %670 = math.tanh %669 : vector<8x32xf32>
    %671 = arith.mulf %666, %670 : vector<8x32xf32>
    %672 = arith.index_cast %569 : i32 to index
    %c0_250 = arith.constant 0 : index
    %c0_251 = arith.constant 0 : index
    %673 = vector.load %arg21[%672, %c0_250, %c0_251] : memref<8x8x32xf32, #tpu.memory_space<vmem>>, vector<1x8x32xf32>
    %674 = vector.shape_cast %673 : vector<1x8x32xf32> to vector<8x32xf32>
    %675 = vector.shape_cast %671 : vector<8x32xf32> to vector<1x8x32xf32>
    tpu.vector_store %arg21[%672, %c0_250, %c0_251], %675 {strides = array<i32>} : memref<8x8x32xf32, #tpu.memory_space<vmem>>, vector<1x8x32xf32>,
    %c6_i32 = arith.constant 6 : i32
    %c7_i32_252 = arith.constant 7 : i32
    %676 = arith.subi %c7_i32_252, %c6_i32 : i32
    %677 = arith.index_cast %c6_i32 : i32 to index
    %c0_253 = arith.constant 0 : index
    %c0_254 = arith.constant 0 : index
    %678 = vector.load %arg12[%677, %c0_253, %c0_254] : memref<8x8x32xf32, #tpu.memory_space<vmem>>, vector<1x8x32xf32>
    %679 = vector.shape_cast %678 : vector<1x8x32xf32> to vector<8x32xf32>
    %680 = vector.extract_strided_slice %30 {offsets = [0, 0, 0], sizes = [1, 32, 32], strides = [1, 1, 1]} : vector<4x32x32xf32> to vector<1x32x32xf32>
    %681 = vector.shape_cast %680 : vector<1x32x32xf32> to vector<32x32xf32>
    %cst_255 = arith.constant dense<0.000000e+00> : vector<8x32xf32>
    %682 = tpu.matmul %618, %681, %cst_255 {dimension_numbers = #tpu.dot_dimension_numbers<[1], [0], [0], [1], [0, 0, 1, 1], [], []>} : vector<8x32xf32>, vector<32x32xf32>, vector<8x32xf32> -> vector<8x32xf32>
    %683 = arith.addf %679, %682 : vector<8x32xf32>
    %684 = arith.negf %683 : vector<8x32xf32>
    %685 = math.exp %684 : vector<8x32xf32>
    %cst_256 = arith.constant 1.000000e+00 : f32
    %686 = vector.broadcast %cst_256 : f32 to vector<8x32xf32>
    %687 = arith.addf %686, %685 : vector<8x32xf32>
    %688 = arith.divf %686, %687 : vector<8x32xf32>
    %689 = arith.index_cast %c6_i32 : i32 to index
    %c0_257 = arith.constant 0 : index
    %c0_258 = arith.constant 0 : index
    %690 = vector.load %arg13[%689, %c0_257, %c0_258] : memref<8x8x32xf32, #tpu.memory_space<vmem>>, vector<1x8x32xf32>
    %691 = vector.shape_cast %690 : vector<1x8x32xf32> to vector<8x32xf32>
    %692 = vector.extract_strided_slice %30 {offsets = [1, 0, 0], sizes = [1, 32, 32], strides = [1, 1, 1]} : vector<4x32x32xf32> to vector<1x32x32xf32>
    %693 = vector.shape_cast %692 : vector<1x32x32xf32> to vector<32x32xf32>
    %cst_259 = arith.constant dense<0.000000e+00> : vector<8x32xf32>
    %694 = tpu.matmul %618, %693, %cst_259 {dimension_numbers = #tpu.dot_dimension_numbers<[1], [0], [0], [1], [0, 0, 1, 1], [], []>} : vector<8x32xf32>, vector<32x32xf32>, vector<8x32xf32> -> vector<8x32xf32>
    %695 = arith.addf %691, %694 : vector<8x32xf32>
    %696 = arith.negf %695 : vector<8x32xf32>
    %697 = math.exp %696 : vector<8x32xf32>
    %cst_260 = arith.constant 1.000000e+00 : f32
    %698 = vector.broadcast %cst_260 : f32 to vector<8x32xf32>
    %699 = arith.addf %698, %697 : vector<8x32xf32>
    %700 = arith.divf %698, %699 : vector<8x32xf32>
    %701 = arith.index_cast %c6_i32 : i32 to index
    %c0_261 = arith.constant 0 : index
    %c0_262 = arith.constant 0 : index
    %702 = vector.load %arg14[%701, %c0_261, %c0_262] : memref<8x8x32xf32, #tpu.memory_space<vmem>>, vector<1x8x32xf32>
    %703 = vector.shape_cast %702 : vector<1x8x32xf32> to vector<8x32xf32>
    %704 = vector.extract_strided_slice %30 {offsets = [2, 0, 0], sizes = [1, 32, 32], strides = [1, 1, 1]} : vector<4x32x32xf32> to vector<1x32x32xf32>
    %705 = vector.shape_cast %704 : vector<1x32x32xf32> to vector<32x32xf32>
    %cst_263 = arith.constant dense<0.000000e+00> : vector<8x32xf32>
    %706 = tpu.matmul %618, %705, %cst_263 {dimension_numbers = #tpu.dot_dimension_numbers<[1], [0], [0], [1], [0, 0, 1, 1], [], []>} : vector<8x32xf32>, vector<32x32xf32>, vector<8x32xf32> -> vector<8x32xf32>
    %707 = arith.addf %703, %706 : vector<8x32xf32>
    %708 = math.tanh %707 : vector<8x32xf32>
    %709 = arith.index_cast %c6_i32 : i32 to index
    %c0_264 = arith.constant 0 : index
    %c0_265 = arith.constant 0 : index
    %710 = vector.load %arg15[%709, %c0_264, %c0_265] : memref<8x8x32xf32, #tpu.memory_space<vmem>>, vector<1x8x32xf32>
    %711 = vector.shape_cast %710 : vector<1x8x32xf32> to vector<8x32xf32>
    %712 = vector.extract_strided_slice %30 {offsets = [3, 0, 0], sizes = [1, 32, 32], strides = [1, 1, 1]} : vector<4x32x32xf32> to vector<1x32x32xf32>
    %713 = vector.shape_cast %712 : vector<1x32x32xf32> to vector<32x32xf32>
    %cst_266 = arith.constant dense<0.000000e+00> : vector<8x32xf32>
    %714 = tpu.matmul %618, %713, %cst_266 {dimension_numbers = #tpu.dot_dimension_numbers<[1], [0], [0], [1], [0, 0, 1, 1], [], []>} : vector<8x32xf32>, vector<32x32xf32>, vector<8x32xf32> -> vector<8x32xf32>
    %715 = arith.addf %711, %714 : vector<8x32xf32>
    %716 = arith.negf %715 : vector<8x32xf32>
    %717 = math.exp %716 : vector<8x32xf32>
    %cst_267 = arith.constant 1.000000e+00 : f32
    %718 = vector.broadcast %cst_267 : f32 to vector<8x32xf32>
    %719 = arith.addf %718, %717 : vector<8x32xf32>
    %720 = arith.divf %718, %719 : vector<8x32xf32>
    %721 = arith.mulf %700, %616 : vector<8x32xf32>
    %722 = arith.mulf %688, %708 : vector<8x32xf32>
    %723 = arith.addf %721, %722 : vector<8x32xf32>
    %724 = math.tanh %723 : vector<8x32xf32>
    %725 = arith.mulf %720, %724 : vector<8x32xf32>
    %726 = arith.index_cast %c6_i32 : i32 to index
    %c0_268 = arith.constant 0 : index
    %c0_269 = arith.constant 0 : index
    %727 = vector.load %arg20[%726, %c0_268, %c0_269] : memref<8x8x32xf32, #tpu.memory_space<vmem>>, vector<1x8x32xf32>
    %728 = vector.shape_cast %727 : vector<1x8x32xf32> to vector<8x32xf32>
    %729 = vector.shape_cast %725 : vector<8x32xf32> to vector<1x8x32xf32>
    tpu.vector_store %arg20[%726, %c0_268, %c0_269], %729 {strides = array<i32>} : memref<8x8x32xf32, #tpu.memory_space<vmem>>, vector<1x8x32xf32>,
    %730 = arith.index_cast %676 : i32 to index
    %c0_270 = arith.constant 0 : index
    %c0_271 = arith.constant 0 : index
    %731 = vector.load %arg16[%730, %c0_270, %c0_271] : memref<8x8x32xf32, #tpu.memory_space<vmem>>, vector<1x8x32xf32>
    %732 = vector.shape_cast %731 : vector<1x8x32xf32> to vector<8x32xf32>
    %733 = vector.extract_strided_slice %31 {offsets = [0, 0, 0], sizes = [1, 32, 32], strides = [1, 1, 1]} : vector<4x32x32xf32> to vector<1x32x32xf32>
    %734 = vector.shape_cast %733 : vector<1x32x32xf32> to vector<32x32xf32>
    %cst_272 = arith.constant dense<0.000000e+00> : vector<8x32xf32>
    %735 = tpu.matmul %671, %734, %cst_272 {dimension_numbers = #tpu.dot_dimension_numbers<[1], [0], [0], [1], [0, 0, 1, 1], [], []>} : vector<8x32xf32>, vector<32x32xf32>, vector<8x32xf32> -> vector<8x32xf32>
    %736 = arith.addf %732, %735 : vector<8x32xf32>
    %737 = arith.negf %736 : vector<8x32xf32>
    %738 = math.exp %737 : vector<8x32xf32>
    %cst_273 = arith.constant 1.000000e+00 : f32
    %739 = vector.broadcast %cst_273 : f32 to vector<8x32xf32>
    %740 = arith.addf %739, %738 : vector<8x32xf32>
    %741 = arith.divf %739, %740 : vector<8x32xf32>
    %742 = arith.index_cast %676 : i32 to index
    %c0_274 = arith.constant 0 : index
    %c0_275 = arith.constant 0 : index
    %743 = vector.load %arg17[%742, %c0_274, %c0_275] : memref<8x8x32xf32, #tpu.memory_space<vmem>>, vector<1x8x32xf32>
    %744 = vector.shape_cast %743 : vector<1x8x32xf32> to vector<8x32xf32>
    %745 = vector.extract_strided_slice %31 {offsets = [1, 0, 0], sizes = [1, 32, 32], strides = [1, 1, 1]} : vector<4x32x32xf32> to vector<1x32x32xf32>
    %746 = vector.shape_cast %745 : vector<1x32x32xf32> to vector<32x32xf32>
    %cst_276 = arith.constant dense<0.000000e+00> : vector<8x32xf32>
    %747 = tpu.matmul %671, %746, %cst_276 {dimension_numbers = #tpu.dot_dimension_numbers<[1], [0], [0], [1], [0, 0, 1, 1], [], []>} : vector<8x32xf32>, vector<32x32xf32>, vector<8x32xf32> -> vector<8x32xf32>
    %748 = arith.addf %744, %747 : vector<8x32xf32>
    %749 = arith.negf %748 : vector<8x32xf32>
    %750 = math.exp %749 : vector<8x32xf32>
    %cst_277 = arith.constant 1.000000e+00 : f32
    %751 = vector.broadcast %cst_277 : f32 to vector<8x32xf32>
    %752 = arith.addf %751, %750 : vector<8x32xf32>
    %753 = arith.divf %751, %752 : vector<8x32xf32>
    %754 = arith.index_cast %676 : i32 to index
    %c0_278 = arith.constant 0 : index
    %c0_279 = arith.constant 0 : index
    %755 = vector.load %arg18[%754, %c0_278, %c0_279] : memref<8x8x32xf32, #tpu.memory_space<vmem>>, vector<1x8x32xf32>
    %756 = vector.shape_cast %755 : vector<1x8x32xf32> to vector<8x32xf32>
    %757 = vector.extract_strided_slice %31 {offsets = [2, 0, 0], sizes = [1, 32, 32], strides = [1, 1, 1]} : vector<4x32x32xf32> to vector<1x32x32xf32>
    %758 = vector.shape_cast %757 : vector<1x32x32xf32> to vector<32x32xf32>
    %cst_280 = arith.constant dense<0.000000e+00> : vector<8x32xf32>
    %759 = tpu.matmul %671, %758, %cst_280 {dimension_numbers = #tpu.dot_dimension_numbers<[1], [0], [0], [1], [0, 0, 1, 1], [], []>} : vector<8x32xf32>, vector<32x32xf32>, vector<8x32xf32> -> vector<8x32xf32>
    %760 = arith.addf %756, %759 : vector<8x32xf32>
    %761 = math.tanh %760 : vector<8x32xf32>
    %762 = arith.index_cast %676 : i32 to index
    %c0_281 = arith.constant 0 : index
    %c0_282 = arith.constant 0 : index
    %763 = vector.load %arg19[%762, %c0_281, %c0_282] : memref<8x8x32xf32, #tpu.memory_space<vmem>>, vector<1x8x32xf32>
    %764 = vector.shape_cast %763 : vector<1x8x32xf32> to vector<8x32xf32>
    %765 = vector.extract_strided_slice %31 {offsets = [3, 0, 0], sizes = [1, 32, 32], strides = [1, 1, 1]} : vector<4x32x32xf32> to vector<1x32x32xf32>
    %766 = vector.shape_cast %765 : vector<1x32x32xf32> to vector<32x32xf32>
    %cst_283 = arith.constant dense<0.000000e+00> : vector<8x32xf32>
    %767 = tpu.matmul %671, %766, %cst_283 {dimension_numbers = #tpu.dot_dimension_numbers<[1], [0], [0], [1], [0, 0, 1, 1], [], []>} : vector<8x32xf32>, vector<32x32xf32>, vector<8x32xf32> -> vector<8x32xf32>
    %768 = arith.addf %764, %767 : vector<8x32xf32>
    %769 = arith.negf %768 : vector<8x32xf32>
    %770 = math.exp %769 : vector<8x32xf32>
    %cst_284 = arith.constant 1.000000e+00 : f32
    %771 = vector.broadcast %cst_284 : f32 to vector<8x32xf32>
    %772 = arith.addf %771, %770 : vector<8x32xf32>
    %773 = arith.divf %771, %772 : vector<8x32xf32>
    %774 = arith.mulf %753, %669 : vector<8x32xf32>
    %775 = arith.mulf %741, %761 : vector<8x32xf32>
    %776 = arith.addf %774, %775 : vector<8x32xf32>
    %777 = math.tanh %776 : vector<8x32xf32>
    %778 = arith.mulf %773, %777 : vector<8x32xf32>
    %779 = arith.index_cast %676 : i32 to index
    %c0_285 = arith.constant 0 : index
    %c0_286 = arith.constant 0 : index
    %780 = vector.load %arg21[%779, %c0_285, %c0_286] : memref<8x8x32xf32, #tpu.memory_space<vmem>>, vector<1x8x32xf32>
    %781 = vector.shape_cast %780 : vector<1x8x32xf32> to vector<8x32xf32>
    %782 = vector.shape_cast %778 : vector<8x32xf32> to vector<1x8x32xf32>
    tpu.vector_store %arg21[%779, %c0_285, %c0_286], %782 {strides = array<i32>} : memref<8x8x32xf32, #tpu.memory_space<vmem>>, vector<1x8x32xf32>,
    %c7_i32_287 = arith.constant 7 : i32
    %c7_i32_288 = arith.constant 7 : i32
    %783 = arith.subi %c7_i32_288, %c7_i32_287 : i32
    %784 = arith.index_cast %c7_i32_287 : i32 to index
    %c0_289 = arith.constant 0 : index
    %c0_290 = arith.constant 0 : index
    %785 = vector.load %arg12[%784, %c0_289, %c0_290] : memref<8x8x32xf32, #tpu.memory_space<vmem>>, vector<1x8x32xf32>
    %786 = vector.shape_cast %785 : vector<1x8x32xf32> to vector<8x32xf32>
    %787 = vector.extract_strided_slice %30 {offsets = [0, 0, 0], sizes = [1, 32, 32], strides = [1, 1, 1]} : vector<4x32x32xf32> to vector<1x32x32xf32>
    %788 = vector.shape_cast %787 : vector<1x32x32xf32> to vector<32x32xf32>
    %cst_291 = arith.constant dense<0.000000e+00> : vector<8x32xf32>
    %789 = tpu.matmul %725, %788, %cst_291 {dimension_numbers = #tpu.dot_dimension_numbers<[1], [0], [0], [1], [0, 0, 1, 1], [], []>} : vector<8x32xf32>, vector<32x32xf32>, vector<8x32xf32> -> vector<8x32xf32>
    %790 = arith.addf %786, %789 : vector<8x32xf32>
    %791 = arith.negf %790 : vector<8x32xf32>
    %792 = math.exp %791 : vector<8x32xf32>
    %cst_292 = arith.constant 1.000000e+00 : f32
    %793 = vector.broadcast %cst_292 : f32 to vector<8x32xf32>
    %794 = arith.addf %793, %792 : vector<8x32xf32>
    %795 = arith.divf %793, %794 : vector<8x32xf32>
    %796 = arith.index_cast %c7_i32_287 : i32 to index
    %c0_293 = arith.constant 0 : index
    %c0_294 = arith.constant 0 : index
    %797 = vector.load %arg13[%796, %c0_293, %c0_294] : memref<8x8x32xf32, #tpu.memory_space<vmem>>, vector<1x8x32xf32>
    %798 = vector.shape_cast %797 : vector<1x8x32xf32> to vector<8x32xf32>
    %799 = vector.extract_strided_slice %30 {offsets = [1, 0, 0], sizes = [1, 32, 32], strides = [1, 1, 1]} : vector<4x32x32xf32> to vector<1x32x32xf32>
    %800 = vector.shape_cast %799 : vector<1x32x32xf32> to vector<32x32xf32>
    %cst_295 = arith.constant dense<0.000000e+00> : vector<8x32xf32>
    %801 = tpu.matmul %725, %800, %cst_295 {dimension_numbers = #tpu.dot_dimension_numbers<[1], [0], [0], [1], [0, 0, 1, 1], [], []>} : vector<8x32xf32>, vector<32x32xf32>, vector<8x32xf32> -> vector<8x32xf32>
    %802 = arith.addf %798, %801 : vector<8x32xf32>
    %803 = arith.negf %802 : vector<8x32xf32>
    %804 = math.exp %803 : vector<8x32xf32>
    %cst_296 = arith.constant 1.000000e+00 : f32
    %805 = vector.broadcast %cst_296 : f32 to vector<8x32xf32>
    %806 = arith.addf %805, %804 : vector<8x32xf32>
    %807 = arith.divf %805, %806 : vector<8x32xf32>
    %808 = arith.index_cast %c7_i32_287 : i32 to index
    %c0_297 = arith.constant 0 : index
    %c0_298 = arith.constant 0 : index
    %809 = vector.load %arg14[%808, %c0_297, %c0_298] : memref<8x8x32xf32, #tpu.memory_space<vmem>>, vector<1x8x32xf32>
    %810 = vector.shape_cast %809 : vector<1x8x32xf32> to vector<8x32xf32>
    %811 = vector.extract_strided_slice %30 {offsets = [2, 0, 0], sizes = [1, 32, 32], strides = [1, 1, 1]} : vector<4x32x32xf32> to vector<1x32x32xf32>
    %812 = vector.shape_cast %811 : vector<1x32x32xf32> to vector<32x32xf32>
    %cst_299 = arith.constant dense<0.000000e+00> : vector<8x32xf32>
    %813 = tpu.matmul %725, %812, %cst_299 {dimension_numbers = #tpu.dot_dimension_numbers<[1], [0], [0], [1], [0, 0, 1, 1], [], []>} : vector<8x32xf32>, vector<32x32xf32>, vector<8x32xf32> -> vector<8x32xf32>
    %814 = arith.addf %810, %813 : vector<8x32xf32>
    %815 = math.tanh %814 : vector<8x32xf32>
    %816 = arith.index_cast %c7_i32_287 : i32 to index
    %c0_300 = arith.constant 0 : index
    %c0_301 = arith.constant 0 : index
    %817 = vector.load %arg15[%816, %c0_300, %c0_301] : memref<8x8x32xf32, #tpu.memory_space<vmem>>, vector<1x8x32xf32>
    %818 = vector.shape_cast %817 : vector<1x8x32xf32> to vector<8x32xf32>
    %819 = vector.extract_strided_slice %30 {offsets = [3, 0, 0], sizes = [1, 32, 32], strides = [1, 1, 1]} : vector<4x32x32xf32> to vector<1x32x32xf32>
    %820 = vector.shape_cast %819 : vector<1x32x32xf32> to vector<32x32xf32>
    %cst_302 = arith.constant dense<0.000000e+00> : vector<8x32xf32>
    %821 = tpu.matmul %725, %820, %cst_302 {dimension_numbers = #tpu.dot_dimension_numbers<[1], [0], [0], [1], [0, 0, 1, 1], [], []>} : vector<8x32xf32>, vector<32x32xf32>, vector<8x32xf32> -> vector<8x32xf32>
    %822 = arith.addf %818, %821 : vector<8x32xf32>
    %823 = arith.negf %822 : vector<8x32xf32>
    %824 = math.exp %823 : vector<8x32xf32>
    %cst_303 = arith.constant 1.000000e+00 : f32
    %825 = vector.broadcast %cst_303 : f32 to vector<8x32xf32>
    %826 = arith.addf %825, %824 : vector<8x32xf32>
    %827 = arith.divf %825, %826 : vector<8x32xf32>
    %828 = arith.mulf %807, %723 : vector<8x32xf32>
    %829 = arith.mulf %795, %815 : vector<8x32xf32>
    %830 = arith.addf %828, %829 : vector<8x32xf32>
    %831 = math.tanh %830 : vector<8x32xf32>
    %832 = arith.mulf %827, %831 : vector<8x32xf32>
    %833 = arith.index_cast %c7_i32_287 : i32 to index
    %c0_304 = arith.constant 0 : index
    %c0_305 = arith.constant 0 : index
    %834 = vector.load %arg20[%833, %c0_304, %c0_305] : memref<8x8x32xf32, #tpu.memory_space<vmem>>, vector<1x8x32xf32>
    %835 = vector.shape_cast %834 : vector<1x8x32xf32> to vector<8x32xf32>
    %836 = vector.shape_cast %832 : vector<8x32xf32> to vector<1x8x32xf32>
    tpu.vector_store %arg20[%833, %c0_304, %c0_305], %836 {strides = array<i32>} : memref<8x8x32xf32, #tpu.memory_space<vmem>>, vector<1x8x32xf32>,
    %837 = arith.index_cast %783 : i32 to index
    %c0_306 = arith.constant 0 : index
    %c0_307 = arith.constant 0 : index
    %838 = vector.load %arg16[%837, %c0_306, %c0_307] : memref<8x8x32xf32, #tpu.memory_space<vmem>>, vector<1x8x32xf32>
    %839 = vector.shape_cast %838 : vector<1x8x32xf32> to vector<8x32xf32>
    %840 = vector.extract_strided_slice %31 {offsets = [0, 0, 0], sizes = [1, 32, 32], strides = [1, 1, 1]} : vector<4x32x32xf32> to vector<1x32x32xf32>
    %841 = vector.shape_cast %840 : vector<1x32x32xf32> to vector<32x32xf32>
    %cst_308 = arith.constant dense<0.000000e+00> : vector<8x32xf32>
    %842 = tpu.matmul %778, %841, %cst_308 {dimension_numbers = #tpu.dot_dimension_numbers<[1], [0], [0], [1], [0, 0, 1, 1], [], []>} : vector<8x32xf32>, vector<32x32xf32>, vector<8x32xf32> -> vector<8x32xf32>
    %843 = arith.addf %839, %842 : vector<8x32xf32>
    %844 = arith.negf %843 : vector<8x32xf32>
    %845 = math.exp %844 : vector<8x32xf32>
    %cst_309 = arith.constant 1.000000e+00 : f32
    %846 = vector.broadcast %cst_309 : f32 to vector<8x32xf32>
    %847 = arith.addf %846, %845 : vector<8x32xf32>
    %848 = arith.divf %846, %847 : vector<8x32xf32>
    %849 = arith.index_cast %783 : i32 to index
    %c0_310 = arith.constant 0 : index
    %c0_311 = arith.constant 0 : index
    %850 = vector.load %arg17[%849, %c0_310, %c0_311] : memref<8x8x32xf32, #tpu.memory_space<vmem>>, vector<1x8x32xf32>
    %851 = vector.shape_cast %850 : vector<1x8x32xf32> to vector<8x32xf32>
    %852 = vector.extract_strided_slice %31 {offsets = [1, 0, 0], sizes = [1, 32, 32], strides = [1, 1, 1]} : vector<4x32x32xf32> to vector<1x32x32xf32>
    %853 = vector.shape_cast %852 : vector<1x32x32xf32> to vector<32x32xf32>
    %cst_312 = arith.constant dense<0.000000e+00> : vector<8x32xf32>
    %854 = tpu.matmul %778, %853, %cst_312 {dimension_numbers = #tpu.dot_dimension_numbers<[1], [0], [0], [1], [0, 0, 1, 1], [], []>} : vector<8x32xf32>, vector<32x32xf32>, vector<8x32xf32> -> vector<8x32xf32>
    %855 = arith.addf %851, %854 : vector<8x32xf32>
    %856 = arith.negf %855 : vector<8x32xf32>
    %857 = math.exp %856 : vector<8x32xf32>
    %cst_313 = arith.constant 1.000000e+00 : f32
    %858 = vector.broadcast %cst_313 : f32 to vector<8x32xf32>
    %859 = arith.addf %858, %857 : vector<8x32xf32>
    %860 = arith.divf %858, %859 : vector<8x32xf32>
    %861 = arith.index_cast %783 : i32 to index
    %c0_314 = arith.constant 0 : index
    %c0_315 = arith.constant 0 : index
    %862 = vector.load %arg18[%861, %c0_314, %c0_315] : memref<8x8x32xf32, #tpu.memory_space<vmem>>, vector<1x8x32xf32>
    %863 = vector.shape_cast %862 : vector<1x8x32xf32> to vector<8x32xf32>
    %864 = vector.extract_strided_slice %31 {offsets = [2, 0, 0], sizes = [1, 32, 32], strides = [1, 1, 1]} : vector<4x32x32xf32> to vector<1x32x32xf32>
    %865 = vector.shape_cast %864 : vector<1x32x32xf32> to vector<32x32xf32>
    %cst_316 = arith.constant dense<0.000000e+00> : vector<8x32xf32>
    %866 = tpu.matmul %778, %865, %cst_316 {dimension_numbers = #tpu.dot_dimension_numbers<[1], [0], [0], [1], [0, 0, 1, 1], [], []>} : vector<8x32xf32>, vector<32x32xf32>, vector<8x32xf32> -> vector<8x32xf32>
    %867 = arith.addf %863, %866 : vector<8x32xf32>
    %868 = math.tanh %867 : vector<8x32xf32>
    %869 = arith.index_cast %783 : i32 to index
    %c0_317 = arith.constant 0 : index
    %c0_318 = arith.constant 0 : index
    %870 = vector.load %arg19[%869, %c0_317, %c0_318] : memref<8x8x32xf32, #tpu.memory_space<vmem>>, vector<1x8x32xf32>
    %871 = vector.shape_cast %870 : vector<1x8x32xf32> to vector<8x32xf32>
    %872 = vector.extract_strided_slice %31 {offsets = [3, 0, 0], sizes = [1, 32, 32], strides = [1, 1, 1]} : vector<4x32x32xf32> to vector<1x32x32xf32>
    %873 = vector.shape_cast %872 : vector<1x32x32xf32> to vector<32x32xf32>
    %cst_319 = arith.constant dense<0.000000e+00> : vector<8x32xf32>
    %874 = tpu.matmul %778, %873, %cst_319 {dimension_numbers = #tpu.dot_dimension_numbers<[1], [0], [0], [1], [0, 0, 1, 1], [], []>} : vector<8x32xf32>, vector<32x32xf32>, vector<8x32xf32> -> vector<8x32xf32>
    %875 = arith.addf %871, %874 : vector<8x32xf32>
    %876 = arith.negf %875 : vector<8x32xf32>
    %877 = math.exp %876 : vector<8x32xf32>
    %cst_320 = arith.constant 1.000000e+00 : f32
    %878 = vector.broadcast %cst_320 : f32 to vector<8x32xf32>
    %879 = arith.addf %878, %877 : vector<8x32xf32>
    %880 = arith.divf %878, %879 : vector<8x32xf32>
    %881 = arith.mulf %860, %776 : vector<8x32xf32>
    %882 = arith.mulf %848, %868 : vector<8x32xf32>
    %883 = arith.addf %881, %882 : vector<8x32xf32>
    %884 = math.tanh %883 : vector<8x32xf32>
    %885 = arith.mulf %880, %884 : vector<8x32xf32>
    %886 = arith.index_cast %783 : i32 to index
    %c0_321 = arith.constant 0 : index
    %c0_322 = arith.constant 0 : index
    %887 = vector.load %arg21[%886, %c0_321, %c0_322] : memref<8x8x32xf32, #tpu.memory_space<vmem>>, vector<1x8x32xf32>
    %888 = vector.shape_cast %887 : vector<1x8x32xf32> to vector<8x32xf32>
    %889 = vector.shape_cast %885 : vector<8x32xf32> to vector<1x8x32xf32>
    tpu.vector_store %arg21[%886, %c0_321, %c0_322], %889 {strides = array<i32>} : memref<8x8x32xf32, #tpu.memory_space<vmem>>, vector<1x8x32xf32>,
    %c8_i32 = arith.constant 8 : i32
    %c0_323 = arith.constant 0 : index
    %c0_324 = arith.constant 0 : index
    %c0_325 = arith.constant 0 : index
    %890 = vector.load %arg20[%c0_323, %c0_324, %c0_325] : memref<8x8x32xf32, #tpu.memory_space<vmem>>, vector<8x8x32xf32>
    %891 = vector.shape_cast %890 : vector<8x8x32xf32> to vector<64x32xf32>
    %c0_326 = arith.constant 0 : index
    %c0_327 = arith.constant 0 : index
    %892 = vector.load %arg8[%c0_326, %c0_327] : memref<32x128xf32, #tpu.memory_space<vmem>>, vector<32x128xf32>
    %cst_328 = arith.constant dense<0.000000e+00> : vector<64x128xf32>
    %893 = tpu.matmul %891, %892, %cst_328 {dimension_numbers = #tpu.dot_dimension_numbers<[1], [0], [0], [1], [0, 0, 1, 1], [], []>} : vector<64x32xf32>, vector<32x128xf32>, vector<64x128xf32> -> vector<64x128xf32>
    %c0_329 = arith.constant 0 : index
    %c0_330 = arith.constant 0 : index
    %c0_331 = arith.constant 0 : index
    %894 = vector.load %arg21[%c0_329, %c0_330, %c0_331] : memref<8x8x32xf32, #tpu.memory_space<vmem>>, vector<8x8x32xf32>
    %895 = vector.shape_cast %894 : vector<8x8x32xf32> to vector<64x32xf32>
    %c0_332 = arith.constant 0 : index
    %c0_333 = arith.constant 0 : index
    %896 = vector.load %arg9[%c0_332, %c0_333] : memref<32x128xf32, #tpu.memory_space<vmem>>, vector<32x128xf32>
    %cst_334 = arith.constant dense<0.000000e+00> : vector<64x128xf32>
    %897 = tpu.matmul %895, %896, %cst_334 {dimension_numbers = #tpu.dot_dimension_numbers<[1], [0], [0], [1], [0, 0, 1, 1], [], []>} : vector<64x32xf32>, vector<32x128xf32>, vector<64x128xf32> -> vector<64x128xf32>
    %898 = arith.addf %893, %897 : vector<64x128xf32>
    %c0_335 = arith.constant 0 : index
    %c0_336 = arith.constant 0 : index
    %899 = vector.load %arg10[%c0_335, %c0_336] : memref<1x128xf32, #tpu.memory_space<vmem>>, vector<1x128xf32>
    %900 = vector.broadcast %899 : vector<1x128xf32> to vector<64x128xf32>
    %901 = arith.addf %898, %900 : vector<64x128xf32>
    %902 = vector.shape_cast %901 : vector<64x128xf32> to vector<8x8x128xf32>
    %c0_337 = arith.constant 0 : index
    %c0_338 = arith.constant 0 : index
    %c0_339 = arith.constant 0 : index
    %903 = vector.load %arg11[%c0_337, %c0_338, %c0_339] : memref<8x8x128xf32, #tpu.memory_space<vmem>>, vector<8x8x128xf32>
    tpu.vector_store %arg11[%c0_337, %c0_338, %c0_339], %902 {strides = array<i32>} : memref<8x8x128xf32, #tpu.memory_space<vmem>>, vector<8x8x128xf32>,
    return
  }
  func.func @transform_0(%arg0: i32) -> (i32, i32, i32) {
    %c0_i32 = arith.constant 0 : i32
    %c0_i32_0 = arith.constant 0 : i32
    %c0_i32_1 = arith.constant 0 : i32
    return %c0_i32, %arg0, %c0_i32_0 : i32, i32, i32
  }
  func.func @transform_1(%arg0: i32) -> (i32, i32) {
    %c0_i32 = arith.constant 0 : i32
    %c0_i32_0 = arith.constant 0 : i32
    %c0_i32_1 = arith.constant 0 : i32
    return %c0_i32, %c0_i32_0 : i32, i32
  }
  func.func @transform_2(%arg0: i32) -> (i32, i32) {
    %c0_i32 = arith.constant 0 : i32
    %c0_i32_0 = arith.constant 0 : i32
    %c0_i32_1 = arith.constant 0 : i32
    return %c0_i32, %c0_i32_0 : i32, i32
  }
  func.func @transform_3(%arg0: i32) -> (i32, i32, i32) {
    %c0_i32 = arith.constant 0 : i32
    %c0_i32_0 = arith.constant 0 : i32
    %c0_i32_1 = arith.constant 0 : i32
    %c0_i32_2 = arith.constant 0 : i32
    return %c0_i32, %c0_i32_0, %c0_i32_1 : i32, i32, i32
  }
  func.func @transform_4(%arg0: i32) -> (i32, i32) {
    %c0_i32 = arith.constant 0 : i32
    %c0_i32_0 = arith.constant 0 : i32
    %c0_i32_1 = arith.constant 0 : i32
    return %c0_i32, %c0_i32_0 : i32, i32
  }
  func.func @transform_5(%arg0: i32) -> (i32, i32) {
    %c0_i32 = arith.constant 0 : i32
    %c0_i32_0 = arith.constant 0 : i32
    %c0_i32_1 = arith.constant 0 : i32
    return %c0_i32, %c0_i32_0 : i32, i32
  }
  func.func @transform_6(%arg0: i32) -> (i32, i32, i32) {
    %c0_i32 = arith.constant 0 : i32
    %c0_i32_0 = arith.constant 0 : i32
    %c0_i32_1 = arith.constant 0 : i32
    %c0_i32_2 = arith.constant 0 : i32
    return %c0_i32, %c0_i32_0, %c0_i32_1 : i32, i32, i32
  }
  func.func @transform_7(%arg0: i32) -> (i32, i32) {
    %c0_i32 = arith.constant 0 : i32
    %c0_i32_0 = arith.constant 0 : i32
    %c0_i32_1 = arith.constant 0 : i32
    return %c0_i32, %c0_i32_0 : i32, i32
  }
  func.func @transform_8(%arg0: i32) -> (i32, i32) {
    %c0_i32 = arith.constant 0 : i32
    %c0_i32_0 = arith.constant 0 : i32
    %c0_i32_1 = arith.constant 0 : i32
    return %c0_i32, %c0_i32_0 : i32, i32
  }
  func.func @transform_9(%arg0: i32) -> (i32, i32) {
    %c0_i32 = arith.constant 0 : i32
    %c0_i32_0 = arith.constant 0 : i32
    %c0_i32_1 = arith.constant 0 : i32
    return %c0_i32, %c0_i32_0 : i32, i32
  }
  func.func @transform_10(%arg0: i32) -> (i32, i32, i32) {
    %c0_i32 = arith.constant 0 : i32
    %c0_i32_0 = arith.constant 0 : i32
    %c0_i32_1 = arith.constant 0 : i32
    return %c0_i32, %arg0, %c0_i32_0 : i32, i32, i32
  }
}

</mosaic_0001>

<llo_original>
// kernel: tpu_custom_call.1
$region0: #{tpu_custom_call.1}
  #allocation0 [shape = 'u32[]', space=smem, size = 0x4, offset = 0x4, fixed_abs, tag = 'smem constant byte address 0x4 - core index']
  #allocation1 [shape = 'u32[144,128]{1,0:T(1,128)}', space=vmem, size = 0x12000, scoped, tag = 'internal scratch']
  #allocation2 [shape = 'f32[8,8,32]{2,1,0:T(8,128)}', space=vmem, size = 0x8000, scoped, tag = 'scratch operand']
  #allocation3 [shape = 'f32[8,8,32]{2,1,0:T(8,128)}', space=vmem, size = 0x8000, scoped, tag = 'scratch operand']
  #allocation4 [shape = 'f32[8,8,32]{2,1,0:T(8,128)}', space=vmem, size = 0x8000, scoped, tag = 'scratch operand']
  #allocation5 [shape = 'f32[8,8,32]{2,1,0:T(8,128)}', space=vmem, size = 0x8000, scoped, tag = 'scratch operand']
  #allocation6 [shape = 'f32[8,8,32]{2,1,0:T(8,128)}', space=vmem, size = 0x8000, scoped, tag = 'scratch operand']
  #allocation7 [shape = 'f32[8,8,32]{2,1,0:T(8,128)}', space=vmem, size = 0x8000, scoped, tag = 'scratch operand']
  #allocation8 [shape = 'f32[8,8,32]{2,1,0:T(8,128)}', space=vmem, size = 0x8000, scoped, tag = 'scratch operand']
  #allocation9 [shape = 'f32[8,8,32]{2,1,0:T(8,128)}', space=vmem, size = 0x8000, scoped, tag = 'scratch operand']
  #allocation10 [shape = 'f32[8,8,32]{2,1,0:T(8,128)}', space=vmem, size = 0x8000, scoped, tag = 'scratch operand']
  #allocation11 [shape = 'f32[8,8,32]{2,1,0:T(8,128)}', space=vmem, size = 0x8000, scoped, tag = 'scratch operand']
  %s0 = inlined_call_operand.hbm [shape: f32[8,8,16], index: 0, kind: input, shape index: {}]
  %s1 = inlined_call_operand.hbm [shape: f32[16,128], index: 1, kind: input, shape index: {}]
  %s2 = inlined_call_operand.vmem [shape: f32[1,128], index: 2, kind: input, shape index: {}]
  %s3 = inlined_call_operand.hbm [shape: f32[4,32,32], index: 3, kind: input, shape index: {}]
  %s4 = inlined_call_operand.hbm [shape: f32[16,128], index: 4, kind: input, shape index: {}]
  %s5 = inlined_call_operand.vmem [shape: f32[1,128], index: 5, kind: input, shape index: {}]
  %s6 = inlined_call_operand.hbm [shape: f32[4,32,32], index: 6, kind: input, shape index: {}]
  %s7 = inlined_call_operand.hbm [shape: f32[32,128], index: 7, kind: input, shape index: {}]
  %s8 = inlined_call_operand.hbm [shape: f32[32,128], index: 8, kind: input, shape index: {}]
  %s9 = inlined_call_operand.vmem [shape: f32[1,128], index: 9, kind: input, shape index: {}]
  %s10 = inlined_call_operand.hbm [shape: f32[8,8,128], index: 10, kind: output, shape index: {}]
  %s11 = sld [smem:[#allocation0]]
  $region78: #{tpu_custom_call.1} parent=0
    _
  %s13 = ssub.s32 1, %s11
  %s14 = scalar_select 0, %s13, %s11
  $region1: #{tpu_custom_call.1} parent=0
    #allocation12 [shape = 'u8[32768]{0}', space=vmem, size = 0x8000, scoped, tag = 'input window, operand 0, single buffered']
    #allocation13 [shape = 's32[1]{0}', space=sflag, size = 0x4, scoped, tag = 'scoped memory for tpu_custom_call.1']
    #allocation14 [shape = 's32[1]{0}', space=sflag, size = 0x4, scoped, tag = 'scoped memory for tpu_custom_call.1']
    #allocation15 [shape = 'u8[8192]{0}', space=vmem, size = 0x2000, scoped, tag = 'input window, operand 1, single buffered']
    #allocation16 [shape = 's32[1]{0}', space=sflag, size = 0x4, scoped, tag = 'scoped memory for tpu_custom_call.1']
    #allocation17 [shape = 'u8[65536]{0}', space=vmem, size = 0x10000, scoped, tag = 'input window, operand 3, single buffered']
    #allocation18 [shape = 'u8[8192]{0}', space=vmem, size = 0x2000, scoped, tag = 'input window, operand 4, single buffered']
    #allocation19 [shape = 's32[1]{0}', space=sflag, size = 0x4, scoped, tag = 'scoped memory for tpu_custom_call.1']
    #allocation20 [shape = 'u8[65536]{0}', space=vmem, size = 0x10000, scoped, tag = 'input window, operand 6, single buffered']
    #allocation21 [shape = 'u8[16384]{0}', space=vmem, size = 0x4000, scoped, tag = 'input window, operand 7, single buffered']
    #allocation22 [shape = 's32[1]{0}', space=sflag, size = 0x4, scoped, tag = 'scoped memory for tpu_custom_call.1']
    #allocation23 [shape = 'u8[16384]{0}', space=vmem, size = 0x4000, scoped, tag = 'input window, operand 8, single buffered']
    #allocation24 [shape = 'u8[32768]{0}', space=vmem, size = 0x8000, scoped, tag = 'output window, operand 0, single buffered']
    %15 = vsyncpa [#allocation13], 0
    %16 = vsyncpa [#allocation16], 0
    %17 = vsyncpa [#allocation19], 0
    %18 = vsyncpa [#allocation22], 0
    %19 = vsyncpa [#allocation14], 0
    // Predicated region
    $region2: #{tpu_custom_call.1} parent=1 // pred_check
      _
    $region3: #{tpu_custom_call.1} parent=1 // pred_check_branch
      %21 = sbr.rel (0) target = $region5
    $region4: #{tpu_custom_call.1} parent=1 // pred_region
      %s23 = ssub.s32 1024, 1024
      %24 = vsyncadd [#allocation13], %s23
      %s25 = sshll.u32 [#allocation12], 4
      %s26 = int_to_ptr.vmem [resolvable:$true] %s25
      %31 = dma.hbm_to_vmem [thread:$0]  %s0, 1024, %s26, [#allocation13], 128, 128, 8
    $region5: #{tpu_custom_call.1} parent=1 // pred_fallthru
      _
    // Predicated region
    $region6: #{tpu_custom_call.1} parent=1 // pred_check
      _
    $region7: #{tpu_custom_call.1} parent=1 // pred_check_branch
      %33 = sbr.rel (0) target = $region9
    $region8: #{tpu_custom_call.1} parent=1 // pred_region
      %s35 = ssub.s32 256, 256
      %36 = vsyncadd [#allocation16], %s35
      %s37 = sshll.u32 [#allocation15], 4
      %s38 = int_to_ptr.vmem [resolvable:$true] %s37
      %43 = dma.hbm_to_vmem [thread:$0]  %s1, 256, %s38, [#allocation16], 128, 128, 8
    $region9: #{tpu_custom_call.1} parent=1 // pred_fallthru
      _
    // Predicated region
    $region10: #{tpu_custom_call.1} parent=1 // pred_check
      _
    $region11: #{tpu_custom_call.1} parent=1 // pred_check_branch
      %45 = sbr.rel (0) target = $region13
    $region12: #{tpu_custom_call.1} parent=1 // pred_region
      _
    $region13: #{tpu_custom_call.1} parent=1 // pred_fallthru
      _
    // Predicated region
    $region14: #{tpu_custom_call.1} parent=1 // pred_check
      _
    $region15: #{tpu_custom_call.1} parent=1 // pred_check_branch
      %47 = sbr.rel (0) target = $region17
    $region16: #{tpu_custom_call.1} parent=1 // pred_region
      %s49 = ssub.s32 2048, 2048
      %50 = vsyncadd [#allocation16], %s49
      %s51 = sshll.u32 [#allocation17], 4
      %s52 = int_to_ptr.vmem [resolvable:$true] %s51
      %57 = dma.hbm_to_vmem [thread:$0]  %s3, 2048, %s52, [#allocation16], 128, 128, 8
    $region17: #{tpu_custom_call.1} parent=1 // pred_fallthru
      _
    // Predicated region
    $region18: #{tpu_custom_call.1} parent=1 // pred_check
      _
    $region19: #{tpu_custom_call.1} parent=1 // pred_check_branch
      %59 = sbr.rel (0) target = $region21
    $region20: #{tpu_custom_call.1} parent=1 // pred_region
      %s61 = ssub.s32 256, 256
      %62 = vsyncadd [#allocation19], %s61
      %s63 = sshll.u32 [#allocation18], 4
      %s64 = int_to_ptr.vmem [resolvable:$true] %s63
      %69 = dma.hbm_to_vmem [thread:$0]  %s4, 256, %s64, [#allocation19], 128, 128, 8
    $region21: #{tpu_custom_call.1} parent=1 // pred_fallthru
      _
    // Predicated region
    $region22: #{tpu_custom_call.1} parent=1 // pred_check
      _
    $region23: #{tpu_custom_call.1} parent=1 // pred_check_branch
      %71 = sbr.rel (0) target = $region25
    $region24: #{tpu_custom_call.1} parent=1 // pred_region
      _
    $region25: #{tpu_custom_call.1} parent=1 // pred_fallthru
      _
    // Predicated region
    $region26: #{tpu_custom_call.1} parent=1 // pred_check
      _
    $region27: #{tpu_custom_call.1} parent=1 // pred_check_branch
      %73 = sbr.rel (0) target = $region29
    $region28: #{tpu_custom_call.1} parent=1 // pred_region
      %s75 = ssub.s32 2048, 2048
      %76 = vsyncadd [#allocation19], %s75
      %s77 = sshll.u32 [#allocation20], 4
      %s78 = int_to_ptr.vmem [resolvable:$true] %s77
      %83 = dma.hbm_to_vmem [thread:$0]  %s6, 2048, %s78, [#allocation19], 128, 128, 8
    $region29: #{tpu_custom_call.1} parent=1 // pred_fallthru
      _
    // Predicated region
    $region30: #{tpu_custom_call.1} parent=1 // pred_check
      _
    $region31: #{tpu_custom_call.1} parent=1 // pred_check_branch
      %85 = sbr.rel (0) target = $region33
    $region32: #{tpu_custom_call.1} parent=1 // pred_region
      %s87 = ssub.s32 512, 512
      %88 = vsyncadd [#allocation22], %s87
      %s89 = sshll.u32 [#allocation21], 4
      %s90 = int_to_ptr.vmem [resolvable:$true] %s89
      %95 = dma.hbm_to_vmem [thread:$0]  %s7, 512, %s90, [#allocation22], 128, 128, 8
    $region33: #{tpu_custom_call.1} parent=1 // pred_fallthru
      _
    // Predicated region
    $region34: #{tpu_custom_call.1} parent=1 // pred_check
      _
    $region35: #{tpu_custom_call.1} parent=1 // pred_check_branch
      %97 = sbr.rel (0) target = $region37
    $region36: #{tpu_custom_call.1} parent=1 // pred_region
      %s99 = ssub.s32 512, 512
      %100 = vsyncadd [#allocation22], %s99
      %s101 = sshll.u32 [#allocation23], 4
      %s102 = int_to_ptr.vmem [resolvable:$true] %s101
      %107 = dma.hbm_to_vmem [thread:$0]  %s8, 512, %s102, [#allocation22], 128, 128, 8
    $region37: #{tpu_custom_call.1} parent=1 // pred_fallthru
      _
    // Predicated region
    $region38: #{tpu_custom_call.1} parent=1 // pred_check
      _
    $region39: #{tpu_custom_call.1} parent=1 // pred_check_branch
      %109 = sbr.rel (0) target = $region41
    $region40: #{tpu_custom_call.1} parent=1 // pred_region
      _
    $region41: #{tpu_custom_call.1} parent=1 // pred_fallthru
      _
    // Predicated region
    $region42: #{tpu_custom_call.1} parent=1 // pred_check
      _
    $region43: #{tpu_custom_call.1} parent=1 // pred_check_branch
      %111 = sbr.rel (0) target = $region45
    $region44: #{tpu_custom_call.1} parent=1 // pred_region
      %112 = dma.done [#allocation13], 1024
    $region45: #{tpu_custom_call.1} parent=1 // pred_fallthru
      _
    // Predicated region
    $region46: #{tpu_custom_call.1} parent=1 // pred_check
      _
    $region47: #{tpu_custom_call.1} parent=1 // pred_check_branch
      %114 = sbr.rel (0) target = $region49
    $region48: #{tpu_custom_call.1} parent=1 // pred_region
      %115 = dma.done [#allocation16], 256
    $region49: #{tpu_custom_call.1} parent=1 // pred_fallthru
      _
    // Predicated region
    $region50: #{tpu_custom_call.1} parent=1 // pred_check
      _
    $region51: #{tpu_custom_call.1} parent=1 // pred_check_branch
      %117 = sbr.rel (0) target = $region53
    $region52: #{tpu_custom_call.1} parent=1 // pred_region
      %118 = dma.done [#allocation16], 2048
    $region53: #{tpu_custom_call.1} parent=1 // pred_fallthru
      _
    // Predicated region
    $region54: #{tpu_custom_call.1} parent=1 // pred_check
      _
    $region55: #{tpu_custom_call.1} parent=1 // pred_check_branch
      %120 = sbr.rel (0) target = $region57
    $region56: #{tpu_custom_call.1} parent=1 // pred_region
      %121 = dma.done [#allocation19], 256
    $region57: #{tpu_custom_call.1} parent=1 // pred_fallthru
      _
    // Predicated region
    $region58: #{tpu_custom_call.1} parent=1 // pred_check
      _
    $region59: #{tpu_custom_call.1} parent=1 // pred_check_branch
      %123 = sbr.rel (0) target = $region61
    $region60: #{tpu_custom_call.1} parent=1 // pred_region
      %124 = dma.done [#allocation19], 2048
    $region61: #{tpu_custom_call.1} parent=1 // pred_fallthru
      _
    // Predicated region
    $region62: #{tpu_custom_call.1} parent=1 // pred_check
      _
    $region63: #{tpu_custom_call.1} parent=1 // pred_check_branch
      %126 = sbr.rel (0) target = $region65
    $region64: #{tpu_custom_call.1} parent=1 // pred_region
      %127 = dma.done [#allocation22], 512
    $region65: #{tpu_custom_call.1} parent=1 // pred_fallthru
      _
    // Predicated region
    $region66: #{tpu_custom_call.1} parent=1 // pred_check
      _
    $region67: #{tpu_custom_call.1} parent=1 // pred_check_branch
      %129 = sbr.rel (0) target = $region69
    $region68: #{tpu_custom_call.1} parent=1 // pred_region
      %130 = dma.done [#allocation22], 512
    $region69: #{tpu_custom_call.1} parent=1 // pred_fallthru
      _
    %v131 = vld [vmem:[#allocation12] sm:$0xff]
    %v132 = vld [vmem:[#allocation12 + $0x8] sm:$0xff]
    %v133 = vld [vmem:[#allocation12 + $0x10] sm:$0xff]
    %v134 = vld [vmem:[#allocation12 + $0x18] sm:$0xff]
    %v135 = vld [vmem:[#allocation12 + $0x20] sm:$0xff]
    %v136 = vld [vmem:[#allocation12 + $0x28] sm:$0xff]
    %v137 = vld [vmem:[#allocation12 + $0x30] sm:$0xff]
    %v138 = vld [vmem:[#allocation12 + $0x38] sm:$0xff]
    %v139 = vld [vmem:[#allocation15] sm:$0xff]
    %v140 = vld [vmem:[#allocation15 + $0x8] sm:$0xff]
    %v141 = vld [vmem:[%s2] sm:$0x1]
    %v143 = vlaneseq
    %v144 = vshrl.u32 %v143, 7
    %v145 = vsub.s32 0, %v144
    %v146 = vrot.slane %v141, %v145
    %vm148 = vcmask 130048
    %v150 = vsel %vm148, %v131, 0
    %v153 = vsel %vm148, %v132, 0
    %v156 = vsel %vm148, %v133, 0
    %v159 = vsel %vm148, %v134, 0
    %v162 = vsel %vm148, %v135, 0
    %v165 = vsel %vm148, %v136, 0
    %v168 = vsel %vm148, %v137, 0
    %v171 = vsel %vm148, %v138, 0
    %173 = vmatprep.subr.mxu0 0.0
    %174 = vmatpush1.msra.mxu0 0.0
    %175 = vmatprep.subr.mxu0 0.0
    %176 = vmatpush1.msra.mxu0 0.0
    %177 = vmatprep.subr.mxu0 0.0
    %178 = vmatpush1.msra.mxu0 0.0
    %179 = vmatprep.subr.mxu0 0.0
    %180 = vmatpush1.msra.mxu0 0.0
    %181 = vmatprep.subr.mxu0 0.0
    %182 = vmatpush1.msra.mxu0 0.0
    %183 = vmatprep.subr.mxu0 0.0
    %184 = vmatpush1.msra.mxu0 0.0
    %185 = vmatprep.subr.mxu0 0.0
    %186 = vmatpush1.msra.mxu0 0.0
    %187 = vmatprep.subr.mxu0 0.0
    %188 = vmatpush1.msra.mxu0 0.0
    %189 = vmatprep.subr.mxu0 0.0
    %190 = vmatpush1.msra.mxu0 0.0
    %191 = vmatprep.subr.mxu0 0.0
    %192 = vmatpush1.msra.mxu0 0.0
    %193 = vmatprep.subr.mxu0 0.0
    %194 = vmatpush1.msra.mxu0 0.0
    %195 = vmatprep.subr.mxu0 0.0
    %196 = vmatpush1.msra.mxu0 0.0
    %197 = vmatprep.subr.mxu0 0.0
    %198 = vmatpush1.msra.mxu0 0.0
    %199 = vmatprep.subr.mxu0 0.0
    %200 = vmatpush1.msra.mxu0 0.0
    %201 = vmatprep.subr.mxu0 0.0
    %202 = vmatpush1.msra.mxu0 %v140
    %203 = vmatprep.subr.mxu0 0.0
    %204 = vmatpush1.msra.mxu0 %v139
    %205 = vmatprep.subr.mxu0 0.0
    %206 = vmatpush2.msra.mxu0 0.0
    %207 = vmatprep.subr.mxu0 0.0
    %208 = vmatpush2.msra.mxu0 0.0
    %209 = vmatprep.subr.mxu0 0.0
    %210 = vmatpush2.msra.mxu0 0.0
    %211 = vmatprep.subr.mxu0 0.0
    %212 = vmatpush2.msra.mxu0 0.0
    %213 = vmatprep.subr.mxu0 0.0
    %214 = vmatpush2.msra.mxu0 0.0
    %215 = vmatprep.subr.mxu0 0.0
    %216 = vmatpush2.msra.mxu0 0.0
    %217 = vmatprep.subr.mxu0 0.0
    %218 = vmatpush2.msra.mxu0 0.0
    %219 = vmatprep.subr.mxu0 0.0
    %220 = vmatpush2.msra.mxu0 0.0
    %221 = vmatprep.subr.mxu0 0.0
    %222 = vmatpush2.msra.mxu0 0.0
    %223 = vmatprep.subr.mxu0 0.0
    %224 = vmatpush2.msra.mxu0 0.0
    %225 = vmatprep.subr.mxu0 0.0
    %226 = vmatpush2.msra.mxu0 0.0
    %227 = vmatprep.subr.mxu0 0.0
    %228 = vmatpush2.msra.mxu0 0.0
    %229 = vmatprep.subr.mxu0 0.0
    %230 = vmatpush2.msra.mxu0 0.0
    %231 = vmatprep.subr.mxu0 0.0
    %232 = vmatpush2.msra.mxu0 0.0
    %233 = vmatprep.subr.mxu0 0.0
    %234 = vmatpush2.msra.mxu0 0.0
    %235 = vmatprep.subr.mxu0 0.0
    %236 = vmatpush2.msra.mxu0 0.0
    %237 = vmatprep.mubr.f32.mxu0 0.0
    %238 = vmatmul.mubr.f32.gmra.mxu0 %v150
    %v239 = vpop.f32.mrf.mxu0
    %v240 = vadd.f32 %v146, %v239
    %v241 = vpop.f32.mrf.mxu0
    %242 = vmatprep.mubr.f32.mxu0 0.0
    %243 = vmatmul.mubr.f32.gmra.mxu0 %v153
    %v244 = vpop.f32.mrf.mxu0
    %v245 = vadd.f32 %v146, %v244
    %v246 = vpop.f32.mrf.mxu0
    %247 = vmatprep.mubr.f32.mxu0 0.0
    %248 = vmatmul.mubr.f32.gmra.mxu0 %v156
    %v249 = vpop.f32.mrf.mxu0
    %v250 = vadd.f32 %v146, %v249
    %v251 = vpop.f32.mrf.mxu0
    %252 = vmatprep.mubr.f32.mxu0 0.0
    %253 = vmatmul.mubr.f32.gmra.mxu0 %v159
    %v254 = vpop.f32.mrf.mxu0
    %v255 = vadd.f32 %v146, %v254
    %v256 = vpop.f32.mrf.mxu0
    %257 = vmatprep.mubr.f32.mxu0 0.0
    %258 = vmatmul.mubr.f32.gmra.mxu0 %v162
    %v259 = vpop.f32.mrf.mxu0
    %v260 = vadd.f32 %v146, %v259
    %v261 = vpop.f32.mrf.mxu0
    %262 = vmatprep.mubr.f32.mxu0 0.0
    %263 = vmatmul.mubr.f32.gmra.mxu0 %v165
    %v264 = vpop.f32.mrf.mxu0
    %v265 = vadd.f32 %v146, %v264
    %v266 = vpop.f32.mrf.mxu0
    %267 = vmatprep.mubr.f32.mxu0 0.0
    %268 = vmatmul.mubr.f32.gmra.mxu0 %v168
    %v269 = vpop.f32.mrf.mxu0
    %v270 = vadd.f32 %v146, %v269
    %v271 = vpop.f32.mrf.mxu0
    %272 = vmatprep.mubr.f32.mxu0 0.0
    %273 = vmatmul.mubr.f32.gmra.mxu0 %v171
    %v274 = vpop.f32.mrf.mxu0
    %v275 = vadd.f32 %v146, %v274
    %v276 = vpop.f32.mrf.mxu0
    %277 = vdwg.mxu0
    %v278 = vld [vmem:[#allocation18] sm:$0xff]
    %v279 = vld [vmem:[#allocation18 + $0x8] sm:$0xff]
    %v280 = vld [vmem:[%s5] sm:$0x1]
    %v282 = vlaneseq
    %v283 = vshrl.u32 %v282, 7
    %v284 = vsub.s32 0, %v283
    %v285 = vrot.slane %v280, %v284
    %287 = vmatprep.subr.mxu0 0.0
    %288 = vmatpush1.msra.mxu0 0.0
    %289 = vmatprep.subr.mxu0 0.0
    %290 = vmatpush1.msra.mxu0 0.0
    %291 = vmatprep.subr.mxu0 0.0
    %292 = vmatpush1.msra.mxu0 0.0
    %293 = vmatprep.subr.mxu0 0.0
    %294 = vmatpush1.msra.mxu0 0.0
    %295 = vmatprep.subr.mxu0 0.0
    %296 = vmatpush1.msra.mxu0 0.0
    %297 = vmatprep.subr.mxu0 0.0
    %298 = vmatpush1.msra.mxu0 0.0
    %299 = vmatprep.subr.mxu0 0.0
    %300 = vmatpush1.msra.mxu0 0.0
    %301 = vmatprep.subr.mxu0 0.0
    %302 = vmatpush1.msra.mxu0 0.0
    %303 = vmatprep.subr.mxu0 0.0
    %304 = vmatpush1.msra.mxu0 0.0
    %305 = vmatprep.subr.mxu0 0.0
    %306 = vmatpush1.msra.mxu0 0.0
    %307 = vmatprep.subr.mxu0 0.0
    %308 = vmatpush1.msra.mxu0 0.0
    %309 = vmatprep.subr.mxu0 0.0
    %310 = vmatpush1.msra.mxu0 0.0
    %311 = vmatprep.subr.mxu0 0.0
    %312 = vmatpush1.msra.mxu0 0.0
    %313 = vmatprep.subr.mxu0 0.0
    %314 = vmatpush1.msra.mxu0 0.0
    %315 = vmatprep.subr.mxu0 0.0
    %316 = vmatpush1.msra.mxu0 %v279
    %317 = vmatprep.subr.mxu0 0.0
    %318 = vmatpush1.msra.mxu0 %v278
    %319 = vmatprep.subr.mxu0 0.0
    %320 = vmatpush2.msra.mxu0 0.0
    %321 = vmatprep.subr.mxu0 0.0
    %322 = vmatpush2.msra.mxu0 0.0
    %323 = vmatprep.subr.mxu0 0.0
    %324 = vmatpush2.msra.mxu0 0.0
    %325 = vmatprep.subr.mxu0 0.0
    %326 = vmatpush2.msra.mxu0 0.0
    %327 = vmatprep.subr.mxu0 0.0
    %328 = vmatpush2.msra.mxu0 0.0
    %329 = vmatprep.subr.mxu0 0.0
    %330 = vmatpush2.msra.mxu0 0.0
    %331 = vmatprep.subr.mxu0 0.0
    %332 = vmatpush2.msra.mxu0 0.0
    %333 = vmatprep.subr.mxu0 0.0
    %334 = vmatpush2.msra.mxu0 0.0
    %335 = vmatprep.subr.mxu0 0.0
    %336 = vmatpush2.msra.mxu0 0.0
    %337 = vmatprep.subr.mxu0 0.0
    %338 = vmatpush2.msra.mxu0 0.0
    %339 = vmatprep.subr.mxu0 0.0
    %340 = vmatpush2.msra.mxu0 0.0
    %341 = vmatprep.subr.mxu0 0.0
    %342 = vmatpush2.msra.mxu0 0.0
    %343 = vmatprep.subr.mxu0 0.0
    %344 = vmatpush2.msra.mxu0 0.0
    %345 = vmatprep.subr.mxu0 0.0
    %346 = vmatpush2.msra.mxu0 0.0
    %347 = vmatprep.subr.mxu0 0.0
    %348 = vmatpush2.msra.mxu0 0.0
    %349 = vmatprep.subr.mxu0 0.0
    %350 = vmatpush2.msra.mxu0 0.0
    %351 = vmatprep.mubr.f32.mxu0 0.0
    %352 = vmatmul.mubr.f32.gmra.mxu0 %v150
    %v353 = vpop.f32.mrf.mxu0
    %v354 = vadd.f32 %v285, %v353
    %v355 = vpop.f32.mrf.mxu0
    %356 = vmatprep.mubr.f32.mxu0 0.0
    %357 = vmatmul.mubr.f32.gmra.mxu0 %v153
    %v358 = vpop.f32.mrf.mxu0
    %v359 = vadd.f32 %v285, %v358
    %v360 = vpop.f32.mrf.mxu0
    %361 = vmatprep.mubr.f32.mxu0 0.0
    %362 = vmatmul.mubr.f32.gmra.mxu0 %v156
    %v363 = vpop.f32.mrf.mxu0
    %v364 = vadd.f32 %v285, %v363
    %v365 = vpop.f32.mrf.mxu0
    %366 = vmatprep.mubr.f32.mxu0 0.0
    %367 = vmatmul.mubr.f32.gmra.mxu0 %v159
    %v368 = vpop.f32.mrf.mxu0
    %v369 = vadd.f32 %v285, %v368
    %v370 = vpop.f32.mrf.mxu0
    %371 = vmatprep.mubr.f32.mxu0 0.0
    %372 = vmatmul.mubr.f32.gmra.mxu0 %v162
    %v373 = vpop.f32.mrf.mxu0
    %v374 = vadd.f32 %v285, %v373
    %v375 = vpop.f32.mrf.mxu0
    %376 = vmatprep.mubr.f32.mxu0 0.0
    %377 = vmatmul.mubr.f32.gmra.mxu0 %v165
    %v378 = vpop.f32.mrf.mxu0
    %v379 = vadd.f32 %v285, %v378
    %v380 = vpop.f32.mrf.mxu0
    %381 = vmatprep.mubr.f32.mxu0 0.0
    %382 = vmatmul.mubr.f32.gmra.mxu0 %v168
    %v383 = vpop.f32.mrf.mxu0
    %v384 = vadd.f32 %v285, %v383
    %v385 = vpop.f32.mrf.mxu0
    %386 = vmatprep.mubr.f32.mxu0 0.0
    %387 = vmatmul.mubr.f32.gmra.mxu0 %v171
    %v388 = vpop.f32.mrf.mxu0
    %v389 = vadd.f32 %v285, %v388
    %v390 = vpop.f32.mrf.mxu0
    %391 = vdwg.mxu0
    %vm392 = vcmask 261120
    %393 = vst.msk [vmem:[#allocation2] sm:$0xff] %vm392, %v240
    %394 = vst.msk [vmem:[#allocation2 + $0x8] sm:$0xff] %vm392, %v245
    %395 = vst.msk [vmem:[#allocation2 + $0x10] sm:$0xff] %vm392, %v250
    %396 = vst.msk [vmem:[#allocation2 + $0x18] sm:$0xff] %vm392, %v255
    %397 = vst.msk [vmem:[#allocation2 + $0x20] sm:$0xff] %vm392, %v260
    %398 = vst.msk [vmem:[#allocation2 + $0x28] sm:$0xff] %vm392, %v265
    %399 = vst.msk [vmem:[#allocation2 + $0x30] sm:$0xff] %vm392, %v270
    %400 = vst.msk [vmem:[#allocation2 + $0x38] sm:$0xff] %vm392, %v275
    %401 = vst.msk [vmem:[#allocation6] sm:$0xff] %vm392, %v354
    %402 = vst.msk [vmem:[#allocation6 + $0x8] sm:$0xff] %vm392, %v359
    %403 = vst.msk [vmem:[#allocation6 + $0x10] sm:$0xff] %vm392, %v364
    %404 = vst.msk [vmem:[#allocation6 + $0x18] sm:$0xff] %vm392, %v369
    %405 = vst.msk [vmem:[#allocation6 + $0x20] sm:$0xff] %vm392, %v374
    %406 = vst.msk [vmem:[#allocation6 + $0x28] sm:$0xff] %vm392, %v379
    %407 = vst.msk [vmem:[#allocation6 + $0x30] sm:$0xff] %vm392, %v384
    %408 = vst.msk [vmem:[#allocation6 + $0x38] sm:$0xff] %vm392, %v389
    %417 = vrot.lane.b32.xlu0 %v240, 96
    %v418 = vpop.permute.xlu0 %417
    %419 = vrot.lane.b32.xlu0 %v245, 96
    %v420 = vpop.permute.xlu0 %419
    %421 = vrot.lane.b32.xlu0 %v250, 96
    %v422 = vpop.permute.xlu0 %421
    %423 = vrot.lane.b32.xlu0 %v255, 96
    %v424 = vpop.permute.xlu0 %423
    %425 = vrot.lane.b32.xlu0 %v260, 96
    %v426 = vpop.permute.xlu0 %425
    %427 = vrot.lane.b32.xlu0 %v265, 96
    %v428 = vpop.permute.xlu0 %427
    %429 = vrot.lane.b32.xlu0 %v270, 96
    %v430 = vpop.permute.xlu0 %429
    %431 = vrot.lane.b32.xlu0 %v275, 96
    %v432 = vpop.permute.xlu0 %431
    %441 = vst.msk [vmem:[#allocation3] sm:$0xff] %vm392, %v418
    %442 = vst.msk [vmem:[#allocation3 + $0x8] sm:$0xff] %vm392, %v420
    %443 = vst.msk [vmem:[#allocation3 + $0x10] sm:$0xff] %vm392, %v422
    %444 = vst.msk [vmem:[#allocation3 + $0x18] sm:$0xff] %vm392, %v424
    %445 = vst.msk [vmem:[#allocation3 + $0x20] sm:$0xff] %vm392, %v426
    %446 = vst.msk [vmem:[#allocation3 + $0x28] sm:$0xff] %vm392, %v428
    %447 = vst.msk [vmem:[#allocation3 + $0x30] sm:$0xff] %vm392, %v430
    %448 = vst.msk [vmem:[#allocation3 + $0x38] sm:$0xff] %vm392, %v432
    %457 = vrot.lane.b32.xlu0 %v354, 96
    %v458 = vpop.permute.xlu0 %457
    %459 = vrot.lane.b32.xlu0 %v359, 96
    %v460 = vpop.permute.xlu0 %459
    %461 = vrot.lane.b32.xlu0 %v364, 96
    %v462 = vpop.permute.xlu0 %461
    %463 = vrot.lane.b32.xlu0 %v369, 96
    %v464 = vpop.permute.xlu0 %463
    %465 = vrot.lane.b32.xlu0 %v374, 96
    %v466 = vpop.permute.xlu0 %465
    %467 = vrot.lane.b32.xlu0 %v379, 96
    %v468 = vpop.permute.xlu0 %467
    %469 = vrot.lane.b32.xlu0 %v384, 96
    %v470 = vpop.permute.xlu0 %469
    %471 = vrot.lane.b32.xlu0 %v389, 96
    %v472 = vpop.permute.xlu0 %471
    %481 = vst.msk [vmem:[#allocation7] sm:$0xff] %vm392, %v458
    %482 = vst.msk [vmem:[#allocation7 + $0x8] sm:$0xff] %vm392, %v460
    %483 = vst.msk [vmem:[#allocation7 + $0x10] sm:$0xff] %vm392, %v462
    %484 = vst.msk [vmem:[#allocation7 + $0x18] sm:$0xff] %vm392, %v464
    %485 = vst.msk [vmem:[#allocation7 + $0x20] sm:$0xff] %vm392, %v466
    %486 = vst.msk [vmem:[#allocation7 + $0x28] sm:$0xff] %vm392, %v468
    %487 = vst.msk [vmem:[#allocation7 + $0x30] sm:$0xff] %vm392, %v470
    %488 = vst.msk [vmem:[#allocation7 + $0x38] sm:$0xff] %vm392, %v472
    %489 = vrot.lane.b32.xlu0 %v240, 64
    %v490 = vpop.permute.xlu0 %489
    %491 = vrot.lane.b32.xlu0 %v245, 64
    %v492 = vpop.permute.xlu0 %491
    %493 = vrot.lane.b32.xlu0 %v250, 64
    %v494 = vpop.permute.xlu0 %493
    %495 = vrot.lane.b32.xlu0 %v255, 64
    %v496 = vpop.permute.xlu0 %495
    %497 = vrot.lane.b32.xlu0 %v260, 64
    %v498 = vpop.permute.xlu0 %497
    %499 = vrot.lane.b32.xlu0 %v265, 64
    %v500 = vpop.permute.xlu0 %499
    %501 = vrot.lane.b32.xlu0 %v270, 64
    %v502 = vpop.permute.xlu0 %501
    %503 = vrot.lane.b32.xlu0 %v275, 64
    %v504 = vpop.permute.xlu0 %503
    %513 = vst.msk [vmem:[#allocation4] sm:$0xff] %vm392, %v490
    %514 = vst.msk [vmem:[#allocation4 + $0x8] sm:$0xff] %vm392, %v492
    %515 = vst.msk [vmem:[#allocation4 + $0x10] sm:$0xff] %vm392, %v494
    %516 = vst.msk [vmem:[#allocation4 + $0x18] sm:$0xff] %vm392, %v496
    %517 = vst.msk [vmem:[#allocation4 + $0x20] sm:$0xff] %vm392, %v498
    %518 = vst.msk [vmem:[#allocation4 + $0x28] sm:$0xff] %vm392, %v500
    %519 = vst.msk [vmem:[#allocation4 + $0x30] sm:$0xff] %vm392, %v502
    %520 = vst.msk [vmem:[#allocation4 + $0x38] sm:$0xff] %vm392, %v504
    %521 = vrot.lane.b32.xlu0 %v354, 64
    %v522 = vpop.permute.xlu0 %521
    %523 = vrot.lane.b32.xlu0 %v359, 64
    %v524 = vpop.permute.xlu0 %523
    %525 = vrot.lane.b32.xlu0 %v364, 64
    %v526 = vpop.permute.xlu0 %525
    %527 = vrot.lane.b32.xlu0 %v369, 64
    %v528 = vpop.permute.xlu0 %527
    %529 = vrot.lane.b32.xlu0 %v374, 64
    %v530 = vpop.permute.xlu0 %529
    %531 = vrot.lane.b32.xlu0 %v379, 64
    %v532 = vpop.permute.xlu0 %531
    %533 = vrot.lane.b32.xlu0 %v384, 64
    %v534 = vpop.permute.xlu0 %533
    %535 = vrot.lane.b32.xlu0 %v389, 64
    %v536 = vpop.permute.xlu0 %535
    %545 = vst.msk [vmem:[#allocation8] sm:$0xff] %vm392, %v522
    %546 = vst.msk [vmem:[#allocation8 + $0x8] sm:$0xff] %vm392, %v524
    %547 = vst.msk [vmem:[#allocation8 + $0x10] sm:$0xff] %vm392, %v526
    %548 = vst.msk [vmem:[#allocation8 + $0x18] sm:$0xff] %vm392, %v528
    %549 = vst.msk [vmem:[#allocation8 + $0x20] sm:$0xff] %vm392, %v530
    %550 = vst.msk [vmem:[#allocation8 + $0x28] sm:$0xff] %vm392, %v532
    %551 = vst.msk [vmem:[#allocation8 + $0x30] sm:$0xff] %vm392, %v534
    %552 = vst.msk [vmem:[#allocation8 + $0x38] sm:$0xff] %vm392, %v536
    %553 = vrot.lane.b32.xlu0 %v240, 32
    %v554 = vpop.permute.xlu0 %553
    %555 = vrot.lane.b32.xlu0 %v245, 32
    %v556 = vpop.permute.xlu0 %555
    %557 = vrot.lane.b32.xlu0 %v250, 32
    %v558 = vpop.permute.xlu0 %557
    %559 = vrot.lane.b32.xlu0 %v255, 32
    %v560 = vpop.permute.xlu0 %559
    %561 = vrot.lane.b32.xlu0 %v260, 32
    %v562 = vpop.permute.xlu0 %561
    %563 = vrot.lane.b32.xlu0 %v265, 32
    %v564 = vpop.permute.xlu0 %563
    %565 = vrot.lane.b32.xlu0 %v270, 32
    %v566 = vpop.permute.xlu0 %565
    %567 = vrot.lane.b32.xlu0 %v275, 32
    %v568 = vpop.permute.xlu0 %567
    %577 = vst.msk [vmem:[#allocation5] sm:$0xff] %vm392, %v554
    %578 = vst.msk [vmem:[#allocation5 + $0x8] sm:$0xff] %vm392, %v556
    %579 = vst.msk [vmem:[#allocation5 + $0x10] sm:$0xff] %vm392, %v558
    %580 = vst.msk [vmem:[#allocation5 + $0x18] sm:$0xff] %vm392, %v560
    %581 = vst.msk [vmem:[#allocation5 + $0x20] sm:$0xff] %vm392, %v562
    %582 = vst.msk [vmem:[#allocation5 + $0x28] sm:$0xff] %vm392, %v564
    %583 = vst.msk [vmem:[#allocation5 + $0x30] sm:$0xff] %vm392, %v566
    %584 = vst.msk [vmem:[#allocation5 + $0x38] sm:$0xff] %vm392, %v568
    %585 = vrot.lane.b32.xlu0 %v354, 32
    %v586 = vpop.permute.xlu0 %585
    %587 = vrot.lane.b32.xlu0 %v359, 32
    %v588 = vpop.permute.xlu0 %587
    %589 = vrot.lane.b32.xlu0 %v364, 32
    %v590 = vpop.permute.xlu0 %589
    %591 = vrot.lane.b32.xlu0 %v369, 32
    %v592 = vpop.permute.xlu0 %591
    %593 = vrot.lane.b32.xlu0 %v374, 32
    %v594 = vpop.permute.xlu0 %593
    %595 = vrot.lane.b32.xlu0 %v379, 32
    %v596 = vpop.permute.xlu0 %595
    %597 = vrot.lane.b32.xlu0 %v384, 32
    %v598 = vpop.permute.xlu0 %597
    %599 = vrot.lane.b32.xlu0 %v389, 32
    %v600 = vpop.permute.xlu0 %599
    %609 = vst.msk [vmem:[#allocation9] sm:$0xff] %vm392, %v586
    %610 = vst.msk [vmem:[#allocation9 + $0x8] sm:$0xff] %vm392, %v588
    %611 = vst.msk [vmem:[#allocation9 + $0x10] sm:$0xff] %vm392, %v590
    %612 = vst.msk [vmem:[#allocation9 + $0x18] sm:$0xff] %vm392, %v592
    %613 = vst.msk [vmem:[#allocation9 + $0x20] sm:$0xff] %vm392, %v594
    %614 = vst.msk [vmem:[#allocation9 + $0x28] sm:$0xff] %vm392, %v596
    %615 = vst.msk [vmem:[#allocation9 + $0x30] sm:$0xff] %vm392, %v598
    %616 = vst.msk [vmem:[#allocation9 + $0x38] sm:$0xff] %vm392, %v600
    %v617 = vld [vmem:[#allocation17] sm:$0xff]
    %v618 = vld [vmem:[#allocation17 + $0x8] sm:$0xff]
    %v619 = vld [vmem:[#allocation17 + $0x10] sm:$0xff]
    %v620 = vld [vmem:[#allocation17 + $0x18] sm:$0xff]
    %v621 = vld [vmem:[#allocation17 + $0x20] sm:$0xff]
    %v622 = vld [vmem:[#allocation17 + $0x28] sm:$0xff]
    %v623 = vld [vmem:[#allocation17 + $0x30] sm:$0xff]
    %v624 = vld [vmem:[#allocation17 + $0x38] sm:$0xff]
    %v625 = vld [vmem:[#allocation17 + $0x40] sm:$0xff]
    %v626 = vld [vmem:[#allocation17 + $0x48] sm:$0xff]
    %v627 = vld [vmem:[#allocation17 + $0x50] sm:$0xff]
    %v628 = vld [vmem:[#allocation17 + $0x58] sm:$0xff]
    %v629 = vld [vmem:[#allocation17 + $0x60] sm:$0xff]
    %v630 = vld [vmem:[#allocation17 + $0x68] sm:$0xff]
    %v631 = vld [vmem:[#allocation17 + $0x70] sm:$0xff]
    %v632 = vld [vmem:[#allocation17 + $0x78] sm:$0xff]
    %v633 = vld [vmem:[#allocation20] sm:$0xff]
    %v634 = vld [vmem:[#allocation20 + $0x8] sm:$0xff]
    %v635 = vld [vmem:[#allocation20 + $0x10] sm:$0xff]
    %v636 = vld [vmem:[#allocation20 + $0x18] sm:$0xff]
    %v637 = vld [vmem:[#allocation20 + $0x20] sm:$0xff]
    %v638 = vld [vmem:[#allocation20 + $0x28] sm:$0xff]
    %v639 = vld [vmem:[#allocation20 + $0x30] sm:$0xff]
    %v640 = vld [vmem:[#allocation20 + $0x38] sm:$0xff]
    %v641 = vld [vmem:[#allocation20 + $0x40] sm:$0xff]
    %v642 = vld [vmem:[#allocation20 + $0x48] sm:$0xff]
    %v643 = vld [vmem:[#allocation20 + $0x50] sm:$0xff]
    %v644 = vld [vmem:[#allocation20 + $0x58] sm:$0xff]
    %v645 = vld [vmem:[#allocation20 + $0x60] sm:$0xff]
    %v646 = vld [vmem:[#allocation20 + $0x68] sm:$0xff]
    %v647 = vld [vmem:[#allocation20 + $0x70] sm:$0xff]
    %v648 = vld [vmem:[#allocation20 + $0x78] sm:$0xff]
    %v649 = vld [vmem:[#allocation2] sm:$0xff]
    %v651 = vsel %vm392, 0.0, 0
    %653 = vmatprep.subr.mxu0 0.0
    %654 = vmatpush1.msra.mxu0 0.0
    %655 = vmatprep.subr.mxu0 0.0
    %656 = vmatpush1.msra.mxu0 0.0
    %657 = vmatprep.subr.mxu0 0.0
    %658 = vmatpush1.msra.mxu0 0.0
    %659 = vmatprep.subr.mxu0 0.0
    %660 = vmatpush1.msra.mxu0 0.0
    %661 = vmatprep.subr.mxu0 0.0
    %662 = vmatpush1.msra.mxu0 0.0
    %663 = vmatprep.subr.mxu0 0.0
    %664 = vmatpush1.msra.mxu0 0.0
    %665 = vmatprep.subr.mxu0 0.0
    %666 = vmatpush1.msra.mxu0 0.0
    %667 = vmatprep.subr.mxu0 0.0
    %668 = vmatpush1.msra.mxu0 0.0
    %669 = vmatprep.subr.mxu0 0.0
    %670 = vmatpush1.msra.mxu0 0.0
    %671 = vmatprep.subr.mxu0 0.0
    %672 = vmatpush1.msra.mxu0 0.0
    %673 = vmatprep.subr.mxu0 0.0
    %674 = vmatpush1.msra.mxu0 0.0
    %675 = vmatprep.subr.mxu0 0.0
    %676 = vmatpush1.msra.mxu0 0.0
    %677 = vmatprep.subr.mxu0 0.0
    %678 = vmatpush1.msra.mxu0 %v620
    %679 = vmatprep.subr.mxu0 0.0
    %680 = vmatpush1.msra.mxu0 %v619
    %681 = vmatprep.subr.mxu0 0.0
    %682 = vmatpush1.msra.mxu0 %v618
    %683 = vmatprep.subr.mxu0 0.0
    %684 = vmatpush1.msra.mxu0 %v617
    %685 = vmatprep.subr.mxu0 0.0
    %686 = vmatpush2.msra.mxu0 0.0
    %687 = vmatprep.subr.mxu0 0.0
    %688 = vmatpush2.msra.mxu0 0.0
    %689 = vmatprep.subr.mxu0 0.0
    %690 = vmatpush2.msra.mxu0 0.0
    %691 = vmatprep.subr.mxu0 0.0
    %692 = vmatpush2.msra.mxu0 0.0
    %693 = vmatprep.subr.mxu0 0.0
    %694 = vmatpush2.msra.mxu0 0.0
    %695 = vmatprep.subr.mxu0 0.0
    %696 = vmatpush2.msra.mxu0 0.0
    %697 = vmatprep.subr.mxu0 0.0
    %698 = vmatpush2.msra.mxu0 0.0
    %699 = vmatprep.subr.mxu0 0.0
    %700 = vmatpush2.msra.mxu0 0.0
    %701 = vmatprep.subr.mxu0 0.0
    %702 = vmatpush2.msra.mxu0 0.0
    %703 = vmatprep.subr.mxu0 0.0
    %704 = vmatpush2.msra.mxu0 0.0
    %705 = vmatprep.subr.mxu0 0.0
    %706 = vmatpush2.msra.mxu0 0.0
    %707 = vmatprep.subr.mxu0 0.0
    %708 = vmatpush2.msra.mxu0 0.0
    %709 = vmatprep.subr.mxu0 0.0
    %710 = vmatpush2.msra.mxu0 0.0
    %711 = vmatprep.subr.mxu0 0.0
    %712 = vmatpush2.msra.mxu0 0.0
    %713 = vmatprep.subr.mxu0 0.0
    %714 = vmatpush2.msra.mxu0 0.0
    %715 = vmatprep.subr.mxu0 0.0
    %716 = vmatpush2.msra.mxu0 0.0
    %717 = vmatprep.mubr.f32.mxu0 0.0
    %718 = vmatmul.mubr.f32.gmra.mxu0 %v651
    %v719 = vpop.f32.mrf.mxu0
    %v720 = vadd.f32 0.0, %v719
    %v721 = vpop.f32.mrf.mxu0
    %722 = vdwg.mxu0
    %v723 = vadd.f32 %v649, %v720
    %v724 = vxor.u32 %v723, 2147483648
    %v725 = vmul.f32 %v724, 1.442695
    %v726 = vpow.pop %v725
    %v727 = vadd.f32 %v726, 1.0
    %v728 = vrcp.pop %v727
    %v729 = vmul.f32 1.0, %v728
    %v730 = vld [vmem:[#allocation3] sm:$0xff]
    %731 = vmatprep.subr.mxu0 0.0
    %732 = vmatpush1.msra.mxu0 0.0
    %733 = vmatprep.subr.mxu0 0.0
    %734 = vmatpush1.msra.mxu0 0.0
    %735 = vmatprep.subr.mxu0 0.0
    %736 = vmatpush1.msra.mxu0 0.0
    %737 = vmatprep.subr.mxu0 0.0
    %738 = vmatpush1.msra.mxu0 0.0
    %739 = vmatprep.subr.mxu0 0.0
    %740 = vmatpush1.msra.mxu0 0.0
    %741 = vmatprep.subr.mxu0 0.0
    %742 = vmatpush1.msra.mxu0 0.0
    %743 = vmatprep.subr.mxu0 0.0
    %744 = vmatpush1.msra.mxu0 0.0
    %745 = vmatprep.subr.mxu0 0.0
    %746 = vmatpush1.msra.mxu0 0.0
    %747 = vmatprep.subr.mxu0 0.0
    %748 = vmatpush1.msra.mxu0 0.0
    %749 = vmatprep.subr.mxu0 0.0
    %750 = vmatpush1.msra.mxu0 0.0
    %751 = vmatprep.subr.mxu0 0.0
    %752 = vmatpush1.msra.mxu0 0.0
    %753 = vmatprep.subr.mxu0 0.0
    %754 = vmatpush1.msra.mxu0 0.0
    %755 = vmatprep.subr.mxu0 0.0
    %756 = vmatpush1.msra.mxu0 %v624
    %757 = vmatprep.subr.mxu0 0.0
    %758 = vmatpush1.msra.mxu0 %v623
    %759 = vmatprep.subr.mxu0 0.0
    %760 = vmatpush1.msra.mxu0 %v622
    %761 = vmatprep.subr.mxu0 0.0
    %762 = vmatpush1.msra.mxu0 %v621
    %763 = vmatprep.subr.mxu0 0.0
    %764 = vmatpush2.msra.mxu0 0.0
    %765 = vmatprep.subr.mxu0 0.0
    %766 = vmatpush2.msra.mxu0 0.0
    %767 = vmatprep.subr.mxu0 0.0
    %768 = vmatpush2.msra.mxu0 0.0
    %769 = vmatprep.subr.mxu0 0.0
    %770 = vmatpush2.msra.mxu0 0.0
    %771 = vmatprep.subr.mxu0 0.0
    %772 = vmatpush2.msra.mxu0 0.0
    %773 = vmatprep.subr.mxu0 0.0
    %774 = vmatpush2.msra.mxu0 0.0
    %775 = vmatprep.subr.mxu0 0.0
    %776 = vmatpush2.msra.mxu0 0.0
    %777 = vmatprep.subr.mxu0 0.0
    %778 = vmatpush2.msra.mxu0 0.0
    %779 = vmatprep.subr.mxu0 0.0
    %780 = vmatpush2.msra.mxu0 0.0
    %781 = vmatprep.subr.mxu0 0.0
    %782 = vmatpush2.msra.mxu0 0.0
    %783 = vmatprep.subr.mxu0 0.0
    %784 = vmatpush2.msra.mxu0 0.0
    %785 = vmatprep.subr.mxu0 0.0
    %786 = vmatpush2.msra.mxu0 0.0
    %787 = vmatprep.subr.mxu0 0.0
    %788 = vmatpush2.msra.mxu0 0.0
    %789 = vmatprep.subr.mxu0 0.0
    %790 = vmatpush2.msra.mxu0 0.0
    %791 = vmatprep.subr.mxu0 0.0
    %792 = vmatpush2.msra.mxu0 0.0
    %793 = vmatprep.subr.mxu0 0.0
    %794 = vmatpush2.msra.mxu0 0.0
    %795 = vmatprep.mubr.f32.mxu0 0.0
    %796 = vmatmul.mubr.f32.gmra.mxu0 %v651
    %v797 = vpop.f32.mrf.mxu0
    %v798 = vadd.f32 0.0, %v797
    %v799 = vpop.f32.mrf.mxu0
    %800 = vdwg.mxu0
    %v801 = vadd.f32 %v730, %v798
    %v802 = vxor.u32 %v801, 2147483648
    %v803 = vmul.f32 %v802, 1.442695
    %v804 = vpow.pop %v803
    %v805 = vadd.f32 %v804, 1.0
    %v806 = vrcp.pop %v805
    %v807 = vmul.f32 1.0, %v806
    %v808 = vld [vmem:[#allocation4] sm:$0xff]
    %809 = vmatprep.subr.mxu0 0.0
    %810 = vmatpush1.msra.mxu0 0.0
    %811 = vmatprep.subr.mxu0 0.0
    %812 = vmatpush1.msra.mxu0 0.0
    %813 = vmatprep.subr.mxu0 0.0
    %814 = vmatpush1.msra.mxu0 0.0
    %815 = vmatprep.subr.mxu0 0.0
    %816 = vmatpush1.msra.mxu0 0.0
    %817 = vmatprep.subr.mxu0 0.0
    %818 = vmatpush1.msra.mxu0 0.0
    %819 = vmatprep.subr.mxu0 0.0
    %820 = vmatpush1.msra.mxu0 0.0
    %821 = vmatprep.subr.mxu0 0.0
    %822 = vmatpush1.msra.mxu0 0.0
    %823 = vmatprep.subr.mxu0 0.0
    %824 = vmatpush1.msra.mxu0 0.0
    %825 = vmatprep.subr.mxu0 0.0
    %826 = vmatpush1.msra.mxu0 0.0
    %827 = vmatprep.subr.mxu0 0.0
    %828 = vmatpush1.msra.mxu0 0.0
    %829 = vmatprep.subr.mxu0 0.0
    %830 = vmatpush1.msra.mxu0 0.0
    %831 = vmatprep.subr.mxu0 0.0
    %832 = vmatpush1.msra.mxu0 0.0
    %833 = vmatprep.subr.mxu0 0.0
    %834 = vmatpush1.msra.mxu0 %v628
    %835 = vmatprep.subr.mxu0 0.0
    %836 = vmatpush1.msra.mxu0 %v627
    %837 = vmatprep.subr.mxu0 0.0
    %838 = vmatpush1.msra.mxu0 %v626
    %839 = vmatprep.subr.mxu0 0.0
    %840 = vmatpush1.msra.mxu0 %v625
    %841 = vmatprep.subr.mxu0 0.0
    %842 = vmatpush2.msra.mxu0 0.0
    %843 = vmatprep.subr.mxu0 0.0
    %844 = vmatpush2.msra.mxu0 0.0
    %845 = vmatprep.subr.mxu0 0.0
    %846 = vmatpush2.msra.mxu0 0.0
    %847 = vmatprep.subr.mxu0 0.0
    %848 = vmatpush2.msra.mxu0 0.0
    %849 = vmatprep.subr.mxu0 0.0
    %850 = vmatpush2.msra.mxu0 0.0
    %851 = vmatprep.subr.mxu0 0.0
    %852 = vmatpush2.msra.mxu0 0.0
    %853 = vmatprep.subr.mxu0 0.0
    %854 = vmatpush2.msra.mxu0 0.0
    %855 = vmatprep.subr.mxu0 0.0
    %856 = vmatpush2.msra.mxu0 0.0
    %857 = vmatprep.subr.mxu0 0.0
    %858 = vmatpush2.msra.mxu0 0.0
    %859 = vmatprep.subr.mxu0 0.0
    %860 = vmatpush2.msra.mxu0 0.0
    %861 = vmatprep.subr.mxu0 0.0
    %862 = vmatpush2.msra.mxu0 0.0
    %863 = vmatprep.subr.mxu0 0.0
    %864 = vmatpush2.msra.mxu0 0.0
    %865 = vmatprep.subr.mxu0 0.0
    %866 = vmatpush2.msra.mxu0 0.0
    %867 = vmatprep.subr.mxu0 0.0
    %868 = vmatpush2.msra.mxu0 0.0
    %869 = vmatprep.subr.mxu0 0.0
    %870 = vmatpush2.msra.mxu0 0.0
    %871 = vmatprep.subr.mxu0 0.0
    %872 = vmatpush2.msra.mxu0 0.0
    %873 = vmatprep.mubr.f32.mxu0 0.0
    %874 = vmatmul.mubr.f32.gmra.mxu0 %v651
    %v875 = vpop.f32.mrf.mxu0
    %v876 = vadd.f32 0.0, %v875
    %v877 = vpop.f32.mrf.mxu0
    %878 = vdwg.mxu0
    %v879 = vadd.f32 %v808, %v876
    %v880 = vtanh.pop %v879
    %v881 = vld [vmem:[#allocation5] sm:$0xff]
    %882 = vmatprep.subr.mxu0 0.0
    %883 = vmatpush1.msra.mxu0 0.0
    %884 = vmatprep.subr.mxu0 0.0
    %885 = vmatpush1.msra.mxu0 0.0
    %886 = vmatprep.subr.mxu0 0.0
    %887 = vmatpush1.msra.mxu0 0.0
    %888 = vmatprep.subr.mxu0 0.0
    %889 = vmatpush1.msra.mxu0 0.0
    %890 = vmatprep.subr.mxu0 0.0
    %891 = vmatpush1.msra.mxu0 0.0
    %892 = vmatprep.subr.mxu0 0.0
    %893 = vmatpush1.msra.mxu0 0.0
    %894 = vmatprep.subr.mxu0 0.0
    %895 = vmatpush1.msra.mxu0 0.0
    %896 = vmatprep.subr.mxu0 0.0
    %897 = vmatpush1.msra.mxu0 0.0
    %898 = vmatprep.subr.mxu0 0.0
    %899 = vmatpush1.msra.mxu0 0.0
    %900 = vmatprep.subr.mxu0 0.0
    %901 = vmatpush1.msra.mxu0 0.0
    %902 = vmatprep.subr.mxu0 0.0
    %903 = vmatpush1.msra.mxu0 0.0
    %904 = vmatprep.subr.mxu0 0.0
    %905 = vmatpush1.msra.mxu0 0.0
    %906 = vmatprep.subr.mxu0 0.0
    %907 = vmatpush1.msra.mxu0 %v632
    %908 = vmatprep.subr.mxu0 0.0
    %909 = vmatpush1.msra.mxu0 %v631
    %910 = vmatprep.subr.mxu0 0.0
    %911 = vmatpush1.msra.mxu0 %v630
    %912 = vmatprep.subr.mxu0 0.0
    %913 = vmatpush1.msra.mxu0 %v629
    %914 = vmatprep.subr.mxu0 0.0
    %915 = vmatpush2.msra.mxu0 0.0
    %916 = vmatprep.subr.mxu0 0.0
    %917 = vmatpush2.msra.mxu0 0.0
    %918 = vmatprep.subr.mxu0 0.0
    %919 = vmatpush2.msra.mxu0 0.0
    %920 = vmatprep.subr.mxu0 0.0
    %921 = vmatpush2.msra.mxu0 0.0
    %922 = vmatprep.subr.mxu0 0.0
    %923 = vmatpush2.msra.mxu0 0.0
    %924 = vmatprep.subr.mxu0 0.0
    %925 = vmatpush2.msra.mxu0 0.0
    %926 = vmatprep.subr.mxu0 0.0
    %927 = vmatpush2.msra.mxu0 0.0
    %928 = vmatprep.subr.mxu0 0.0
    %929 = vmatpush2.msra.mxu0 0.0
    %930 = vmatprep.subr.mxu0 0.0
    %931 = vmatpush2.msra.mxu0 0.0
    %932 = vmatprep.subr.mxu0 0.0
    %933 = vmatpush2.msra.mxu0 0.0
    %934 = vmatprep.subr.mxu0 0.0
    %935 = vmatpush2.msra.mxu0 0.0
    %936 = vmatprep.subr.mxu0 0.0
    %937 = vmatpush2.msra.mxu0 0.0
    %938 = vmatprep.subr.mxu0 0.0
    %939 = vmatpush2.msra.mxu0 0.0
    %940 = vmatprep.subr.mxu0 0.0
    %941 = vmatpush2.msra.mxu0 0.0
    %942 = vmatprep.subr.mxu0 0.0
    %943 = vmatpush2.msra.mxu0 0.0
    %944 = vmatprep.subr.mxu0 0.0
    %945 = vmatpush2.msra.mxu0 0.0
    %946 = vmatprep.mubr.f32.mxu0 0.0
    %947 = vmatmul.mubr.f32.gmra.mxu0 %v651
    %v948 = vpop.f32.mrf.mxu0
    %v949 = vadd.f32 0.0, %v948
    %v950 = vpop.f32.mrf.mxu0
    %951 = vdwg.mxu0
    %v952 = vadd.f32 %v881, %v949
    %v953 = vxor.u32 %v952, 2147483648
    %v954 = vmul.f32 %v953, 1.442695
    %v955 = vpow.pop %v954
    %v956 = vadd.f32 %v955, 1.0
    %v957 = vrcp.pop %v956
    %v958 = vmul.f32 1.0, %v957
    %v959 = vmul.f32 %v807, 0.0
    %v960 = vmul.f32 %v729, %v880
    %v961 = vadd.f32 %v959, %v960
    %v962 = vtanh.pop %v961
    %v963 = vmul.f32 %v958, %v962
    %964 = vst.msk [vmem:[#allocation10] sm:$0xff] %vm392, %v963
    %s965 = scalar_lea.vmem [#allocation6], 56
    %v966 = vld [vmem:[%s965] sm:$0xff]
    %967 = vmatprep.subr.mxu0 0.0
    %968 = vmatpush1.msra.mxu0 0.0
    %969 = vmatprep.subr.mxu0 0.0
    %970 = vmatpush1.msra.mxu0 0.0
    %971 = vmatprep.subr.mxu0 0.0
    %972 = vmatpush1.msra.mxu0 0.0
    %973 = vmatprep.subr.mxu0 0.0
    %974 = vmatpush1.msra.mxu0 0.0
    %975 = vmatprep.subr.mxu0 0.0
    %976 = vmatpush1.msra.mxu0 0.0
    %977 = vmatprep.subr.mxu0 0.0
    %978 = vmatpush1.msra.mxu0 0.0
    %979 = vmatprep.subr.mxu0 0.0
    %980 = vmatpush1.msra.mxu0 0.0
    %981 = vmatprep.subr.mxu0 0.0
    %982 = vmatpush1.msra.mxu0 0.0
    %983 = vmatprep.subr.mxu0 0.0
    %984 = vmatpush1.msra.mxu0 0.0
    %985 = vmatprep.subr.mxu0 0.0
    %986 = vmatpush1.msra.mxu0 0.0
    %987 = vmatprep.subr.mxu0 0.0
    %988 = vmatpush1.msra.mxu0 0.0
    %989 = vmatprep.subr.mxu0 0.0
    %990 = vmatpush1.msra.mxu0 0.0
    %991 = vmatprep.subr.mxu0 0.0
    %992 = vmatpush1.msra.mxu0 %v636
    %993 = vmatprep.subr.mxu0 0.0
    %994 = vmatpush1.msra.mxu0 %v635
    %995 = vmatprep.subr.mxu0 0.0
    %996 = vmatpush1.msra.mxu0 %v634
    %997 = vmatprep.subr.mxu0 0.0
    %998 = vmatpush1.msra.mxu0 %v633
    %999 = vmatprep.subr.mxu0 0.0
    %1000 = vmatpush2.msra.mxu0 0.0
    %1001 = vmatprep.subr.mxu0 0.0
    %1002 = vmatpush2.msra.mxu0 0.0
    %1003 = vmatprep.subr.mxu0 0.0
    %1004 = vmatpush2.msra.mxu0 0.0
    %1005 = vmatprep.subr.mxu0 0.0
    %1006 = vmatpush2.msra.mxu0 0.0
    %1007 = vmatprep.subr.mxu0 0.0
    %1008 = vmatpush2.msra.mxu0 0.0
    %1009 = vmatprep.subr.mxu0 0.0
    %1010 = vmatpush2.msra.mxu0 0.0
    %1011 = vmatprep.subr.mxu0 0.0
    %1012 = vmatpush2.msra.mxu0 0.0
    %1013 = vmatprep.subr.mxu0 0.0
    %1014 = vmatpush2.msra.mxu0 0.0
    %1015 = vmatprep.subr.mxu0 0.0
    %1016 = vmatpush2.msra.mxu0 0.0
    %1017 = vmatprep.subr.mxu0 0.0
    %1018 = vmatpush2.msra.mxu0 0.0
    %1019 = vmatprep.subr.mxu0 0.0
    %1020 = vmatpush2.msra.mxu0 0.0
    %1021 = vmatprep.subr.mxu0 0.0
    %1022 = vmatpush2.msra.mxu0 0.0
    %1023 = vmatprep.subr.mxu0 0.0
    %1024 = vmatpush2.msra.mxu0 0.0
    %1025 = vmatprep.subr.mxu0 0.0
    %1026 = vmatpush2.msra.mxu0 0.0
    %1027 = vmatprep.subr.mxu0 0.0
    %1028 = vmatpush2.msra.mxu0 0.0
    %1029 = vmatprep.subr.mxu0 0.0
    %1030 = vmatpush2.msra.mxu0 0.0
    %1031 = vmatprep.mubr.f32.mxu0 0.0
    %1032 = vmatmul.mubr.f32.gmra.mxu0 %v651
    %v1033 = vpop.f32.mrf.mxu0
    %v1034 = vadd.f32 0.0, %v1033
    %v1035 = vpop.f32.mrf.mxu0
    %1036 = vdwg.mxu0
    %v1037 = vadd.f32 %v966, %v1034
    %v1038 = vxor.u32 %v1037, 2147483648
    %v1039 = vmul.f32 %v1038, 1.442695
    %v1040 = vpow.pop %v1039
    %v1041 = vadd.f32 %v1040, 1.0
    %v1042 = vrcp.pop %v1041
    %v1043 = vmul.f32 1.0, %v1042
    %s1044 = scalar_lea.vmem [#allocation7], 56
    %v1045 = vld [vmem:[%s1044] sm:$0xff]
    %1046 = vmatprep.subr.mxu0 0.0
    %1047 = vmatpush1.msra.mxu0 0.0
    %1048 = vmatprep.subr.mxu0 0.0
    %1049 = vmatpush1.msra.mxu0 0.0
    %1050 = vmatprep.subr.mxu0 0.0
    %1051 = vmatpush1.msra.mxu0 0.0
    %1052 = vmatprep.subr.mxu0 0.0
    %1053 = vmatpush1.msra.mxu0 0.0
    %1054 = vmatprep.subr.mxu0 0.0
    %1055 = vmatpush1.msra.mxu0 0.0
    %1056 = vmatprep.subr.mxu0 0.0
    %1057 = vmatpush1.msra.mxu0 0.0
    %1058 = vmatprep.subr.mxu0 0.0
    %1059 = vmatpush1.msra.mxu0 0.0
    %1060 = vmatprep.subr.mxu0 0.0
    %1061 = vmatpush1.msra.mxu0 0.0
    %1062 = vmatprep.subr.mxu0 0.0
    %1063 = vmatpush1.msra.mxu0 0.0
    %1064 = vmatprep.subr.mxu0 0.0
    %1065 = vmatpush1.msra.mxu0 0.0
    %1066 = vmatprep.subr.mxu0 0.0
    %1067 = vmatpush1.msra.mxu0 0.0
    %1068 = vmatprep.subr.mxu0 0.0
    %1069 = vmatpush1.msra.mxu0 0.0
    %1070 = vmatprep.subr.mxu0 0.0
    %1071 = vmatpush1.msra.mxu0 %v640
    %1072 = vmatprep.subr.mxu0 0.0
    %1073 = vmatpush1.msra.mxu0 %v639
    %1074 = vmatprep.subr.mxu0 0.0
    %1075 = vmatpush1.msra.mxu0 %v638
    %1076 = vmatprep.subr.mxu0 0.0
    %1077 = vmatpush1.msra.mxu0 %v637
    %1078 = vmatprep.subr.mxu0 0.0
    %1079 = vmatpush2.msra.mxu0 0.0
    %1080 = vmatprep.subr.mxu0 0.0
    %1081 = vmatpush2.msra.mxu0 0.0
    %1082 = vmatprep.subr.mxu0 0.0
    %1083 = vmatpush2.msra.mxu0 0.0
    %1084 = vmatprep.subr.mxu0 0.0
    %1085 = vmatpush2.msra.mxu0 0.0
    %1086 = vmatprep.subr.mxu0 0.0
    %1087 = vmatpush2.msra.mxu0 0.0
    %1088 = vmatprep.subr.mxu0 0.0
    %1089 = vmatpush2.msra.mxu0 0.0
    %1090 = vmatprep.subr.mxu0 0.0
    %1091 = vmatpush2.msra.mxu0 0.0
    %1092 = vmatprep.subr.mxu0 0.0
    %1093 = vmatpush2.msra.mxu0 0.0
    %1094 = vmatprep.subr.mxu0 0.0
    %1095 = vmatpush2.msra.mxu0 0.0
    %1096 = vmatprep.subr.mxu0 0.0
    %1097 = vmatpush2.msra.mxu0 0.0
    %1098 = vmatprep.subr.mxu0 0.0
    %1099 = vmatpush2.msra.mxu0 0.0
    %1100 = vmatprep.subr.mxu0 0.0
    %1101 = vmatpush2.msra.mxu0 0.0
    %1102 = vmatprep.subr.mxu0 0.0
    %1103 = vmatpush2.msra.mxu0 0.0
    %1104 = vmatprep.subr.mxu0 0.0
    %1105 = vmatpush2.msra.mxu0 0.0
    %1106 = vmatprep.subr.mxu0 0.0
    %1107 = vmatpush2.msra.mxu0 0.0
    %1108 = vmatprep.subr.mxu0 0.0
    %1109 = vmatpush2.msra.mxu0 0.0
    %1110 = vmatprep.mubr.f32.mxu0 0.0
    %1111 = vmatmul.mubr.f32.gmra.mxu0 %v651
    %v1112 = vpop.f32.mrf.mxu0
    %v1113 = vadd.f32 0.0, %v1112
    %v1114 = vpop.f32.mrf.mxu0
    %1115 = vdwg.mxu0
    %v1116 = vadd.f32 %v1045, %v1113
    %v1117 = vxor.u32 %v1116, 2147483648
    %v1118 = vmul.f32 %v1117, 1.442695
    %v1119 = vpow.pop %v1118
    %v1120 = vadd.f32 %v1119, 1.0
    %v1121 = vrcp.pop %v1120
    %v1122 = vmul.f32 1.0, %v1121
    %s1123 = scalar_lea.vmem [#allocation8], 56
    %v1124 = vld [vmem:[%s1123] sm:$0xff]
    %1125 = vmatprep.subr.mxu0 0.0
    %1126 = vmatpush1.msra.mxu0 0.0
    %1127 = vmatprep.subr.mxu0 0.0
    %1128 = vmatpush1.msra.mxu0 0.0
    %1129 = vmatprep.subr.mxu0 0.0
    %1130 = vmatpush1.msra.mxu0 0.0
    %1131 = vmatprep.subr.mxu0 0.0
    %1132 = vmatpush1.msra.mxu0 0.0
    %1133 = vmatprep.subr.mxu0 0.0
    %1134 = vmatpush1.msra.mxu0 0.0
    %1135 = vmatprep.subr.mxu0 0.0
    %1136 = vmatpush1.msra.mxu0 0.0
    %1137 = vmatprep.subr.mxu0 0.0
    %1138 = vmatpush1.msra.mxu0 0.0
    %1139 = vmatprep.subr.mxu0 0.0
    %1140 = vmatpush1.msra.mxu0 0.0
    %1141 = vmatprep.subr.mxu0 0.0
    %1142 = vmatpush1.msra.mxu0 0.0
    %1143 = vmatprep.subr.mxu0 0.0
    %1144 = vmatpush1.msra.mxu0 0.0
    %1145 = vmatprep.subr.mxu0 0.0
    %1146 = vmatpush1.msra.mxu0 0.0
    %1147 = vmatprep.subr.mxu0 0.0
    %1148 = vmatpush1.msra.mxu0 0.0
    %1149 = vmatprep.subr.mxu0 0.0
    %1150 = vmatpush1.msra.mxu0 %v644
    %1151 = vmatprep.subr.mxu0 0.0
    %1152 = vmatpush1.msra.mxu0 %v643
    %1153 = vmatprep.subr.mxu0 0.0
    %1154 = vmatpush1.msra.mxu0 %v642
    %1155 = vmatprep.subr.mxu0 0.0
    %1156 = vmatpush1.msra.mxu0 %v641
    %1157 = vmatprep.subr.mxu0 0.0
    %1158 = vmatpush2.msra.mxu0 0.0
    %1159 = vmatprep.subr.mxu0 0.0
    %1160 = vmatpush2.msra.mxu0 0.0
    %1161 = vmatprep.subr.mxu0 0.0
    %1162 = vmatpush2.msra.mxu0 0.0
    %1163 = vmatprep.subr.mxu0 0.0
    %1164 = vmatpush2.msra.mxu0 0.0
    %1165 = vmatprep.subr.mxu0 0.0
    %1166 = vmatpush2.msra.mxu0 0.0
    %1167 = vmatprep.subr.mxu0 0.0
    %1168 = vmatpush2.msra.mxu0 0.0
    %1169 = vmatprep.subr.mxu0 0.0
    %1170 = vmatpush2.msra.mxu0 0.0
    %1171 = vmatprep.subr.mxu0 0.0
    %1172 = vmatpush2.msra.mxu0 0.0
    %1173 = vmatprep.subr.mxu0 0.0
    %1174 = vmatpush2.msra.mxu0 0.0
    %1175 = vmatprep.subr.mxu0 0.0
    %1176 = vmatpush2.msra.mxu0 0.0
    %1177 = vmatprep.subr.mxu0 0.0
    %1178 = vmatpush2.msra.mxu0 0.0
    %1179 = vmatprep.subr.mxu0 0.0
    %1180 = vmatpush2.msra.mxu0 0.0
    %1181 = vmatprep.subr.mxu0 0.0
    %1182 = vmatpush2.msra.mxu0 0.0
    %1183 = vmatprep.subr.mxu0 0.0
    %1184 = vmatpush2.msra.mxu0 0.0
    %1185 = vmatprep.subr.mxu0 0.0
    %1186 = vmatpush2.msra.mxu0 0.0
    %1187 = vmatprep.subr.mxu0 0.0
    %1188 = vmatpush2.msra.mxu0 0.0
    %1189 = vmatprep.mubr.f32.mxu0 0.0
    %1190 = vmatmul.mubr.f32.gmra.mxu0 %v651
    %v1191 = vpop.f32.mrf.mxu0
    %v1192 = vadd.f32 0.0, %v1191
    %v1193 = vpop.f32.mrf.mxu0
    %1194 = vdwg.mxu0
    %v1195 = vadd.f32 %v1124, %v1192
    %v1196 = vtanh.pop %v1195
    %s1197 = scalar_lea.vmem [#allocation9], 56
    %v1198 = vld [vmem:[%s1197] sm:$0xff]
    %1199 = vmatprep.subr.mxu0 0.0
    %1200 = vmatpush1.msra.mxu0 0.0
    %1201 = vmatprep.subr.mxu0 0.0
    %1202 = vmatpush1.msra.mxu0 0.0
    %1203 = vmatprep.subr.mxu0 0.0
    %1204 = vmatpush1.msra.mxu0 0.0
    %1205 = vmatprep.subr.mxu0 0.0
    %1206 = vmatpush1.msra.mxu0 0.0
    %1207 = vmatprep.subr.mxu0 0.0
    %1208 = vmatpush1.msra.mxu0 0.0
    %1209 = vmatprep.subr.mxu0 0.0
    %1210 = vmatpush1.msra.mxu0 0.0
    %1211 = vmatprep.subr.mxu0 0.0
    %1212 = vmatpush1.msra.mxu0 0.0
    %1213 = vmatprep.subr.mxu0 0.0
    %1214 = vmatpush1.msra.mxu0 0.0
    %1215 = vmatprep.subr.mxu0 0.0
    %1216 = vmatpush1.msra.mxu0 0.0
    %1217 = vmatprep.subr.mxu0 0.0
    %1218 = vmatpush1.msra.mxu0 0.0
    %1219 = vmatprep.subr.mxu0 0.0
    %1220 = vmatpush1.msra.mxu0 0.0
    %1221 = vmatprep.subr.mxu0 0.0
    %1222 = vmatpush1.msra.mxu0 0.0
    %1223 = vmatprep.subr.mxu0 0.0
    %1224 = vmatpush1.msra.mxu0 %v648
    %1225 = vmatprep.subr.mxu0 0.0
    %1226 = vmatpush1.msra.mxu0 %v647
    %1227 = vmatprep.subr.mxu0 0.0
    %1228 = vmatpush1.msra.mxu0 %v646
    %1229 = vmatprep.subr.mxu0 0.0
    %1230 = vmatpush1.msra.mxu0 %v645
    %1231 = vmatprep.subr.mxu0 0.0
    %1232 = vmatpush2.msra.mxu0 0.0
    %1233 = vmatprep.subr.mxu0 0.0
    %1234 = vmatpush2.msra.mxu0 0.0
    %1235 = vmatprep.subr.mxu0 0.0
    %1236 = vmatpush2.msra.mxu0 0.0
    %1237 = vmatprep.subr.mxu0 0.0
    %1238 = vmatpush2.msra.mxu0 0.0
    %1239 = vmatprep.subr.mxu0 0.0
    %1240 = vmatpush2.msra.mxu0 0.0
    %1241 = vmatprep.subr.mxu0 0.0
    %1242 = vmatpush2.msra.mxu0 0.0
    %1243 = vmatprep.subr.mxu0 0.0
    %1244 = vmatpush2.msra.mxu0 0.0
    %1245 = vmatprep.subr.mxu0 0.0
    %1246 = vmatpush2.msra.mxu0 0.0
    %1247 = vmatprep.subr.mxu0 0.0
    %1248 = vmatpush2.msra.mxu0 0.0
    %1249 = vmatprep.subr.mxu0 0.0
    %1250 = vmatpush2.msra.mxu0 0.0
    %1251 = vmatprep.subr.mxu0 0.0
    %1252 = vmatpush2.msra.mxu0 0.0
    %1253 = vmatprep.subr.mxu0 0.0
    %1254 = vmatpush2.msra.mxu0 0.0
    %1255 = vmatprep.subr.mxu0 0.0
    %1256 = vmatpush2.msra.mxu0 0.0
    %1257 = vmatprep.subr.mxu0 0.0
    %1258 = vmatpush2.msra.mxu0 0.0
    %1259 = vmatprep.subr.mxu0 0.0
    %1260 = vmatpush2.msra.mxu0 0.0
    %1261 = vmatprep.subr.mxu0 0.0
    %1262 = vmatpush2.msra.mxu0 0.0
    %1263 = vmatprep.mubr.f32.mxu0 0.0
    %1264 = vmatmul.mubr.f32.gmra.mxu0 %v651
    %v1265 = vpop.f32.mrf.mxu0
    %v1266 = vadd.f32 0.0, %v1265
    %v1267 = vpop.f32.mrf.mxu0
    %1268 = vdwg.mxu0
    %v1269 = vadd.f32 %v1198, %v1266
    %v1270 = vxor.u32 %v1269, 2147483648
    %v1271 = vmul.f32 %v1270, 1.442695
    %v1272 = vpow.pop %v1271
    %v1273 = vadd.f32 %v1272, 1.0
    %v1274 = vrcp.pop %v1273
    %v1275 = vmul.f32 1.0, %v1274
    %v1276 = vmul.f32 %v1122, 0.0
    %v1277 = vmul.f32 %v1043, %v1196
    %v1278 = vadd.f32 %v1276, %v1277
    %v1279 = vtanh.pop %v1278
    %v1280 = vmul.f32 %v1275, %v1279
    %s1281 = scalar_lea.vmem [#allocation11], 56
    %1282 = vst.msk [vmem:[%s1281] sm:$0xff] %vm392, %v1280
    %s1283 = scalar_lea.vmem [#allocation2], 8
    %v1284 = vld [vmem:[%s1283] sm:$0xff]
    %v1286 = vsel %vm392, %v963, 0
    %1288 = vmatprep.subr.mxu0 0.0
    %1289 = vmatpush1.msra.mxu0 0.0
    %1290 = vmatprep.subr.mxu0 0.0
    %1291 = vmatpush1.msra.mxu0 0.0
    %1292 = vmatprep.subr.mxu0 0.0
    %1293 = vmatpush1.msra.mxu0 0.0
    %1294 = vmatprep.subr.mxu0 0.0
    %1295 = vmatpush1.msra.mxu0 0.0
    %1296 = vmatprep.subr.mxu0 0.0
    %1297 = vmatpush1.msra.mxu0 0.0
    %1298 = vmatprep.subr.mxu0 0.0
    %1299 = vmatpush1.msra.mxu0 0.0
    %1300 = vmatprep.subr.mxu0 0.0
    %1301 = vmatpush1.msra.mxu0 0.0
    %1302 = vmatprep.subr.mxu0 0.0
    %1303 = vmatpush1.msra.mxu0 0.0
    %1304 = vmatprep.subr.mxu0 0.0
    %1305 = vmatpush1.msra.mxu0 0.0
    %1306 = vmatprep.subr.mxu0 0.0
    %1307 = vmatpush1.msra.mxu0 0.0
    %1308 = vmatprep.subr.mxu0 0.0
    %1309 = vmatpush1.msra.mxu0 0.0
    %1310 = vmatprep.subr.mxu0 0.0
    %1311 = vmatpush1.msra.mxu0 0.0
    %1312 = vmatprep.subr.mxu0 0.0
    %1313 = vmatpush1.msra.mxu0 %v620
    %1314 = vmatprep.subr.mxu0 0.0
    %1315 = vmatpush1.msra.mxu0 %v619
    %1316 = vmatprep.subr.mxu0 0.0
    %1317 = vmatpush1.msra.mxu0 %v618
    %1318 = vmatprep.subr.mxu0 0.0
    %1319 = vmatpush1.msra.mxu0 %v617
    %1320 = vmatprep.subr.mxu0 0.0
    %1321 = vmatpush2.msra.mxu0 0.0
    %1322 = vmatprep.subr.mxu0 0.0
    %1323 = vmatpush2.msra.mxu0 0.0
    %1324 = vmatprep.subr.mxu0 0.0
    %1325 = vmatpush2.msra.mxu0 0.0
    %1326 = vmatprep.subr.mxu0 0.0
    %1327 = vmatpush2.msra.mxu0 0.0
    %1328 = vmatprep.subr.mxu0 0.0
    %1329 = vmatpush2.msra.mxu0 0.0
    %1330 = vmatprep.subr.mxu0 0.0
    %1331 = vmatpush2.msra.mxu0 0.0
    %1332 = vmatprep.subr.mxu0 0.0
    %1333 = vmatpush2.msra.mxu0 0.0
    %1334 = vmatprep.subr.mxu0 0.0
    %1335 = vmatpush2.msra.mxu0 0.0
    %1336 = vmatprep.subr.mxu0 0.0
    %1337 = vmatpush2.msra.mxu0 0.0
    %1338 = vmatprep.subr.mxu0 0.0
    %1339 = vmatpush2.msra.mxu0 0.0
    %1340 = vmatprep.subr.mxu0 0.0
    %1341 = vmatpush2.msra.mxu0 0.0
    %1342 = vmatprep.subr.mxu0 0.0
    %1343 = vmatpush2.msra.mxu0 0.0
    %1344 = vmatprep.subr.mxu0 0.0
    %1345 = vmatpush2.msra.mxu0 0.0
    %1346 = vmatprep.subr.mxu0 0.0
    %1347 = vmatpush2.msra.mxu0 0.0
    %1348 = vmatprep.subr.mxu0 0.0
    %1349 = vmatpush2.msra.mxu0 0.0
    %1350 = vmatprep.subr.mxu0 0.0
    %1351 = vmatpush2.msra.mxu0 0.0
    %1352 = vmatprep.mubr.f32.mxu0 0.0
    %1353 = vmatmul.mubr.f32.gmra.mxu0 %v1286
    %v1354 = vpop.f32.mrf.mxu0
    %v1355 = vadd.f32 0.0, %v1354
    %v1356 = vpop.f32.mrf.mxu0
    %1357 = vdwg.mxu0
    %v1358 = vadd.f32 %v1284, %v1355
    %v1359 = vxor.u32 %v1358, 2147483648
    %v1360 = vmul.f32 %v1359, 1.442695
    %v1361 = vpow.pop %v1360
    %v1362 = vadd.f32 %v1361, 1.0
    %v1363 = vrcp.pop %v1362
    %v1364 = vmul.f32 1.0, %v1363
    %s1365 = scalar_lea.vmem [#allocation3], 8
    %v1366 = vld [vmem:[%s1365] sm:$0xff]
    %1367 = vmatprep.subr.mxu0 0.0
    %1368 = vmatpush1.msra.mxu0 0.0
    %1369 = vmatprep.subr.mxu0 0.0
    %1370 = vmatpush1.msra.mxu0 0.0
    %1371 = vmatprep.subr.mxu0 0.0
    %1372 = vmatpush1.msra.mxu0 0.0
    %1373 = vmatprep.subr.mxu0 0.0
    %1374 = vmatpush1.msra.mxu0 0.0
    %1375 = vmatprep.subr.mxu0 0.0
    %1376 = vmatpush1.msra.mxu0 0.0
    %1377 = vmatprep.subr.mxu0 0.0
    %1378 = vmatpush1.msra.mxu0 0.0
    %1379 = vmatprep.subr.mxu0 0.0
    %1380 = vmatpush1.msra.mxu0 0.0
    %1381 = vmatprep.subr.mxu0 0.0
    %1382 = vmatpush1.msra.mxu0 0.0
    %1383 = vmatprep.subr.mxu0 0.0
    %1384 = vmatpush1.msra.mxu0 0.0
    %1385 = vmatprep.subr.mxu0 0.0
    %1386 = vmatpush1.msra.mxu0 0.0
    %1387 = vmatprep.subr.mxu0 0.0
    %1388 = vmatpush1.msra.mxu0 0.0
    %1389 = vmatprep.subr.mxu0 0.0
    %1390 = vmatpush1.msra.mxu0 0.0
    %1391 = vmatprep.subr.mxu0 0.0
    %1392 = vmatpush1.msra.mxu0 %v624
    %1393 = vmatprep.subr.mxu0 0.0
    %1394 = vmatpush1.msra.mxu0 %v623
    %1395 = vmatprep.subr.mxu0 0.0
    %1396 = vmatpush1.msra.mxu0 %v622
    %1397 = vmatprep.subr.mxu0 0.0
    %1398 = vmatpush1.msra.mxu0 %v621
    %1399 = vmatprep.subr.mxu0 0.0
    %1400 = vmatpush2.msra.mxu0 0.0
    %1401 = vmatprep.subr.mxu0 0.0
    %1402 = vmatpush2.msra.mxu0 0.0
    %1403 = vmatprep.subr.mxu0 0.0
    %1404 = vmatpush2.msra.mxu0 0.0
    %1405 = vmatprep.subr.mxu0 0.0
    %1406 = vmatpush2.msra.mxu0 0.0
    %1407 = vmatprep.subr.mxu0 0.0
    %1408 = vmatpush2.msra.mxu0 0.0
    %1409 = vmatprep.subr.mxu0 0.0
    %1410 = vmatpush2.msra.mxu0 0.0
    %1411 = vmatprep.subr.mxu0 0.0
    %1412 = vmatpush2.msra.mxu0 0.0
    %1413 = vmatprep.subr.mxu0 0.0
    %1414 = vmatpush2.msra.mxu0 0.0
    %1415 = vmatprep.subr.mxu0 0.0
    %1416 = vmatpush2.msra.mxu0 0.0
    %1417 = vmatprep.subr.mxu0 0.0
    %1418 = vmatpush2.msra.mxu0 0.0
    %1419 = vmatprep.subr.mxu0 0.0
    %1420 = vmatpush2.msra.mxu0 0.0
    %1421 = vmatprep.subr.mxu0 0.0
    %1422 = vmatpush2.msra.mxu0 0.0
    %1423 = vmatprep.subr.mxu0 0.0
    %1424 = vmatpush2.msra.mxu0 0.0
    %1425 = vmatprep.subr.mxu0 0.0
    %1426 = vmatpush2.msra.mxu0 0.0
    %1427 = vmatprep.subr.mxu0 0.0
    %1428 = vmatpush2.msra.mxu0 0.0
    %1429 = vmatprep.subr.mxu0 0.0
    %1430 = vmatpush2.msra.mxu0 0.0
    %1431 = vmatprep.mubr.f32.mxu0 0.0
    %1432 = vmatmul.mubr.f32.gmra.mxu0 %v1286
    %v1433 = vpop.f32.mrf.mxu0
    %v1434 = vadd.f32 0.0, %v1433
    %v1435 = vpop.f32.mrf.mxu0
    %1436 = vdwg.mxu0
    %v1437 = vadd.f32 %v1366, %v1434
    %v1438 = vxor.u32 %v1437, 2147483648
    %v1439 = vmul.f32 %v1438, 1.442695
    %v1440 = vpow.pop %v1439
    %v1441 = vadd.f32 %v1440, 1.0
    %v1442 = vrcp.pop %v1441
    %v1443 = vmul.f32 1.0, %v1442
    %s1444 = scalar_lea.vmem [#allocation4], 8
    %v1445 = vld [vmem:[%s1444] sm:$0xff]
    %1446 = vmatprep.subr.mxu0 0.0
    %1447 = vmatpush1.msra.mxu0 0.0
    %1448 = vmatprep.subr.mxu0 0.0
    %1449 = vmatpush1.msra.mxu0 0.0
    %1450 = vmatprep.subr.mxu0 0.0
    %1451 = vmatpush1.msra.mxu0 0.0
    %1452 = vmatprep.subr.mxu0 0.0
    %1453 = vmatpush1.msra.mxu0 0.0
    %1454 = vmatprep.subr.mxu0 0.0
    %1455 = vmatpush1.msra.mxu0 0.0
    %1456 = vmatprep.subr.mxu0 0.0
    %1457 = vmatpush1.msra.mxu0 0.0
    %1458 = vmatprep.subr.mxu0 0.0
    %1459 = vmatpush1.msra.mxu0 0.0
    %1460 = vmatprep.subr.mxu0 0.0
    %1461 = vmatpush1.msra.mxu0 0.0
    %1462 = vmatprep.subr.mxu0 0.0
    %1463 = vmatpush1.msra.mxu0 0.0
    %1464 = vmatprep.subr.mxu0 0.0
    %1465 = vmatpush1.msra.mxu0 0.0
    %1466 = vmatprep.subr.mxu0 0.0
    %1467 = vmatpush1.msra.mxu0 0.0
    %1468 = vmatprep.subr.mxu0 0.0
    %1469 = vmatpush1.msra.mxu0 0.0
    %1470 = vmatprep.subr.mxu0 0.0
    %1471 = vmatpush1.msra.mxu0 %v628
    %1472 = vmatprep.subr.mxu0 0.0
    %1473 = vmatpush1.msra.mxu0 %v627
    %1474 = vmatprep.subr.mxu0 0.0
    %1475 = vmatpush1.msra.mxu0 %v626
    %1476 = vmatprep.subr.mxu0 0.0
    %1477 = vmatpush1.msra.mxu0 %v625
    %1478 = vmatprep.subr.mxu0 0.0
    %1479 = vmatpush2.msra.mxu0 0.0
    %1480 = vmatprep.subr.mxu0 0.0
    %1481 = vmatpush2.msra.mxu0 0.0
    %1482 = vmatprep.subr.mxu0 0.0
    %1483 = vmatpush2.msra.mxu0 0.0
    %1484 = vmatprep.subr.mxu0 0.0
    %1485 = vmatpush2.msra.mxu0 0.0
    %1486 = vmatprep.subr.mxu0 0.0
    %1487 = vmatpush2.msra.mxu0 0.0
    %1488 = vmatprep.subr.mxu0 0.0
    %1489 = vmatpush2.msra.mxu0 0.0
    %1490 = vmatprep.subr.mxu0 0.0
    %1491 = vmatpush2.msra.mxu0 0.0
    %1492 = vmatprep.subr.mxu0 0.0
    %1493 = vmatpush2.msra.mxu0 0.0
    %1494 = vmatprep.subr.mxu0 0.0
    %1495 = vmatpush2.msra.mxu0 0.0
    %1496 = vmatprep.subr.mxu0 0.0
    %1497 = vmatpush2.msra.mxu0 0.0
    %1498 = vmatprep.subr.mxu0 0.0
    %1499 = vmatpush2.msra.mxu0 0.0
    %1500 = vmatprep.subr.mxu0 0.0
    %1501 = vmatpush2.msra.mxu0 0.0
    %1502 = vmatprep.subr.mxu0 0.0
    %1503 = vmatpush2.msra.mxu0 0.0
    %1504 = vmatprep.subr.mxu0 0.0
    %1505 = vmatpush2.msra.mxu0 0.0
    %1506 = vmatprep.subr.mxu0 0.0
    %1507 = vmatpush2.msra.mxu0 0.0
    %1508 = vmatprep.subr.mxu0 0.0
    %1509 = vmatpush2.msra.mxu0 0.0
    %1510 = vmatprep.mubr.f32.mxu0 0.0
    %1511 = vmatmul.mubr.f32.gmra.mxu0 %v1286
    %v1512 = vpop.f32.mrf.mxu0
    %v1513 = vadd.f32 0.0, %v1512
    %v1514 = vpop.f32.mrf.mxu0
    %1515 = vdwg.mxu0
    %v1516 = vadd.f32 %v1445, %v1513
    %v1517 = vtanh.pop %v1516
    %s1518 = scalar_lea.vmem [#allocation5], 8
    %v1519 = vld [vmem:[%s1518] sm:$0xff]
    %1520 = vmatprep.subr.mxu0 0.0
    %1521 = vmatpush1.msra.mxu0 0.0
    %1522 = vmatprep.subr.mxu0 0.0
    %1523 = vmatpush1.msra.mxu0 0.0
    %1524 = vmatprep.subr.mxu0 0.0
    %1525 = vmatpush1.msra.mxu0 0.0
    %1526 = vmatprep.subr.mxu0 0.0
    %1527 = vmatpush1.msra.mxu0 0.0
    %1528 = vmatprep.subr.mxu0 0.0
    %1529 = vmatpush1.msra.mxu0 0.0
    %1530 = vmatprep.subr.mxu0 0.0
    %1531 = vmatpush1.msra.mxu0 0.0
    %1532 = vmatprep.subr.mxu0 0.0
    %1533 = vmatpush1.msra.mxu0 0.0
    %1534 = vmatprep.subr.mxu0 0.0
    %1535 = vmatpush1.msra.mxu0 0.0
    %1536 = vmatprep.subr.mxu0 0.0
    %1537 = vmatpush1.msra.mxu0 0.0
    %1538 = vmatprep.subr.mxu0 0.0
    %1539 = vmatpush1.msra.mxu0 0.0
    %1540 = vmatprep.subr.mxu0 0.0
    %1541 = vmatpush1.msra.mxu0 0.0
    %1542 = vmatprep.subr.mxu0 0.0
    %1543 = vmatpush1.msra.mxu0 0.0
    %1544 = vmatprep.subr.mxu0 0.0
    %1545 = vmatpush1.msra.mxu0 %v632
    %1546 = vmatprep.subr.mxu0 0.0
    %1547 = vmatpush1.msra.mxu0 %v631
    %1548 = vmatprep.subr.mxu0 0.0
    %1549 = vmatpush1.msra.mxu0 %v630
    %1550 = vmatprep.subr.mxu0 0.0
    %1551 = vmatpush1.msra.mxu0 %v629
    %1552 = vmatprep.subr.mxu0 0.0
    %1553 = vmatpush2.msra.mxu0 0.0
    %1554 = vmatprep.subr.mxu0 0.0
    %1555 = vmatpush2.msra.mxu0 0.0
    %1556 = vmatprep.subr.mxu0 0.0
    %1557 = vmatpush2.msra.mxu0 0.0
    %1558 = vmatprep.subr.mxu0 0.0
    %1559 = vmatpush2.msra.mxu0 0.0
    %1560 = vmatprep.subr.mxu0 0.0
    %1561 = vmatpush2.msra.mxu0 0.0
    %1562 = vmatprep.subr.mxu0 0.0
    %1563 = vmatpush2.msra.mxu0 0.0
    %1564 = vmatprep.subr.mxu0 0.0
    %1565 = vmatpush2.msra.mxu0 0.0
    %1566 = vmatprep.subr.mxu0 0.0
    %1567 = vmatpush2.msra.mxu0 0.0
    %1568 = vmatprep.subr.mxu0 0.0
    %1569 = vmatpush2.msra.mxu0 0.0
    %1570 = vmatprep.subr.mxu0 0.0
    %1571 = vmatpush2.msra.mxu0 0.0
    %1572 = vmatprep.subr.mxu0 0.0
    %1573 = vmatpush2.msra.mxu0 0.0
    %1574 = vmatprep.subr.mxu0 0.0
    %1575 = vmatpush2.msra.mxu0 0.0
    %1576 = vmatprep.subr.mxu0 0.0
    %1577 = vmatpush2.msra.mxu0 0.0
    %1578 = vmatprep.subr.mxu0 0.0
    %1579 = vmatpush2.msra.mxu0 0.0
    %1580 = vmatprep.subr.mxu0 0.0
    %1581 = vmatpush2.msra.mxu0 0.0
    %1582 = vmatprep.subr.mxu0 0.0
    %1583 = vmatpush2.msra.mxu0 0.0
    %1584 = vmatprep.mubr.f32.mxu0 0.0
    %1585 = vmatmul.mubr.f32.gmra.mxu0 %v1286
    %v1586 = vpop.f32.mrf.mxu0
    %v1587 = vadd.f32 0.0, %v1586
    %v1588 = vpop.f32.mrf.mxu0
    %1589 = vdwg.mxu0
    %v1590 = vadd.f32 %v1519, %v1587
    %v1591 = vxor.u32 %v1590, 2147483648
    %v1592 = vmul.f32 %v1591, 1.442695
    %v1593 = vpow.pop %v1592
    %v1594 = vadd.f32 %v1593, 1.0
    %v1595 = vrcp.pop %v1594
    %v1596 = vmul.f32 1.0, %v1595
    %v1597 = vmul.f32 %v1443, %v961
    %v1598 = vmul.f32 %v1364, %v1517
    %v1599 = vadd.f32 %v1597, %v1598
    %v1600 = vtanh.pop %v1599
    %v1601 = vmul.f32 %v1596, %v1600
    %s1602 = scalar_lea.vmem [#allocation10], 8
    %1603 = vst.msk [vmem:[%s1602] sm:$0xff] %vm392, %v1601
    %s1604 = scalar_lea.vmem [#allocation6], 48
    %v1605 = vld [vmem:[%s1604] sm:$0xff]
    %v1607 = vsel %vm392, %v1280, 0
    %1609 = vmatprep.subr.mxu0 0.0
    %1610 = vmatpush1.msra.mxu0 0.0
    %1611 = vmatprep.subr.mxu0 0.0
    %1612 = vmatpush1.msra.mxu0 0.0
    %1613 = vmatprep.subr.mxu0 0.0
    %1614 = vmatpush1.msra.mxu0 0.0
    %1615 = vmatprep.subr.mxu0 0.0
    %1616 = vmatpush1.msra.mxu0 0.0
    %1617 = vmatprep.subr.mxu0 0.0
    %1618 = vmatpush1.msra.mxu0 0.0
    %1619 = vmatprep.subr.mxu0 0.0
    %1620 = vmatpush1.msra.mxu0 0.0
    %1621 = vmatprep.subr.mxu0 0.0
    %1622 = vmatpush1.msra.mxu0 0.0
    %1623 = vmatprep.subr.mxu0 0.0
    %1624 = vmatpush1.msra.mxu0 0.0
    %1625 = vmatprep.subr.mxu0 0.0
    %1626 = vmatpush1.msra.mxu0 0.0
    %1627 = vmatprep.subr.mxu0 0.0
    %1628 = vmatpush1.msra.mxu0 0.0
    %1629 = vmatprep.subr.mxu0 0.0
    %1630 = vmatpush1.msra.mxu0 0.0
    %1631 = vmatprep.subr.mxu0 0.0
    %1632 = vmatpush1.msra.mxu0 0.0
    %1633 = vmatprep.subr.mxu0 0.0
    %1634 = vmatpush1.msra.mxu0 %v636
    %1635 = vmatprep.subr.mxu0 0.0
    %1636 = vmatpush1.msra.mxu0 %v635
    %1637 = vmatprep.subr.mxu0 0.0
    %1638 = vmatpush1.msra.mxu0 %v634
    %1639 = vmatprep.subr.mxu0 0.0
    %1640 = vmatpush1.msra.mxu0 %v633
    %1641 = vmatprep.subr.mxu0 0.0
    %1642 = vmatpush2.msra.mxu0 0.0
    %1643 = vmatprep.subr.mxu0 0.0
    %1644 = vmatpush2.msra.mxu0 0.0
    %1645 = vmatprep.subr.mxu0 0.0
    %1646 = vmatpush2.msra.mxu0 0.0
    %1647 = vmatprep.subr.mxu0 0.0
    %1648 = vmatpush2.msra.mxu0 0.0
    %1649 = vmatprep.subr.mxu0 0.0
    %1650 = vmatpush2.msra.mxu0 0.0
    %1651 = vmatprep.subr.mxu0 0.0
    %1652 = vmatpush2.msra.mxu0 0.0
    %1653 = vmatprep.subr.mxu0 0.0
    %1654 = vmatpush2.msra.mxu0 0.0
    %1655 = vmatprep.subr.mxu0 0.0
    %1656 = vmatpush2.msra.mxu0 0.0
    %1657 = vmatprep.subr.mxu0 0.0
    %1658 = vmatpush2.msra.mxu0 0.0
    %1659 = vmatprep.subr.mxu0 0.0
    %1660 = vmatpush2.msra.mxu0 0.0
    %1661 = vmatprep.subr.mxu0 0.0
    %1662 = vmatpush2.msra.mxu0 0.0
    %1663 = vmatprep.subr.mxu0 0.0
    %1664 = vmatpush2.msra.mxu0 0.0
    %1665 = vmatprep.subr.mxu0 0.0
    %1666 = vmatpush2.msra.mxu0 0.0
    %1667 = vmatprep.subr.mxu0 0.0
    %1668 = vmatpush2.msra.mxu0 0.0
    %1669 = vmatprep.subr.mxu0 0.0
    %1670 = vmatpush2.msra.mxu0 0.0
    %1671 = vmatprep.subr.mxu0 0.0
    %1672 = vmatpush2.msra.mxu0 0.0
    %1673 = vmatprep.mubr.f32.mxu0 0.0
    %1674 = vmatmul.mubr.f32.gmra.mxu0 %v1607
    %v1675 = vpop.f32.mrf.mxu0
    %v1676 = vadd.f32 0.0, %v1675
    %v1677 = vpop.f32.mrf.mxu0
    %1678 = vdwg.mxu0
    %v1679 = vadd.f32 %v1605, %v1676
    %v1680 = vxor.u32 %v1679, 2147483648
    %v1681 = vmul.f32 %v1680, 1.442695
    %v1682 = vpow.pop %v1681
    %v1683 = vadd.f32 %v1682, 1.0
    %v1684 = vrcp.pop %v1683
    %v1685 = vmul.f32 1.0, %v1684
    %s1686 = scalar_lea.vmem [#allocation7], 48
    %v1687 = vld [vmem:[%s1686] sm:$0xff]
    %1688 = vmatprep.subr.mxu0 0.0
    %1689 = vmatpush1.msra.mxu0 0.0
    %1690 = vmatprep.subr.mxu0 0.0
    %1691 = vmatpush1.msra.mxu0 0.0
    %1692 = vmatprep.subr.mxu0 0.0
    %1693 = vmatpush1.msra.mxu0 0.0
    %1694 = vmatprep.subr.mxu0 0.0
    %1695 = vmatpush1.msra.mxu0 0.0
    %1696 = vmatprep.subr.mxu0 0.0
    %1697 = vmatpush1.msra.mxu0 0.0
    %1698 = vmatprep.subr.mxu0 0.0
    %1699 = vmatpush1.msra.mxu0 0.0
    %1700 = vmatprep.subr.mxu0 0.0
    %1701 = vmatpush1.msra.mxu0 0.0
    %1702 = vmatprep.subr.mxu0 0.0
    %1703 = vmatpush1.msra.mxu0 0.0
    %1704 = vmatprep.subr.mxu0 0.0
    %1705 = vmatpush1.msra.mxu0 0.0
    %1706 = vmatprep.subr.mxu0 0.0
    %1707 = vmatpush1.msra.mxu0 0.0
    %1708 = vmatprep.subr.mxu0 0.0
    %1709 = vmatpush1.msra.mxu0 0.0
    %1710 = vmatprep.subr.mxu0 0.0
    %1711 = vmatpush1.msra.mxu0 0.0
    %1712 = vmatprep.subr.mxu0 0.0
    %1713 = vmatpush1.msra.mxu0 %v640
    %1714 = vmatprep.subr.mxu0 0.0
    %1715 = vmatpush1.msra.mxu0 %v639
    %1716 = vmatprep.subr.mxu0 0.0
    %1717 = vmatpush1.msra.mxu0 %v638
    %1718 = vmatprep.subr.mxu0 0.0
    %1719 = vmatpush1.msra.mxu0 %v637
    %1720 = vmatprep.subr.mxu0 0.0
    %1721 = vmatpush2.msra.mxu0 0.0
    %1722 = vmatprep.subr.mxu0 0.0
    %1723 = vmatpush2.msra.mxu0 0.0
    %1724 = vmatprep.subr.mxu0 0.0
    %1725 = vmatpush2.msra.mxu0 0.0
    %1726 = vmatprep.subr.mxu0 0.0
    %1727 = vmatpush2.msra.mxu0 0.0
    %1728 = vmatprep.subr.mxu0 0.0
    %1729 = vmatpush2.msra.mxu0 0.0
    %1730 = vmatprep.subr.mxu0 0.0
    %1731 = vmatpush2.msra.mxu0 0.0
    %1732 = vmatprep.subr.mxu0 0.0
    %1733 = vmatpush2.msra.mxu0 0.0
    %1734 = vmatprep.subr.mxu0 0.0
    %1735 = vmatpush2.msra.mxu0 0.0
    %1736 = vmatprep.subr.mxu0 0.0
    %1737 = vmatpush2.msra.mxu0 0.0
    %1738 = vmatprep.subr.mxu0 0.0
    %1739 = vmatpush2.msra.mxu0 0.0
    %1740 = vmatprep.subr.mxu0 0.0
    %1741 = vmatpush2.msra.mxu0 0.0
    %1742 = vmatprep.subr.mxu0 0.0
    %1743 = vmatpush2.msra.mxu0 0.0
    %1744 = vmatprep.subr.mxu0 0.0
    %1745 = vmatpush2.msra.mxu0 0.0
    %1746 = vmatprep.subr.mxu0 0.0
    %1747 = vmatpush2.msra.mxu0 0.0
    %1748 = vmatprep.subr.mxu0 0.0
    %1749 = vmatpush2.msra.mxu0 0.0
    %1750 = vmatprep.subr.mxu0 0.0
    %1751 = vmatpush2.msra.mxu0 0.0
    %1752 = vmatprep.mubr.f32.mxu0 0.0
    %1753 = vmatmul.mubr.f32.gmra.mxu0 %v1607
    %v1754 = vpop.f32.mrf.mxu0
    %v1755 = vadd.f32 0.0, %v1754
    %v1756 = vpop.f32.mrf.mxu0
    %1757 = vdwg.mxu0
    %v1758 = vadd.f32 %v1687, %v1755
    %v1759 = vxor.u32 %v1758, 2147483648
    %v1760 = vmul.f32 %v1759, 1.442695
    %v1761 = vpow.pop %v1760
    %v1762 = vadd.f32 %v1761, 1.0
    %v1763 = vrcp.pop %v1762
    %v1764 = vmul.f32 1.0, %v1763
    %s1765 = scalar_lea.vmem [#allocation8], 48
    %v1766 = vld [vmem:[%s1765] sm:$0xff]
    %1767 = vmatprep.subr.mxu0 0.0
    %1768 = vmatpush1.msra.mxu0 0.0
    %1769 = vmatprep.subr.mxu0 0.0
    %1770 = vmatpush1.msra.mxu0 0.0
    %1771 = vmatprep.subr.mxu0 0.0
    %1772 = vmatpush1.msra.mxu0 0.0
    %1773 = vmatprep.subr.mxu0 0.0
    %1774 = vmatpush1.msra.mxu0 0.0
    %1775 = vmatprep.subr.mxu0 0.0
    %1776 = vmatpush1.msra.mxu0 0.0
    %1777 = vmatprep.subr.mxu0 0.0
    %1778 = vmatpush1.msra.mxu0 0.0
    %1779 = vmatprep.subr.mxu0 0.0
    %1780 = vmatpush1.msra.mxu0 0.0
    %1781 = vmatprep.subr.mxu0 0.0
    %1782 = vmatpush1.msra.mxu0 0.0
    %1783 = vmatprep.subr.mxu0 0.0
    %1784 = vmatpush1.msra.mxu0 0.0
    %1785 = vmatprep.subr.mxu0 0.0
    %1786 = vmatpush1.msra.mxu0 0.0
    %1787 = vmatprep.subr.mxu0 0.0
    %1788 = vmatpush1.msra.mxu0 0.0
    %1789 = vmatprep.subr.mxu0 0.0
    %1790 = vmatpush1.msra.mxu0 0.0
    %1791 = vmatprep.subr.mxu0 0.0
    %1792 = vmatpush1.msra.mxu0 %v644
    %1793 = vmatprep.subr.mxu0 0.0
    %1794 = vmatpush1.msra.mxu0 %v643
    %1795 = vmatprep.subr.mxu0 0.0
    %1796 = vmatpush1.msra.mxu0 %v642
    %1797 = vmatprep.subr.mxu0 0.0
    %1798 = vmatpush1.msra.mxu0 %v641
    %1799 = vmatprep.subr.mxu0 0.0
    %1800 = vmatpush2.msra.mxu0 0.0
    %1801 = vmatprep.subr.mxu0 0.0
    %1802 = vmatpush2.msra.mxu0 0.0
    %1803 = vmatprep.subr.mxu0 0.0
    %1804 = vmatpush2.msra.mxu0 0.0
    %1805 = vmatprep.subr.mxu0 0.0
    %1806 = vmatpush2.msra.mxu0 0.0
    %1807 = vmatprep.subr.mxu0 0.0
    %1808 = vmatpush2.msra.mxu0 0.0
    %1809 = vmatprep.subr.mxu0 0.0
    %1810 = vmatpush2.msra.mxu0 0.0
    %1811 = vmatprep.subr.mxu0 0.0
    %1812 = vmatpush2.msra.mxu0 0.0
    %1813 = vmatprep.subr.mxu0 0.0
    %1814 = vmatpush2.msra.mxu0 0.0
    %1815 = vmatprep.subr.mxu0 0.0
    %1816 = vmatpush2.msra.mxu0 0.0
    %1817 = vmatprep.subr.mxu0 0.0
    %1818 = vmatpush2.msra.mxu0 0.0
    %1819 = vmatprep.subr.mxu0 0.0
    %1820 = vmatpush2.msra.mxu0 0.0
    %1821 = vmatprep.subr.mxu0 0.0
    %1822 = vmatpush2.msra.mxu0 0.0
    %1823 = vmatprep.subr.mxu0 0.0
    %1824 = vmatpush2.msra.mxu0 0.0
    %1825 = vmatprep.subr.mxu0 0.0
    %1826 = vmatpush2.msra.mxu0 0.0
    %1827 = vmatprep.subr.mxu0 0.0
    %1828 = vmatpush2.msra.mxu0 0.0
    %1829 = vmatprep.subr.mxu0 0.0
    %1830 = vmatpush2.msra.mxu0 0.0
    %1831 = vmatprep.mubr.f32.mxu0 0.0
    %1832 = vmatmul.mubr.f32.gmra.mxu0 %v1607
    %v1833 = vpop.f32.mrf.mxu0
    %v1834 = vadd.f32 0.0, %v1833
    %v1835 = vpop.f32.mrf.mxu0
    %1836 = vdwg.mxu0
    %v1837 = vadd.f32 %v1766, %v1834
    %v1838 = vtanh.pop %v1837
    %s1839 = scalar_lea.vmem [#allocation9], 48
    %v1840 = vld [vmem:[%s1839] sm:$0xff]
    %1841 = vmatprep.subr.mxu0 0.0
    %1842 = vmatpush1.msra.mxu0 0.0
    %1843 = vmatprep.subr.mxu0 0.0
    %1844 = vmatpush1.msra.mxu0 0.0
    %1845 = vmatprep.subr.mxu0 0.0
    %1846 = vmatpush1.msra.mxu0 0.0
    %1847 = vmatprep.subr.mxu0 0.0
    %1848 = vmatpush1.msra.mxu0 0.0
    %1849 = vmatprep.subr.mxu0 0.0
    %1850 = vmatpush1.msra.mxu0 0.0
    %1851 = vmatprep.subr.mxu0 0.0
    %1852 = vmatpush1.msra.mxu0 0.0
    %1853 = vmatprep.subr.mxu0 0.0
    %1854 = vmatpush1.msra.mxu0 0.0
    %1855 = vmatprep.subr.mxu0 0.0
    %1856 = vmatpush1.msra.mxu0 0.0
    %1857 = vmatprep.subr.mxu0 0.0
    %1858 = vmatpush1.msra.mxu0 0.0
    %1859 = vmatprep.subr.mxu0 0.0
    %1860 = vmatpush1.msra.mxu0 0.0
    %1861 = vmatprep.subr.mxu0 0.0
    %1862 = vmatpush1.msra.mxu0 0.0
    %1863 = vmatprep.subr.mxu0 0.0
    %1864 = vmatpush1.msra.mxu0 0.0
    %1865 = vmatprep.subr.mxu0 0.0
    %1866 = vmatpush1.msra.mxu0 %v648
    %1867 = vmatprep.subr.mxu0 0.0
    %1868 = vmatpush1.msra.mxu0 %v647
    %1869 = vmatprep.subr.mxu0 0.0
    %1870 = vmatpush1.msra.mxu0 %v646
    %1871 = vmatprep.subr.mxu0 0.0
    %1872 = vmatpush1.msra.mxu0 %v645
    %1873 = vmatprep.subr.mxu0 0.0
    %1874 = vmatpush2.msra.mxu0 0.0
    %1875 = vmatprep.subr.mxu0 0.0
    %1876 = vmatpush2.msra.mxu0 0.0
    %1877 = vmatprep.subr.mxu0 0.0
    %1878 = vmatpush2.msra.mxu0 0.0
    %1879 = vmatprep.subr.mxu0 0.0
    %1880 = vmatpush2.msra.mxu0 0.0
    %1881 = vmatprep.subr.mxu0 0.0
    %1882 = vmatpush2.msra.mxu0 0.0
    %1883 = vmatprep.subr.mxu0 0.0
    %1884 = vmatpush2.msra.mxu0 0.0
    %1885 = vmatprep.subr.mxu0 0.0
    %1886 = vmatpush2.msra.mxu0 0.0
    %1887 = vmatprep.subr.mxu0 0.0
    %1888 = vmatpush2.msra.mxu0 0.0
    %1889 = vmatprep.subr.mxu0 0.0
    %1890 = vmatpush2.msra.mxu0 0.0
    %1891 = vmatprep.subr.mxu0 0.0
    %1892 = vmatpush2.msra.mxu0 0.0
    %1893 = vmatprep.subr.mxu0 0.0
    %1894 = vmatpush2.msra.mxu0 0.0
    %1895 = vmatprep.subr.mxu0 0.0
    %1896 = vmatpush2.msra.mxu0 0.0
    %1897 = vmatprep.subr.mxu0 0.0
    %1898 = vmatpush2.msra.mxu0 0.0
    %1899 = vmatprep.subr.mxu0 0.0
    %1900 = vmatpush2.msra.mxu0 0.0
    %1901 = vmatprep.subr.mxu0 0.0
    %1902 = vmatpush2.msra.mxu0 0.0
    %1903 = vmatprep.subr.mxu0 0.0
    %1904 = vmatpush2.msra.mxu0 0.0
    %1905 = vmatprep.mubr.f32.mxu0 0.0
    %1906 = vmatmul.mubr.f32.gmra.mxu0 %v1607
    %v1907 = vpop.f32.mrf.mxu0
    %v1908 = vadd.f32 0.0, %v1907
    %v1909 = vpop.f32.mrf.mxu0
    %1910 = vdwg.mxu0
    %v1911 = vadd.f32 %v1840, %v1908
    %v1912 = vxor.u32 %v1911, 2147483648
    %v1913 = vmul.f32 %v1912, 1.442695
    %v1914 = vpow.pop %v1913
    %v1915 = vadd.f32 %v1914, 1.0
    %v1916 = vrcp.pop %v1915
    %v1917 = vmul.f32 1.0, %v1916
    %v1918 = vmul.f32 %v1764, %v1278
    %v1919 = vmul.f32 %v1685, %v1838
    %v1920 = vadd.f32 %v1918, %v1919
    %v1921 = vtanh.pop %v1920
    %v1922 = vmul.f32 %v1917, %v1921
    %s1923 = scalar_lea.vmem [#allocation11], 48
    %1924 = vst.msk [vmem:[%s1923] sm:$0xff] %vm392, %v1922
    %s1925 = scalar_lea.vmem [#allocation2], 16
    %v1926 = vld [vmem:[%s1925] sm:$0xff]
    %v1928 = vsel %vm392, %v1601, 0
    %1930 = vmatprep.subr.mxu0 0.0
    %1931 = vmatpush1.msra.mxu0 0.0
    %1932 = vmatprep.subr.mxu0 0.0
    %1933 = vmatpush1.msra.mxu0 0.0
    %1934 = vmatprep.subr.mxu0 0.0
    %1935 = vmatpush1.msra.mxu0 0.0
    %1936 = vmatprep.subr.mxu0 0.0
    %1937 = vmatpush1.msra.mxu0 0.0
    %1938 = vmatprep.subr.mxu0 0.0
    %1939 = vmatpush1.msra.mxu0 0.0
    %1940 = vmatprep.subr.mxu0 0.0
    %1941 = vmatpush1.msra.mxu0 0.0
    %1942 = vmatprep.subr.mxu0 0.0
    %1943 = vmatpush1.msra.mxu0 0.0
    %1944 = vmatprep.subr.mxu0 0.0
    %1945 = vmatpush1.msra.mxu0 0.0
    %1946 = vmatprep.subr.mxu0 0.0
    %1947 = vmatpush1.msra.mxu0 0.0
    %1948 = vmatprep.subr.mxu0 0.0
    %1949 = vmatpush1.msra.mxu0 0.0
    %1950 = vmatprep.subr.mxu0 0.0
    %1951 = vmatpush1.msra.mxu0 0.0
    %1952 = vmatprep.subr.mxu0 0.0
    %1953 = vmatpush1.msra.mxu0 0.0
    %1954 = vmatprep.subr.mxu0 0.0
    %1955 = vmatpush1.msra.mxu0 %v620
    %1956 = vmatprep.subr.mxu0 0.0
    %1957 = vmatpush1.msra.mxu0 %v619
    %1958 = vmatprep.subr.mxu0 0.0
    %1959 = vmatpush1.msra.mxu0 %v618
    %1960 = vmatprep.subr.mxu0 0.0
    %1961 = vmatpush1.msra.mxu0 %v617
    %1962 = vmatprep.subr.mxu0 0.0
    %1963 = vmatpush2.msra.mxu0 0.0
    %1964 = vmatprep.subr.mxu0 0.0
    %1965 = vmatpush2.msra.mxu0 0.0
    %1966 = vmatprep.subr.mxu0 0.0
    %1967 = vmatpush2.msra.mxu0 0.0
    %1968 = vmatprep.subr.mxu0 0.0
    %1969 = vmatpush2.msra.mxu0 0.0
    %1970 = vmatprep.subr.mxu0 0.0
    %1971 = vmatpush2.msra.mxu0 0.0
    %1972 = vmatprep.subr.mxu0 0.0
    %1973 = vmatpush2.msra.mxu0 0.0
    %1974 = vmatprep.subr.mxu0 0.0
    %1975 = vmatpush2.msra.mxu0 0.0
    %1976 = vmatprep.subr.mxu0 0.0
    %1977 = vmatpush2.msra.mxu0 0.0
    %1978 = vmatprep.subr.mxu0 0.0
    %1979 = vmatpush2.msra.mxu0 0.0
    %1980 = vmatprep.subr.mxu0 0.0
    %1981 = vmatpush2.msra.mxu0 0.0
    %1982 = vmatprep.subr.mxu0 0.0
    %1983 = vmatpush2.msra.mxu0 0.0
    %1984 = vmatprep.subr.mxu0 0.0
    %1985 = vmatpush2.msra.mxu0 0.0
    %1986 = vmatprep.subr.mxu0 0.0
    %1987 = vmatpush2.msra.mxu0 0.0
    %1988 = vmatprep.subr.mxu0 0.0
    %1989 = vmatpush2.msra.mxu0 0.0
    %1990 = vmatprep.subr.mxu0 0.0
    %1991 = vmatpush2.msra.mxu0 0.0
    %1992 = vmatprep.subr.mxu0 0.0
    %1993 = vmatpush2.msra.mxu0 0.0
    %1994 = vmatprep.mubr.f32.mxu0 0.0
    %1995 = vmatmul.mubr.f32.gmra.mxu0 %v1928
    %v1996 = vpop.f32.mrf.mxu0
    %v1997 = vadd.f32 0.0, %v1996
    %v1998 = vpop.f32.mrf.mxu0
    %1999 = vdwg.mxu0
    %v2000 = vadd.f32 %v1926, %v1997
    %v2001 = vxor.u32 %v2000, 2147483648
    %v2002 = vmul.f32 %v2001, 1.442695
    %v2003 = vpow.pop %v2002
    %v2004 = vadd.f32 %v2003, 1.0
    %v2005 = vrcp.pop %v2004
    %v2006 = vmul.f32 1.0, %v2005
    %s2007 = scalar_lea.vmem [#allocation3], 16
    %v2008 = vld [vmem:[%s2007] sm:$0xff]
    %2009 = vmatprep.subr.mxu0 0.0
    %2010 = vmatpush1.msra.mxu0 0.0
    %2011 = vmatprep.subr.mxu0 0.0
    %2012 = vmatpush1.msra.mxu0 0.0
    %2013 = vmatprep.subr.mxu0 0.0
    %2014 = vmatpush1.msra.mxu0 0.0
    %2015 = vmatprep.subr.mxu0 0.0
    %2016 = vmatpush1.msra.mxu0 0.0
    %2017 = vmatprep.subr.mxu0 0.0
    %2018 = vmatpush1.msra.mxu0 0.0
    %2019 = vmatprep.subr.mxu0 0.0
    %2020 = vmatpush1.msra.mxu0 0.0
    %2021 = vmatprep.subr.mxu0 0.0
    %2022 = vmatpush1.msra.mxu0 0.0
    %2023 = vmatprep.subr.mxu0 0.0
    %2024 = vmatpush1.msra.mxu0 0.0
    %2025 = vmatprep.subr.mxu0 0.0
    %2026 = vmatpush1.msra.mxu0 0.0
    %2027 = vmatprep.subr.mxu0 0.0
    %2028 = vmatpush1.msra.mxu0 0.0
    %2029 = vmatprep.subr.mxu0 0.0
    %2030 = vmatpush1.msra.mxu0 0.0
    %2031 = vmatprep.subr.mxu0 0.0
    %2032 = vmatpush1.msra.mxu0 0.0
    %2033 = vmatprep.subr.mxu0 0.0
    %2034 = vmatpush1.msra.mxu0 %v624
    %2035 = vmatprep.subr.mxu0 0.0
    %2036 = vmatpush1.msra.mxu0 %v623
    %2037 = vmatprep.subr.mxu0 0.0
    %2038 = vmatpush1.msra.mxu0 %v622
    %2039 = vmatprep.subr.mxu0 0.0
    %2040 = vmatpush1.msra.mxu0 %v621
    %2041 = vmatprep.subr.mxu0 0.0
    %2042 = vmatpush2.msra.mxu0 0.0
    %2043 = vmatprep.subr.mxu0 0.0
    %2044 = vmatpush2.msra.mxu0 0.0
    %2045 = vmatprep.subr.mxu0 0.0
    %2046 = vmatpush2.msra.mxu0 0.0
    %2047 = vmatprep.subr.mxu0 0.0
    %2048 = vmatpush2.msra.mxu0 0.0
    %2049 = vmatprep.subr.mxu0 0.0
    %2050 = vmatpush2.msra.mxu0 0.0
    %2051 = vmatprep.subr.mxu0 0.0
    %2052 = vmatpush2.msra.mxu0 0.0
    %2053 = vmatprep.subr.mxu0 0.0
    %2054 = vmatpush2.msra.mxu0 0.0
    %2055 = vmatprep.subr.mxu0 0.0
    %2056 = vmatpush2.msra.mxu0 0.0
    %2057 = vmatprep.subr.mxu0 0.0
    %2058 = vmatpush2.msra.mxu0 0.0
    %2059 = vmatprep.subr.mxu0 0.0
    %2060 = vmatpush2.msra.mxu0 0.0
    %2061 = vmatprep.subr.mxu0 0.0
    %2062 = vmatpush2.msra.mxu0 0.0
    %2063 = vmatprep.subr.mxu0 0.0
    %2064 = vmatpush2.msra.mxu0 0.0
    %2065 = vmatprep.subr.mxu0 0.0
    %2066 = vmatpush2.msra.mxu0 0.0
    %2067 = vmatprep.subr.mxu0 0.0
    %2068 = vmatpush2.msra.mxu0 0.0
    %2069 = vmatprep.subr.mxu0 0.0
    %2070 = vmatpush2.msra.mxu0 0.0
    %2071 = vmatprep.subr.mxu0 0.0
    %2072 = vmatpush2.msra.mxu0 0.0
    %2073 = vmatprep.mubr.f32.mxu0 0.0
    %2074 = vmatmul.mubr.f32.gmra.mxu0 %v1928
    %v2075 = vpop.f32.mrf.mxu0
    %v2076 = vadd.f32 0.0, %v2075
    %v2077 = vpop.f32.mrf.mxu0
    %2078 = vdwg.mxu0
    %v2079 = vadd.f32 %v2008, %v2076
    %v2080 = vxor.u32 %v2079, 2147483648
    %v2081 = vmul.f32 %v2080, 1.442695
    %v2082 = vpow.pop %v2081
    %v2083 = vadd.f32 %v2082, 1.0
    %v2084 = vrcp.pop %v2083
    %v2085 = vmul.f32 1.0, %v2084
    %s2086 = scalar_lea.vmem [#allocation4], 16
    %v2087 = vld [vmem:[%s2086] sm:$0xff]
    %2088 = vmatprep.subr.mxu0 0.0
    %2089 = vmatpush1.msra.mxu0 0.0
    %2090 = vmatprep.subr.mxu0 0.0
    %2091 = vmatpush1.msra.mxu0 0.0
    %2092 = vmatprep.subr.mxu0 0.0
    %2093 = vmatpush1.msra.mxu0 0.0
    %2094 = vmatprep.subr.mxu0 0.0
    %2095 = vmatpush1.msra.mxu0 0.0
    %2096 = vmatprep.subr.mxu0 0.0
    %2097 = vmatpush1.msra.mxu0 0.0
    %2098 = vmatprep.subr.mxu0 0.0
    %2099 = vmatpush1.msra.mxu0 0.0
    %2100 = vmatprep.subr.mxu0 0.0
    %2101 = vmatpush1.msra.mxu0 0.0
    %2102 = vmatprep.subr.mxu0 0.0
    %2103 = vmatpush1.msra.mxu0 0.0
    %2104 = vmatprep.subr.mxu0 0.0
    %2105 = vmatpush1.msra.mxu0 0.0
    %2106 = vmatprep.subr.mxu0 0.0
    %2107 = vmatpush1.msra.mxu0 0.0
    %2108 = vmatprep.subr.mxu0 0.0
    %2109 = vmatpush1.msra.mxu0 0.0
    %2110 = vmatprep.subr.mxu0 0.0
    %2111 = vmatpush1.msra.mxu0 0.0
    %2112 = vmatprep.subr.mxu0 0.0
    %2113 = vmatpush1.msra.mxu0 %v628
    %2114 = vmatprep.subr.mxu0 0.0
    %2115 = vmatpush1.msra.mxu0 %v627
    %2116 = vmatprep.subr.mxu0 0.0
    %2117 = vmatpush1.msra.mxu0 %v626
    %2118 = vmatprep.subr.mxu0 0.0
    %2119 = vmatpush1.msra.mxu0 %v625
    %2120 = vmatprep.subr.mxu0 0.0
    %2121 = vmatpush2.msra.mxu0 0.0
    %2122 = vmatprep.subr.mxu0 0.0
    %2123 = vmatpush2.msra.mxu0 0.0
    %2124 = vmatprep.subr.mxu0 0.0
    %2125 = vmatpush2.msra.mxu0 0.0
    %2126 = vmatprep.subr.mxu0 0.0
    %2127 = vmatpush2.msra.mxu0 0.0
    %2128 = vmatprep.subr.mxu0 0.0
    %2129 = vmatpush2.msra.mxu0 0.0
    %2130 = vmatprep.subr.mxu0 0.0
    %2131 = vmatpush2.msra.mxu0 0.0
    %2132 = vmatprep.subr.mxu0 0.0
    %2133 = vmatpush2.msra.mxu0 0.0
    %2134 = vmatprep.subr.mxu0 0.0
    %2135 = vmatpush2.msra.mxu0 0.0
    %2136 = vmatprep.subr.mxu0 0.0
    %2137 = vmatpush2.msra.mxu0 0.0
    %2138 = vmatprep.subr.mxu0 0.0
    %2139 = vmatpush2.msra.mxu0 0.0
    %2140 = vmatprep.subr.mxu0 0.0
    %2141 = vmatpush2.msra.mxu0 0.0
    %2142 = vmatprep.subr.mxu0 0.0
    %2143 = vmatpush2.msra.mxu0 0.0
    %2144 = vmatprep.subr.mxu0 0.0
    %2145 = vmatpush2.msra.mxu0 0.0
    %2146 = vmatprep.subr.mxu0 0.0
    %2147 = vmatpush2.msra.mxu0 0.0
    %2148 = vmatprep.subr.mxu0 0.0
    %2149 = vmatpush2.msra.mxu0 0.0
    %2150 = vmatprep.subr.mxu0 0.0
    %2151 = vmatpush2.msra.mxu0 0.0
    %2152 = vmatprep.mubr.f32.mxu0 0.0
    %2153 = vmatmul.mubr.f32.gmra.mxu0 %v1928
    %v2154 = vpop.f32.mrf.mxu0
    %v2155 = vadd.f32 0.0, %v2154
    %v2156 = vpop.f32.mrf.mxu0
    %2157 = vdwg.mxu0
    %v2158 = vadd.f32 %v2087, %v2155
    %v2159 = vtanh.pop %v2158
    %s2160 = scalar_lea.vmem [#allocation5], 16
    %v2161 = vld [vmem:[%s2160] sm:$0xff]
    %2162 = vmatprep.subr.mxu0 0.0
    %2163 = vmatpush1.msra.mxu0 0.0
    %2164 = vmatprep.subr.mxu0 0.0
    %2165 = vmatpush1.msra.mxu0 0.0
    %2166 = vmatprep.subr.mxu0 0.0
    %2167 = vmatpush1.msra.mxu0 0.0
    %2168 = vmatprep.subr.mxu0 0.0
    %2169 = vmatpush1.msra.mxu0 0.0
    %2170 = vmatprep.subr.mxu0 0.0
    %2171 = vmatpush1.msra.mxu0 0.0
    %2172 = vmatprep.subr.mxu0 0.0
    %2173 = vmatpush1.msra.mxu0 0.0
    %2174 = vmatprep.subr.mxu0 0.0
    %2175 = vmatpush1.msra.mxu0 0.0
    %2176 = vmatprep.subr.mxu0 0.0
    %2177 = vmatpush1.msra.mxu0 0.0
    %2178 = vmatprep.subr.mxu0 0.0
    %2179 = vmatpush1.msra.mxu0 0.0
    %2180 = vmatprep.subr.mxu0 0.0
    %2181 = vmatpush1.msra.mxu0 0.0
    %2182 = vmatprep.subr.mxu0 0.0
    %2183 = vmatpush1.msra.mxu0 0.0
    %2184 = vmatprep.subr.mxu0 0.0
    %2185 = vmatpush1.msra.mxu0 0.0
    %2186 = vmatprep.subr.mxu0 0.0
    %2187 = vmatpush1.msra.mxu0 %v632
    %2188 = vmatprep.subr.mxu0 0.0
    %2189 = vmatpush1.msra.mxu0 %v631
    %2190 = vmatprep.subr.mxu0 0.0
    %2191 = vmatpush1.msra.mxu0 %v630
    %2192 = vmatprep.subr.mxu0 0.0
    %2193 = vmatpush1.msra.mxu0 %v629
    %2194 = vmatprep.subr.mxu0 0.0
    %2195 = vmatpush2.msra.mxu0 0.0
    %2196 = vmatprep.subr.mxu0 0.0
    %2197 = vmatpush2.msra.mxu0 0.0
    %2198 = vmatprep.subr.mxu0 0.0
    %2199 = vmatpush2.msra.mxu0 0.0
    %2200 = vmatprep.subr.mxu0 0.0
    %2201 = vmatpush2.msra.mxu0 0.0
    %2202 = vmatprep.subr.mxu0 0.0
    %2203 = vmatpush2.msra.mxu0 0.0
    %2204 = vmatprep.subr.mxu0 0.0
    %2205 = vmatpush2.msra.mxu0 0.0
    %2206 = vmatprep.subr.mxu0 0.0
    %2207 = vmatpush2.msra.mxu0 0.0
    %2208 = vmatprep.subr.mxu0 0.0
    %2209 = vmatpush2.msra.mxu0 0.0
    %2210 = vmatprep.subr.mxu0 0.0
    %2211 = vmatpush2.msra.mxu0 0.0
    %2212 = vmatprep.subr.mxu0 0.0
    %2213 = vmatpush2.msra.mxu0 0.0
    %2214 = vmatprep.subr.mxu0 0.0
    %2215 = vmatpush2.msra.mxu0 0.0
    %2216 = vmatprep.subr.mxu0 0.0
    %2217 = vmatpush2.msra.mxu0 0.0
    %2218 = vmatprep.subr.mxu0 0.0
    %2219 = vmatpush2.msra.mxu0 0.0
    %2220 = vmatprep.subr.mxu0 0.0
    %2221 = vmatpush2.msra.mxu0 0.0
    %2222 = vmatprep.subr.mxu0 0.0
    %2223 = vmatpush2.msra.mxu0 0.0
    %2224 = vmatprep.subr.mxu0 0.0
    %2225 = vmatpush2.msra.mxu0 0.0
    %2226 = vmatprep.mubr.f32.mxu0 0.0
    %2227 = vmatmul.mubr.f32.gmra.mxu0 %v1928
    %v2228 = vpop.f32.mrf.mxu0
    %v2229 = vadd.f32 0.0, %v2228
    %v2230 = vpop.f32.mrf.mxu0
    %2231 = vdwg.mxu0
    %v2232 = vadd.f32 %v2161, %v2229
    %v2233 = vxor.u32 %v2232, 2147483648
    %v2234 = vmul.f32 %v2233, 1.442695
    %v2235 = vpow.pop %v2234
    %v2236 = vadd.f32 %v2235, 1.0
    %v2237 = vrcp.pop %v2236
    %v2238 = vmul.f32 1.0, %v2237
    %v2239 = vmul.f32 %v2085, %v1599
    %v2240 = vmul.f32 %v2006, %v2159
    %v2241 = vadd.f32 %v2239, %v2240
    %v2242 = vtanh.pop %v2241
    %v2243 = vmul.f32 %v2238, %v2242
    %s2244 = scalar_lea.vmem [#allocation10], 16
    %2245 = vst.msk [vmem:[%s2244] sm:$0xff] %vm392, %v2243
    %s2246 = scalar_lea.vmem [#allocation6], 40
    %v2247 = vld [vmem:[%s2246] sm:$0xff]
    %v2249 = vsel %vm392, %v1922, 0
    %2251 = vmatprep.subr.mxu0 0.0
    %2252 = vmatpush1.msra.mxu0 0.0
    %2253 = vmatprep.subr.mxu0 0.0
    %2254 = vmatpush1.msra.mxu0 0.0
    %2255 = vmatprep.subr.mxu0 0.0
    %2256 = vmatpush1.msra.mxu0 0.0
    %2257 = vmatprep.subr.mxu0 0.0
    %2258 = vmatpush1.msra.mxu0 0.0
    %2259 = vmatprep.subr.mxu0 0.0
    %2260 = vmatpush1.msra.mxu0 0.0
    %2261 = vmatprep.subr.mxu0 0.0
    %2262 = vmatpush1.msra.mxu0 0.0
    %2263 = vmatprep.subr.mxu0 0.0
    %2264 = vmatpush1.msra.mxu0 0.0
    %2265 = vmatprep.subr.mxu0 0.0
    %2266 = vmatpush1.msra.mxu0 0.0
    %2267 = vmatprep.subr.mxu0 0.0
    %2268 = vmatpush1.msra.mxu0 0.0
    %2269 = vmatprep.subr.mxu0 0.0
    %2270 = vmatpush1.msra.mxu0 0.0
    %2271 = vmatprep.subr.mxu0 0.0
    %2272 = vmatpush1.msra.mxu0 0.0
    %2273 = vmatprep.subr.mxu0 0.0
    %2274 = vmatpush1.msra.mxu0 0.0
    %2275 = vmatprep.subr.mxu0 0.0
    %2276 = vmatpush1.msra.mxu0 %v636
    %2277 = vmatprep.subr.mxu0 0.0
    %2278 = vmatpush1.msra.mxu0 %v635
    %2279 = vmatprep.subr.mxu0 0.0
    %2280 = vmatpush1.msra.mxu0 %v634
    %2281 = vmatprep.subr.mxu0 0.0
    %2282 = vmatpush1.msra.mxu0 %v633
    %2283 = vmatprep.subr.mxu0 0.0
    %2284 = vmatpush2.msra.mxu0 0.0
    %2285 = vmatprep.subr.mxu0 0.0
    %2286 = vmatpush2.msra.mxu0 0.0
    %2287 = vmatprep.subr.mxu0 0.0
    %2288 = vmatpush2.msra.mxu0 0.0
    %2289 = vmatprep.subr.mxu0 0.0
    %2290 = vmatpush2.msra.mxu0 0.0
    %2291 = vmatprep.subr.mxu0 0.0
    %2292 = vmatpush2.msra.mxu0 0.0
    %2293 = vmatprep.subr.mxu0 0.0
    %2294 = vmatpush2.msra.mxu0 0.0
    %2295 = vmatprep.subr.mxu0 0.0
    %2296 = vmatpush2.msra.mxu0 0.0
    %2297 = vmatprep.subr.mxu0 0.0
    %2298 = vmatpush2.msra.mxu0 0.0
    %2299 = vmatprep.subr.mxu0 0.0
    %2300 = vmatpush2.msra.mxu0 0.0
    %2301 = vmatprep.subr.mxu0 0.0
    %2302 = vmatpush2.msra.mxu0 0.0
    %2303 = vmatprep.subr.mxu0 0.0
    %2304 = vmatpush2.msra.mxu0 0.0
    %2305 = vmatprep.subr.mxu0 0.0
    %2306 = vmatpush2.msra.mxu0 0.0
    %2307 = vmatprep.subr.mxu0 0.0
    %2308 = vmatpush2.msra.mxu0 0.0
    %2309 = vmatprep.subr.mxu0 0.0
    %2310 = vmatpush2.msra.mxu0 0.0
    %2311 = vmatprep.subr.mxu0 0.0
    %2312 = vmatpush2.msra.mxu0 0.0
    %2313 = vmatprep.subr.mxu0 0.0
    %2314 = vmatpush2.msra.mxu0 0.0
    %2315 = vmatprep.mubr.f32.mxu0 0.0
    %2316 = vmatmul.mubr.f32.gmra.mxu0 %v2249
    %v2317 = vpop.f32.mrf.mxu0
    %v2318 = vadd.f32 0.0, %v2317
    %v2319 = vpop.f32.mrf.mxu0
    %2320 = vdwg.mxu0
    %v2321 = vadd.f32 %v2247, %v2318
    %v2322 = vxor.u32 %v2321, 2147483648
    %v2323 = vmul.f32 %v2322, 1.442695
    %v2324 = vpow.pop %v2323
    %v2325 = vadd.f32 %v2324, 1.0
    %v2326 = vrcp.pop %v2325
    %v2327 = vmul.f32 1.0, %v2326
    %s2328 = scalar_lea.vmem [#allocation7], 40
    %v2329 = vld [vmem:[%s2328] sm:$0xff]
    %2330 = vmatprep.subr.mxu0 0.0
    %2331 = vmatpush1.msra.mxu0 0.0
    %2332 = vmatprep.subr.mxu0 0.0
    %2333 = vmatpush1.msra.mxu0 0.0
    %2334 = vmatprep.subr.mxu0 0.0
    %2335 = vmatpush1.msra.mxu0 0.0
    %2336 = vmatprep.subr.mxu0 0.0
    %2337 = vmatpush1.msra.mxu0 0.0
    %2338 = vmatprep.subr.mxu0 0.0
    %2339 = vmatpush1.msra.mxu0 0.0
    %2340 = vmatprep.subr.mxu0 0.0
    %2341 = vmatpush1.msra.mxu0 0.0
    %2342 = vmatprep.subr.mxu0 0.0
    %2343 = vmatpush1.msra.mxu0 0.0
    %2344 = vmatprep.subr.mxu0 0.0
    %2345 = vmatpush1.msra.mxu0 0.0
    %2346 = vmatprep.subr.mxu0 0.0
    %2347 = vmatpush1.msra.mxu0 0.0
    %2348 = vmatprep.subr.mxu0 0.0
    %2349 = vmatpush1.msra.mxu0 0.0
    %2350 = vmatprep.subr.mxu0 0.0
    %2351 = vmatpush1.msra.mxu0 0.0
    %2352 = vmatprep.subr.mxu0 0.0
    %2353 = vmatpush1.msra.mxu0 0.0
    %2354 = vmatprep.subr.mxu0 0.0
    %2355 = vmatpush1.msra.mxu0 %v640
    %2356 = vmatprep.subr.mxu0 0.0
    %2357 = vmatpush1.msra.mxu0 %v639
    %2358 = vmatprep.subr.mxu0 0.0
    %2359 = vmatpush1.msra.mxu0 %v638
    %2360 = vmatprep.subr.mxu0 0.0
    %2361 = vmatpush1.msra.mxu0 %v637
    %2362 = vmatprep.subr.mxu0 0.0
    %2363 = vmatpush2.msra.mxu0 0.0
    %2364 = vmatprep.subr.mxu0 0.0
    %2365 = vmatpush2.msra.mxu0 0.0
    %2366 = vmatprep.subr.mxu0 0.0
    %2367 = vmatpush2.msra.mxu0 0.0
    %2368 = vmatprep.subr.mxu0 0.0
    %2369 = vmatpush2.msra.mxu0 0.0
    %2370 = vmatprep.subr.mxu0 0.0
    %2371 = vmatpush2.msra.mxu0 0.0
    %2372 = vmatprep.subr.mxu0 0.0
    %2373 = vmatpush2.msra.mxu0 0.0
    %2374 = vmatprep.subr.mxu0 0.0
    %2375 = vmatpush2.msra.mxu0 0.0
    %2376 = vmatprep.subr.mxu0 0.0
    %2377 = vmatpush2.msra.mxu0 0.0
    %2378 = vmatprep.subr.mxu0 0.0
    %2379 = vmatpush2.msra.mxu0 0.0
    %2380 = vmatprep.subr.mxu0 0.0
    %2381 = vmatpush2.msra.mxu0 0.0
    %2382 = vmatprep.subr.mxu0 0.0
    %2383 = vmatpush2.msra.mxu0 0.0
    %2384 = vmatprep.subr.mxu0 0.0
    %2385 = vmatpush2.msra.mxu0 0.0
    %2386 = vmatprep.subr.mxu0 0.0
    %2387 = vmatpush2.msra.mxu0 0.0
    %2388 = vmatprep.subr.mxu0 0.0
    %2389 = vmatpush2.msra.mxu0 0.0
    %2390 = vmatprep.subr.mxu0 0.0
    %2391 = vmatpush2.msra.mxu0 0.0
    %2392 = vmatprep.subr.mxu0 0.0
    %2393 = vmatpush2.msra.mxu0 0.0
    %2394 = vmatprep.mubr.f32.mxu0 0.0
    %2395 = vmatmul.mubr.f32.gmra.mxu0 %v2249
    %v2396 = vpop.f32.mrf.mxu0
    %v2397 = vadd.f32 0.0, %v2396
    %v2398 = vpop.f32.mrf.mxu0
    %2399 = vdwg.mxu0
    %v2400 = vadd.f32 %v2329, %v2397
    %v2401 = vxor.u32 %v2400, 2147483648
    %v2402 = vmul.f32 %v2401, 1.442695
    %v2403 = vpow.pop %v2402
    %v2404 = vadd.f32 %v2403, 1.0
    %v2405 = vrcp.pop %v2404
    %v2406 = vmul.f32 1.0, %v2405
    %s2407 = scalar_lea.vmem [#allocation8], 40
    %v2408 = vld [vmem:[%s2407] sm:$0xff]
    %2409 = vmatprep.subr.mxu0 0.0
    %2410 = vmatpush1.msra.mxu0 0.0
    %2411 = vmatprep.subr.mxu0 0.0
    %2412 = vmatpush1.msra.mxu0 0.0
    %2413 = vmatprep.subr.mxu0 0.0
    %2414 = vmatpush1.msra.mxu0 0.0
    %2415 = vmatprep.subr.mxu0 0.0
    %2416 = vmatpush1.msra.mxu0 0.0
    %2417 = vmatprep.subr.mxu0 0.0
    %2418 = vmatpush1.msra.mxu0 0.0
    %2419 = vmatprep.subr.mxu0 0.0
    %2420 = vmatpush1.msra.mxu0 0.0
    %2421 = vmatprep.subr.mxu0 0.0
    %2422 = vmatpush1.msra.mxu0 0.0
    %2423 = vmatprep.subr.mxu0 0.0
    %2424 = vmatpush1.msra.mxu0 0.0
    %2425 = vmatprep.subr.mxu0 0.0
    %2426 = vmatpush1.msra.mxu0 0.0
    %2427 = vmatprep.subr.mxu0 0.0
    %2428 = vmatpush1.msra.mxu0 0.0
    %2429 = vmatprep.subr.mxu0 0.0
    %2430 = vmatpush1.msra.mxu0 0.0
    %2431 = vmatprep.subr.mxu0 0.0
    %2432 = vmatpush1.msra.mxu0 0.0
    %2433 = vmatprep.subr.mxu0 0.0
    %2434 = vmatpush1.msra.mxu0 %v644
    %2435 = vmatprep.subr.mxu0 0.0
    %2436 = vmatpush1.msra.mxu0 %v643
    %2437 = vmatprep.subr.mxu0 0.0
    %2438 = vmatpush1.msra.mxu0 %v642
    %2439 = vmatprep.subr.mxu0 0.0
    %2440 = vmatpush1.msra.mxu0 %v641
    %2441 = vmatprep.subr.mxu0 0.0
    %2442 = vmatpush2.msra.mxu0 0.0
    %2443 = vmatprep.subr.mxu0 0.0
    %2444 = vmatpush2.msra.mxu0 0.0
    %2445 = vmatprep.subr.mxu0 0.0
    %2446 = vmatpush2.msra.mxu0 0.0
    %2447 = vmatprep.subr.mxu0 0.0
    %2448 = vmatpush2.msra.mxu0 0.0
    %2449 = vmatprep.subr.mxu0 0.0
    %2450 = vmatpush2.msra.mxu0 0.0
    %2451 = vmatprep.subr.mxu0 0.0
    %2452 = vmatpush2.msra.mxu0 0.0
    %2453 = vmatprep.subr.mxu0 0.0
    %2454 = vmatpush2.msra.mxu0 0.0
    %2455 = vmatprep.subr.mxu0 0.0
    %2456 = vmatpush2.msra.mxu0 0.0
    %2457 = vmatprep.subr.mxu0 0.0
    %2458 = vmatpush2.msra.mxu0 0.0
    %2459 = vmatprep.subr.mxu0 0.0
    %2460 = vmatpush2.msra.mxu0 0.0
    %2461 = vmatprep.subr.mxu0 0.0
    %2462 = vmatpush2.msra.mxu0 0.0
    %2463 = vmatprep.subr.mxu0 0.0
    %2464 = vmatpush2.msra.mxu0 0.0
    %2465 = vmatprep.subr.mxu0 0.0
    %2466 = vmatpush2.msra.mxu0 0.0
    %2467 = vmatprep.subr.mxu0 0.0
    %2468 = vmatpush2.msra.mxu0 0.0
    %2469 = vmatprep.subr.mxu0 0.0
    %2470 = vmatpush2.msra.mxu0 0.0
    %2471 = vmatprep.subr.mxu0 0.0
    %2472 = vmatpush2.msra.mxu0 0.0
    %2473 = vmatprep.mubr.f32.mxu0 0.0
    %2474 = vmatmul.mubr.f32.gmra.mxu0 %v2249
    %v2475 = vpop.f32.mrf.mxu0
    %v2476 = vadd.f32 0.0, %v2475
    %v2477 = vpop.f32.mrf.mxu0
    %2478 = vdwg.mxu0
    %v2479 = vadd.f32 %v2408, %v2476
    %v2480 = vtanh.pop %v2479
    %s2481 = scalar_lea.vmem [#allocation9], 40
    %v2482 = vld [vmem:[%s2481] sm:$0xff]
    %2483 = vmatprep.subr.mxu0 0.0
    %2484 = vmatpush1.msra.mxu0 0.0
    %2485 = vmatprep.subr.mxu0 0.0
    %2486 = vmatpush1.msra.mxu0 0.0
    %2487 = vmatprep.subr.mxu0 0.0
    %2488 = vmatpush1.msra.mxu0 0.0
    %2489 = vmatprep.subr.mxu0 0.0
    %2490 = vmatpush1.msra.mxu0 0.0
    %2491 = vmatprep.subr.mxu0 0.0
    %2492 = vmatpush1.msra.mxu0 0.0
    %2493 = vmatprep.subr.mxu0 0.0
    %2494 = vmatpush1.msra.mxu0 0.0
    %2495 = vmatprep.subr.mxu0 0.0
    %2496 = vmatpush1.msra.mxu0 0.0
    %2497 = vmatprep.subr.mxu0 0.0
    %2498 = vmatpush1.msra.mxu0 0.0
    %2499 = vmatprep.subr.mxu0 0.0
    %2500 = vmatpush1.msra.mxu0 0.0
    %2501 = vmatprep.subr.mxu0 0.0
    %2502 = vmatpush1.msra.mxu0 0.0
    %2503 = vmatprep.subr.mxu0 0.0
    %2504 = vmatpush1.msra.mxu0 0.0
    %2505 = vmatprep.subr.mxu0 0.0
    %2506 = vmatpush1.msra.mxu0 0.0
    %2507 = vmatprep.subr.mxu0 0.0
    %2508 = vmatpush1.msra.mxu0 %v648
    %2509 = vmatprep.subr.mxu0 0.0
    %2510 = vmatpush1.msra.mxu0 %v647
    %2511 = vmatprep.subr.mxu0 0.0
    %2512 = vmatpush1.msra.mxu0 %v646
    %2513 = vmatprep.subr.mxu0 0.0
    %2514 = vmatpush1.msra.mxu0 %v645
    %2515 = vmatprep.subr.mxu0 0.0
    %2516 = vmatpush2.msra.mxu0 0.0
    %2517 = vmatprep.subr.mxu0 0.0
    %2518 = vmatpush2.msra.mxu0 0.0
    %2519 = vmatprep.subr.mxu0 0.0
    %2520 = vmatpush2.msra.mxu0 0.0
    %2521 = vmatprep.subr.mxu0 0.0
    %2522 = vmatpush2.msra.mxu0 0.0
    %2523 = vmatprep.subr.mxu0 0.0
    %2524 = vmatpush2.msra.mxu0 0.0
    %2525 = vmatprep.subr.mxu0 0.0
    %2526 = vmatpush2.msra.mxu0 0.0
    %2527 = vmatprep.subr.mxu0 0.0
    %2528 = vmatpush2.msra.mxu0 0.0
    %2529 = vmatprep.subr.mxu0 0.0
    %2530 = vmatpush2.msra.mxu0 0.0
    %2531 = vmatprep.subr.mxu0 0.0
    %2532 = vmatpush2.msra.mxu0 0.0
    %2533 = vmatprep.subr.mxu0 0.0
    %2534 = vmatpush2.msra.mxu0 0.0
    %2535 = vmatprep.subr.mxu0 0.0
    %2536 = vmatpush2.msra.mxu0 0.0
    %2537 = vmatprep.subr.mxu0 0.0
    %2538 = vmatpush2.msra.mxu0 0.0
    %2539 = vmatprep.subr.mxu0 0.0
    %2540 = vmatpush2.msra.mxu0 0.0
    %2541 = vmatprep.subr.mxu0 0.0
    %2542 = vmatpush2.msra.mxu0 0.0
    %2543 = vmatprep.subr.mxu0 0.0
    %2544 = vmatpush2.msra.mxu0 0.0
    %2545 = vmatprep.subr.mxu0 0.0
    %2546 = vmatpush2.msra.mxu0 0.0
    %2547 = vmatprep.mubr.f32.mxu0 0.0
    %2548 = vmatmul.mubr.f32.gmra.mxu0 %v2249
    %v2549 = vpop.f32.mrf.mxu0
    %v2550 = vadd.f32 0.0, %v2549
    %v2551 = vpop.f32.mrf.mxu0
    %2552 = vdwg.mxu0
    %v2553 = vadd.f32 %v2482, %v2550
    %v2554 = vxor.u32 %v2553, 2147483648
    %v2555 = vmul.f32 %v2554, 1.442695
    %v2556 = vpow.pop %v2555
    %v2557 = vadd.f32 %v2556, 1.0
    %v2558 = vrcp.pop %v2557
    %v2559 = vmul.f32 1.0, %v2558
    %v2560 = vmul.f32 %v2406, %v1920
    %v2561 = vmul.f32 %v2327, %v2480
    %v2562 = vadd.f32 %v2560, %v2561
    %v2563 = vtanh.pop %v2562
    %v2564 = vmul.f32 %v2559, %v2563
    %s2565 = scalar_lea.vmem [#allocation11], 40
    %2566 = vst.msk [vmem:[%s2565] sm:$0xff] %vm392, %v2564
    %s2567 = scalar_lea.vmem [#allocation2], 24
    %v2568 = vld [vmem:[%s2567] sm:$0xff]
    %v2570 = vsel %vm392, %v2243, 0
    %2572 = vmatprep.subr.mxu0 0.0
    %2573 = vmatpush1.msra.mxu0 0.0
    %2574 = vmatprep.subr.mxu0 0.0
    %2575 = vmatpush1.msra.mxu0 0.0
    %2576 = vmatprep.subr.mxu0 0.0
    %2577 = vmatpush1.msra.mxu0 0.0
    %2578 = vmatprep.subr.mxu0 0.0
    %2579 = vmatpush1.msra.mxu0 0.0
    %2580 = vmatprep.subr.mxu0 0.0
    %2581 = vmatpush1.msra.mxu0 0.0
    %2582 = vmatprep.subr.mxu0 0.0
    %2583 = vmatpush1.msra.mxu0 0.0
    %2584 = vmatprep.subr.mxu0 0.0
    %2585 = vmatpush1.msra.mxu0 0.0
    %2586 = vmatprep.subr.mxu0 0.0
    %2587 = vmatpush1.msra.mxu0 0.0
    %2588 = vmatprep.subr.mxu0 0.0
    %2589 = vmatpush1.msra.mxu0 0.0
    %2590 = vmatprep.subr.mxu0 0.0
    %2591 = vmatpush1.msra.mxu0 0.0
    %2592 = vmatprep.subr.mxu0 0.0
    %2593 = vmatpush1.msra.mxu0 0.0
    %2594 = vmatprep.subr.mxu0 0.0
    %2595 = vmatpush1.msra.mxu0 0.0
    %2596 = vmatprep.subr.mxu0 0.0
    %2597 = vmatpush1.msra.mxu0 %v620
    %2598 = vmatprep.subr.mxu0 0.0
    %2599 = vmatpush1.msra.mxu0 %v619
    %2600 = vmatprep.subr.mxu0 0.0
    %2601 = vmatpush1.msra.mxu0 %v618
    %2602 = vmatprep.subr.mxu0 0.0
    %2603 = vmatpush1.msra.mxu0 %v617
    %2604 = vmatprep.subr.mxu0 0.0
    %2605 = vmatpush2.msra.mxu0 0.0
    %2606 = vmatprep.subr.mxu0 0.0
    %2607 = vmatpush2.msra.mxu0 0.0
    %2608 = vmatprep.subr.mxu0 0.0
    %2609 = vmatpush2.msra.mxu0 0.0
    %2610 = vmatprep.subr.mxu0 0.0
    %2611 = vmatpush2.msra.mxu0 0.0
    %2612 = vmatprep.subr.mxu0 0.0
    %2613 = vmatpush2.msra.mxu0 0.0
    %2614 = vmatprep.subr.mxu0 0.0
    %2615 = vmatpush2.msra.mxu0 0.0
    %2616 = vmatprep.subr.mxu0 0.0
    %2617 = vmatpush2.msra.mxu0 0.0
    %2618 = vmatprep.subr.mxu0 0.0
    %2619 = vmatpush2.msra.mxu0 0.0
    %2620 = vmatprep.subr.mxu0 0.0
    %2621 = vmatpush2.msra.mxu0 0.0
    %2622 = vmatprep.subr.mxu0 0.0
    %2623 = vmatpush2.msra.mxu0 0.0
    %2624 = vmatprep.subr.mxu0 0.0
    %2625 = vmatpush2.msra.mxu0 0.0
    %2626 = vmatprep.subr.mxu0 0.0
    %2627 = vmatpush2.msra.mxu0 0.0
    %2628 = vmatprep.subr.mxu0 0.0
    %2629 = vmatpush2.msra.mxu0 0.0
    %2630 = vmatprep.subr.mxu0 0.0
    %2631 = vmatpush2.msra.mxu0 0.0
    %2632 = vmatprep.subr.mxu0 0.0
    %2633 = vmatpush2.msra.mxu0 0.0
    %2634 = vmatprep.subr.mxu0 0.0
    %2635 = vmatpush2.msra.mxu0 0.0
    %2636 = vmatprep.mubr.f32.mxu0 0.0
    %2637 = vmatmul.mubr.f32.gmra.mxu0 %v2570
    %v2638 = vpop.f32.mrf.mxu0
    %v2639 = vadd.f32 0.0, %v2638
    %v2640 = vpop.f32.mrf.mxu0
    %2641 = vdwg.mxu0
    %v2642 = vadd.f32 %v2568, %v2639
    %v2643 = vxor.u32 %v2642, 2147483648
    %v2644 = vmul.f32 %v2643, 1.442695
    %v2645 = vpow.pop %v2644
    %v2646 = vadd.f32 %v2645, 1.0
    %v2647 = vrcp.pop %v2646
    %v2648 = vmul.f32 1.0, %v2647
    %s2649 = scalar_lea.vmem [#allocation3], 24
    %v2650 = vld [vmem:[%s2649] sm:$0xff]
    %2651 = vmatprep.subr.mxu0 0.0
    %2652 = vmatpush1.msra.mxu0 0.0
    %2653 = vmatprep.subr.mxu0 0.0
    %2654 = vmatpush1.msra.mxu0 0.0
    %2655 = vmatprep.subr.mxu0 0.0
    %2656 = vmatpush1.msra.mxu0 0.0
    %2657 = vmatprep.subr.mxu0 0.0
    %2658 = vmatpush1.msra.mxu0 0.0
    %2659 = vmatprep.subr.mxu0 0.0
    %2660 = vmatpush1.msra.mxu0 0.0
    %2661 = vmatprep.subr.mxu0 0.0
    %2662 = vmatpush1.msra.mxu0 0.0
    %2663 = vmatprep.subr.mxu0 0.0
    %2664 = vmatpush1.msra.mxu0 0.0
    %2665 = vmatprep.subr.mxu0 0.0
    %2666 = vmatpush1.msra.mxu0 0.0
    %2667 = vmatprep.subr.mxu0 0.0
    %2668 = vmatpush1.msra.mxu0 0.0
    %2669 = vmatprep.subr.mxu0 0.0
    %2670 = vmatpush1.msra.mxu0 0.0
    %2671 = vmatprep.subr.mxu0 0.0
    %2672 = vmatpush1.msra.mxu0 0.0
    %2673 = vmatprep.subr.mxu0 0.0
    %2674 = vmatpush1.msra.mxu0 0.0
    %2675 = vmatprep.subr.mxu0 0.0
    %2676 = vmatpush1.msra.mxu0 %v624
    %2677 = vmatprep.subr.mxu0 0.0
    %2678 = vmatpush1.msra.mxu0 %v623
    %2679 = vmatprep.subr.mxu0 0.0
    %2680 = vmatpush1.msra.mxu0 %v622
    %2681 = vmatprep.subr.mxu0 0.0
    %2682 = vmatpush1.msra.mxu0 %v621
    %2683 = vmatprep.subr.mxu0 0.0
    %2684 = vmatpush2.msra.mxu0 0.0
    %2685 = vmatprep.subr.mxu0 0.0
    %2686 = vmatpush2.msra.mxu0 0.0
    %2687 = vmatprep.subr.mxu0 0.0
    %2688 = vmatpush2.msra.mxu0 0.0
    %2689 = vmatprep.subr.mxu0 0.0
    %2690 = vmatpush2.msra.mxu0 0.0
    %2691 = vmatprep.subr.mxu0 0.0
    %2692 = vmatpush2.msra.mxu0 0.0
    %2693 = vmatprep.subr.mxu0 0.0
    %2694 = vmatpush2.msra.mxu0 0.0
    %2695 = vmatprep.subr.mxu0 0.0
    %2696 = vmatpush2.msra.mxu0 0.0
    %2697 = vmatprep.subr.mxu0 0.0
    %2698 = vmatpush2.msra.mxu0 0.0
    %2699 = vmatprep.subr.mxu0 0.0
    %2700 = vmatpush2.msra.mxu0 0.0
    %2701 = vmatprep.subr.mxu0 0.0
    %2702 = vmatpush2.msra.mxu0 0.0
    %2703 = vmatprep.subr.mxu0 0.0
    %2704 = vmatpush2.msra.mxu0 0.0
    %2705 = vmatprep.subr.mxu0 0.0
    %2706 = vmatpush2.msra.mxu0 0.0
    %2707 = vmatprep.subr.mxu0 0.0
    %2708 = vmatpush2.msra.mxu0 0.0
    %2709 = vmatprep.subr.mxu0 0.0
    %2710 = vmatpush2.msra.mxu0 0.0
    %2711 = vmatprep.subr.mxu0 0.0
    %2712 = vmatpush2.msra.mxu0 0.0
    %2713 = vmatprep.subr.mxu0 0.0
    %2714 = vmatpush2.msra.mxu0 0.0
    %2715 = vmatprep.mubr.f32.mxu0 0.0
    %2716 = vmatmul.mubr.f32.gmra.mxu0 %v2570
    %v2717 = vpop.f32.mrf.mxu0
    %v2718 = vadd.f32 0.0, %v2717
    %v2719 = vpop.f32.mrf.mxu0
    %2720 = vdwg.mxu0
    %v2721 = vadd.f32 %v2650, %v2718
    %v2722 = vxor.u32 %v2721, 2147483648
    %v2723 = vmul.f32 %v2722, 1.442695
    %v2724 = vpow.pop %v2723
    %v2725 = vadd.f32 %v2724, 1.0
    %v2726 = vrcp.pop %v2725
    %v2727 = vmul.f32 1.0, %v2726
    %s2728 = scalar_lea.vmem [#allocation4], 24
    %v2729 = vld [vmem:[%s2728] sm:$0xff]
    %2730 = vmatprep.subr.mxu0 0.0
    %2731 = vmatpush1.msra.mxu0 0.0
    %2732 = vmatprep.subr.mxu0 0.0
    %2733 = vmatpush1.msra.mxu0 0.0
    %2734 = vmatprep.subr.mxu0 0.0
    %2735 = vmatpush1.msra.mxu0 0.0
    %2736 = vmatprep.subr.mxu0 0.0
    %2737 = vmatpush1.msra.mxu0 0.0
    %2738 = vmatprep.subr.mxu0 0.0
    %2739 = vmatpush1.msra.mxu0 0.0
    %2740 = vmatprep.subr.mxu0 0.0
    %2741 = vmatpush1.msra.mxu0 0.0
    %2742 = vmatprep.subr.mxu0 0.0
    %2743 = vmatpush1.msra.mxu0 0.0
    %2744 = vmatprep.subr.mxu0 0.0
    %2745 = vmatpush1.msra.mxu0 0.0
    %2746 = vmatprep.subr.mxu0 0.0
    %2747 = vmatpush1.msra.mxu0 0.0
    %2748 = vmatprep.subr.mxu0 0.0
    %2749 = vmatpush1.msra.mxu0 0.0
    %2750 = vmatprep.subr.mxu0 0.0
    %2751 = vmatpush1.msra.mxu0 0.0
    %2752 = vmatprep.subr.mxu0 0.0
    %2753 = vmatpush1.msra.mxu0 0.0
    %2754 = vmatprep.subr.mxu0 0.0
    %2755 = vmatpush1.msra.mxu0 %v628
    %2756 = vmatprep.subr.mxu0 0.0
    %2757 = vmatpush1.msra.mxu0 %v627
    %2758 = vmatprep.subr.mxu0 0.0
    %2759 = vmatpush1.msra.mxu0 %v626
    %2760 = vmatprep.subr.mxu0 0.0
    %2761 = vmatpush1.msra.mxu0 %v625
    %2762 = vmatprep.subr.mxu0 0.0
    %2763 = vmatpush2.msra.mxu0 0.0
    %2764 = vmatprep.subr.mxu0 0.0
    %2765 = vmatpush2.msra.mxu0 0.0
    %2766 = vmatprep.subr.mxu0 0.0
    %2767 = vmatpush2.msra.mxu0 0.0
    %2768 = vmatprep.subr.mxu0 0.0
    %2769 = vmatpush2.msra.mxu0 0.0
    %2770 = vmatprep.subr.mxu0 0.0
    %2771 = vmatpush2.msra.mxu0 0.0
    %2772 = vmatprep.subr.mxu0 0.0
    %2773 = vmatpush2.msra.mxu0 0.0
    %2774 = vmatprep.subr.mxu0 0.0
    %2775 = vmatpush2.msra.mxu0 0.0
    %2776 = vmatprep.subr.mxu0 0.0
    %2777 = vmatpush2.msra.mxu0 0.0
    %2778 = vmatprep.subr.mxu0 0.0
    %2779 = vmatpush2.msra.mxu0 0.0
    %2780 = vmatprep.subr.mxu0 0.0
    %2781 = vmatpush2.msra.mxu0 0.0
    %2782 = vmatprep.subr.mxu0 0.0
    %2783 = vmatpush2.msra.mxu0 0.0
    %2784 = vmatprep.subr.mxu0 0.0
    %2785 = vmatpush2.msra.mxu0 0.0
    %2786 = vmatprep.subr.mxu0 0.0
    %2787 = vmatpush2.msra.mxu0 0.0
    %2788 = vmatprep.subr.mxu0 0.0
    %2789 = vmatpush2.msra.mxu0 0.0
    %2790 = vmatprep.subr.mxu0 0.0
    %2791 = vmatpush2.msra.mxu0 0.0
    %2792 = vmatprep.subr.mxu0 0.0
    %2793 = vmatpush2.msra.mxu0 0.0
    %2794 = vmatprep.mubr.f32.mxu0 0.0
    %2795 = vmatmul.mubr.f32.gmra.mxu0 %v2570
    %v2796 = vpop.f32.mrf.mxu0
    %v2797 = vadd.f32 0.0, %v2796
    %v2798 = vpop.f32.mrf.mxu0
    %2799 = vdwg.mxu0
    %v2800 = vadd.f32 %v2729, %v2797
    %v2801 = vtanh.pop %v2800
    %s2802 = scalar_lea.vmem [#allocation5], 24
    %v2803 = vld [vmem:[%s2802] sm:$0xff]
    %2804 = vmatprep.subr.mxu0 0.0
    %2805 = vmatpush1.msra.mxu0 0.0
    %2806 = vmatprep.subr.mxu0 0.0
    %2807 = vmatpush1.msra.mxu0 0.0
    %2808 = vmatprep.subr.mxu0 0.0
    %2809 = vmatpush1.msra.mxu0 0.0
    %2810 = vmatprep.subr.mxu0 0.0
    %2811 = vmatpush1.msra.mxu0 0.0
    %2812 = vmatprep.subr.mxu0 0.0
    %2813 = vmatpush1.msra.mxu0 0.0
    %2814 = vmatprep.subr.mxu0 0.0
    %2815 = vmatpush1.msra.mxu0 0.0
    %2816 = vmatprep.subr.mxu0 0.0
    %2817 = vmatpush1.msra.mxu0 0.0
    %2818 = vmatprep.subr.mxu0 0.0
    %2819 = vmatpush1.msra.mxu0 0.0
    %2820 = vmatprep.subr.mxu0 0.0
    %2821 = vmatpush1.msra.mxu0 0.0
    %2822 = vmatprep.subr.mxu0 0.0
    %2823 = vmatpush1.msra.mxu0 0.0
    %2824 = vmatprep.subr.mxu0 0.0
    %2825 = vmatpush1.msra.mxu0 0.0
    %2826 = vmatprep.subr.mxu0 0.0
    %2827 = vmatpush1.msra.mxu0 0.0
    %2828 = vmatprep.subr.mxu0 0.0
    %2829 = vmatpush1.msra.mxu0 %v632
    %2830 = vmatprep.subr.mxu0 0.0
    %2831 = vmatpush1.msra.mxu0 %v631
    %2832 = vmatprep.subr.mxu0 0.0
    %2833 = vmatpush1.msra.mxu0 %v630
    %2834 = vmatprep.subr.mxu0 0.0
    %2835 = vmatpush1.msra.mxu0 %v629
    %2836 = vmatprep.subr.mxu0 0.0
    %2837 = vmatpush2.msra.mxu0 0.0
    %2838 = vmatprep.subr.mxu0 0.0
    %2839 = vmatpush2.msra.mxu0 0.0
    %2840 = vmatprep.subr.mxu0 0.0
    %2841 = vmatpush2.msra.mxu0 0.0
    %2842 = vmatprep.subr.mxu0 0.0
    %2843 = vmatpush2.msra.mxu0 0.0
    %2844 = vmatprep.subr.mxu0 0.0
    %2845 = vmatpush2.msra.mxu0 0.0
    %2846 = vmatprep.subr.mxu0 0.0
    %2847 = vmatpush2.msra.mxu0 0.0
    %2848 = vmatprep.subr.mxu0 0.0
    %2849 = vmatpush2.msra.mxu0 0.0
    %2850 = vmatprep.subr.mxu0 0.0
    %2851 = vmatpush2.msra.mxu0 0.0
    %2852 = vmatprep.subr.mxu0 0.0
    %2853 = vmatpush2.msra.mxu0 0.0
    %2854 = vmatprep.subr.mxu0 0.0
    %2855 = vmatpush2.msra.mxu0 0.0
    %2856 = vmatprep.subr.mxu0 0.0
    %2857 = vmatpush2.msra.mxu0 0.0
    %2858 = vmatprep.subr.mxu0 0.0
    %2859 = vmatpush2.msra.mxu0 0.0
    %2860 = vmatprep.subr.mxu0 0.0
    %2861 = vmatpush2.msra.mxu0 0.0
    %2862 = vmatprep.subr.mxu0 0.0
    %2863 = vmatpush2.msra.mxu0 0.0
    %2864 = vmatprep.subr.mxu0 0.0
    %2865 = vmatpush2.msra.mxu0 0.0
    %2866 = vmatprep.subr.mxu0 0.0
    %2867 = vmatpush2.msra.mxu0 0.0
    %2868 = vmatprep.mubr.f32.mxu0 0.0
    %2869 = vmatmul.mubr.f32.gmra.mxu0 %v2570
    %v2870 = vpop.f32.mrf.mxu0
    %v2871 = vadd.f32 0.0, %v2870
    %v2872 = vpop.f32.mrf.mxu0
    %2873 = vdwg.mxu0
    %v2874 = vadd.f32 %v2803, %v2871
    %v2875 = vxor.u32 %v2874, 2147483648
    %v2876 = vmul.f32 %v2875, 1.442695
    %v2877 = vpow.pop %v2876
    %v2878 = vadd.f32 %v2877, 1.0
    %v2879 = vrcp.pop %v2878
    %v2880 = vmul.f32 1.0, %v2879
    %v2881 = vmul.f32 %v2727, %v2241
    %v2882 = vmul.f32 %v2648, %v2801
    %v2883 = vadd.f32 %v2881, %v2882
    %v2884 = vtanh.pop %v2883
    %v2885 = vmul.f32 %v2880, %v2884
    %s2886 = scalar_lea.vmem [#allocation10], 24
    %2887 = vst.msk [vmem:[%s2886] sm:$0xff] %vm392, %v2885
    %s2888 = scalar_lea.vmem [#allocation6], 32
    %v2889 = vld [vmem:[%s2888] sm:$0xff]
    %v2891 = vsel %vm392, %v2564, 0
    %2893 = vmatprep.subr.mxu0 0.0
    %2894 = vmatpush1.msra.mxu0 0.0
    %2895 = vmatprep.subr.mxu0 0.0
    %2896 = vmatpush1.msra.mxu0 0.0
    %2897 = vmatprep.subr.mxu0 0.0
    %2898 = vmatpush1.msra.mxu0 0.0
    %2899 = vmatprep.subr.mxu0 0.0
    %2900 = vmatpush1.msra.mxu0 0.0
    %2901 = vmatprep.subr.mxu0 0.0
    %2902 = vmatpush1.msra.mxu0 0.0
    %2903 = vmatprep.subr.mxu0 0.0
    %2904 = vmatpush1.msra.mxu0 0.0
    %2905 = vmatprep.subr.mxu0 0.0
    %2906 = vmatpush1.msra.mxu0 0.0
    %2907 = vmatprep.subr.mxu0 0.0
    %2908 = vmatpush1.msra.mxu0 0.0
    %2909 = vmatprep.subr.mxu0 0.0
    %2910 = vmatpush1.msra.mxu0 0.0
    %2911 = vmatprep.subr.mxu0 0.0
    %2912 = vmatpush1.msra.mxu0 0.0
    %2913 = vmatprep.subr.mxu0 0.0
    %2914 = vmatpush1.msra.mxu0 0.0
    %2915 = vmatprep.subr.mxu0 0.0
    %2916 = vmatpush1.msra.mxu0 0.0
    %2917 = vmatprep.subr.mxu0 0.0
    %2918 = vmatpush1.msra.mxu0 %v636
    %2919 = vmatprep.subr.mxu0 0.0
    %2920 = vmatpush1.msra.mxu0 %v635
    %2921 = vmatprep.subr.mxu0 0.0
    %2922 = vmatpush1.msra.mxu0 %v634
    %2923 = vmatprep.subr.mxu0 0.0
    %2924 = vmatpush1.msra.mxu0 %v633
    %2925 = vmatprep.subr.mxu0 0.0
    %2926 = vmatpush2.msra.mxu0 0.0
    %2927 = vmatprep.subr.mxu0 0.0
    %2928 = vmatpush2.msra.mxu0 0.0
    %2929 = vmatprep.subr.mxu0 0.0
    %2930 = vmatpush2.msra.mxu0 0.0
    %2931 = vmatprep.subr.mxu0 0.0
    %2932 = vmatpush2.msra.mxu0 0.0
    %2933 = vmatprep.subr.mxu0 0.0
    %2934 = vmatpush2.msra.mxu0 0.0
    %2935 = vmatprep.subr.mxu0 0.0
    %2936 = vmatpush2.msra.mxu0 0.0
    %2937 = vmatprep.subr.mxu0 0.0
    %2938 = vmatpush2.msra.mxu0 0.0
    %2939 = vmatprep.subr.mxu0 0.0
    %2940 = vmatpush2.msra.mxu0 0.0
    %2941 = vmatprep.subr.mxu0 0.0
    %2942 = vmatpush2.msra.mxu0 0.0
    %2943 = vmatprep.subr.mxu0 0.0
    %2944 = vmatpush2.msra.mxu0 0.0
    %2945 = vmatprep.subr.mxu0 0.0
    %2946 = vmatpush2.msra.mxu0 0.0
    %2947 = vmatprep.subr.mxu0 0.0
    %2948 = vmatpush2.msra.mxu0 0.0
    %2949 = vmatprep.subr.mxu0 0.0
    %2950 = vmatpush2.msra.mxu0 0.0
    %2951 = vmatprep.subr.mxu0 0.0
    %2952 = vmatpush2.msra.mxu0 0.0
    %2953 = vmatprep.subr.mxu0 0.0
    %2954 = vmatpush2.msra.mxu0 0.0
    %2955 = vmatprep.subr.mxu0 0.0
    %2956 = vmatpush2.msra.mxu0 0.0
    %2957 = vmatprep.mubr.f32.mxu0 0.0
    %2958 = vmatmul.mubr.f32.gmra.mxu0 %v2891
    %v2959 = vpop.f32.mrf.mxu0
    %v2960 = vadd.f32 0.0, %v2959
    %v2961 = vpop.f32.mrf.mxu0
    %2962 = vdwg.mxu0
    %v2963 = vadd.f32 %v2889, %v2960
    %v2964 = vxor.u32 %v2963, 2147483648
    %v2965 = vmul.f32 %v2964, 1.442695
    %v2966 = vpow.pop %v2965
    %v2967 = vadd.f32 %v2966, 1.0
    %v2968 = vrcp.pop %v2967
    %v2969 = vmul.f32 1.0, %v2968
    %s2970 = scalar_lea.vmem [#allocation7], 32
    %v2971 = vld [vmem:[%s2970] sm:$0xff]
    %2972 = vmatprep.subr.mxu0 0.0
    %2973 = vmatpush1.msra.mxu0 0.0
    %2974 = vmatprep.subr.mxu0 0.0
    %2975 = vmatpush1.msra.mxu0 0.0
    %2976 = vmatprep.subr.mxu0 0.0
    %2977 = vmatpush1.msra.mxu0 0.0
    %2978 = vmatprep.subr.mxu0 0.0
    %2979 = vmatpush1.msra.mxu0 0.0
    %2980 = vmatprep.subr.mxu0 0.0
    %2981 = vmatpush1.msra.mxu0 0.0
    %2982 = vmatprep.subr.mxu0 0.0
    %2983 = vmatpush1.msra.mxu0 0.0
    %2984 = vmatprep.subr.mxu0 0.0
    %2985 = vmatpush1.msra.mxu0 0.0
    %2986 = vmatprep.subr.mxu0 0.0
    %2987 = vmatpush1.msra.mxu0 0.0
    %2988 = vmatprep.subr.mxu0 0.0
    %2989 = vmatpush1.msra.mxu0 0.0
    %2990 = vmatprep.subr.mxu0 0.0
    %2991 = vmatpush1.msra.mxu0 0.0
    %2992 = vmatprep.subr.mxu0 0.0
    %2993 = vmatpush1.msra.mxu0 0.0
    %2994 = vmatprep.subr.mxu0 0.0
    %2995 = vmatpush1.msra.mxu0 0.0
    %2996 = vmatprep.subr.mxu0 0.0
    %2997 = vmatpush1.msra.mxu0 %v640
    %2998 = vmatprep.subr.mxu0 0.0
    %2999 = vmatpush1.msra.mxu0 %v639
    %3000 = vmatprep.subr.mxu0 0.0
    %3001 = vmatpush1.msra.mxu0 %v638
    %3002 = vmatprep.subr.mxu0 0.0
    %3003 = vmatpush1.msra.mxu0 %v637
    %3004 = vmatprep.subr.mxu0 0.0
    %3005 = vmatpush2.msra.mxu0 0.0
    %3006 = vmatprep.subr.mxu0 0.0
    %3007 = vmatpush2.msra.mxu0 0.0
    %3008 = vmatprep.subr.mxu0 0.0
    %3009 = vmatpush2.msra.mxu0 0.0
    %3010 = vmatprep.subr.mxu0 0.0
    %3011 = vmatpush2.msra.mxu0 0.0
    %3012 = vmatprep.subr.mxu0 0.0
    %3013 = vmatpush2.msra.mxu0 0.0
    %3014 = vmatprep.subr.mxu0 0.0
    %3015 = vmatpush2.msra.mxu0 0.0
    %3016 = vmatprep.subr.mxu0 0.0
    %3017 = vmatpush2.msra.mxu0 0.0
    %3018 = vmatprep.subr.mxu0 0.0
    %3019 = vmatpush2.msra.mxu0 0.0
    %3020 = vmatprep.subr.mxu0 0.0
    %3021 = vmatpush2.msra.mxu0 0.0
    %3022 = vmatprep.subr.mxu0 0.0
    %3023 = vmatpush2.msra.mxu0 0.0
    %3024 = vmatprep.subr.mxu0 0.0
    %3025 = vmatpush2.msra.mxu0 0.0
    %3026 = vmatprep.subr.mxu0 0.0
    %3027 = vmatpush2.msra.mxu0 0.0
    %3028 = vmatprep.subr.mxu0 0.0
    %3029 = vmatpush2.msra.mxu0 0.0
    %3030 = vmatprep.subr.mxu0 0.0
    %3031 = vmatpush2.msra.mxu0 0.0
    %3032 = vmatprep.subr.mxu0 0.0
    %3033 = vmatpush2.msra.mxu0 0.0
    %3034 = vmatprep.subr.mxu0 0.0
    %3035 = vmatpush2.msra.mxu0 0.0
    %3036 = vmatprep.mubr.f32.mxu0 0.0
    %3037 = vmatmul.mubr.f32.gmra.mxu0 %v2891
    %v3038 = vpop.f32.mrf.mxu0
    %v3039 = vadd.f32 0.0, %v3038
    %v3040 = vpop.f32.mrf.mxu0
    %3041 = vdwg.mxu0
    %v3042 = vadd.f32 %v2971, %v3039
    %v3043 = vxor.u32 %v3042, 2147483648
    %v3044 = vmul.f32 %v3043, 1.442695
    %v3045 = vpow.pop %v3044
    %v3046 = vadd.f32 %v3045, 1.0
    %v3047 = vrcp.pop %v3046
    %v3048 = vmul.f32 1.0, %v3047
    %s3049 = scalar_lea.vmem [#allocation8], 32
    %v3050 = vld [vmem:[%s3049] sm:$0xff]
    %3051 = vmatprep.subr.mxu0 0.0
    %3052 = vmatpush1.msra.mxu0 0.0
    %3053 = vmatprep.subr.mxu0 0.0
    %3054 = vmatpush1.msra.mxu0 0.0
    %3055 = vmatprep.subr.mxu0 0.0
    %3056 = vmatpush1.msra.mxu0 0.0
    %3057 = vmatprep.subr.mxu0 0.0
    %3058 = vmatpush1.msra.mxu0 0.0
    %3059 = vmatprep.subr.mxu0 0.0
    %3060 = vmatpush1.msra.mxu0 0.0
    %3061 = vmatprep.subr.mxu0 0.0
    %3062 = vmatpush1.msra.mxu0 0.0
    %3063 = vmatprep.subr.mxu0 0.0
    %3064 = vmatpush1.msra.mxu0 0.0
    %3065 = vmatprep.subr.mxu0 0.0
    %3066 = vmatpush1.msra.mxu0 0.0
    %3067 = vmatprep.subr.mxu0 0.0
    %3068 = vmatpush1.msra.mxu0 0.0
    %3069 = vmatprep.subr.mxu0 0.0
    %3070 = vmatpush1.msra.mxu0 0.0
    %3071 = vmatprep.subr.mxu0 0.0
    %3072 = vmatpush1.msra.mxu0 0.0
    %3073 = vmatprep.subr.mxu0 0.0
    %3074 = vmatpush1.msra.mxu0 0.0
    %3075 = vmatprep.subr.mxu0 0.0
    %3076 = vmatpush1.msra.mxu0 %v644
    %3077 = vmatprep.subr.mxu0 0.0
    %3078 = vmatpush1.msra.mxu0 %v643
    %3079 = vmatprep.subr.mxu0 0.0
    %3080 = vmatpush1.msra.mxu0 %v642
    %3081 = vmatprep.subr.mxu0 0.0
    %3082 = vmatpush1.msra.mxu0 %v641
    %3083 = vmatprep.subr.mxu0 0.0
    %3084 = vmatpush2.msra.mxu0 0.0
    %3085 = vmatprep.subr.mxu0 0.0
    %3086 = vmatpush2.msra.mxu0 0.0
    %3087 = vmatprep.subr.mxu0 0.0
    %3088 = vmatpush2.msra.mxu0 0.0
    %3089 = vmatprep.subr.mxu0 0.0
    %3090 = vmatpush2.msra.mxu0 0.0
    %3091 = vmatprep.subr.mxu0 0.0
    %3092 = vmatpush2.msra.mxu0 0.0
    %3093 = vmatprep.subr.mxu0 0.0
    %3094 = vmatpush2.msra.mxu0 0.0
    %3095 = vmatprep.subr.mxu0 0.0
    %3096 = vmatpush2.msra.mxu0 0.0
    %3097 = vmatprep.subr.mxu0 0.0
    %3098 = vmatpush2.msra.mxu0 0.0
    %3099 = vmatprep.subr.mxu0 0.0
    %3100 = vmatpush2.msra.mxu0 0.0
    %3101 = vmatprep.subr.mxu0 0.0
    %3102 = vmatpush2.msra.mxu0 0.0
    %3103 = vmatprep.subr.mxu0 0.0
    %3104 = vmatpush2.msra.mxu0 0.0
    %3105 = vmatprep.subr.mxu0 0.0
    %3106 = vmatpush2.msra.mxu0 0.0
    %3107 = vmatprep.subr.mxu0 0.0
    %3108 = vmatpush2.msra.mxu0 0.0
    %3109 = vmatprep.subr.mxu0 0.0
    %3110 = vmatpush2.msra.mxu0 0.0
    %3111 = vmatprep.subr.mxu0 0.0
    %3112 = vmatpush2.msra.mxu0 0.0
    %3113 = vmatprep.subr.mxu0 0.0
    %3114 = vmatpush2.msra.mxu0 0.0
    %3115 = vmatprep.mubr.f32.mxu0 0.0
    %3116 = vmatmul.mubr.f32.gmra.mxu0 %v2891
    %v3117 = vpop.f32.mrf.mxu0
    %v3118 = vadd.f32 0.0, %v3117
    %v3119 = vpop.f32.mrf.mxu0
    %3120 = vdwg.mxu0
    %v3121 = vadd.f32 %v3050, %v3118
    %v3122 = vtanh.pop %v3121
    %s3123 = scalar_lea.vmem [#allocation9], 32
    %v3124 = vld [vmem:[%s3123] sm:$0xff]
    %3125 = vmatprep.subr.mxu0 0.0
    %3126 = vmatpush1.msra.mxu0 0.0
    %3127 = vmatprep.subr.mxu0 0.0
    %3128 = vmatpush1.msra.mxu0 0.0
    %3129 = vmatprep.subr.mxu0 0.0
    %3130 = vmatpush1.msra.mxu0 0.0
    %3131 = vmatprep.subr.mxu0 0.0
    %3132 = vmatpush1.msra.mxu0 0.0
    %3133 = vmatprep.subr.mxu0 0.0
    %3134 = vmatpush1.msra.mxu0 0.0
    %3135 = vmatprep.subr.mxu0 0.0
    %3136 = vmatpush1.msra.mxu0 0.0
    %3137 = vmatprep.subr.mxu0 0.0
    %3138 = vmatpush1.msra.mxu0 0.0
    %3139 = vmatprep.subr.mxu0 0.0
    %3140 = vmatpush1.msra.mxu0 0.0
    %3141 = vmatprep.subr.mxu0 0.0
    %3142 = vmatpush1.msra.mxu0 0.0
    %3143 = vmatprep.subr.mxu0 0.0
    %3144 = vmatpush1.msra.mxu0 0.0
    %3145 = vmatprep.subr.mxu0 0.0
    %3146 = vmatpush1.msra.mxu0 0.0
    %3147 = vmatprep.subr.mxu0 0.0
    %3148 = vmatpush1.msra.mxu0 0.0
    %3149 = vmatprep.subr.mxu0 0.0
    %3150 = vmatpush1.msra.mxu0 %v648
    %3151 = vmatprep.subr.mxu0 0.0
    %3152 = vmatpush1.msra.mxu0 %v647
    %3153 = vmatprep.subr.mxu0 0.0
    %3154 = vmatpush1.msra.mxu0 %v646
    %3155 = vmatprep.subr.mxu0 0.0
    %3156 = vmatpush1.msra.mxu0 %v645
    %3157 = vmatprep.subr.mxu0 0.0
    %3158 = vmatpush2.msra.mxu0 0.0
    %3159 = vmatprep.subr.mxu0 0.0
    %3160 = vmatpush2.msra.mxu0 0.0
    %3161 = vmatprep.subr.mxu0 0.0
    %3162 = vmatpush2.msra.mxu0 0.0
    %3163 = vmatprep.subr.mxu0 0.0
    %3164 = vmatpush2.msra.mxu0 0.0
    %3165 = vmatprep.subr.mxu0 0.0
    %3166 = vmatpush2.msra.mxu0 0.0
    %3167 = vmatprep.subr.mxu0 0.0
    %3168 = vmatpush2.msra.mxu0 0.0
    %3169 = vmatprep.subr.mxu0 0.0
    %3170 = vmatpush2.msra.mxu0 0.0
    %3171 = vmatprep.subr.mxu0 0.0
    %3172 = vmatpush2.msra.mxu0 0.0
    %3173 = vmatprep.subr.mxu0 0.0
    %3174 = vmatpush2.msra.mxu0 0.0
    %3175 = vmatprep.subr.mxu0 0.0
    %3176 = vmatpush2.msra.mxu0 0.0
    %3177 = vmatprep.subr.mxu0 0.0
    %3178 = vmatpush2.msra.mxu0 0.0
    %3179 = vmatprep.subr.mxu0 0.0
    %3180 = vmatpush2.msra.mxu0 0.0
    %3181 = vmatprep.subr.mxu0 0.0
    %3182 = vmatpush2.msra.mxu0 0.0
    %3183 = vmatprep.subr.mxu0 0.0
    %3184 = vmatpush2.msra.mxu0 0.0
    %3185 = vmatprep.subr.mxu0 0.0
    %3186 = vmatpush2.msra.mxu0 0.0
    %3187 = vmatprep.subr.mxu0 0.0
    %3188 = vmatpush2.msra.mxu0 0.0
    %3189 = vmatprep.mubr.f32.mxu0 0.0
    %3190 = vmatmul.mubr.f32.gmra.mxu0 %v2891
    %v3191 = vpop.f32.mrf.mxu0
    %v3192 = vadd.f32 0.0, %v3191
    %v3193 = vpop.f32.mrf.mxu0
    %3194 = vdwg.mxu0
    %v3195 = vadd.f32 %v3124, %v3192
    %v3196 = vxor.u32 %v3195, 2147483648
    %v3197 = vmul.f32 %v3196, 1.442695
    %v3198 = vpow.pop %v3197
    %v3199 = vadd.f32 %v3198, 1.0
    %v3200 = vrcp.pop %v3199
    %v3201 = vmul.f32 1.0, %v3200
    %v3202 = vmul.f32 %v3048, %v2562
    %v3203 = vmul.f32 %v2969, %v3122
    %v3204 = vadd.f32 %v3202, %v3203
    %v3205 = vtanh.pop %v3204
    %v3206 = vmul.f32 %v3201, %v3205
    %s3207 = scalar_lea.vmem [#allocation11], 32
    %3208 = vst.msk [vmem:[%s3207] sm:$0xff] %vm392, %v3206
    %s3209 = scalar_lea.vmem [#allocation2], 32
    %v3210 = vld [vmem:[%s3209] sm:$0xff]
    %v3212 = vsel %vm392, %v2885, 0
    %3214 = vmatprep.subr.mxu0 0.0
    %3215 = vmatpush1.msra.mxu0 0.0
    %3216 = vmatprep.subr.mxu0 0.0
    %3217 = vmatpush1.msra.mxu0 0.0
    %3218 = vmatprep.subr.mxu0 0.0
    %3219 = vmatpush1.msra.mxu0 0.0
    %3220 = vmatprep.subr.mxu0 0.0
    %3221 = vmatpush1.msra.mxu0 0.0
    %3222 = vmatprep.subr.mxu0 0.0
    %3223 = vmatpush1.msra.mxu0 0.0
    %3224 = vmatprep.subr.mxu0 0.0
    %3225 = vmatpush1.msra.mxu0 0.0
    %3226 = vmatprep.subr.mxu0 0.0
    %3227 = vmatpush1.msra.mxu0 0.0
    %3228 = vmatprep.subr.mxu0 0.0
    %3229 = vmatpush1.msra.mxu0 0.0
    %3230 = vmatprep.subr.mxu0 0.0
    %3231 = vmatpush1.msra.mxu0 0.0
    %3232 = vmatprep.subr.mxu0 0.0
    %3233 = vmatpush1.msra.mxu0 0.0
    %3234 = vmatprep.subr.mxu0 0.0
    %3235 = vmatpush1.msra.mxu0 0.0
    %3236 = vmatprep.subr.mxu0 0.0
    %3237 = vmatpush1.msra.mxu0 0.0
    %3238 = vmatprep.subr.mxu0 0.0
    %3239 = vmatpush1.msra.mxu0 %v620
    %3240 = vmatprep.subr.mxu0 0.0
    %3241 = vmatpush1.msra.mxu0 %v619
    %3242 = vmatprep.subr.mxu0 0.0
    %3243 = vmatpush1.msra.mxu0 %v618
    %3244 = vmatprep.subr.mxu0 0.0
    %3245 = vmatpush1.msra.mxu0 %v617
    %3246 = vmatprep.subr.mxu0 0.0
    %3247 = vmatpush2.msra.mxu0 0.0
    %3248 = vmatprep.subr.mxu0 0.0
    %3249 = vmatpush2.msra.mxu0 0.0
    %3250 = vmatprep.subr.mxu0 0.0
    %3251 = vmatpush2.msra.mxu0 0.0
    %3252 = vmatprep.subr.mxu0 0.0
    %3253 = vmatpush2.msra.mxu0 0.0
    %3254 = vmatprep.subr.mxu0 0.0
    %3255 = vmatpush2.msra.mxu0 0.0
    %3256 = vmatprep.subr.mxu0 0.0
    %3257 = vmatpush2.msra.mxu0 0.0
    %3258 = vmatprep.subr.mxu0 0.0
    %3259 = vmatpush2.msra.mxu0 0.0
    %3260 = vmatprep.subr.mxu0 0.0
    %3261 = vmatpush2.msra.mxu0 0.0
    %3262 = vmatprep.subr.mxu0 0.0
    %3263 = vmatpush2.msra.mxu0 0.0
    %3264 = vmatprep.subr.mxu0 0.0
    %3265 = vmatpush2.msra.mxu0 0.0
    %3266 = vmatprep.subr.mxu0 0.0
    %3267 = vmatpush2.msra.mxu0 0.0
    %3268 = vmatprep.subr.mxu0 0.0
    %3269 = vmatpush2.msra.mxu0 0.0
    %3270 = vmatprep.subr.mxu0 0.0
    %3271 = vmatpush2.msra.mxu0 0.0
    %3272 = vmatprep.subr.mxu0 0.0
    %3273 = vmatpush2.msra.mxu0 0.0
    %3274 = vmatprep.subr.mxu0 0.0
    %3275 = vmatpush2.msra.mxu0 0.0
    %3276 = vmatprep.subr.mxu0 0.0
    %3277 = vmatpush2.msra.mxu0 0.0
    %3278 = vmatprep.mubr.f32.mxu0 0.0
    %3279 = vmatmul.mubr.f32.gmra.mxu0 %v3212
    %v3280 = vpop.f32.mrf.mxu0
    %v3281 = vadd.f32 0.0, %v3280
    %v3282 = vpop.f32.mrf.mxu0
    %3283 = vdwg.mxu0
    %v3284 = vadd.f32 %v3210, %v3281
    %v3285 = vxor.u32 %v3284, 2147483648
    %v3286 = vmul.f32 %v3285, 1.442695
    %v3287 = vpow.pop %v3286
    %v3288 = vadd.f32 %v3287, 1.0
    %v3289 = vrcp.pop %v3288
    %v3290 = vmul.f32 1.0, %v3289
    %s3291 = scalar_lea.vmem [#allocation3], 32
    %v3292 = vld [vmem:[%s3291] sm:$0xff]
    %3293 = vmatprep.subr.mxu0 0.0
    %3294 = vmatpush1.msra.mxu0 0.0
    %3295 = vmatprep.subr.mxu0 0.0
    %3296 = vmatpush1.msra.mxu0 0.0
    %3297 = vmatprep.subr.mxu0 0.0
    %3298 = vmatpush1.msra.mxu0 0.0
    %3299 = vmatprep.subr.mxu0 0.0
    %3300 = vmatpush1.msra.mxu0 0.0
    %3301 = vmatprep.subr.mxu0 0.0
    %3302 = vmatpush1.msra.mxu0 0.0
    %3303 = vmatprep.subr.mxu0 0.0
    %3304 = vmatpush1.msra.mxu0 0.0
    %3305 = vmatprep.subr.mxu0 0.0
    %3306 = vmatpush1.msra.mxu0 0.0
    %3307 = vmatprep.subr.mxu0 0.0
    %3308 = vmatpush1.msra.mxu0 0.0
    %3309 = vmatprep.subr.mxu0 0.0
    %3310 = vmatpush1.msra.mxu0 0.0
    %3311 = vmatprep.subr.mxu0 0.0
    %3312 = vmatpush1.msra.mxu0 0.0
    %3313 = vmatprep.subr.mxu0 0.0
    %3314 = vmatpush1.msra.mxu0 0.0
    %3315 = vmatprep.subr.mxu0 0.0
    %3316 = vmatpush1.msra.mxu0 0.0
    %3317 = vmatprep.subr.mxu0 0.0
    %3318 = vmatpush1.msra.mxu0 %v624
    %3319 = vmatprep.subr.mxu0 0.0
    %3320 = vmatpush1.msra.mxu0 %v623
    %3321 = vmatprep.subr.mxu0 0.0
    %3322 = vmatpush1.msra.mxu0 %v622
    %3323 = vmatprep.subr.mxu0 0.0
    %3324 = vmatpush1.msra.mxu0 %v621
    %3325 = vmatprep.subr.mxu0 0.0
    %3326 = vmatpush2.msra.mxu0 0.0
    %3327 = vmatprep.subr.mxu0 0.0
    %3328 = vmatpush2.msra.mxu0 0.0
    %3329 = vmatprep.subr.mxu0 0.0
    %3330 = vmatpush2.msra.mxu0 0.0
    %3331 = vmatprep.subr.mxu0 0.0
    %3332 = vmatpush2.msra.mxu0 0.0
    %3333 = vmatprep.subr.mxu0 0.0
    %3334 = vmatpush2.msra.mxu0 0.0
    %3335 = vmatprep.subr.mxu0 0.0
    %3336 = vmatpush2.msra.mxu0 0.0
    %3337 = vmatprep.subr.mxu0 0.0
    %3338 = vmatpush2.msra.mxu0 0.0
    %3339 = vmatprep.subr.mxu0 0.0
    %3340 = vmatpush2.msra.mxu0 0.0
    %3341 = vmatprep.subr.mxu0 0.0
    %3342 = vmatpush2.msra.mxu0 0.0
    %3343 = vmatprep.subr.mxu0 0.0
    %3344 = vmatpush2.msra.mxu0 0.0
    %3345 = vmatprep.subr.mxu0 0.0
    %3346 = vmatpush2.msra.mxu0 0.0
    %3347 = vmatprep.subr.mxu0 0.0
    %3348 = vmatpush2.msra.mxu0 0.0
    %3349 = vmatprep.subr.mxu0 0.0
    %3350 = vmatpush2.msra.mxu0 0.0
    %3351 = vmatprep.subr.mxu0 0.0
    %3352 = vmatpush2.msra.mxu0 0.0
    %3353 = vmatprep.subr.mxu0 0.0
    %3354 = vmatpush2.msra.mxu0 0.0
    %3355 = vmatprep.subr.mxu0 0.0
    %3356 = vmatpush2.msra.mxu0 0.0
    %3357 = vmatprep.mubr.f32.mxu0 0.0
    %3358 = vmatmul.mubr.f32.gmra.mxu0 %v3212
    %v3359 = vpop.f32.mrf.mxu0
    %v3360 = vadd.f32 0.0, %v3359
    %v3361 = vpop.f32.mrf.mxu0
    %3362 = vdwg.mxu0
    %v3363 = vadd.f32 %v3292, %v3360
    %v3364 = vxor.u32 %v3363, 2147483648
    %v3365 = vmul.f32 %v3364, 1.442695
    %v3366 = vpow.pop %v3365
    %v3367 = vadd.f32 %v3366, 1.0
    %v3368 = vrcp.pop %v3367
    %v3369 = vmul.f32 1.0, %v3368
    %s3370 = scalar_lea.vmem [#allocation4], 32
    %v3371 = vld [vmem:[%s3370] sm:$0xff]
    %3372 = vmatprep.subr.mxu0 0.0
    %3373 = vmatpush1.msra.mxu0 0.0
    %3374 = vmatprep.subr.mxu0 0.0
    %3375 = vmatpush1.msra.mxu0 0.0
    %3376 = vmatprep.subr.mxu0 0.0
    %3377 = vmatpush1.msra.mxu0 0.0
    %3378 = vmatprep.subr.mxu0 0.0
    %3379 = vmatpush1.msra.mxu0 0.0
    %3380 = vmatprep.subr.mxu0 0.0
    %3381 = vmatpush1.msra.mxu0 0.0
    %3382 = vmatprep.subr.mxu0 0.0
    %3383 = vmatpush1.msra.mxu0 0.0
    %3384 = vmatprep.subr.mxu0 0.0
    %3385 = vmatpush1.msra.mxu0 0.0
    %3386 = vmatprep.subr.mxu0 0.0
    %3387 = vmatpush1.msra.mxu0 0.0
    %3388 = vmatprep.subr.mxu0 0.0
    %3389 = vmatpush1.msra.mxu0 0.0
    %3390 = vmatprep.subr.mxu0 0.0
    %3391 = vmatpush1.msra.mxu0 0.0
    %3392 = vmatprep.subr.mxu0 0.0
    %3393 = vmatpush1.msra.mxu0 0.0
    %3394 = vmatprep.subr.mxu0 0.0
    %3395 = vmatpush1.msra.mxu0 0.0
    %3396 = vmatprep.subr.mxu0 0.0
    %3397 = vmatpush1.msra.mxu0 %v628
    %3398 = vmatprep.subr.mxu0 0.0
    %3399 = vmatpush1.msra.mxu0 %v627
    %3400 = vmatprep.subr.mxu0 0.0
    %3401 = vmatpush1.msra.mxu0 %v626
    %3402 = vmatprep.subr.mxu0 0.0
    %3403 = vmatpush1.msra.mxu0 %v625
    %3404 = vmatprep.subr.mxu0 0.0
    %3405 = vmatpush2.msra.mxu0 0.0
    %3406 = vmatprep.subr.mxu0 0.0
    %3407 = vmatpush2.msra.mxu0 0.0
    %3408 = vmatprep.subr.mxu0 0.0
    %3409 = vmatpush2.msra.mxu0 0.0
    %3410 = vmatprep.subr.mxu0 0.0
    %3411 = vmatpush2.msra.mxu0 0.0
    %3412 = vmatprep.subr.mxu0 0.0
    %3413 = vmatpush2.msra.mxu0 0.0
    %3414 = vmatprep.subr.mxu0 0.0
    %3415 = vmatpush2.msra.mxu0 0.0
    %3416 = vmatprep.subr.mxu0 0.0
    %3417 = vmatpush2.msra.mxu0 0.0
    %3418 = vmatprep.subr.mxu0 0.0
    %3419 = vmatpush2.msra.mxu0 0.0
    %3420 = vmatprep.subr.mxu0 0.0
    %3421 = vmatpush2.msra.mxu0 0.0
    %3422 = vmatprep.subr.mxu0 0.0
    %3423 = vmatpush2.msra.mxu0 0.0
    %3424 = vmatprep.subr.mxu0 0.0
    %3425 = vmatpush2.msra.mxu0 0.0
    %3426 = vmatprep.subr.mxu0 0.0
    %3427 = vmatpush2.msra.mxu0 0.0
    %3428 = vmatprep.subr.mxu0 0.0
    %3429 = vmatpush2.msra.mxu0 0.0
    %3430 = vmatprep.subr.mxu0 0.0
    %3431 = vmatpush2.msra.mxu0 0.0
    %3432 = vmatprep.subr.mxu0 0.0
    %3433 = vmatpush2.msra.mxu0 0.0
    %3434 = vmatprep.subr.mxu0 0.0
    %3435 = vmatpush2.msra.mxu0 0.0
    %3436 = vmatprep.mubr.f32.mxu0 0.0
    %3437 = vmatmul.mubr.f32.gmra.mxu0 %v3212
    %v3438 = vpop.f32.mrf.mxu0
    %v3439 = vadd.f32 0.0, %v3438
    %v3440 = vpop.f32.mrf.mxu0
    %3441 = vdwg.mxu0
    %v3442 = vadd.f32 %v3371, %v3439
    %v3443 = vtanh.pop %v3442
    %s3444 = scalar_lea.vmem [#allocation5], 32
    %v3445 = vld [vmem:[%s3444] sm:$0xff]
    %3446 = vmatprep.subr.mxu0 0.0
    %3447 = vmatpush1.msra.mxu0 0.0
    %3448 = vmatprep.subr.mxu0 0.0
    %3449 = vmatpush1.msra.mxu0 0.0
    %3450 = vmatprep.subr.mxu0 0.0
    %3451 = vmatpush1.msra.mxu0 0.0
    %3452 = vmatprep.subr.mxu0 0.0
    %3453 = vmatpush1.msra.mxu0 0.0
    %3454 = vmatprep.subr.mxu0 0.0
    %3455 = vmatpush1.msra.mxu0 0.0
    %3456 = vmatprep.subr.mxu0 0.0
    %3457 = vmatpush1.msra.mxu0 0.0
    %3458 = vmatprep.subr.mxu0 0.0
    %3459 = vmatpush1.msra.mxu0 0.0
    %3460 = vmatprep.subr.mxu0 0.0
    %3461 = vmatpush1.msra.mxu0 0.0
    %3462 = vmatprep.subr.mxu0 0.0
    %3463 = vmatpush1.msra.mxu0 0.0
    %3464 = vmatprep.subr.mxu0 0.0
    %3465 = vmatpush1.msra.mxu0 0.0
    %3466 = vmatprep.subr.mxu0 0.0
    %3467 = vmatpush1.msra.mxu0 0.0
    %3468 = vmatprep.subr.mxu0 0.0
    %3469 = vmatpush1.msra.mxu0 0.0
    %3470 = vmatprep.subr.mxu0 0.0
    %3471 = vmatpush1.msra.mxu0 %v632
    %3472 = vmatprep.subr.mxu0 0.0
    %3473 = vmatpush1.msra.mxu0 %v631
    %3474 = vmatprep.subr.mxu0 0.0
    %3475 = vmatpush1.msra.mxu0 %v630
    %3476 = vmatprep.subr.mxu0 0.0
    %3477 = vmatpush1.msra.mxu0 %v629
    %3478 = vmatprep.subr.mxu0 0.0
    %3479 = vmatpush2.msra.mxu0 0.0
    %3480 = vmatprep.subr.mxu0 0.0
    %3481 = vmatpush2.msra.mxu0 0.0
    %3482 = vmatprep.subr.mxu0 0.0
    %3483 = vmatpush2.msra.mxu0 0.0
    %3484 = vmatprep.subr.mxu0 0.0
    %3485 = vmatpush2.msra.mxu0 0.0
    %3486 = vmatprep.subr.mxu0 0.0
    %3487 = vmatpush2.msra.mxu0 0.0
    %3488 = vmatprep.subr.mxu0 0.0
    %3489 = vmatpush2.msra.mxu0 0.0
    %3490 = vmatprep.subr.mxu0 0.0
    %3491 = vmatpush2.msra.mxu0 0.0
    %3492 = vmatprep.subr.mxu0 0.0
    %3493 = vmatpush2.msra.mxu0 0.0
    %3494 = vmatprep.subr.mxu0 0.0
    %3495 = vmatpush2.msra.mxu0 0.0
    %3496 = vmatprep.subr.mxu0 0.0
    %3497 = vmatpush2.msra.mxu0 0.0
    %3498 = vmatprep.subr.mxu0 0.0
    %3499 = vmatpush2.msra.mxu0 0.0
    %3500 = vmatprep.subr.mxu0 0.0
    %3501 = vmatpush2.msra.mxu0 0.0
    %3502 = vmatprep.subr.mxu0 0.0
    %3503 = vmatpush2.msra.mxu0 0.0
    %3504 = vmatprep.subr.mxu0 0.0
    %3505 = vmatpush2.msra.mxu0 0.0
    %3506 = vmatprep.subr.mxu0 0.0
    %3507 = vmatpush2.msra.mxu0 0.0
    %3508 = vmatprep.subr.mxu0 0.0
    %3509 = vmatpush2.msra.mxu0 0.0
    %3510 = vmatprep.mubr.f32.mxu0 0.0
    %3511 = vmatmul.mubr.f32.gmra.mxu0 %v3212
    %v3512 = vpop.f32.mrf.mxu0
    %v3513 = vadd.f32 0.0, %v3512
    %v3514 = vpop.f32.mrf.mxu0
    %3515 = vdwg.mxu0
    %v3516 = vadd.f32 %v3445, %v3513
    %v3517 = vxor.u32 %v3516, 2147483648
    %v3518 = vmul.f32 %v3517, 1.442695
    %v3519 = vpow.pop %v3518
    %v3520 = vadd.f32 %v3519, 1.0
    %v3521 = vrcp.pop %v3520
    %v3522 = vmul.f32 1.0, %v3521
    %v3523 = vmul.f32 %v3369, %v2883
    %v3524 = vmul.f32 %v3290, %v3443
    %v3525 = vadd.f32 %v3523, %v3524
    %v3526 = vtanh.pop %v3525
    %v3527 = vmul.f32 %v3522, %v3526
    %s3528 = scalar_lea.vmem [#allocation10], 32
    %3529 = vst.msk [vmem:[%s3528] sm:$0xff] %vm392, %v3527
    %s3530 = scalar_lea.vmem [#allocation6], 24
    %v3531 = vld [vmem:[%s3530] sm:$0xff]
    %v3533 = vsel %vm392, %v3206, 0
    %3535 = vmatprep.subr.mxu0 0.0
    %3536 = vmatpush1.msra.mxu0 0.0
    %3537 = vmatprep.subr.mxu0 0.0
    %3538 = vmatpush1.msra.mxu0 0.0
    %3539 = vmatprep.subr.mxu0 0.0
    %3540 = vmatpush1.msra.mxu0 0.0
    %3541 = vmatprep.subr.mxu0 0.0
    %3542 = vmatpush1.msra.mxu0 0.0
    %3543 = vmatprep.subr.mxu0 0.0
    %3544 = vmatpush1.msra.mxu0 0.0
    %3545 = vmatprep.subr.mxu0 0.0
    %3546 = vmatpush1.msra.mxu0 0.0
    %3547 = vmatprep.subr.mxu0 0.0
    %3548 = vmatpush1.msra.mxu0 0.0
    %3549 = vmatprep.subr.mxu0 0.0
    %3550 = vmatpush1.msra.mxu0 0.0
    %3551 = vmatprep.subr.mxu0 0.0
    %3552 = vmatpush1.msra.mxu0 0.0
    %3553 = vmatprep.subr.mxu0 0.0
    %3554 = vmatpush1.msra.mxu0 0.0
    %3555 = vmatprep.subr.mxu0 0.0
    %3556 = vmatpush1.msra.mxu0 0.0
    %3557 = vmatprep.subr.mxu0 0.0
    %3558 = vmatpush1.msra.mxu0 0.0
    %3559 = vmatprep.subr.mxu0 0.0
    %3560 = vmatpush1.msra.mxu0 %v636
    %3561 = vmatprep.subr.mxu0 0.0
    %3562 = vmatpush1.msra.mxu0 %v635
    %3563 = vmatprep.subr.mxu0 0.0
    %3564 = vmatpush1.msra.mxu0 %v634
    %3565 = vmatprep.subr.mxu0 0.0
    %3566 = vmatpush1.msra.mxu0 %v633
    %3567 = vmatprep.subr.mxu0 0.0
    %3568 = vmatpush2.msra.mxu0 0.0
    %3569 = vmatprep.subr.mxu0 0.0
    %3570 = vmatpush2.msra.mxu0 0.0
    %3571 = vmatprep.subr.mxu0 0.0
    %3572 = vmatpush2.msra.mxu0 0.0
    %3573 = vmatprep.subr.mxu0 0.0
    %3574 = vmatpush2.msra.mxu0 0.0
    %3575 = vmatprep.subr.mxu0 0.0
    %3576 = vmatpush2.msra.mxu0 0.0
    %3577 = vmatprep.subr.mxu0 0.0
    %3578 = vmatpush2.msra.mxu0 0.0
    %3579 = vmatprep.subr.mxu0 0.0
    %3580 = vmatpush2.msra.mxu0 0.0
    %3581 = vmatprep.subr.mxu0 0.0
    %3582 = vmatpush2.msra.mxu0 0.0
    %3583 = vmatprep.subr.mxu0 0.0
    %3584 = vmatpush2.msra.mxu0 0.0
    %3585 = vmatprep.subr.mxu0 0.0
    %3586 = vmatpush2.msra.mxu0 0.0
    %3587 = vmatprep.subr.mxu0 0.0
    %3588 = vmatpush2.msra.mxu0 0.0
    %3589 = vmatprep.subr.mxu0 0.0
    %3590 = vmatpush2.msra.mxu0 0.0
    %3591 = vmatprep.subr.mxu0 0.0
    %3592 = vmatpush2.msra.mxu0 0.0
    %3593 = vmatprep.subr.mxu0 0.0
    %3594 = vmatpush2.msra.mxu0 0.0
    %3595 = vmatprep.subr.mxu0 0.0
    %3596 = vmatpush2.msra.mxu0 0.0
    %3597 = vmatprep.subr.mxu0 0.0
    %3598 = vmatpush2.msra.mxu0 0.0
    %3599 = vmatprep.mubr.f32.mxu0 0.0
    %3600 = vmatmul.mubr.f32.gmra.mxu0 %v3533
    %v3601 = vpop.f32.mrf.mxu0
    %v3602 = vadd.f32 0.0, %v3601
    %v3603 = vpop.f32.mrf.mxu0
    %3604 = vdwg.mxu0
    %v3605 = vadd.f32 %v3531, %v3602
    %v3606 = vxor.u32 %v3605, 2147483648
    %v3607 = vmul.f32 %v3606, 1.442695
    %v3608 = vpow.pop %v3607
    %v3609 = vadd.f32 %v3608, 1.0
    %v3610 = vrcp.pop %v3609
    %v3611 = vmul.f32 1.0, %v3610
    %s3612 = scalar_lea.vmem [#allocation7], 24
    %v3613 = vld [vmem:[%s3612] sm:$0xff]
    %3614 = vmatprep.subr.mxu0 0.0
    %3615 = vmatpush1.msra.mxu0 0.0
    %3616 = vmatprep.subr.mxu0 0.0
    %3617 = vmatpush1.msra.mxu0 0.0
    %3618 = vmatprep.subr.mxu0 0.0
    %3619 = vmatpush1.msra.mxu0 0.0
    %3620 = vmatprep.subr.mxu0 0.0
    %3621 = vmatpush1.msra.mxu0 0.0
    %3622 = vmatprep.subr.mxu0 0.0
    %3623 = vmatpush1.msra.mxu0 0.0
    %3624 = vmatprep.subr.mxu0 0.0
    %3625 = vmatpush1.msra.mxu0 0.0
    %3626 = vmatprep.subr.mxu0 0.0
    %3627 = vmatpush1.msra.mxu0 0.0
    %3628 = vmatprep.subr.mxu0 0.0
    %3629 = vmatpush1.msra.mxu0 0.0
    %3630 = vmatprep.subr.mxu0 0.0
    %3631 = vmatpush1.msra.mxu0 0.0
    %3632 = vmatprep.subr.mxu0 0.0
    %3633 = vmatpush1.msra.mxu0 0.0
    %3634 = vmatprep.subr.mxu0 0.0
    %3635 = vmatpush1.msra.mxu0 0.0
    %3636 = vmatprep.subr.mxu0 0.0
    %3637 = vmatpush1.msra.mxu0 0.0
    %3638 = vmatprep.subr.mxu0 0.0
    %3639 = vmatpush1.msra.mxu0 %v640
    %3640 = vmatprep.subr.mxu0 0.0
    %3641 = vmatpush1.msra.mxu0 %v639
    %3642 = vmatprep.subr.mxu0 0.0
    %3643 = vmatpush1.msra.mxu0 %v638
    %3644 = vmatprep.subr.mxu0 0.0
    %3645 = vmatpush1.msra.mxu0 %v637
    %3646 = vmatprep.subr.mxu0 0.0
    %3647 = vmatpush2.msra.mxu0 0.0
    %3648 = vmatprep.subr.mxu0 0.0
    %3649 = vmatpush2.msra.mxu0 0.0
    %3650 = vmatprep.subr.mxu0 0.0
    %3651 = vmatpush2.msra.mxu0 0.0
    %3652 = vmatprep.subr.mxu0 0.0
    %3653 = vmatpush2.msra.mxu0 0.0
    %3654 = vmatprep.subr.mxu0 0.0
    %3655 = vmatpush2.msra.mxu0 0.0
    %3656 = vmatprep.subr.mxu0 0.0
    %3657 = vmatpush2.msra.mxu0 0.0
    %3658 = vmatprep.subr.mxu0 0.0
    %3659 = vmatpush2.msra.mxu0 0.0
    %3660 = vmatprep.subr.mxu0 0.0
    %3661 = vmatpush2.msra.mxu0 0.0
    %3662 = vmatprep.subr.mxu0 0.0
    %3663 = vmatpush2.msra.mxu0 0.0
    %3664 = vmatprep.subr.mxu0 0.0
    %3665 = vmatpush2.msra.mxu0 0.0
    %3666 = vmatprep.subr.mxu0 0.0
    %3667 = vmatpush2.msra.mxu0 0.0
    %3668 = vmatprep.subr.mxu0 0.0
    %3669 = vmatpush2.msra.mxu0 0.0
    %3670 = vmatprep.subr.mxu0 0.0
    %3671 = vmatpush2.msra.mxu0 0.0
    %3672 = vmatprep.subr.mxu0 0.0
    %3673 = vmatpush2.msra.mxu0 0.0
    %3674 = vmatprep.subr.mxu0 0.0
    %3675 = vmatpush2.msra.mxu0 0.0
    %3676 = vmatprep.subr.mxu0 0.0
    %3677 = vmatpush2.msra.mxu0 0.0
    %3678 = vmatprep.mubr.f32.mxu0 0.0
    %3679 = vmatmul.mubr.f32.gmra.mxu0 %v3533
    %v3680 = vpop.f32.mrf.mxu0
    %v3681 = vadd.f32 0.0, %v3680
    %v3682 = vpop.f32.mrf.mxu0
    %3683 = vdwg.mxu0
    %v3684 = vadd.f32 %v3613, %v3681
    %v3685 = vxor.u32 %v3684, 2147483648
    %v3686 = vmul.f32 %v3685, 1.442695
    %v3687 = vpow.pop %v3686
    %v3688 = vadd.f32 %v3687, 1.0
    %v3689 = vrcp.pop %v3688
    %v3690 = vmul.f32 1.0, %v3689
    %s3691 = scalar_lea.vmem [#allocation8], 24
    %v3692 = vld [vmem:[%s3691] sm:$0xff]
    %3693 = vmatprep.subr.mxu0 0.0
    %3694 = vmatpush1.msra.mxu0 0.0
    %3695 = vmatprep.subr.mxu0 0.0
    %3696 = vmatpush1.msra.mxu0 0.0
    %3697 = vmatprep.subr.mxu0 0.0
    %3698 = vmatpush1.msra.mxu0 0.0
    %3699 = vmatprep.subr.mxu0 0.0
    %3700 = vmatpush1.msra.mxu0 0.0
    %3701 = vmatprep.subr.mxu0 0.0
    %3702 = vmatpush1.msra.mxu0 0.0
    %3703 = vmatprep.subr.mxu0 0.0
    %3704 = vmatpush1.msra.mxu0 0.0
    %3705 = vmatprep.subr.mxu0 0.0
    %3706 = vmatpush1.msra.mxu0 0.0
    %3707 = vmatprep.subr.mxu0 0.0
    %3708 = vmatpush1.msra.mxu0 0.0
    %3709 = vmatprep.subr.mxu0 0.0
    %3710 = vmatpush1.msra.mxu0 0.0
    %3711 = vmatprep.subr.mxu0 0.0
    %3712 = vmatpush1.msra.mxu0 0.0
    %3713 = vmatprep.subr.mxu0 0.0
    %3714 = vmatpush1.msra.mxu0 0.0
    %3715 = vmatprep.subr.mxu0 0.0
    %3716 = vmatpush1.msra.mxu0 0.0
    %3717 = vmatprep.subr.mxu0 0.0
    %3718 = vmatpush1.msra.mxu0 %v644
    %3719 = vmatprep.subr.mxu0 0.0
    %3720 = vmatpush1.msra.mxu0 %v643
    %3721 = vmatprep.subr.mxu0 0.0
    %3722 = vmatpush1.msra.mxu0 %v642
    %3723 = vmatprep.subr.mxu0 0.0
    %3724 = vmatpush1.msra.mxu0 %v641
    %3725 = vmatprep.subr.mxu0 0.0
    %3726 = vmatpush2.msra.mxu0 0.0
    %3727 = vmatprep.subr.mxu0 0.0
    %3728 = vmatpush2.msra.mxu0 0.0
    %3729 = vmatprep.subr.mxu0 0.0
    %3730 = vmatpush2.msra.mxu0 0.0
    %3731 = vmatprep.subr.mxu0 0.0
    %3732 = vmatpush2.msra.mxu0 0.0
    %3733 = vmatprep.subr.mxu0 0.0
    %3734 = vmatpush2.msra.mxu0 0.0
    %3735 = vmatprep.subr.mxu0 0.0
    %3736 = vmatpush2.msra.mxu0 0.0
    %3737 = vmatprep.subr.mxu0 0.0
    %3738 = vmatpush2.msra.mxu0 0.0
    %3739 = vmatprep.subr.mxu0 0.0
    %3740 = vmatpush2.msra.mxu0 0.0
    %3741 = vmatprep.subr.mxu0 0.0
    %3742 = vmatpush2.msra.mxu0 0.0
    %3743 = vmatprep.subr.mxu0 0.0
    %3744 = vmatpush2.msra.mxu0 0.0
    %3745 = vmatprep.subr.mxu0 0.0
    %3746 = vmatpush2.msra.mxu0 0.0
    %3747 = vmatprep.subr.mxu0 0.0
    %3748 = vmatpush2.msra.mxu0 0.0
    %3749 = vmatprep.subr.mxu0 0.0
    %3750 = vmatpush2.msra.mxu0 0.0
    %3751 = vmatprep.subr.mxu0 0.0
    %3752 = vmatpush2.msra.mxu0 0.0
    %3753 = vmatprep.subr.mxu0 0.0
    %3754 = vmatpush2.msra.mxu0 0.0
    %3755 = vmatprep.subr.mxu0 0.0
    %3756 = vmatpush2.msra.mxu0 0.0
    %3757 = vmatprep.mubr.f32.mxu0 0.0
    %3758 = vmatmul.mubr.f32.gmra.mxu0 %v3533
    %v3759 = vpop.f32.mrf.mxu0
    %v3760 = vadd.f32 0.0, %v3759
    %v3761 = vpop.f32.mrf.mxu0
    %3762 = vdwg.mxu0
    %v3763 = vadd.f32 %v3692, %v3760
    %v3764 = vtanh.pop %v3763
    %s3765 = scalar_lea.vmem [#allocation9], 24
    %v3766 = vld [vmem:[%s3765] sm:$0xff]
    %3767 = vmatprep.subr.mxu0 0.0
    %3768 = vmatpush1.msra.mxu0 0.0
    %3769 = vmatprep.subr.mxu0 0.0
    %3770 = vmatpush1.msra.mxu0 0.0
    %3771 = vmatprep.subr.mxu0 0.0
    %3772 = vmatpush1.msra.mxu0 0.0
    %3773 = vmatprep.subr.mxu0 0.0
    %3774 = vmatpush1.msra.mxu0 0.0
    %3775 = vmatprep.subr.mxu0 0.0
    %3776 = vmatpush1.msra.mxu0 0.0
    %3777 = vmatprep.subr.mxu0 0.0
    %3778 = vmatpush1.msra.mxu0 0.0
    %3779 = vmatprep.subr.mxu0 0.0
    %3780 = vmatpush1.msra.mxu0 0.0
    %3781 = vmatprep.subr.mxu0 0.0
    %3782 = vmatpush1.msra.mxu0 0.0
    %3783 = vmatprep.subr.mxu0 0.0
    %3784 = vmatpush1.msra.mxu0 0.0
    %3785 = vmatprep.subr.mxu0 0.0
    %3786 = vmatpush1.msra.mxu0 0.0
    %3787 = vmatprep.subr.mxu0 0.0
    %3788 = vmatpush1.msra.mxu0 0.0
    %3789 = vmatprep.subr.mxu0 0.0
    %3790 = vmatpush1.msra.mxu0 0.0
    %3791 = vmatprep.subr.mxu0 0.0
    %3792 = vmatpush1.msra.mxu0 %v648
    %3793 = vmatprep.subr.mxu0 0.0
    %3794 = vmatpush1.msra.mxu0 %v647
    %3795 = vmatprep.subr.mxu0 0.0
    %3796 = vmatpush1.msra.mxu0 %v646
    %3797 = vmatprep.subr.mxu0 0.0
    %3798 = vmatpush1.msra.mxu0 %v645
    %3799 = vmatprep.subr.mxu0 0.0
    %3800 = vmatpush2.msra.mxu0 0.0
    %3801 = vmatprep.subr.mxu0 0.0
    %3802 = vmatpush2.msra.mxu0 0.0
    %3803 = vmatprep.subr.mxu0 0.0
    %3804 = vmatpush2.msra.mxu0 0.0
    %3805 = vmatprep.subr.mxu0 0.0
    %3806 = vmatpush2.msra.mxu0 0.0
    %3807 = vmatprep.subr.mxu0 0.0
    %3808 = vmatpush2.msra.mxu0 0.0
    %3809 = vmatprep.subr.mxu0 0.0
    %3810 = vmatpush2.msra.mxu0 0.0
    %3811 = vmatprep.subr.mxu0 0.0
    %3812 = vmatpush2.msra.mxu0 0.0
    %3813 = vmatprep.subr.mxu0 0.0
    %3814 = vmatpush2.msra.mxu0 0.0
    %3815 = vmatprep.subr.mxu0 0.0
    %3816 = vmatpush2.msra.mxu0 0.0
    %3817 = vmatprep.subr.mxu0 0.0
    %3818 = vmatpush2.msra.mxu0 0.0
    %3819 = vmatprep.subr.mxu0 0.0
    %3820 = vmatpush2.msra.mxu0 0.0
    %3821 = vmatprep.subr.mxu0 0.0
    %3822 = vmatpush2.msra.mxu0 0.0
    %3823 = vmatprep.subr.mxu0 0.0
    %3824 = vmatpush2.msra.mxu0 0.0
    %3825 = vmatprep.subr.mxu0 0.0
    %3826 = vmatpush2.msra.mxu0 0.0
    %3827 = vmatprep.subr.mxu0 0.0
    %3828 = vmatpush2.msra.mxu0 0.0
    %3829 = vmatprep.subr.mxu0 0.0
    %3830 = vmatpush2.msra.mxu0 0.0
    %3831 = vmatprep.mubr.f32.mxu0 0.0
    %3832 = vmatmul.mubr.f32.gmra.mxu0 %v3533
    %v3833 = vpop.f32.mrf.mxu0
    %v3834 = vadd.f32 0.0, %v3833
    %v3835 = vpop.f32.mrf.mxu0
    %3836 = vdwg.mxu0
    %v3837 = vadd.f32 %v3766, %v3834
    %v3838 = vxor.u32 %v3837, 2147483648
    %v3839 = vmul.f32 %v3838, 1.442695
    %v3840 = vpow.pop %v3839
    %v3841 = vadd.f32 %v3840, 1.0
    %v3842 = vrcp.pop %v3841
    %v3843 = vmul.f32 1.0, %v3842
    %v3844 = vmul.f32 %v3690, %v3204
    %v3845 = vmul.f32 %v3611, %v3764
    %v3846 = vadd.f32 %v3844, %v3845
    %v3847 = vtanh.pop %v3846
    %v3848 = vmul.f32 %v3843, %v3847
    %s3849 = scalar_lea.vmem [#allocation11], 24
    %3850 = vst.msk [vmem:[%s3849] sm:$0xff] %vm392, %v3848
    %s3851 = scalar_lea.vmem [#allocation2], 40
    %v3852 = vld [vmem:[%s3851] sm:$0xff]
    %v3854 = vsel %vm392, %v3527, 0
    %3856 = vmatprep.subr.mxu0 0.0
    %3857 = vmatpush1.msra.mxu0 0.0
    %3858 = vmatprep.subr.mxu0 0.0
    %3859 = vmatpush1.msra.mxu0 0.0
    %3860 = vmatprep.subr.mxu0 0.0
    %3861 = vmatpush1.msra.mxu0 0.0
    %3862 = vmatprep.subr.mxu0 0.0
    %3863 = vmatpush1.msra.mxu0 0.0
    %3864 = vmatprep.subr.mxu0 0.0
    %3865 = vmatpush1.msra.mxu0 0.0
    %3866 = vmatprep.subr.mxu0 0.0
    %3867 = vmatpush1.msra.mxu0 0.0
    %3868 = vmatprep.subr.mxu0 0.0
    %3869 = vmatpush1.msra.mxu0 0.0
    %3870 = vmatprep.subr.mxu0 0.0
    %3871 = vmatpush1.msra.mxu0 0.0
    %3872 = vmatprep.subr.mxu0 0.0
    %3873 = vmatpush1.msra.mxu0 0.0
    %3874 = vmatprep.subr.mxu0 0.0
    %3875 = vmatpush1.msra.mxu0 0.0
    %3876 = vmatprep.subr.mxu0 0.0
    %3877 = vmatpush1.msra.mxu0 0.0
    %3878 = vmatprep.subr.mxu0 0.0
    %3879 = vmatpush1.msra.mxu0 0.0
    %3880 = vmatprep.subr.mxu0 0.0
    %3881 = vmatpush1.msra.mxu0 %v620
    %3882 = vmatprep.subr.mxu0 0.0
    %3883 = vmatpush1.msra.mxu0 %v619
    %3884 = vmatprep.subr.mxu0 0.0
    %3885 = vmatpush1.msra.mxu0 %v618
    %3886 = vmatprep.subr.mxu0 0.0
    %3887 = vmatpush1.msra.mxu0 %v617
    %3888 = vmatprep.subr.mxu0 0.0
    %3889 = vmatpush2.msra.mxu0 0.0
    %3890 = vmatprep.subr.mxu0 0.0
    %3891 = vmatpush2.msra.mxu0 0.0
    %3892 = vmatprep.subr.mxu0 0.0
    %3893 = vmatpush2.msra.mxu0 0.0
    %3894 = vmatprep.subr.mxu0 0.0
    %3895 = vmatpush2.msra.mxu0 0.0
    %3896 = vmatprep.subr.mxu0 0.0
    %3897 = vmatpush2.msra.mxu0 0.0
    %3898 = vmatprep.subr.mxu0 0.0
    %3899 = vmatpush2.msra.mxu0 0.0
    %3900 = vmatprep.subr.mxu0 0.0
    %3901 = vmatpush2.msra.mxu0 0.0
    %3902 = vmatprep.subr.mxu0 0.0
    %3903 = vmatpush2.msra.mxu0 0.0
    %3904 = vmatprep.subr.mxu0 0.0
    %3905 = vmatpush2.msra.mxu0 0.0
    %3906 = vmatprep.subr.mxu0 0.0
    %3907 = vmatpush2.msra.mxu0 0.0
    %3908 = vmatprep.subr.mxu0 0.0
    %3909 = vmatpush2.msra.mxu0 0.0
    %3910 = vmatprep.subr.mxu0 0.0
    %3911 = vmatpush2.msra.mxu0 0.0
    %3912 = vmatprep.subr.mxu0 0.0
    %3913 = vmatpush2.msra.mxu0 0.0
    %3914 = vmatprep.subr.mxu0 0.0
    %3915 = vmatpush2.msra.mxu0 0.0
    %3916 = vmatprep.subr.mxu0 0.0
    %3917 = vmatpush2.msra.mxu0 0.0
    %3918 = vmatprep.subr.mxu0 0.0
    %3919 = vmatpush2.msra.mxu0 0.0
    %3920 = vmatprep.mubr.f32.mxu0 0.0
    %3921 = vmatmul.mubr.f32.gmra.mxu0 %v3854
    %v3922 = vpop.f32.mrf.mxu0
    %v3923 = vadd.f32 0.0, %v3922
    %v3924 = vpop.f32.mrf.mxu0
    %3925 = vdwg.mxu0
    %v3926 = vadd.f32 %v3852, %v3923
    %v3927 = vxor.u32 %v3926, 2147483648
    %v3928 = vmul.f32 %v3927, 1.442695
    %v3929 = vpow.pop %v3928
    %v3930 = vadd.f32 %v3929, 1.0
    %v3931 = vrcp.pop %v3930
    %v3932 = vmul.f32 1.0, %v3931
    %s3933 = scalar_lea.vmem [#allocation3], 40
    %v3934 = vld [vmem:[%s3933] sm:$0xff]
    %3935 = vmatprep.subr.mxu0 0.0
    %3936 = vmatpush1.msra.mxu0 0.0
    %3937 = vmatprep.subr.mxu0 0.0
    %3938 = vmatpush1.msra.mxu0 0.0
    %3939 = vmatprep.subr.mxu0 0.0
    %3940 = vmatpush1.msra.mxu0 0.0
    %3941 = vmatprep.subr.mxu0 0.0
    %3942 = vmatpush1.msra.mxu0 0.0
    %3943 = vmatprep.subr.mxu0 0.0
    %3944 = vmatpush1.msra.mxu0 0.0
    %3945 = vmatprep.subr.mxu0 0.0
    %3946 = vmatpush1.msra.mxu0 0.0
    %3947 = vmatprep.subr.mxu0 0.0
    %3948 = vmatpush1.msra.mxu0 0.0
    %3949 = vmatprep.subr.mxu0 0.0
    %3950 = vmatpush1.msra.mxu0 0.0
    %3951 = vmatprep.subr.mxu0 0.0
    %3952 = vmatpush1.msra.mxu0 0.0
    %3953 = vmatprep.subr.mxu0 0.0
    %3954 = vmatpush1.msra.mxu0 0.0
    %3955 = vmatprep.subr.mxu0 0.0
    %3956 = vmatpush1.msra.mxu0 0.0
    %3957 = vmatprep.subr.mxu0 0.0
    %3958 = vmatpush1.msra.mxu0 0.0
    %3959 = vmatprep.subr.mxu0 0.0
    %3960 = vmatpush1.msra.mxu0 %v624
    %3961 = vmatprep.subr.mxu0 0.0
    %3962 = vmatpush1.msra.mxu0 %v623
    %3963 = vmatprep.subr.mxu0 0.0
    %3964 = vmatpush1.msra.mxu0 %v622
    %3965 = vmatprep.subr.mxu0 0.0
    %3966 = vmatpush1.msra.mxu0 %v621
    %3967 = vmatprep.subr.mxu0 0.0
    %3968 = vmatpush2.msra.mxu0 0.0
    %3969 = vmatprep.subr.mxu0 0.0
    %3970 = vmatpush2.msra.mxu0 0.0
    %3971 = vmatprep.subr.mxu0 0.0
    %3972 = vmatpush2.msra.mxu0 0.0
    %3973 = vmatprep.subr.mxu0 0.0
    %3974 = vmatpush2.msra.mxu0 0.0
    %3975 = vmatprep.subr.mxu0 0.0
    %3976 = vmatpush2.msra.mxu0 0.0
    %3977 = vmatprep.subr.mxu0 0.0
    %3978 = vmatpush2.msra.mxu0 0.0
    %3979 = vmatprep.subr.mxu0 0.0
    %3980 = vmatpush2.msra.mxu0 0.0
    %3981 = vmatprep.subr.mxu0 0.0
    %3982 = vmatpush2.msra.mxu0 0.0
    %3983 = vmatprep.subr.mxu0 0.0
    %3984 = vmatpush2.msra.mxu0 0.0
    %3985 = vmatprep.subr.mxu0 0.0
    %3986 = vmatpush2.msra.mxu0 0.0
    %3987 = vmatprep.subr.mxu0 0.0
    %3988 = vmatpush2.msra.mxu0 0.0
    %3989 = vmatprep.subr.mxu0 0.0
    %3990 = vmatpush2.msra.mxu0 0.0
    %3991 = vmatprep.subr.mxu0 0.0
    %3992 = vmatpush2.msra.mxu0 0.0
    %3993 = vmatprep.subr.mxu0 0.0
    %3994 = vmatpush2.msra.mxu0 0.0
    %3995 = vmatprep.subr.mxu0 0.0
    %3996 = vmatpush2.msra.mxu0 0.0
    %3997 = vmatprep.subr.mxu0 0.0
    %3998 = vmatpush2.msra.mxu0 0.0
    %3999 = vmatprep.mubr.f32.mxu0 0.0
    %4000 = vmatmul.mubr.f32.gmra.mxu0 %v3854
    %v4001 = vpop.f32.mrf.mxu0
    %v4002 = vadd.f32 0.0, %v4001
    %v4003 = vpop.f32.mrf.mxu0
    %4004 = vdwg.mxu0
    %v4005 = vadd.f32 %v3934, %v4002
    %v4006 = vxor.u32 %v4005, 2147483648
    %v4007 = vmul.f32 %v4006, 1.442695
    %v4008 = vpow.pop %v4007
    %v4009 = vadd.f32 %v4008, 1.0
    %v4010 = vrcp.pop %v4009
    %v4011 = vmul.f32 1.0, %v4010
    %s4012 = scalar_lea.vmem [#allocation4], 40
    %v4013 = vld [vmem:[%s4012] sm:$0xff]
    %4014 = vmatprep.subr.mxu0 0.0
    %4015 = vmatpush1.msra.mxu0 0.0
    %4016 = vmatprep.subr.mxu0 0.0
    %4017 = vmatpush1.msra.mxu0 0.0
    %4018 = vmatprep.subr.mxu0 0.0
    %4019 = vmatpush1.msra.mxu0 0.0
    %4020 = vmatprep.subr.mxu0 0.0
    %4021 = vmatpush1.msra.mxu0 0.0
    %4022 = vmatprep.subr.mxu0 0.0
    %4023 = vmatpush1.msra.mxu0 0.0
    %4024 = vmatprep.subr.mxu0 0.0
    %4025 = vmatpush1.msra.mxu0 0.0
    %4026 = vmatprep.subr.mxu0 0.0
    %4027 = vmatpush1.msra.mxu0 0.0
    %4028 = vmatprep.subr.mxu0 0.0
    %4029 = vmatpush1.msra.mxu0 0.0
    %4030 = vmatprep.subr.mxu0 0.0
    %4031 = vmatpush1.msra.mxu0 0.0
    %4032 = vmatprep.subr.mxu0 0.0
    %4033 = vmatpush1.msra.mxu0 0.0
    %4034 = vmatprep.subr.mxu0 0.0
    %4035 = vmatpush1.msra.mxu0 0.0
    %4036 = vmatprep.subr.mxu0 0.0
    %4037 = vmatpush1.msra.mxu0 0.0
    %4038 = vmatprep.subr.mxu0 0.0
    %4039 = vmatpush1.msra.mxu0 %v628
    %4040 = vmatprep.subr.mxu0 0.0
    %4041 = vmatpush1.msra.mxu0 %v627
    %4042 = vmatprep.subr.mxu0 0.0
    %4043 = vmatpush1.msra.mxu0 %v626
    %4044 = vmatprep.subr.mxu0 0.0
    %4045 = vmatpush1.msra.mxu0 %v625
    %4046 = vmatprep.subr.mxu0 0.0
    %4047 = vmatpush2.msra.mxu0 0.0
    %4048 = vmatprep.subr.mxu0 0.0
    %4049 = vmatpush2.msra.mxu0 0.0
    %4050 = vmatprep.subr.mxu0 0.0
    %4051 = vmatpush2.msra.mxu0 0.0
    %4052 = vmatprep.subr.mxu0 0.0
    %4053 = vmatpush2.msra.mxu0 0.0
    %4054 = vmatprep.subr.mxu0 0.0
    %4055 = vmatpush2.msra.mxu0 0.0
    %4056 = vmatprep.subr.mxu0 0.0
    %4057 = vmatpush2.msra.mxu0 0.0
    %4058 = vmatprep.subr.mxu0 0.0
    %4059 = vmatpush2.msra.mxu0 0.0
    %4060 = vmatprep.subr.mxu0 0.0
    %4061 = vmatpush2.msra.mxu0 0.0
    %4062 = vmatprep.subr.mxu0 0.0
    %4063 = vmatpush2.msra.mxu0 0.0
    %4064 = vmatprep.subr.mxu0 0.0
    %4065 = vmatpush2.msra.mxu0 0.0
    %4066 = vmatprep.subr.mxu0 0.0
    %4067 = vmatpush2.msra.mxu0 0.0
    %4068 = vmatprep.subr.mxu0 0.0
    %4069 = vmatpush2.msra.mxu0 0.0
    %4070 = vmatprep.subr.mxu0 0.0
    %4071 = vmatpush2.msra.mxu0 0.0
    %4072 = vmatprep.subr.mxu0 0.0
    %4073 = vmatpush2.msra.mxu0 0.0
    %4074 = vmatprep.subr.mxu0 0.0
    %4075 = vmatpush2.msra.mxu0 0.0
    %4076 = vmatprep.subr.mxu0 0.0
    %4077 = vmatpush2.msra.mxu0 0.0
    %4078 = vmatprep.mubr.f32.mxu0 0.0
    %4079 = vmatmul.mubr.f32.gmra.mxu0 %v3854
    %v4080 = vpop.f32.mrf.mxu0
    %v4081 = vadd.f32 0.0, %v4080
    %v4082 = vpop.f32.mrf.mxu0
    %4083 = vdwg.mxu0
    %v4084 = vadd.f32 %v4013, %v4081
    %v4085 = vtanh.pop %v4084
    %s4086 = scalar_lea.vmem [#allocation5], 40
    %v4087 = vld [vmem:[%s4086] sm:$0xff]
    %4088 = vmatprep.subr.mxu0 0.0
    %4089 = vmatpush1.msra.mxu0 0.0
    %4090 = vmatprep.subr.mxu0 0.0
    %4091 = vmatpush1.msra.mxu0 0.0
    %4092 = vmatprep.subr.mxu0 0.0
    %4093 = vmatpush1.msra.mxu0 0.0
    %4094 = vmatprep.subr.mxu0 0.0
    %4095 = vmatpush1.msra.mxu0 0.0
    %4096 = vmatprep.subr.mxu0 0.0
    %4097 = vmatpush1.msra.mxu0 0.0
    %4098 = vmatprep.subr.mxu0 0.0
    %4099 = vmatpush1.msra.mxu0 0.0
    %4100 = vmatprep.subr.mxu0 0.0
    %4101 = vmatpush1.msra.mxu0 0.0
    %4102 = vmatprep.subr.mxu0 0.0
    %4103 = vmatpush1.msra.mxu0 0.0
    %4104 = vmatprep.subr.mxu0 0.0
    %4105 = vmatpush1.msra.mxu0 0.0
    %4106 = vmatprep.subr.mxu0 0.0
    %4107 = vmatpush1.msra.mxu0 0.0
    %4108 = vmatprep.subr.mxu0 0.0
    %4109 = vmatpush1.msra.mxu0 0.0
    %4110 = vmatprep.subr.mxu0 0.0
    %4111 = vmatpush1.msra.mxu0 0.0
    %4112 = vmatprep.subr.mxu0 0.0
    %4113 = vmatpush1.msra.mxu0 %v632
    %4114 = vmatprep.subr.mxu0 0.0
    %4115 = vmatpush1.msra.mxu0 %v631
    %4116 = vmatprep.subr.mxu0 0.0
    %4117 = vmatpush1.msra.mxu0 %v630
    %4118 = vmatprep.subr.mxu0 0.0
    %4119 = vmatpush1.msra.mxu0 %v629
    %4120 = vmatprep.subr.mxu0 0.0
    %4121 = vmatpush2.msra.mxu0 0.0
    %4122 = vmatprep.subr.mxu0 0.0
    %4123 = vmatpush2.msra.mxu0 0.0
    %4124 = vmatprep.subr.mxu0 0.0
    %4125 = vmatpush2.msra.mxu0 0.0
    %4126 = vmatprep.subr.mxu0 0.0
    %4127 = vmatpush2.msra.mxu0 0.0
    %4128 = vmatprep.subr.mxu0 0.0
    %4129 = vmatpush2.msra.mxu0 0.0
    %4130 = vmatprep.subr.mxu0 0.0
    %4131 = vmatpush2.msra.mxu0 0.0
    %4132 = vmatprep.subr.mxu0 0.0
    %4133 = vmatpush2.msra.mxu0 0.0
    %4134 = vmatprep.subr.mxu0 0.0
    %4135 = vmatpush2.msra.mxu0 0.0
    %4136 = vmatprep.subr.mxu0 0.0
    %4137 = vmatpush2.msra.mxu0 0.0
    %4138 = vmatprep.subr.mxu0 0.0
    %4139 = vmatpush2.msra.mxu0 0.0
    %4140 = vmatprep.subr.mxu0 0.0
    %4141 = vmatpush2.msra.mxu0 0.0
    %4142 = vmatprep.subr.mxu0 0.0
    %4143 = vmatpush2.msra.mxu0 0.0
    %4144 = vmatprep.subr.mxu0 0.0
    %4145 = vmatpush2.msra.mxu0 0.0
    %4146 = vmatprep.subr.mxu0 0.0
    %4147 = vmatpush2.msra.mxu0 0.0
    %4148 = vmatprep.subr.mxu0 0.0
    %4149 = vmatpush2.msra.mxu0 0.0
    %4150 = vmatprep.subr.mxu0 0.0
    %4151 = vmatpush2.msra.mxu0 0.0
    %4152 = vmatprep.mubr.f32.mxu0 0.0
    %4153 = vmatmul.mubr.f32.gmra.mxu0 %v3854
    %v4154 = vpop.f32.mrf.mxu0
    %v4155 = vadd.f32 0.0, %v4154
    %v4156 = vpop.f32.mrf.mxu0
    %4157 = vdwg.mxu0
    %v4158 = vadd.f32 %v4087, %v4155
    %v4159 = vxor.u32 %v4158, 2147483648
    %v4160 = vmul.f32 %v4159, 1.442695
    %v4161 = vpow.pop %v4160
    %v4162 = vadd.f32 %v4161, 1.0
    %v4163 = vrcp.pop %v4162
    %v4164 = vmul.f32 1.0, %v4163
    %v4165 = vmul.f32 %v4011, %v3525
    %v4166 = vmul.f32 %v3932, %v4085
    %v4167 = vadd.f32 %v4165, %v4166
    %v4168 = vtanh.pop %v4167
    %v4169 = vmul.f32 %v4164, %v4168
    %s4170 = scalar_lea.vmem [#allocation10], 40
    %4171 = vst.msk [vmem:[%s4170] sm:$0xff] %vm392, %v4169
    %s4172 = scalar_lea.vmem [#allocation6], 16
    %v4173 = vld [vmem:[%s4172] sm:$0xff]
    %v4175 = vsel %vm392, %v3848, 0
    %4177 = vmatprep.subr.mxu0 0.0
    %4178 = vmatpush1.msra.mxu0 0.0
    %4179 = vmatprep.subr.mxu0 0.0
    %4180 = vmatpush1.msra.mxu0 0.0
    %4181 = vmatprep.subr.mxu0 0.0
    %4182 = vmatpush1.msra.mxu0 0.0
    %4183 = vmatprep.subr.mxu0 0.0
    %4184 = vmatpush1.msra.mxu0 0.0
    %4185 = vmatprep.subr.mxu0 0.0
    %4186 = vmatpush1.msra.mxu0 0.0
    %4187 = vmatprep.subr.mxu0 0.0
    %4188 = vmatpush1.msra.mxu0 0.0
    %4189 = vmatprep.subr.mxu0 0.0
    %4190 = vmatpush1.msra.mxu0 0.0
    %4191 = vmatprep.subr.mxu0 0.0
    %4192 = vmatpush1.msra.mxu0 0.0
    %4193 = vmatprep.subr.mxu0 0.0
    %4194 = vmatpush1.msra.mxu0 0.0
    %4195 = vmatprep.subr.mxu0 0.0
    %4196 = vmatpush1.msra.mxu0 0.0
    %4197 = vmatprep.subr.mxu0 0.0
    %4198 = vmatpush1.msra.mxu0 0.0
    %4199 = vmatprep.subr.mxu0 0.0
    %4200 = vmatpush1.msra.mxu0 0.0
    %4201 = vmatprep.subr.mxu0 0.0
    %4202 = vmatpush1.msra.mxu0 %v636
    %4203 = vmatprep.subr.mxu0 0.0
    %4204 = vmatpush1.msra.mxu0 %v635
    %4205 = vmatprep.subr.mxu0 0.0
    %4206 = vmatpush1.msra.mxu0 %v634
    %4207 = vmatprep.subr.mxu0 0.0
    %4208 = vmatpush1.msra.mxu0 %v633
    %4209 = vmatprep.subr.mxu0 0.0
    %4210 = vmatpush2.msra.mxu0 0.0
    %4211 = vmatprep.subr.mxu0 0.0
    %4212 = vmatpush2.msra.mxu0 0.0
    %4213 = vmatprep.subr.mxu0 0.0
    %4214 = vmatpush2.msra.mxu0 0.0
    %4215 = vmatprep.subr.mxu0 0.0
    %4216 = vmatpush2.msra.mxu0 0.0
    %4217 = vmatprep.subr.mxu0 0.0
    %4218 = vmatpush2.msra.mxu0 0.0
    %4219 = vmatprep.subr.mxu0 0.0
    %4220 = vmatpush2.msra.mxu0 0.0
    %4221 = vmatprep.subr.mxu0 0.0
    %4222 = vmatpush2.msra.mxu0 0.0
    %4223 = vmatprep.subr.mxu0 0.0
    %4224 = vmatpush2.msra.mxu0 0.0
    %4225 = vmatprep.subr.mxu0 0.0
    %4226 = vmatpush2.msra.mxu0 0.0
    %4227 = vmatprep.subr.mxu0 0.0
    %4228 = vmatpush2.msra.mxu0 0.0
    %4229 = vmatprep.subr.mxu0 0.0
    %4230 = vmatpush2.msra.mxu0 0.0
    %4231 = vmatprep.subr.mxu0 0.0
    %4232 = vmatpush2.msra.mxu0 0.0
    %4233 = vmatprep.subr.mxu0 0.0
    %4234 = vmatpush2.msra.mxu0 0.0
    %4235 = vmatprep.subr.mxu0 0.0
    %4236 = vmatpush2.msra.mxu0 0.0
    %4237 = vmatprep.subr.mxu0 0.0
    %4238 = vmatpush2.msra.mxu0 0.0
    %4239 = vmatprep.subr.mxu0 0.0
    %4240 = vmatpush2.msra.mxu0 0.0
    %4241 = vmatprep.mubr.f32.mxu0 0.0
    %4242 = vmatmul.mubr.f32.gmra.mxu0 %v4175
    %v4243 = vpop.f32.mrf.mxu0
    %v4244 = vadd.f32 0.0, %v4243
    %v4245 = vpop.f32.mrf.mxu0
    %4246 = vdwg.mxu0
    %v4247 = vadd.f32 %v4173, %v4244
    %v4248 = vxor.u32 %v4247, 2147483648
    %v4249 = vmul.f32 %v4248, 1.442695
    %v4250 = vpow.pop %v4249
    %v4251 = vadd.f32 %v4250, 1.0
    %v4252 = vrcp.pop %v4251
    %v4253 = vmul.f32 1.0, %v4252
    %s4254 = scalar_lea.vmem [#allocation7], 16
    %v4255 = vld [vmem:[%s4254] sm:$0xff]
    %4256 = vmatprep.subr.mxu0 0.0
    %4257 = vmatpush1.msra.mxu0 0.0
    %4258 = vmatprep.subr.mxu0 0.0
    %4259 = vmatpush1.msra.mxu0 0.0
    %4260 = vmatprep.subr.mxu0 0.0
    %4261 = vmatpush1.msra.mxu0 0.0
    %4262 = vmatprep.subr.mxu0 0.0
    %4263 = vmatpush1.msra.mxu0 0.0
    %4264 = vmatprep.subr.mxu0 0.0
    %4265 = vmatpush1.msra.mxu0 0.0
    %4266 = vmatprep.subr.mxu0 0.0
    %4267 = vmatpush1.msra.mxu0 0.0
    %4268 = vmatprep.subr.mxu0 0.0
    %4269 = vmatpush1.msra.mxu0 0.0
    %4270 = vmatprep.subr.mxu0 0.0
    %4271 = vmatpush1.msra.mxu0 0.0
    %4272 = vmatprep.subr.mxu0 0.0
    %4273 = vmatpush1.msra.mxu0 0.0
    %4274 = vmatprep.subr.mxu0 0.0
    %4275 = vmatpush1.msra.mxu0 0.0
    %4276 = vmatprep.subr.mxu0 0.0
    %4277 = vmatpush1.msra.mxu0 0.0
    %4278 = vmatprep.subr.mxu0 0.0
    %4279 = vmatpush1.msra.mxu0 0.0
    %4280 = vmatprep.subr.mxu0 0.0
    %4281 = vmatpush1.msra.mxu0 %v640
    %4282 = vmatprep.subr.mxu0 0.0
    %4283 = vmatpush1.msra.mxu0 %v639
    %4284 = vmatprep.subr.mxu0 0.0
    %4285 = vmatpush1.msra.mxu0 %v638
    %4286 = vmatprep.subr.mxu0 0.0
    %4287 = vmatpush1.msra.mxu0 %v637
    %4288 = vmatprep.subr.mxu0 0.0
    %4289 = vmatpush2.msra.mxu0 0.0
    %4290 = vmatprep.subr.mxu0 0.0
    %4291 = vmatpush2.msra.mxu0 0.0
    %4292 = vmatprep.subr.mxu0 0.0
    %4293 = vmatpush2.msra.mxu0 0.0
    %4294 = vmatprep.subr.mxu0 0.0
    %4295 = vmatpush2.msra.mxu0 0.0
    %4296 = vmatprep.subr.mxu0 0.0
    %4297 = vmatpush2.msra.mxu0 0.0
    %4298 = vmatprep.subr.mxu0 0.0
    %4299 = vmatpush2.msra.mxu0 0.0
    %4300 = vmatprep.subr.mxu0 0.0
    %4301 = vmatpush2.msra.mxu0 0.0
    %4302 = vmatprep.subr.mxu0 0.0
    %4303 = vmatpush2.msra.mxu0 0.0
    %4304 = vmatprep.subr.mxu0 0.0
    %4305 = vmatpush2.msra.mxu0 0.0
    %4306 = vmatprep.subr.mxu0 0.0
    %4307 = vmatpush2.msra.mxu0 0.0
    %4308 = vmatprep.subr.mxu0 0.0
    %4309 = vmatpush2.msra.mxu0 0.0
    %4310 = vmatprep.subr.mxu0 0.0
    %4311 = vmatpush2.msra.mxu0 0.0
    %4312 = vmatprep.subr.mxu0 0.0
    %4313 = vmatpush2.msra.mxu0 0.0
    %4314 = vmatprep.subr.mxu0 0.0
    %4315 = vmatpush2.msra.mxu0 0.0
    %4316 = vmatprep.subr.mxu0 0.0
    %4317 = vmatpush2.msra.mxu0 0.0
    %4318 = vmatprep.subr.mxu0 0.0
    %4319 = vmatpush2.msra.mxu0 0.0
    %4320 = vmatprep.mubr.f32.mxu0 0.0
    %4321 = vmatmul.mubr.f32.gmra.mxu0 %v4175
    %v4322 = vpop.f32.mrf.mxu0
    %v4323 = vadd.f32 0.0, %v4322
    %v4324 = vpop.f32.mrf.mxu0
    %4325 = vdwg.mxu0
    %v4326 = vadd.f32 %v4255, %v4323
    %v4327 = vxor.u32 %v4326, 2147483648
    %v4328 = vmul.f32 %v4327, 1.442695
    %v4329 = vpow.pop %v4328
    %v4330 = vadd.f32 %v4329, 1.0
    %v4331 = vrcp.pop %v4330
    %v4332 = vmul.f32 1.0, %v4331
    %s4333 = scalar_lea.vmem [#allocation8], 16
    %v4334 = vld [vmem:[%s4333] sm:$0xff]
    %4335 = vmatprep.subr.mxu0 0.0
    %4336 = vmatpush1.msra.mxu0 0.0
    %4337 = vmatprep.subr.mxu0 0.0
    %4338 = vmatpush1.msra.mxu0 0.0
    %4339 = vmatprep.subr.mxu0 0.0
    %4340 = vmatpush1.msra.mxu0 0.0
    %4341 = vmatprep.subr.mxu0 0.0
    %4342 = vmatpush1.msra.mxu0 0.0
    %4343 = vmatprep.subr.mxu0 0.0
    %4344 = vmatpush1.msra.mxu0 0.0
    %4345 = vmatprep.subr.mxu0 0.0
    %4346 = vmatpush1.msra.mxu0 0.0
    %4347 = vmatprep.subr.mxu0 0.0
    %4348 = vmatpush1.msra.mxu0 0.0
    %4349 = vmatprep.subr.mxu0 0.0
    %4350 = vmatpush1.msra.mxu0 0.0
    %4351 = vmatprep.subr.mxu0 0.0
    %4352 = vmatpush1.msra.mxu0 0.0
    %4353 = vmatprep.subr.mxu0 0.0
    %4354 = vmatpush1.msra.mxu0 0.0
    %4355 = vmatprep.subr.mxu0 0.0
    %4356 = vmatpush1.msra.mxu0 0.0
    %4357 = vmatprep.subr.mxu0 0.0
    %4358 = vmatpush1.msra.mxu0 0.0
    %4359 = vmatprep.subr.mxu0 0.0
    %4360 = vmatpush1.msra.mxu0 %v644
    %4361 = vmatprep.subr.mxu0 0.0
    %4362 = vmatpush1.msra.mxu0 %v643
    %4363 = vmatprep.subr.mxu0 0.0
    %4364 = vmatpush1.msra.mxu0 %v642
    %4365 = vmatprep.subr.mxu0 0.0
    %4366 = vmatpush1.msra.mxu0 %v641
    %4367 = vmatprep.subr.mxu0 0.0
    %4368 = vmatpush2.msra.mxu0 0.0
    %4369 = vmatprep.subr.mxu0 0.0
    %4370 = vmatpush2.msra.mxu0 0.0
    %4371 = vmatprep.subr.mxu0 0.0
    %4372 = vmatpush2.msra.mxu0 0.0
    %4373 = vmatprep.subr.mxu0 0.0
    %4374 = vmatpush2.msra.mxu0 0.0
    %4375 = vmatprep.subr.mxu0 0.0
    %4376 = vmatpush2.msra.mxu0 0.0
    %4377 = vmatprep.subr.mxu0 0.0
    %4378 = vmatpush2.msra.mxu0 0.0
    %4379 = vmatprep.subr.mxu0 0.0
    %4380 = vmatpush2.msra.mxu0 0.0
    %4381 = vmatprep.subr.mxu0 0.0
    %4382 = vmatpush2.msra.mxu0 0.0
    %4383 = vmatprep.subr.mxu0 0.0
    %4384 = vmatpush2.msra.mxu0 0.0
    %4385 = vmatprep.subr.mxu0 0.0
    %4386 = vmatpush2.msra.mxu0 0.0
    %4387 = vmatprep.subr.mxu0 0.0
    %4388 = vmatpush2.msra.mxu0 0.0
    %4389 = vmatprep.subr.mxu0 0.0
    %4390 = vmatpush2.msra.mxu0 0.0
    %4391 = vmatprep.subr.mxu0 0.0
    %4392 = vmatpush2.msra.mxu0 0.0
    %4393 = vmatprep.subr.mxu0 0.0
    %4394 = vmatpush2.msra.mxu0 0.0
    %4395 = vmatprep.subr.mxu0 0.0
    %4396 = vmatpush2.msra.mxu0 0.0
    %4397 = vmatprep.subr.mxu0 0.0
    %4398 = vmatpush2.msra.mxu0 0.0
    %4399 = vmatprep.mubr.f32.mxu0 0.0
    %4400 = vmatmul.mubr.f32.gmra.mxu0 %v4175
    %v4401 = vpop.f32.mrf.mxu0
    %v4402 = vadd.f32 0.0, %v4401
    %v4403 = vpop.f32.mrf.mxu0
    %4404 = vdwg.mxu0
    %v4405 = vadd.f32 %v4334, %v4402
    %v4406 = vtanh.pop %v4405
    %s4407 = scalar_lea.vmem [#allocation9], 16
    %v4408 = vld [vmem:[%s4407] sm:$0xff]
    %4409 = vmatprep.subr.mxu0 0.0
    %4410 = vmatpush1.msra.mxu0 0.0
    %4411 = vmatprep.subr.mxu0 0.0
    %4412 = vmatpush1.msra.mxu0 0.0
    %4413 = vmatprep.subr.mxu0 0.0
    %4414 = vmatpush1.msra.mxu0 0.0
    %4415 = vmatprep.subr.mxu0 0.0
    %4416 = vmatpush1.msra.mxu0 0.0
    %4417 = vmatprep.subr.mxu0 0.0
    %4418 = vmatpush1.msra.mxu0 0.0
    %4419 = vmatprep.subr.mxu0 0.0
    %4420 = vmatpush1.msra.mxu0 0.0
    %4421 = vmatprep.subr.mxu0 0.0
    %4422 = vmatpush1.msra.mxu0 0.0
    %4423 = vmatprep.subr.mxu0 0.0
    %4424 = vmatpush1.msra.mxu0 0.0
    %4425 = vmatprep.subr.mxu0 0.0
    %4426 = vmatpush1.msra.mxu0 0.0
    %4427 = vmatprep.subr.mxu0 0.0
    %4428 = vmatpush1.msra.mxu0 0.0
    %4429 = vmatprep.subr.mxu0 0.0
    %4430 = vmatpush1.msra.mxu0 0.0
    %4431 = vmatprep.subr.mxu0 0.0
    %4432 = vmatpush1.msra.mxu0 0.0
    %4433 = vmatprep.subr.mxu0 0.0
    %4434 = vmatpush1.msra.mxu0 %v648
    %4435 = vmatprep.subr.mxu0 0.0
    %4436 = vmatpush1.msra.mxu0 %v647
    %4437 = vmatprep.subr.mxu0 0.0
    %4438 = vmatpush1.msra.mxu0 %v646
    %4439 = vmatprep.subr.mxu0 0.0
    %4440 = vmatpush1.msra.mxu0 %v645
    %4441 = vmatprep.subr.mxu0 0.0
    %4442 = vmatpush2.msra.mxu0 0.0
    %4443 = vmatprep.subr.mxu0 0.0
    %4444 = vmatpush2.msra.mxu0 0.0
    %4445 = vmatprep.subr.mxu0 0.0
    %4446 = vmatpush2.msra.mxu0 0.0
    %4447 = vmatprep.subr.mxu0 0.0
    %4448 = vmatpush2.msra.mxu0 0.0
    %4449 = vmatprep.subr.mxu0 0.0
    %4450 = vmatpush2.msra.mxu0 0.0
    %4451 = vmatprep.subr.mxu0 0.0
    %4452 = vmatpush2.msra.mxu0 0.0
    %4453 = vmatprep.subr.mxu0 0.0
    %4454 = vmatpush2.msra.mxu0 0.0
    %4455 = vmatprep.subr.mxu0 0.0
    %4456 = vmatpush2.msra.mxu0 0.0
    %4457 = vmatprep.subr.mxu0 0.0
    %4458 = vmatpush2.msra.mxu0 0.0
    %4459 = vmatprep.subr.mxu0 0.0
    %4460 = vmatpush2.msra.mxu0 0.0
    %4461 = vmatprep.subr.mxu0 0.0
    %4462 = vmatpush2.msra.mxu0 0.0
    %4463 = vmatprep.subr.mxu0 0.0
    %4464 = vmatpush2.msra.mxu0 0.0
    %4465 = vmatprep.subr.mxu0 0.0
    %4466 = vmatpush2.msra.mxu0 0.0
    %4467 = vmatprep.subr.mxu0 0.0
    %4468 = vmatpush2.msra.mxu0 0.0
    %4469 = vmatprep.subr.mxu0 0.0
    %4470 = vmatpush2.msra.mxu0 0.0
    %4471 = vmatprep.subr.mxu0 0.0
    %4472 = vmatpush2.msra.mxu0 0.0
    %4473 = vmatprep.mubr.f32.mxu0 0.0
    %4474 = vmatmul.mubr.f32.gmra.mxu0 %v4175
    %v4475 = vpop.f32.mrf.mxu0
    %v4476 = vadd.f32 0.0, %v4475
    %v4477 = vpop.f32.mrf.mxu0
    %4478 = vdwg.mxu0
    %v4479 = vadd.f32 %v4408, %v4476
    %v4480 = vxor.u32 %v4479, 2147483648
    %v4481 = vmul.f32 %v4480, 1.442695
    %v4482 = vpow.pop %v4481
    %v4483 = vadd.f32 %v4482, 1.0
    %v4484 = vrcp.pop %v4483
    %v4485 = vmul.f32 1.0, %v4484
    %v4486 = vmul.f32 %v4332, %v3846
    %v4487 = vmul.f32 %v4253, %v4406
    %v4488 = vadd.f32 %v4486, %v4487
    %v4489 = vtanh.pop %v4488
    %v4490 = vmul.f32 %v4485, %v4489
    %s4491 = scalar_lea.vmem [#allocation11], 16
    %4492 = vst.msk [vmem:[%s4491] sm:$0xff] %vm392, %v4490
    %s4493 = scalar_lea.vmem [#allocation2], 48
    %v4494 = vld [vmem:[%s4493] sm:$0xff]
    %v4496 = vsel %vm392, %v4169, 0
    %4498 = vmatprep.subr.mxu0 0.0
    %4499 = vmatpush1.msra.mxu0 0.0
    %4500 = vmatprep.subr.mxu0 0.0
    %4501 = vmatpush1.msra.mxu0 0.0
    %4502 = vmatprep.subr.mxu0 0.0
    %4503 = vmatpush1.msra.mxu0 0.0
    %4504 = vmatprep.subr.mxu0 0.0
    %4505 = vmatpush1.msra.mxu0 0.0
    %4506 = vmatprep.subr.mxu0 0.0
    %4507 = vmatpush1.msra.mxu0 0.0
    %4508 = vmatprep.subr.mxu0 0.0
    %4509 = vmatpush1.msra.mxu0 0.0
    %4510 = vmatprep.subr.mxu0 0.0
    %4511 = vmatpush1.msra.mxu0 0.0
    %4512 = vmatprep.subr.mxu0 0.0
    %4513 = vmatpush1.msra.mxu0 0.0
    %4514 = vmatprep.subr.mxu0 0.0
    %4515 = vmatpush1.msra.mxu0 0.0
    %4516 = vmatprep.subr.mxu0 0.0
    %4517 = vmatpush1.msra.mxu0 0.0
    %4518 = vmatprep.subr.mxu0 0.0
    %4519 = vmatpush1.msra.mxu0 0.0
    %4520 = vmatprep.subr.mxu0 0.0
    %4521 = vmatpush1.msra.mxu0 0.0
    %4522 = vmatprep.subr.mxu0 0.0
    %4523 = vmatpush1.msra.mxu0 %v620
    %4524 = vmatprep.subr.mxu0 0.0
    %4525 = vmatpush1.msra.mxu0 %v619
    %4526 = vmatprep.subr.mxu0 0.0
    %4527 = vmatpush1.msra.mxu0 %v618
    %4528 = vmatprep.subr.mxu0 0.0
    %4529 = vmatpush1.msra.mxu0 %v617
    %4530 = vmatprep.subr.mxu0 0.0
    %4531 = vmatpush2.msra.mxu0 0.0
    %4532 = vmatprep.subr.mxu0 0.0
    %4533 = vmatpush2.msra.mxu0 0.0
    %4534 = vmatprep.subr.mxu0 0.0
    %4535 = vmatpush2.msra.mxu0 0.0
    %4536 = vmatprep.subr.mxu0 0.0
    %4537 = vmatpush2.msra.mxu0 0.0
    %4538 = vmatprep.subr.mxu0 0.0
    %4539 = vmatpush2.msra.mxu0 0.0
    %4540 = vmatprep.subr.mxu0 0.0
    %4541 = vmatpush2.msra.mxu0 0.0
    %4542 = vmatprep.subr.mxu0 0.0
    %4543 = vmatpush2.msra.mxu0 0.0
    %4544 = vmatprep.subr.mxu0 0.0
    %4545 = vmatpush2.msra.mxu0 0.0
    %4546 = vmatprep.subr.mxu0 0.0
    %4547 = vmatpush2.msra.mxu0 0.0
    %4548 = vmatprep.subr.mxu0 0.0
    %4549 = vmatpush2.msra.mxu0 0.0
    %4550 = vmatprep.subr.mxu0 0.0
    %4551 = vmatpush2.msra.mxu0 0.0
    %4552 = vmatprep.subr.mxu0 0.0
    %4553 = vmatpush2.msra.mxu0 0.0
    %4554 = vmatprep.subr.mxu0 0.0
    %4555 = vmatpush2.msra.mxu0 0.0
    %4556 = vmatprep.subr.mxu0 0.0
    %4557 = vmatpush2.msra.mxu0 0.0
    %4558 = vmatprep.subr.mxu0 0.0
    %4559 = vmatpush2.msra.mxu0 0.0
    %4560 = vmatprep.subr.mxu0 0.0
    %4561 = vmatpush2.msra.mxu0 0.0
    %4562 = vmatprep.mubr.f32.mxu0 0.0
    %4563 = vmatmul.mubr.f32.gmra.mxu0 %v4496
    %v4564 = vpop.f32.mrf.mxu0
    %v4565 = vadd.f32 0.0, %v4564
    %v4566 = vpop.f32.mrf.mxu0
    %4567 = vdwg.mxu0
    %v4568 = vadd.f32 %v4494, %v4565
    %v4569 = vxor.u32 %v4568, 2147483648
    %v4570 = vmul.f32 %v4569, 1.442695
    %v4571 = vpow.pop %v4570
    %v4572 = vadd.f32 %v4571, 1.0
    %v4573 = vrcp.pop %v4572
    %v4574 = vmul.f32 1.0, %v4573
    %s4575 = scalar_lea.vmem [#allocation3], 48
    %v4576 = vld [vmem:[%s4575] sm:$0xff]
    %4577 = vmatprep.subr.mxu0 0.0
    %4578 = vmatpush1.msra.mxu0 0.0
    %4579 = vmatprep.subr.mxu0 0.0
    %4580 = vmatpush1.msra.mxu0 0.0
    %4581 = vmatprep.subr.mxu0 0.0
    %4582 = vmatpush1.msra.mxu0 0.0
    %4583 = vmatprep.subr.mxu0 0.0
    %4584 = vmatpush1.msra.mxu0 0.0
    %4585 = vmatprep.subr.mxu0 0.0
    %4586 = vmatpush1.msra.mxu0 0.0
    %4587 = vmatprep.subr.mxu0 0.0
    %4588 = vmatpush1.msra.mxu0 0.0
    %4589 = vmatprep.subr.mxu0 0.0
    %4590 = vmatpush1.msra.mxu0 0.0
    %4591 = vmatprep.subr.mxu0 0.0
    %4592 = vmatpush1.msra.mxu0 0.0
    %4593 = vmatprep.subr.mxu0 0.0
    %4594 = vmatpush1.msra.mxu0 0.0
    %4595 = vmatprep.subr.mxu0 0.0
    %4596 = vmatpush1.msra.mxu0 0.0
    %4597 = vmatprep.subr.mxu0 0.0
    %4598 = vmatpush1.msra.mxu0 0.0
    %4599 = vmatprep.subr.mxu0 0.0
    %4600 = vmatpush1.msra.mxu0 0.0
    %4601 = vmatprep.subr.mxu0 0.0
    %4602 = vmatpush1.msra.mxu0 %v624
    %4603 = vmatprep.subr.mxu0 0.0
    %4604 = vmatpush1.msra.mxu0 %v623
    %4605 = vmatprep.subr.mxu0 0.0
    %4606 = vmatpush1.msra.mxu0 %v622
    %4607 = vmatprep.subr.mxu0 0.0
    %4608 = vmatpush1.msra.mxu0 %v621
    %4609 = vmatprep.subr.mxu0 0.0
    %4610 = vmatpush2.msra.mxu0 0.0
    %4611 = vmatprep.subr.mxu0 0.0
    %4612 = vmatpush2.msra.mxu0 0.0
    %4613 = vmatprep.subr.mxu0 0.0
    %4614 = vmatpush2.msra.mxu0 0.0
    %4615 = vmatprep.subr.mxu0 0.0
    %4616 = vmatpush2.msra.mxu0 0.0
    %4617 = vmatprep.subr.mxu0 0.0
    %4618 = vmatpush2.msra.mxu0 0.0
    %4619 = vmatprep.subr.mxu0 0.0
    %4620 = vmatpush2.msra.mxu0 0.0
    %4621 = vmatprep.subr.mxu0 0.0
    %4622 = vmatpush2.msra.mxu0 0.0
    %4623 = vmatprep.subr.mxu0 0.0
    %4624 = vmatpush2.msra.mxu0 0.0
    %4625 = vmatprep.subr.mxu0 0.0
    %4626 = vmatpush2.msra.mxu0 0.0
    %4627 = vmatprep.subr.mxu0 0.0
    %4628 = vmatpush2.msra.mxu0 0.0
    %4629 = vmatprep.subr.mxu0 0.0
    %4630 = vmatpush2.msra.mxu0 0.0
    %4631 = vmatprep.subr.mxu0 0.0
    %4632 = vmatpush2.msra.mxu0 0.0
    %4633 = vmatprep.subr.mxu0 0.0
    %4634 = vmatpush2.msra.mxu0 0.0
    %4635 = vmatprep.subr.mxu0 0.0
    %4636 = vmatpush2.msra.mxu0 0.0
    %4637 = vmatprep.subr.mxu0 0.0
    %4638 = vmatpush2.msra.mxu0 0.0
    %4639 = vmatprep.subr.mxu0 0.0
    %4640 = vmatpush2.msra.mxu0 0.0
    %4641 = vmatprep.mubr.f32.mxu0 0.0
    %4642 = vmatmul.mubr.f32.gmra.mxu0 %v4496
    %v4643 = vpop.f32.mrf.mxu0
    %v4644 = vadd.f32 0.0, %v4643
    %v4645 = vpop.f32.mrf.mxu0
    %4646 = vdwg.mxu0
    %v4647 = vadd.f32 %v4576, %v4644
    %v4648 = vxor.u32 %v4647, 2147483648
    %v4649 = vmul.f32 %v4648, 1.442695
    %v4650 = vpow.pop %v4649
    %v4651 = vadd.f32 %v4650, 1.0
    %v4652 = vrcp.pop %v4651
    %v4653 = vmul.f32 1.0, %v4652
    %s4654 = scalar_lea.vmem [#allocation4], 48
    %v4655 = vld [vmem:[%s4654] sm:$0xff]
    %4656 = vmatprep.subr.mxu0 0.0
    %4657 = vmatpush1.msra.mxu0 0.0
    %4658 = vmatprep.subr.mxu0 0.0
    %4659 = vmatpush1.msra.mxu0 0.0
    %4660 = vmatprep.subr.mxu0 0.0
    %4661 = vmatpush1.msra.mxu0 0.0
    %4662 = vmatprep.subr.mxu0 0.0
    %4663 = vmatpush1.msra.mxu0 0.0
    %4664 = vmatprep.subr.mxu0 0.0
    %4665 = vmatpush1.msra.mxu0 0.0
    %4666 = vmatprep.subr.mxu0 0.0
    %4667 = vmatpush1.msra.mxu0 0.0
    %4668 = vmatprep.subr.mxu0 0.0
    %4669 = vmatpush1.msra.mxu0 0.0
    %4670 = vmatprep.subr.mxu0 0.0
    %4671 = vmatpush1.msra.mxu0 0.0
    %4672 = vmatprep.subr.mxu0 0.0
    %4673 = vmatpush1.msra.mxu0 0.0
    %4674 = vmatprep.subr.mxu0 0.0
    %4675 = vmatpush1.msra.mxu0 0.0
    %4676 = vmatprep.subr.mxu0 0.0
    %4677 = vmatpush1.msra.mxu0 0.0
    %4678 = vmatprep.subr.mxu0 0.0
    %4679 = vmatpush1.msra.mxu0 0.0
    %4680 = vmatprep.subr.mxu0 0.0
    %4681 = vmatpush1.msra.mxu0 %v628
    %4682 = vmatprep.subr.mxu0 0.0
    %4683 = vmatpush1.msra.mxu0 %v627
    %4684 = vmatprep.subr.mxu0 0.0
    %4685 = vmatpush1.msra.mxu0 %v626
    %4686 = vmatprep.subr.mxu0 0.0
    %4687 = vmatpush1.msra.mxu0 %v625
    %4688 = vmatprep.subr.mxu0 0.0
    %4689 = vmatpush2.msra.mxu0 0.0
    %4690 = vmatprep.subr.mxu0 0.0
    %4691 = vmatpush2.msra.mxu0 0.0
    %4692 = vmatprep.subr.mxu0 0.0
    %4693 = vmatpush2.msra.mxu0 0.0
    %4694 = vmatprep.subr.mxu0 0.0
    %4695 = vmatpush2.msra.mxu0 0.0
    %4696 = vmatprep.subr.mxu0 0.0
    %4697 = vmatpush2.msra.mxu0 0.0
    %4698 = vmatprep.subr.mxu0 0.0
    %4699 = vmatpush2.msra.mxu0 0.0
    %4700 = vmatprep.subr.mxu0 0.0
    %4701 = vmatpush2.msra.mxu0 0.0
    %4702 = vmatprep.subr.mxu0 0.0
    %4703 = vmatpush2.msra.mxu0 0.0
    %4704 = vmatprep.subr.mxu0 0.0
    %4705 = vmatpush2.msra.mxu0 0.0
    %4706 = vmatprep.subr.mxu0 0.0
    %4707 = vmatpush2.msra.mxu0 0.0
    %4708 = vmatprep.subr.mxu0 0.0
    %4709 = vmatpush2.msra.mxu0 0.0
    %4710 = vmatprep.subr.mxu0 0.0
    %4711 = vmatpush2.msra.mxu0 0.0
    %4712 = vmatprep.subr.mxu0 0.0
    %4713 = vmatpush2.msra.mxu0 0.0
    %4714 = vmatprep.subr.mxu0 0.0
    %4715 = vmatpush2.msra.mxu0 0.0
    %4716 = vmatprep.subr.mxu0 0.0
    %4717 = vmatpush2.msra.mxu0 0.0
    %4718 = vmatprep.subr.mxu0 0.0
    %4719 = vmatpush2.msra.mxu0 0.0
    %4720 = vmatprep.mubr.f32.mxu0 0.0
    %4721 = vmatmul.mubr.f32.gmra.mxu0 %v4496
    %v4722 = vpop.f32.mrf.mxu0
    %v4723 = vadd.f32 0.0, %v4722
    %v4724 = vpop.f32.mrf.mxu0
    %4725 = vdwg.mxu0
    %v4726 = vadd.f32 %v4655, %v4723
    %v4727 = vtanh.pop %v4726
    %s4728 = scalar_lea.vmem [#allocation5], 48
    %v4729 = vld [vmem:[%s4728] sm:$0xff]
    %4730 = vmatprep.subr.mxu0 0.0
    %4731 = vmatpush1.msra.mxu0 0.0
    %4732 = vmatprep.subr.mxu0 0.0
    %4733 = vmatpush1.msra.mxu0 0.0
    %4734 = vmatprep.subr.mxu0 0.0
    %4735 = vmatpush1.msra.mxu0 0.0
    %4736 = vmatprep.subr.mxu0 0.0
    %4737 = vmatpush1.msra.mxu0 0.0
    %4738 = vmatprep.subr.mxu0 0.0
    %4739 = vmatpush1.msra.mxu0 0.0
    %4740 = vmatprep.subr.mxu0 0.0
    %4741 = vmatpush1.msra.mxu0 0.0
    %4742 = vmatprep.subr.mxu0 0.0
    %4743 = vmatpush1.msra.mxu0 0.0
    %4744 = vmatprep.subr.mxu0 0.0
    %4745 = vmatpush1.msra.mxu0 0.0
    %4746 = vmatprep.subr.mxu0 0.0
    %4747 = vmatpush1.msra.mxu0 0.0
    %4748 = vmatprep.subr.mxu0 0.0
    %4749 = vmatpush1.msra.mxu0 0.0
    %4750 = vmatprep.subr.mxu0 0.0
    %4751 = vmatpush1.msra.mxu0 0.0
    %4752 = vmatprep.subr.mxu0 0.0
    %4753 = vmatpush1.msra.mxu0 0.0
    %4754 = vmatprep.subr.mxu0 0.0
    %4755 = vmatpush1.msra.mxu0 %v632
    %4756 = vmatprep.subr.mxu0 0.0
    %4757 = vmatpush1.msra.mxu0 %v631
    %4758 = vmatprep.subr.mxu0 0.0
    %4759 = vmatpush1.msra.mxu0 %v630
    %4760 = vmatprep.subr.mxu0 0.0
    %4761 = vmatpush1.msra.mxu0 %v629
    %4762 = vmatprep.subr.mxu0 0.0
    %4763 = vmatpush2.msra.mxu0 0.0
    %4764 = vmatprep.subr.mxu0 0.0
    %4765 = vmatpush2.msra.mxu0 0.0
    %4766 = vmatprep.subr.mxu0 0.0
    %4767 = vmatpush2.msra.mxu0 0.0
    %4768 = vmatprep.subr.mxu0 0.0
    %4769 = vmatpush2.msra.mxu0 0.0
    %4770 = vmatprep.subr.mxu0 0.0
    %4771 = vmatpush2.msra.mxu0 0.0
    %4772 = vmatprep.subr.mxu0 0.0
    %4773 = vmatpush2.msra.mxu0 0.0
    %4774 = vmatprep.subr.mxu0 0.0
    %4775 = vmatpush2.msra.mxu0 0.0
    %4776 = vmatprep.subr.mxu0 0.0
    %4777 = vmatpush2.msra.mxu0 0.0
    %4778 = vmatprep.subr.mxu0 0.0
    %4779 = vmatpush2.msra.mxu0 0.0
    %4780 = vmatprep.subr.mxu0 0.0
    %4781 = vmatpush2.msra.mxu0 0.0
    %4782 = vmatprep.subr.mxu0 0.0
    %4783 = vmatpush2.msra.mxu0 0.0
    %4784 = vmatprep.subr.mxu0 0.0
    %4785 = vmatpush2.msra.mxu0 0.0
    %4786 = vmatprep.subr.mxu0 0.0
    %4787 = vmatpush2.msra.mxu0 0.0
    %4788 = vmatprep.subr.mxu0 0.0
    %4789 = vmatpush2.msra.mxu0 0.0
    %4790 = vmatprep.subr.mxu0 0.0
    %4791 = vmatpush2.msra.mxu0 0.0
    %4792 = vmatprep.subr.mxu0 0.0
    %4793 = vmatpush2.msra.mxu0 0.0
    %4794 = vmatprep.mubr.f32.mxu0 0.0
    %4795 = vmatmul.mubr.f32.gmra.mxu0 %v4496
    %v4796 = vpop.f32.mrf.mxu0
    %v4797 = vadd.f32 0.0, %v4796
    %v4798 = vpop.f32.mrf.mxu0
    %4799 = vdwg.mxu0
    %v4800 = vadd.f32 %v4729, %v4797
    %v4801 = vxor.u32 %v4800, 2147483648
    %v4802 = vmul.f32 %v4801, 1.442695
    %v4803 = vpow.pop %v4802
    %v4804 = vadd.f32 %v4803, 1.0
    %v4805 = vrcp.pop %v4804
    %v4806 = vmul.f32 1.0, %v4805
    %v4807 = vmul.f32 %v4653, %v4167
    %v4808 = vmul.f32 %v4574, %v4727
    %v4809 = vadd.f32 %v4807, %v4808
    %v4810 = vtanh.pop %v4809
    %v4811 = vmul.f32 %v4806, %v4810
    %s4812 = scalar_lea.vmem [#allocation10], 48
    %4813 = vst.msk [vmem:[%s4812] sm:$0xff] %vm392, %v4811
    %s4814 = scalar_lea.vmem [#allocation6], 8
    %v4815 = vld [vmem:[%s4814] sm:$0xff]
    %v4817 = vsel %vm392, %v4490, 0
    %4819 = vmatprep.subr.mxu0 0.0
    %4820 = vmatpush1.msra.mxu0 0.0
    %4821 = vmatprep.subr.mxu0 0.0
    %4822 = vmatpush1.msra.mxu0 0.0
    %4823 = vmatprep.subr.mxu0 0.0
    %4824 = vmatpush1.msra.mxu0 0.0
    %4825 = vmatprep.subr.mxu0 0.0
    %4826 = vmatpush1.msra.mxu0 0.0
    %4827 = vmatprep.subr.mxu0 0.0
    %4828 = vmatpush1.msra.mxu0 0.0
    %4829 = vmatprep.subr.mxu0 0.0
    %4830 = vmatpush1.msra.mxu0 0.0
    %4831 = vmatprep.subr.mxu0 0.0
    %4832 = vmatpush1.msra.mxu0 0.0
    %4833 = vmatprep.subr.mxu0 0.0
    %4834 = vmatpush1.msra.mxu0 0.0
    %4835 = vmatprep.subr.mxu0 0.0
    %4836 = vmatpush1.msra.mxu0 0.0
    %4837 = vmatprep.subr.mxu0 0.0
    %4838 = vmatpush1.msra.mxu0 0.0
    %4839 = vmatprep.subr.mxu0 0.0
    %4840 = vmatpush1.msra.mxu0 0.0
    %4841 = vmatprep.subr.mxu0 0.0
    %4842 = vmatpush1.msra.mxu0 0.0
    %4843 = vmatprep.subr.mxu0 0.0
    %4844 = vmatpush1.msra.mxu0 %v636
    %4845 = vmatprep.subr.mxu0 0.0
    %4846 = vmatpush1.msra.mxu0 %v635
    %4847 = vmatprep.subr.mxu0 0.0
    %4848 = vmatpush1.msra.mxu0 %v634
    %4849 = vmatprep.subr.mxu0 0.0
    %4850 = vmatpush1.msra.mxu0 %v633
    %4851 = vmatprep.subr.mxu0 0.0
    %4852 = vmatpush2.msra.mxu0 0.0
    %4853 = vmatprep.subr.mxu0 0.0
    %4854 = vmatpush2.msra.mxu0 0.0
    %4855 = vmatprep.subr.mxu0 0.0
    %4856 = vmatpush2.msra.mxu0 0.0
    %4857 = vmatprep.subr.mxu0 0.0
    %4858 = vmatpush2.msra.mxu0 0.0
    %4859 = vmatprep.subr.mxu0 0.0
    %4860 = vmatpush2.msra.mxu0 0.0
    %4861 = vmatprep.subr.mxu0 0.0
    %4862 = vmatpush2.msra.mxu0 0.0
    %4863 = vmatprep.subr.mxu0 0.0
    %4864 = vmatpush2.msra.mxu0 0.0
    %4865 = vmatprep.subr.mxu0 0.0
    %4866 = vmatpush2.msra.mxu0 0.0
    %4867 = vmatprep.subr.mxu0 0.0
    %4868 = vmatpush2.msra.mxu0 0.0
    %4869 = vmatprep.subr.mxu0 0.0
    %4870 = vmatpush2.msra.mxu0 0.0
    %4871 = vmatprep.subr.mxu0 0.0
    %4872 = vmatpush2.msra.mxu0 0.0
    %4873 = vmatprep.subr.mxu0 0.0
    %4874 = vmatpush2.msra.mxu0 0.0
    %4875 = vmatprep.subr.mxu0 0.0
    %4876 = vmatpush2.msra.mxu0 0.0
    %4877 = vmatprep.subr.mxu0 0.0
    %4878 = vmatpush2.msra.mxu0 0.0
    %4879 = vmatprep.subr.mxu0 0.0
    %4880 = vmatpush2.msra.mxu0 0.0
    %4881 = vmatprep.subr.mxu0 0.0
    %4882 = vmatpush2.msra.mxu0 0.0
    %4883 = vmatprep.mubr.f32.mxu0 0.0
    %4884 = vmatmul.mubr.f32.gmra.mxu0 %v4817
    %v4885 = vpop.f32.mrf.mxu0
    %v4886 = vadd.f32 0.0, %v4885
    %v4887 = vpop.f32.mrf.mxu0
    %4888 = vdwg.mxu0
    %v4889 = vadd.f32 %v4815, %v4886
    %v4890 = vxor.u32 %v4889, 2147483648
    %v4891 = vmul.f32 %v4890, 1.442695
    %v4892 = vpow.pop %v4891
    %v4893 = vadd.f32 %v4892, 1.0
    %v4894 = vrcp.pop %v4893
    %v4895 = vmul.f32 1.0, %v4894
    %s4896 = scalar_lea.vmem [#allocation7], 8
    %v4897 = vld [vmem:[%s4896] sm:$0xff]
    %4898 = vmatprep.subr.mxu0 0.0
    %4899 = vmatpush1.msra.mxu0 0.0
    %4900 = vmatprep.subr.mxu0 0.0
    %4901 = vmatpush1.msra.mxu0 0.0
    %4902 = vmatprep.subr.mxu0 0.0
    %4903 = vmatpush1.msra.mxu0 0.0
    %4904 = vmatprep.subr.mxu0 0.0
    %4905 = vmatpush1.msra.mxu0 0.0
    %4906 = vmatprep.subr.mxu0 0.0
    %4907 = vmatpush1.msra.mxu0 0.0
    %4908 = vmatprep.subr.mxu0 0.0
    %4909 = vmatpush1.msra.mxu0 0.0
    %4910 = vmatprep.subr.mxu0 0.0
    %4911 = vmatpush1.msra.mxu0 0.0
    %4912 = vmatprep.subr.mxu0 0.0
    %4913 = vmatpush1.msra.mxu0 0.0
    %4914 = vmatprep.subr.mxu0 0.0
    %4915 = vmatpush1.msra.mxu0 0.0
    %4916 = vmatprep.subr.mxu0 0.0
    %4917 = vmatpush1.msra.mxu0 0.0
    %4918 = vmatprep.subr.mxu0 0.0
    %4919 = vmatpush1.msra.mxu0 0.0
    %4920 = vmatprep.subr.mxu0 0.0
    %4921 = vmatpush1.msra.mxu0 0.0
    %4922 = vmatprep.subr.mxu0 0.0
    %4923 = vmatpush1.msra.mxu0 %v640
    %4924 = vmatprep.subr.mxu0 0.0
    %4925 = vmatpush1.msra.mxu0 %v639
    %4926 = vmatprep.subr.mxu0 0.0
    %4927 = vmatpush1.msra.mxu0 %v638
    %4928 = vmatprep.subr.mxu0 0.0
    %4929 = vmatpush1.msra.mxu0 %v637
    %4930 = vmatprep.subr.mxu0 0.0
    %4931 = vmatpush2.msra.mxu0 0.0
    %4932 = vmatprep.subr.mxu0 0.0
    %4933 = vmatpush2.msra.mxu0 0.0
    %4934 = vmatprep.subr.mxu0 0.0
    %4935 = vmatpush2.msra.mxu0 0.0
    %4936 = vmatprep.subr.mxu0 0.0
    %4937 = vmatpush2.msra.mxu0 0.0
    %4938 = vmatprep.subr.mxu0 0.0
    %4939 = vmatpush2.msra.mxu0 0.0
    %4940 = vmatprep.subr.mxu0 0.0
    %4941 = vmatpush2.msra.mxu0 0.0
    %4942 = vmatprep.subr.mxu0 0.0
    %4943 = vmatpush2.msra.mxu0 0.0
    %4944 = vmatprep.subr.mxu0 0.0
    %4945 = vmatpush2.msra.mxu0 0.0
    %4946 = vmatprep.subr.mxu0 0.0
    %4947 = vmatpush2.msra.mxu0 0.0
    %4948 = vmatprep.subr.mxu0 0.0
    %4949 = vmatpush2.msra.mxu0 0.0
    %4950 = vmatprep.subr.mxu0 0.0
    %4951 = vmatpush2.msra.mxu0 0.0
    %4952 = vmatprep.subr.mxu0 0.0
    %4953 = vmatpush2.msra.mxu0 0.0
    %4954 = vmatprep.subr.mxu0 0.0
    %4955 = vmatpush2.msra.mxu0 0.0
    %4956 = vmatprep.subr.mxu0 0.0
    %4957 = vmatpush2.msra.mxu0 0.0
    %4958 = vmatprep.subr.mxu0 0.0
    %4959 = vmatpush2.msra.mxu0 0.0
    %4960 = vmatprep.subr.mxu0 0.0
    %4961 = vmatpush2.msra.mxu0 0.0
    %4962 = vmatprep.mubr.f32.mxu0 0.0
    %4963 = vmatmul.mubr.f32.gmra.mxu0 %v4817
    %v4964 = vpop.f32.mrf.mxu0
    %v4965 = vadd.f32 0.0, %v4964
    %v4966 = vpop.f32.mrf.mxu0
    %4967 = vdwg.mxu0
    %v4968 = vadd.f32 %v4897, %v4965
    %v4969 = vxor.u32 %v4968, 2147483648
    %v4970 = vmul.f32 %v4969, 1.442695
    %v4971 = vpow.pop %v4970
    %v4972 = vadd.f32 %v4971, 1.0
    %v4973 = vrcp.pop %v4972
    %v4974 = vmul.f32 1.0, %v4973
    %s4975 = scalar_lea.vmem [#allocation8], 8
    %v4976 = vld [vmem:[%s4975] sm:$0xff]
    %4977 = vmatprep.subr.mxu0 0.0
    %4978 = vmatpush1.msra.mxu0 0.0
    %4979 = vmatprep.subr.mxu0 0.0
    %4980 = vmatpush1.msra.mxu0 0.0
    %4981 = vmatprep.subr.mxu0 0.0
    %4982 = vmatpush1.msra.mxu0 0.0
    %4983 = vmatprep.subr.mxu0 0.0
    %4984 = vmatpush1.msra.mxu0 0.0
    %4985 = vmatprep.subr.mxu0 0.0
    %4986 = vmatpush1.msra.mxu0 0.0
    %4987 = vmatprep.subr.mxu0 0.0
    %4988 = vmatpush1.msra.mxu0 0.0
    %4989 = vmatprep.subr.mxu0 0.0
    %4990 = vmatpush1.msra.mxu0 0.0
    %4991 = vmatprep.subr.mxu0 0.0
    %4992 = vmatpush1.msra.mxu0 0.0
    %4993 = vmatprep.subr.mxu0 0.0
    %4994 = vmatpush1.msra.mxu0 0.0
    %4995 = vmatprep.subr.mxu0 0.0
    %4996 = vmatpush1.msra.mxu0 0.0
    %4997 = vmatprep.subr.mxu0 0.0
    %4998 = vmatpush1.msra.mxu0 0.0
    %4999 = vmatprep.subr.mxu0 0.0
    %5000 = vmatpush1.msra.mxu0 0.0
    %5001 = vmatprep.subr.mxu0 0.0
    %5002 = vmatpush1.msra.mxu0 %v644
    %5003 = vmatprep.subr.mxu0 0.0
    %5004 = vmatpush1.msra.mxu0 %v643
    %5005 = vmatprep.subr.mxu0 0.0
    %5006 = vmatpush1.msra.mxu0 %v642
    %5007 = vmatprep.subr.mxu0 0.0
    %5008 = vmatpush1.msra.mxu0 %v641
    %5009 = vmatprep.subr.mxu0 0.0
    %5010 = vmatpush2.msra.mxu0 0.0
    %5011 = vmatprep.subr.mxu0 0.0
    %5012 = vmatpush2.msra.mxu0 0.0
    %5013 = vmatprep.subr.mxu0 0.0
    %5014 = vmatpush2.msra.mxu0 0.0
    %5015 = vmatprep.subr.mxu0 0.0
    %5016 = vmatpush2.msra.mxu0 0.0
    %5017 = vmatprep.subr.mxu0 0.0
    %5018 = vmatpush2.msra.mxu0 0.0
    %5019 = vmatprep.subr.mxu0 0.0
    %5020 = vmatpush2.msra.mxu0 0.0
    %5021 = vmatprep.subr.mxu0 0.0
    %5022 = vmatpush2.msra.mxu0 0.0
    %5023 = vmatprep.subr.mxu0 0.0
    %5024 = vmatpush2.msra.mxu0 0.0
    %5025 = vmatprep.subr.mxu0 0.0
    %5026 = vmatpush2.msra.mxu0 0.0
    %5027 = vmatprep.subr.mxu0 0.0
    %5028 = vmatpush2.msra.mxu0 0.0
    %5029 = vmatprep.subr.mxu0 0.0
    %5030 = vmatpush2.msra.mxu0 0.0
    %5031 = vmatprep.subr.mxu0 0.0
    %5032 = vmatpush2.msra.mxu0 0.0
    %5033 = vmatprep.subr.mxu0 0.0
    %5034 = vmatpush2.msra.mxu0 0.0
    %5035 = vmatprep.subr.mxu0 0.0
    %5036 = vmatpush2.msra.mxu0 0.0
    %5037 = vmatprep.subr.mxu0 0.0
    %5038 = vmatpush2.msra.mxu0 0.0
    %5039 = vmatprep.subr.mxu0 0.0
    %5040 = vmatpush2.msra.mxu0 0.0
    %5041 = vmatprep.mubr.f32.mxu0 0.0
    %5042 = vmatmul.mubr.f32.gmra.mxu0 %v4817
    %v5043 = vpop.f32.mrf.mxu0
    %v5044 = vadd.f32 0.0, %v5043
    %v5045 = vpop.f32.mrf.mxu0
    %5046 = vdwg.mxu0
    %v5047 = vadd.f32 %v4976, %v5044
    %v5048 = vtanh.pop %v5047
    %s5049 = scalar_lea.vmem [#allocation9], 8
    %v5050 = vld [vmem:[%s5049] sm:$0xff]
    %5051 = vmatprep.subr.mxu0 0.0
    %5052 = vmatpush1.msra.mxu0 0.0
    %5053 = vmatprep.subr.mxu0 0.0
    %5054 = vmatpush1.msra.mxu0 0.0
    %5055 = vmatprep.subr.mxu0 0.0
    %5056 = vmatpush1.msra.mxu0 0.0
    %5057 = vmatprep.subr.mxu0 0.0
    %5058 = vmatpush1.msra.mxu0 0.0
    %5059 = vmatprep.subr.mxu0 0.0
    %5060 = vmatpush1.msra.mxu0 0.0
    %5061 = vmatprep.subr.mxu0 0.0
    %5062 = vmatpush1.msra.mxu0 0.0
    %5063 = vmatprep.subr.mxu0 0.0
    %5064 = vmatpush1.msra.mxu0 0.0
    %5065 = vmatprep.subr.mxu0 0.0
    %5066 = vmatpush1.msra.mxu0 0.0
    %5067 = vmatprep.subr.mxu0 0.0
    %5068 = vmatpush1.msra.mxu0 0.0
    %5069 = vmatprep.subr.mxu0 0.0
    %5070 = vmatpush1.msra.mxu0 0.0
    %5071 = vmatprep.subr.mxu0 0.0
    %5072 = vmatpush1.msra.mxu0 0.0
    %5073 = vmatprep.subr.mxu0 0.0
    %5074 = vmatpush1.msra.mxu0 0.0
    %5075 = vmatprep.subr.mxu0 0.0
    %5076 = vmatpush1.msra.mxu0 %v648
    %5077 = vmatprep.subr.mxu0 0.0
    %5078 = vmatpush1.msra.mxu0 %v647
    %5079 = vmatprep.subr.mxu0 0.0
    %5080 = vmatpush1.msra.mxu0 %v646
    %5081 = vmatprep.subr.mxu0 0.0
    %5082 = vmatpush1.msra.mxu0 %v645
    %5083 = vmatprep.subr.mxu0 0.0
    %5084 = vmatpush2.msra.mxu0 0.0
    %5085 = vmatprep.subr.mxu0 0.0
    %5086 = vmatpush2.msra.mxu0 0.0
    %5087 = vmatprep.subr.mxu0 0.0
    %5088 = vmatpush2.msra.mxu0 0.0
    %5089 = vmatprep.subr.mxu0 0.0
    %5090 = vmatpush2.msra.mxu0 0.0
    %5091 = vmatprep.subr.mxu0 0.0
    %5092 = vmatpush2.msra.mxu0 0.0
    %5093 = vmatprep.subr.mxu0 0.0
    %5094 = vmatpush2.msra.mxu0 0.0
    %5095 = vmatprep.subr.mxu0 0.0
    %5096 = vmatpush2.msra.mxu0 0.0
    %5097 = vmatprep.subr.mxu0 0.0
    %5098 = vmatpush2.msra.mxu0 0.0
    %5099 = vmatprep.subr.mxu0 0.0
    %5100 = vmatpush2.msra.mxu0 0.0
    %5101 = vmatprep.subr.mxu0 0.0
    %5102 = vmatpush2.msra.mxu0 0.0
    %5103 = vmatprep.subr.mxu0 0.0
    %5104 = vmatpush2.msra.mxu0 0.0
    %5105 = vmatprep.subr.mxu0 0.0
    %5106 = vmatpush2.msra.mxu0 0.0
    %5107 = vmatprep.subr.mxu0 0.0
    %5108 = vmatpush2.msra.mxu0 0.0
    %5109 = vmatprep.subr.mxu0 0.0
    %5110 = vmatpush2.msra.mxu0 0.0
    %5111 = vmatprep.subr.mxu0 0.0
    %5112 = vmatpush2.msra.mxu0 0.0
    %5113 = vmatprep.subr.mxu0 0.0
    %5114 = vmatpush2.msra.mxu0 0.0
    %5115 = vmatprep.mubr.f32.mxu0 0.0
    %5116 = vmatmul.mubr.f32.gmra.mxu0 %v4817
    %v5117 = vpop.f32.mrf.mxu0
    %v5118 = vadd.f32 0.0, %v5117
    %v5119 = vpop.f32.mrf.mxu0
    %5120 = vdwg.mxu0
    %v5121 = vadd.f32 %v5050, %v5118
    %v5122 = vxor.u32 %v5121, 2147483648
    %v5123 = vmul.f32 %v5122, 1.442695
    %v5124 = vpow.pop %v5123
    %v5125 = vadd.f32 %v5124, 1.0
    %v5126 = vrcp.pop %v5125
    %v5127 = vmul.f32 1.0, %v5126
    %v5128 = vmul.f32 %v4974, %v4488
    %v5129 = vmul.f32 %v4895, %v5048
    %v5130 = vadd.f32 %v5128, %v5129
    %v5131 = vtanh.pop %v5130
    %v5132 = vmul.f32 %v5127, %v5131
    %s5133 = scalar_lea.vmem [#allocation11], 8
    %5134 = vst.msk [vmem:[%s5133] sm:$0xff] %vm392, %v5132
    %s5135 = scalar_lea.vmem [#allocation2], 56
    %v5136 = vld [vmem:[%s5135] sm:$0xff]
    %v5138 = vsel %vm392, %v4811, 0
    %5140 = vmatprep.subr.mxu0 0.0
    %5141 = vmatpush1.msra.mxu0 0.0
    %5142 = vmatprep.subr.mxu0 0.0
    %5143 = vmatpush1.msra.mxu0 0.0
    %5144 = vmatprep.subr.mxu0 0.0
    %5145 = vmatpush1.msra.mxu0 0.0
    %5146 = vmatprep.subr.mxu0 0.0
    %5147 = vmatpush1.msra.mxu0 0.0
    %5148 = vmatprep.subr.mxu0 0.0
    %5149 = vmatpush1.msra.mxu0 0.0
    %5150 = vmatprep.subr.mxu0 0.0
    %5151 = vmatpush1.msra.mxu0 0.0
    %5152 = vmatprep.subr.mxu0 0.0
    %5153 = vmatpush1.msra.mxu0 0.0
    %5154 = vmatprep.subr.mxu0 0.0
    %5155 = vmatpush1.msra.mxu0 0.0
    %5156 = vmatprep.subr.mxu0 0.0
    %5157 = vmatpush1.msra.mxu0 0.0
    %5158 = vmatprep.subr.mxu0 0.0
    %5159 = vmatpush1.msra.mxu0 0.0
    %5160 = vmatprep.subr.mxu0 0.0
    %5161 = vmatpush1.msra.mxu0 0.0
    %5162 = vmatprep.subr.mxu0 0.0
    %5163 = vmatpush1.msra.mxu0 0.0
    %5164 = vmatprep.subr.mxu0 0.0
    %5165 = vmatpush1.msra.mxu0 %v620
    %5166 = vmatprep.subr.mxu0 0.0
    %5167 = vmatpush1.msra.mxu0 %v619
    %5168 = vmatprep.subr.mxu0 0.0
    %5169 = vmatpush1.msra.mxu0 %v618
    %5170 = vmatprep.subr.mxu0 0.0
    %5171 = vmatpush1.msra.mxu0 %v617
    %5172 = vmatprep.subr.mxu0 0.0
    %5173 = vmatpush2.msra.mxu0 0.0
    %5174 = vmatprep.subr.mxu0 0.0
    %5175 = vmatpush2.msra.mxu0 0.0
    %5176 = vmatprep.subr.mxu0 0.0
    %5177 = vmatpush2.msra.mxu0 0.0
    %5178 = vmatprep.subr.mxu0 0.0
    %5179 = vmatpush2.msra.mxu0 0.0
    %5180 = vmatprep.subr.mxu0 0.0
    %5181 = vmatpush2.msra.mxu0 0.0
    %5182 = vmatprep.subr.mxu0 0.0
    %5183 = vmatpush2.msra.mxu0 0.0
    %5184 = vmatprep.subr.mxu0 0.0
    %5185 = vmatpush2.msra.mxu0 0.0
    %5186 = vmatprep.subr.mxu0 0.0
    %5187 = vmatpush2.msra.mxu0 0.0
    %5188 = vmatprep.subr.mxu0 0.0
    %5189 = vmatpush2.msra.mxu0 0.0
    %5190 = vmatprep.subr.mxu0 0.0
    %5191 = vmatpush2.msra.mxu0 0.0
    %5192 = vmatprep.subr.mxu0 0.0
    %5193 = vmatpush2.msra.mxu0 0.0
    %5194 = vmatprep.subr.mxu0 0.0
    %5195 = vmatpush2.msra.mxu0 0.0
    %5196 = vmatprep.subr.mxu0 0.0
    %5197 = vmatpush2.msra.mxu0 0.0
    %5198 = vmatprep.subr.mxu0 0.0
    %5199 = vmatpush2.msra.mxu0 0.0
    %5200 = vmatprep.subr.mxu0 0.0
    %5201 = vmatpush2.msra.mxu0 0.0
    %5202 = vmatprep.subr.mxu0 0.0
    %5203 = vmatpush2.msra.mxu0 0.0
    %5204 = vmatprep.mubr.f32.mxu0 0.0
    %5205 = vmatmul.mubr.f32.gmra.mxu0 %v5138
    %v5206 = vpop.f32.mrf.mxu0
    %v5207 = vadd.f32 0.0, %v5206
    %v5208 = vpop.f32.mrf.mxu0
    %5209 = vdwg.mxu0
    %v5210 = vadd.f32 %v5136, %v5207
    %v5211 = vxor.u32 %v5210, 2147483648
    %v5212 = vmul.f32 %v5211, 1.442695
    %v5213 = vpow.pop %v5212
    %v5214 = vadd.f32 %v5213, 1.0
    %v5215 = vrcp.pop %v5214
    %v5216 = vmul.f32 1.0, %v5215
    %s5217 = scalar_lea.vmem [#allocation3], 56
    %v5218 = vld [vmem:[%s5217] sm:$0xff]
    %5219 = vmatprep.subr.mxu0 0.0
    %5220 = vmatpush1.msra.mxu0 0.0
    %5221 = vmatprep.subr.mxu0 0.0
    %5222 = vmatpush1.msra.mxu0 0.0
    %5223 = vmatprep.subr.mxu0 0.0
    %5224 = vmatpush1.msra.mxu0 0.0
    %5225 = vmatprep.subr.mxu0 0.0
    %5226 = vmatpush1.msra.mxu0 0.0
    %5227 = vmatprep.subr.mxu0 0.0
    %5228 = vmatpush1.msra.mxu0 0.0
    %5229 = vmatprep.subr.mxu0 0.0
    %5230 = vmatpush1.msra.mxu0 0.0
    %5231 = vmatprep.subr.mxu0 0.0
    %5232 = vmatpush1.msra.mxu0 0.0
    %5233 = vmatprep.subr.mxu0 0.0
    %5234 = vmatpush1.msra.mxu0 0.0
    %5235 = vmatprep.subr.mxu0 0.0
    %5236 = vmatpush1.msra.mxu0 0.0
    %5237 = vmatprep.subr.mxu0 0.0
    %5238 = vmatpush1.msra.mxu0 0.0
    %5239 = vmatprep.subr.mxu0 0.0
    %5240 = vmatpush1.msra.mxu0 0.0
    %5241 = vmatprep.subr.mxu0 0.0
    %5242 = vmatpush1.msra.mxu0 0.0
    %5243 = vmatprep.subr.mxu0 0.0
    %5244 = vmatpush1.msra.mxu0 %v624
    %5245 = vmatprep.subr.mxu0 0.0
    %5246 = vmatpush1.msra.mxu0 %v623
    %5247 = vmatprep.subr.mxu0 0.0
    %5248 = vmatpush1.msra.mxu0 %v622
    %5249 = vmatprep.subr.mxu0 0.0
    %5250 = vmatpush1.msra.mxu0 %v621
    %5251 = vmatprep.subr.mxu0 0.0
    %5252 = vmatpush2.msra.mxu0 0.0
    %5253 = vmatprep.subr.mxu0 0.0
    %5254 = vmatpush2.msra.mxu0 0.0
    %5255 = vmatprep.subr.mxu0 0.0
    %5256 = vmatpush2.msra.mxu0 0.0
    %5257 = vmatprep.subr.mxu0 0.0
    %5258 = vmatpush2.msra.mxu0 0.0
    %5259 = vmatprep.subr.mxu0 0.0
    %5260 = vmatpush2.msra.mxu0 0.0
    %5261 = vmatprep.subr.mxu0 0.0
    %5262 = vmatpush2.msra.mxu0 0.0
    %5263 = vmatprep.subr.mxu0 0.0
    %5264 = vmatpush2.msra.mxu0 0.0
    %5265 = vmatprep.subr.mxu0 0.0
    %5266 = vmatpush2.msra.mxu0 0.0
    %5267 = vmatprep.subr.mxu0 0.0
    %5268 = vmatpush2.msra.mxu0 0.0
    %5269 = vmatprep.subr.mxu0 0.0
    %5270 = vmatpush2.msra.mxu0 0.0
    %5271 = vmatprep.subr.mxu0 0.0
    %5272 = vmatpush2.msra.mxu0 0.0
    %5273 = vmatprep.subr.mxu0 0.0
    %5274 = vmatpush2.msra.mxu0 0.0
    %5275 = vmatprep.subr.mxu0 0.0
    %5276 = vmatpush2.msra.mxu0 0.0
    %5277 = vmatprep.subr.mxu0 0.0
    %5278 = vmatpush2.msra.mxu0 0.0
    %5279 = vmatprep.subr.mxu0 0.0
    %5280 = vmatpush2.msra.mxu0 0.0
    %5281 = vmatprep.subr.mxu0 0.0
    %5282 = vmatpush2.msra.mxu0 0.0
    %5283 = vmatprep.mubr.f32.mxu0 0.0
    %5284 = vmatmul.mubr.f32.gmra.mxu0 %v5138
    %v5285 = vpop.f32.mrf.mxu0
    %v5286 = vadd.f32 0.0, %v5285
    %v5287 = vpop.f32.mrf.mxu0
    %5288 = vdwg.mxu0
    %v5289 = vadd.f32 %v5218, %v5286
    %v5290 = vxor.u32 %v5289, 2147483648
    %v5291 = vmul.f32 %v5290, 1.442695
    %v5292 = vpow.pop %v5291
    %v5293 = vadd.f32 %v5292, 1.0
    %v5294 = vrcp.pop %v5293
    %v5295 = vmul.f32 1.0, %v5294
    %s5296 = scalar_lea.vmem [#allocation4], 56
    %v5297 = vld [vmem:[%s5296] sm:$0xff]
    %5298 = vmatprep.subr.mxu0 0.0
    %5299 = vmatpush1.msra.mxu0 0.0
    %5300 = vmatprep.subr.mxu0 0.0
    %5301 = vmatpush1.msra.mxu0 0.0
    %5302 = vmatprep.subr.mxu0 0.0
    %5303 = vmatpush1.msra.mxu0 0.0
    %5304 = vmatprep.subr.mxu0 0.0
    %5305 = vmatpush1.msra.mxu0 0.0
    %5306 = vmatprep.subr.mxu0 0.0
    %5307 = vmatpush1.msra.mxu0 0.0
    %5308 = vmatprep.subr.mxu0 0.0
    %5309 = vmatpush1.msra.mxu0 0.0
    %5310 = vmatprep.subr.mxu0 0.0
    %5311 = vmatpush1.msra.mxu0 0.0
    %5312 = vmatprep.subr.mxu0 0.0
    %5313 = vmatpush1.msra.mxu0 0.0
    %5314 = vmatprep.subr.mxu0 0.0
    %5315 = vmatpush1.msra.mxu0 0.0
    %5316 = vmatprep.subr.mxu0 0.0
    %5317 = vmatpush1.msra.mxu0 0.0
    %5318 = vmatprep.subr.mxu0 0.0
    %5319 = vmatpush1.msra.mxu0 0.0
    %5320 = vmatprep.subr.mxu0 0.0
    %5321 = vmatpush1.msra.mxu0 0.0
    %5322 = vmatprep.subr.mxu0 0.0
    %5323 = vmatpush1.msra.mxu0 %v628
    %5324 = vmatprep.subr.mxu0 0.0
    %5325 = vmatpush1.msra.mxu0 %v627
    %5326 = vmatprep.subr.mxu0 0.0
    %5327 = vmatpush1.msra.mxu0 %v626
    %5328 = vmatprep.subr.mxu0 0.0
    %5329 = vmatpush1.msra.mxu0 %v625
    %5330 = vmatprep.subr.mxu0 0.0
    %5331 = vmatpush2.msra.mxu0 0.0
    %5332 = vmatprep.subr.mxu0 0.0
    %5333 = vmatpush2.msra.mxu0 0.0
    %5334 = vmatprep.subr.mxu0 0.0
    %5335 = vmatpush2.msra.mxu0 0.0
    %5336 = vmatprep.subr.mxu0 0.0
    %5337 = vmatpush2.msra.mxu0 0.0
    %5338 = vmatprep.subr.mxu0 0.0
    %5339 = vmatpush2.msra.mxu0 0.0
    %5340 = vmatprep.subr.mxu0 0.0
    %5341 = vmatpush2.msra.mxu0 0.0
    %5342 = vmatprep.subr.mxu0 0.0
    %5343 = vmatpush2.msra.mxu0 0.0
    %5344 = vmatprep.subr.mxu0 0.0
    %5345 = vmatpush2.msra.mxu0 0.0
    %5346 = vmatprep.subr.mxu0 0.0
    %5347 = vmatpush2.msra.mxu0 0.0
    %5348 = vmatprep.subr.mxu0 0.0
    %5349 = vmatpush2.msra.mxu0 0.0
    %5350 = vmatprep.subr.mxu0 0.0
    %5351 = vmatpush2.msra.mxu0 0.0
    %5352 = vmatprep.subr.mxu0 0.0
    %5353 = vmatpush2.msra.mxu0 0.0
    %5354 = vmatprep.subr.mxu0 0.0
    %5355 = vmatpush2.msra.mxu0 0.0
    %5356 = vmatprep.subr.mxu0 0.0
    %5357 = vmatpush2.msra.mxu0 0.0
    %5358 = vmatprep.subr.mxu0 0.0
    %5359 = vmatpush2.msra.mxu0 0.0
    %5360 = vmatprep.subr.mxu0 0.0
    %5361 = vmatpush2.msra.mxu0 0.0
    %5362 = vmatprep.mubr.f32.mxu0 0.0
    %5363 = vmatmul.mubr.f32.gmra.mxu0 %v5138
    %v5364 = vpop.f32.mrf.mxu0
    %v5365 = vadd.f32 0.0, %v5364
    %v5366 = vpop.f32.mrf.mxu0
    %5367 = vdwg.mxu0
    %v5368 = vadd.f32 %v5297, %v5365
    %v5369 = vtanh.pop %v5368
    %s5370 = scalar_lea.vmem [#allocation5], 56
    %v5371 = vld [vmem:[%s5370] sm:$0xff]
    %5372 = vmatprep.subr.mxu0 0.0
    %5373 = vmatpush1.msra.mxu0 0.0
    %5374 = vmatprep.subr.mxu0 0.0
    %5375 = vmatpush1.msra.mxu0 0.0
    %5376 = vmatprep.subr.mxu0 0.0
    %5377 = vmatpush1.msra.mxu0 0.0
    %5378 = vmatprep.subr.mxu0 0.0
    %5379 = vmatpush1.msra.mxu0 0.0
    %5380 = vmatprep.subr.mxu0 0.0
    %5381 = vmatpush1.msra.mxu0 0.0
    %5382 = vmatprep.subr.mxu0 0.0
    %5383 = vmatpush1.msra.mxu0 0.0
    %5384 = vmatprep.subr.mxu0 0.0
    %5385 = vmatpush1.msra.mxu0 0.0
    %5386 = vmatprep.subr.mxu0 0.0
    %5387 = vmatpush1.msra.mxu0 0.0
    %5388 = vmatprep.subr.mxu0 0.0
    %5389 = vmatpush1.msra.mxu0 0.0
    %5390 = vmatprep.subr.mxu0 0.0
    %5391 = vmatpush1.msra.mxu0 0.0
    %5392 = vmatprep.subr.mxu0 0.0
    %5393 = vmatpush1.msra.mxu0 0.0
    %5394 = vmatprep.subr.mxu0 0.0
    %5395 = vmatpush1.msra.mxu0 0.0
    %5396 = vmatprep.subr.mxu0 0.0
    %5397 = vmatpush1.msra.mxu0 %v632
    %5398 = vmatprep.subr.mxu0 0.0
    %5399 = vmatpush1.msra.mxu0 %v631
    %5400 = vmatprep.subr.mxu0 0.0
    %5401 = vmatpush1.msra.mxu0 %v630
    %5402 = vmatprep.subr.mxu0 0.0
    %5403 = vmatpush1.msra.mxu0 %v629
    %5404 = vmatprep.subr.mxu0 0.0
    %5405 = vmatpush2.msra.mxu0 0.0
    %5406 = vmatprep.subr.mxu0 0.0
    %5407 = vmatpush2.msra.mxu0 0.0
    %5408 = vmatprep.subr.mxu0 0.0
    %5409 = vmatpush2.msra.mxu0 0.0
    %5410 = vmatprep.subr.mxu0 0.0
    %5411 = vmatpush2.msra.mxu0 0.0
    %5412 = vmatprep.subr.mxu0 0.0
    %5413 = vmatpush2.msra.mxu0 0.0
    %5414 = vmatprep.subr.mxu0 0.0
    %5415 = vmatpush2.msra.mxu0 0.0
    %5416 = vmatprep.subr.mxu0 0.0
    %5417 = vmatpush2.msra.mxu0 0.0
    %5418 = vmatprep.subr.mxu0 0.0
    %5419 = vmatpush2.msra.mxu0 0.0
    %5420 = vmatprep.subr.mxu0 0.0
    %5421 = vmatpush2.msra.mxu0 0.0
    %5422 = vmatprep.subr.mxu0 0.0
    %5423 = vmatpush2.msra.mxu0 0.0
    %5424 = vmatprep.subr.mxu0 0.0
    %5425 = vmatpush2.msra.mxu0 0.0
    %5426 = vmatprep.subr.mxu0 0.0
    %5427 = vmatpush2.msra.mxu0 0.0
    %5428 = vmatprep.subr.mxu0 0.0
    %5429 = vmatpush2.msra.mxu0 0.0
    %5430 = vmatprep.subr.mxu0 0.0
    %5431 = vmatpush2.msra.mxu0 0.0
    %5432 = vmatprep.subr.mxu0 0.0
    %5433 = vmatpush2.msra.mxu0 0.0
    %5434 = vmatprep.subr.mxu0 0.0
    %5435 = vmatpush2.msra.mxu0 0.0
    %5436 = vmatprep.mubr.f32.mxu0 0.0
    %5437 = vmatmul.mubr.f32.gmra.mxu0 %v5138
    %v5438 = vpop.f32.mrf.mxu0
    %v5439 = vadd.f32 0.0, %v5438
    %v5440 = vpop.f32.mrf.mxu0
    %5441 = vdwg.mxu0
    %v5442 = vadd.f32 %v5371, %v5439
    %v5443 = vxor.u32 %v5442, 2147483648
    %v5444 = vmul.f32 %v5443, 1.442695
    %v5445 = vpow.pop %v5444
    %v5446 = vadd.f32 %v5445, 1.0
    %v5447 = vrcp.pop %v5446
    %v5448 = vmul.f32 1.0, %v5447
    %v5449 = vmul.f32 %v5295, %v4809
    %v5450 = vmul.f32 %v5216, %v5369
    %v5451 = vadd.f32 %v5449, %v5450
    %v5452 = vtanh.pop %v5451
    %v5453 = vmul.f32 %v5448, %v5452
    %s5454 = scalar_lea.vmem [#allocation10], 56
    %5455 = vst.msk [vmem:[%s5454] sm:$0xff] %vm392, %v5453
    %v5456 = vld [vmem:[#allocation6] sm:$0xff]
    %v5458 = vsel %vm392, %v5132, 0
    %5460 = vmatprep.subr.mxu0 0.0
    %5461 = vmatpush1.msra.mxu0 0.0
    %5462 = vmatprep.subr.mxu0 0.0
    %5463 = vmatpush1.msra.mxu0 0.0
    %5464 = vmatprep.subr.mxu0 0.0
    %5465 = vmatpush1.msra.mxu0 0.0
    %5466 = vmatprep.subr.mxu0 0.0
    %5467 = vmatpush1.msra.mxu0 0.0
    %5468 = vmatprep.subr.mxu0 0.0
    %5469 = vmatpush1.msra.mxu0 0.0
    %5470 = vmatprep.subr.mxu0 0.0
    %5471 = vmatpush1.msra.mxu0 0.0
    %5472 = vmatprep.subr.mxu0 0.0
    %5473 = vmatpush1.msra.mxu0 0.0
    %5474 = vmatprep.subr.mxu0 0.0
    %5475 = vmatpush1.msra.mxu0 0.0
    %5476 = vmatprep.subr.mxu0 0.0
    %5477 = vmatpush1.msra.mxu0 0.0
    %5478 = vmatprep.subr.mxu0 0.0
    %5479 = vmatpush1.msra.mxu0 0.0
    %5480 = vmatprep.subr.mxu0 0.0
    %5481 = vmatpush1.msra.mxu0 0.0
    %5482 = vmatprep.subr.mxu0 0.0
    %5483 = vmatpush1.msra.mxu0 0.0
    %5484 = vmatprep.subr.mxu0 0.0
    %5485 = vmatpush1.msra.mxu0 %v636
    %5486 = vmatprep.subr.mxu0 0.0
    %5487 = vmatpush1.msra.mxu0 %v635
    %5488 = vmatprep.subr.mxu0 0.0
    %5489 = vmatpush1.msra.mxu0 %v634
    %5490 = vmatprep.subr.mxu0 0.0
    %5491 = vmatpush1.msra.mxu0 %v633
    %5492 = vmatprep.subr.mxu0 0.0
    %5493 = vmatpush2.msra.mxu0 0.0
    %5494 = vmatprep.subr.mxu0 0.0
    %5495 = vmatpush2.msra.mxu0 0.0
    %5496 = vmatprep.subr.mxu0 0.0
    %5497 = vmatpush2.msra.mxu0 0.0
    %5498 = vmatprep.subr.mxu0 0.0
    %5499 = vmatpush2.msra.mxu0 0.0
    %5500 = vmatprep.subr.mxu0 0.0
    %5501 = vmatpush2.msra.mxu0 0.0
    %5502 = vmatprep.subr.mxu0 0.0
    %5503 = vmatpush2.msra.mxu0 0.0
    %5504 = vmatprep.subr.mxu0 0.0
    %5505 = vmatpush2.msra.mxu0 0.0
    %5506 = vmatprep.subr.mxu0 0.0
    %5507 = vmatpush2.msra.mxu0 0.0
    %5508 = vmatprep.subr.mxu0 0.0
    %5509 = vmatpush2.msra.mxu0 0.0
    %5510 = vmatprep.subr.mxu0 0.0
    %5511 = vmatpush2.msra.mxu0 0.0
    %5512 = vmatprep.subr.mxu0 0.0
    %5513 = vmatpush2.msra.mxu0 0.0
    %5514 = vmatprep.subr.mxu0 0.0
    %5515 = vmatpush2.msra.mxu0 0.0
    %5516 = vmatprep.subr.mxu0 0.0
    %5517 = vmatpush2.msra.mxu0 0.0
    %5518 = vmatprep.subr.mxu0 0.0
    %5519 = vmatpush2.msra.mxu0 0.0
    %5520 = vmatprep.subr.mxu0 0.0
    %5521 = vmatpush2.msra.mxu0 0.0
    %5522 = vmatprep.subr.mxu0 0.0
    %5523 = vmatpush2.msra.mxu0 0.0
    %5524 = vmatprep.mubr.f32.mxu0 0.0
    %5525 = vmatmul.mubr.f32.gmra.mxu0 %v5458
    %v5526 = vpop.f32.mrf.mxu0
    %v5527 = vadd.f32 0.0, %v5526
    %v5528 = vpop.f32.mrf.mxu0
    %5529 = vdwg.mxu0
    %v5530 = vadd.f32 %v5456, %v5527
    %v5531 = vxor.u32 %v5530, 2147483648
    %v5532 = vmul.f32 %v5531, 1.442695
    %v5533 = vpow.pop %v5532
    %v5534 = vadd.f32 %v5533, 1.0
    %v5535 = vrcp.pop %v5534
    %v5536 = vmul.f32 1.0, %v5535
    %v5537 = vld [vmem:[#allocation7] sm:$0xff]
    %5538 = vmatprep.subr.mxu0 0.0
    %5539 = vmatpush1.msra.mxu0 0.0
    %5540 = vmatprep.subr.mxu0 0.0
    %5541 = vmatpush1.msra.mxu0 0.0
    %5542 = vmatprep.subr.mxu0 0.0
    %5543 = vmatpush1.msra.mxu0 0.0
    %5544 = vmatprep.subr.mxu0 0.0
    %5545 = vmatpush1.msra.mxu0 0.0
    %5546 = vmatprep.subr.mxu0 0.0
    %5547 = vmatpush1.msra.mxu0 0.0
    %5548 = vmatprep.subr.mxu0 0.0
    %5549 = vmatpush1.msra.mxu0 0.0
    %5550 = vmatprep.subr.mxu0 0.0
    %5551 = vmatpush1.msra.mxu0 0.0
    %5552 = vmatprep.subr.mxu0 0.0
    %5553 = vmatpush1.msra.mxu0 0.0
    %5554 = vmatprep.subr.mxu0 0.0
    %5555 = vmatpush1.msra.mxu0 0.0
    %5556 = vmatprep.subr.mxu0 0.0
    %5557 = vmatpush1.msra.mxu0 0.0
    %5558 = vmatprep.subr.mxu0 0.0
    %5559 = vmatpush1.msra.mxu0 0.0
    %5560 = vmatprep.subr.mxu0 0.0
    %5561 = vmatpush1.msra.mxu0 0.0
    %5562 = vmatprep.subr.mxu0 0.0
    %5563 = vmatpush1.msra.mxu0 %v640
    %5564 = vmatprep.subr.mxu0 0.0
    %5565 = vmatpush1.msra.mxu0 %v639
    %5566 = vmatprep.subr.mxu0 0.0
    %5567 = vmatpush1.msra.mxu0 %v638
    %5568 = vmatprep.subr.mxu0 0.0
    %5569 = vmatpush1.msra.mxu0 %v637
    %5570 = vmatprep.subr.mxu0 0.0
    %5571 = vmatpush2.msra.mxu0 0.0
    %5572 = vmatprep.subr.mxu0 0.0
    %5573 = vmatpush2.msra.mxu0 0.0
    %5574 = vmatprep.subr.mxu0 0.0
    %5575 = vmatpush2.msra.mxu0 0.0
    %5576 = vmatprep.subr.mxu0 0.0
    %5577 = vmatpush2.msra.mxu0 0.0
    %5578 = vmatprep.subr.mxu0 0.0
    %5579 = vmatpush2.msra.mxu0 0.0
    %5580 = vmatprep.subr.mxu0 0.0
    %5581 = vmatpush2.msra.mxu0 0.0
    %5582 = vmatprep.subr.mxu0 0.0
    %5583 = vmatpush2.msra.mxu0 0.0
    %5584 = vmatprep.subr.mxu0 0.0
    %5585 = vmatpush2.msra.mxu0 0.0
    %5586 = vmatprep.subr.mxu0 0.0
    %5587 = vmatpush2.msra.mxu0 0.0
    %5588 = vmatprep.subr.mxu0 0.0
    %5589 = vmatpush2.msra.mxu0 0.0
    %5590 = vmatprep.subr.mxu0 0.0
    %5591 = vmatpush2.msra.mxu0 0.0
    %5592 = vmatprep.subr.mxu0 0.0
    %5593 = vmatpush2.msra.mxu0 0.0
    %5594 = vmatprep.subr.mxu0 0.0
    %5595 = vmatpush2.msra.mxu0 0.0
    %5596 = vmatprep.subr.mxu0 0.0
    %5597 = vmatpush2.msra.mxu0 0.0
    %5598 = vmatprep.subr.mxu0 0.0
    %5599 = vmatpush2.msra.mxu0 0.0
    %5600 = vmatprep.subr.mxu0 0.0
    %5601 = vmatpush2.msra.mxu0 0.0
    %5602 = vmatprep.mubr.f32.mxu0 0.0
    %5603 = vmatmul.mubr.f32.gmra.mxu0 %v5458
    %v5604 = vpop.f32.mrf.mxu0
    %v5605 = vadd.f32 0.0, %v5604
    %v5606 = vpop.f32.mrf.mxu0
    %5607 = vdwg.mxu0
    %v5608 = vadd.f32 %v5537, %v5605
    %v5609 = vxor.u32 %v5608, 2147483648
    %v5610 = vmul.f32 %v5609, 1.442695
    %v5611 = vpow.pop %v5610
    %v5612 = vadd.f32 %v5611, 1.0
    %v5613 = vrcp.pop %v5612
    %v5614 = vmul.f32 1.0, %v5613
    %v5615 = vld [vmem:[#allocation8] sm:$0xff]
    %5616 = vmatprep.subr.mxu0 0.0
    %5617 = vmatpush1.msra.mxu0 0.0
    %5618 = vmatprep.subr.mxu0 0.0
    %5619 = vmatpush1.msra.mxu0 0.0
    %5620 = vmatprep.subr.mxu0 0.0
    %5621 = vmatpush1.msra.mxu0 0.0
    %5622 = vmatprep.subr.mxu0 0.0
    %5623 = vmatpush1.msra.mxu0 0.0
    %5624 = vmatprep.subr.mxu0 0.0
    %5625 = vmatpush1.msra.mxu0 0.0
    %5626 = vmatprep.subr.mxu0 0.0
    %5627 = vmatpush1.msra.mxu0 0.0
    %5628 = vmatprep.subr.mxu0 0.0
    %5629 = vmatpush1.msra.mxu0 0.0
    %5630 = vmatprep.subr.mxu0 0.0
    %5631 = vmatpush1.msra.mxu0 0.0
    %5632 = vmatprep.subr.mxu0 0.0
    %5633 = vmatpush1.msra.mxu0 0.0
    %5634 = vmatprep.subr.mxu0 0.0
    %5635 = vmatpush1.msra.mxu0 0.0
    %5636 = vmatprep.subr.mxu0 0.0
    %5637 = vmatpush1.msra.mxu0 0.0
    %5638 = vmatprep.subr.mxu0 0.0
    %5639 = vmatpush1.msra.mxu0 0.0
    %5640 = vmatprep.subr.mxu0 0.0
    %5641 = vmatpush1.msra.mxu0 %v644
    %5642 = vmatprep.subr.mxu0 0.0
    %5643 = vmatpush1.msra.mxu0 %v643
    %5644 = vmatprep.subr.mxu0 0.0
    %5645 = vmatpush1.msra.mxu0 %v642
    %5646 = vmatprep.subr.mxu0 0.0
    %5647 = vmatpush1.msra.mxu0 %v641
    %5648 = vmatprep.subr.mxu0 0.0
    %5649 = vmatpush2.msra.mxu0 0.0
    %5650 = vmatprep.subr.mxu0 0.0
    %5651 = vmatpush2.msra.mxu0 0.0
    %5652 = vmatprep.subr.mxu0 0.0
    %5653 = vmatpush2.msra.mxu0 0.0
    %5654 = vmatprep.subr.mxu0 0.0
    %5655 = vmatpush2.msra.mxu0 0.0
    %5656 = vmatprep.subr.mxu0 0.0
    %5657 = vmatpush2.msra.mxu0 0.0
    %5658 = vmatprep.subr.mxu0 0.0
    %5659 = vmatpush2.msra.mxu0 0.0
    %5660 = vmatprep.subr.mxu0 0.0
    %5661 = vmatpush2.msra.mxu0 0.0
    %5662 = vmatprep.subr.mxu0 0.0
    %5663 = vmatpush2.msra.mxu0 0.0
    %5664 = vmatprep.subr.mxu0 0.0
    %5665 = vmatpush2.msra.mxu0 0.0
    %5666 = vmatprep.subr.mxu0 0.0
    %5667 = vmatpush2.msra.mxu0 0.0
    %5668 = vmatprep.subr.mxu0 0.0
    %5669 = vmatpush2.msra.mxu0 0.0
    %5670 = vmatprep.subr.mxu0 0.0
    %5671 = vmatpush2.msra.mxu0 0.0
    %5672 = vmatprep.subr.mxu0 0.0
    %5673 = vmatpush2.msra.mxu0 0.0
    %5674 = vmatprep.subr.mxu0 0.0
    %5675 = vmatpush2.msra.mxu0 0.0
    %5676 = vmatprep.subr.mxu0 0.0
    %5677 = vmatpush2.msra.mxu0 0.0
    %5678 = vmatprep.subr.mxu0 0.0
    %5679 = vmatpush2.msra.mxu0 0.0
    %5680 = vmatprep.mubr.f32.mxu0 0.0
    %5681 = vmatmul.mubr.f32.gmra.mxu0 %v5458
    %v5682 = vpop.f32.mrf.mxu0
    %v5683 = vadd.f32 0.0, %v5682
    %v5684 = vpop.f32.mrf.mxu0
    %5685 = vdwg.mxu0
    %v5686 = vadd.f32 %v5615, %v5683
    %v5687 = vtanh.pop %v5686
    %v5688 = vld [vmem:[#allocation9] sm:$0xff]
    %5689 = vmatprep.subr.mxu0 0.0
    %5690 = vmatpush1.msra.mxu0 0.0
    %5691 = vmatprep.subr.mxu0 0.0
    %5692 = vmatpush1.msra.mxu0 0.0
    %5693 = vmatprep.subr.mxu0 0.0
    %5694 = vmatpush1.msra.mxu0 0.0
    %5695 = vmatprep.subr.mxu0 0.0
    %5696 = vmatpush1.msra.mxu0 0.0
    %5697 = vmatprep.subr.mxu0 0.0
    %5698 = vmatpush1.msra.mxu0 0.0
    %5699 = vmatprep.subr.mxu0 0.0
    %5700 = vmatpush1.msra.mxu0 0.0
    %5701 = vmatprep.subr.mxu0 0.0
    %5702 = vmatpush1.msra.mxu0 0.0
    %5703 = vmatprep.subr.mxu0 0.0
    %5704 = vmatpush1.msra.mxu0 0.0
    %5705 = vmatprep.subr.mxu0 0.0
    %5706 = vmatpush1.msra.mxu0 0.0
    %5707 = vmatprep.subr.mxu0 0.0
    %5708 = vmatpush1.msra.mxu0 0.0
    %5709 = vmatprep.subr.mxu0 0.0
    %5710 = vmatpush1.msra.mxu0 0.0
    %5711 = vmatprep.subr.mxu0 0.0
    %5712 = vmatpush1.msra.mxu0 0.0
    %5713 = vmatprep.subr.mxu0 0.0
    %5714 = vmatpush1.msra.mxu0 %v648
    %5715 = vmatprep.subr.mxu0 0.0
    %5716 = vmatpush1.msra.mxu0 %v647
    %5717 = vmatprep.subr.mxu0 0.0
    %5718 = vmatpush1.msra.mxu0 %v646
    %5719 = vmatprep.subr.mxu0 0.0
    %5720 = vmatpush1.msra.mxu0 %v645
    %5721 = vmatprep.subr.mxu0 0.0
    %5722 = vmatpush2.msra.mxu0 0.0
    %5723 = vmatprep.subr.mxu0 0.0
    %5724 = vmatpush2.msra.mxu0 0.0
    %5725 = vmatprep.subr.mxu0 0.0
    %5726 = vmatpush2.msra.mxu0 0.0
    %5727 = vmatprep.subr.mxu0 0.0
    %5728 = vmatpush2.msra.mxu0 0.0
    %5729 = vmatprep.subr.mxu0 0.0
    %5730 = vmatpush2.msra.mxu0 0.0
    %5731 = vmatprep.subr.mxu0 0.0
    %5732 = vmatpush2.msra.mxu0 0.0
    %5733 = vmatprep.subr.mxu0 0.0
    %5734 = vmatpush2.msra.mxu0 0.0
    %5735 = vmatprep.subr.mxu0 0.0
    %5736 = vmatpush2.msra.mxu0 0.0
    %5737 = vmatprep.subr.mxu0 0.0
    %5738 = vmatpush2.msra.mxu0 0.0
    %5739 = vmatprep.subr.mxu0 0.0
    %5740 = vmatpush2.msra.mxu0 0.0
    %5741 = vmatprep.subr.mxu0 0.0
    %5742 = vmatpush2.msra.mxu0 0.0
    %5743 = vmatprep.subr.mxu0 0.0
    %5744 = vmatpush2.msra.mxu0 0.0
    %5745 = vmatprep.subr.mxu0 0.0
    %5746 = vmatpush2.msra.mxu0 0.0
    %5747 = vmatprep.subr.mxu0 0.0
    %5748 = vmatpush2.msra.mxu0 0.0
    %5749 = vmatprep.subr.mxu0 0.0
    %5750 = vmatpush2.msra.mxu0 0.0
    %5751 = vmatprep.subr.mxu0 0.0
    %5752 = vmatpush2.msra.mxu0 0.0
    %5753 = vmatprep.mubr.f32.mxu0 0.0
    %5754 = vmatmul.mubr.f32.gmra.mxu0 %v5458
    %v5755 = vpop.f32.mrf.mxu0
    %v5756 = vadd.f32 0.0, %v5755
    %v5757 = vpop.f32.mrf.mxu0
    %5758 = vdwg.mxu0
    %v5759 = vadd.f32 %v5688, %v5756
    %v5760 = vxor.u32 %v5759, 2147483648
    %v5761 = vmul.f32 %v5760, 1.442695
    %v5762 = vpow.pop %v5761
    %v5763 = vadd.f32 %v5762, 1.0
    %v5764 = vrcp.pop %v5763
    %v5765 = vmul.f32 1.0, %v5764
    %v5766 = vmul.f32 %v5614, %v5130
    %v5767 = vmul.f32 %v5536, %v5687
    %v5768 = vadd.f32 %v5766, %v5767
    %v5769 = vtanh.pop %v5768
    %v5770 = vmul.f32 %v5765, %v5769
    %5771 = vst.msk [vmem:[#allocation11] sm:$0xff] %vm392, %v5770
    %v5772 = vld [vmem:[#allocation10] sm:$0xff]
    %v5773 = vld [vmem:[#allocation10 + $0x8] sm:$0xff]
    %v5774 = vld [vmem:[#allocation10 + $0x10] sm:$0xff]
    %v5775 = vld [vmem:[#allocation10 + $0x18] sm:$0xff]
    %v5776 = vld [vmem:[#allocation10 + $0x20] sm:$0xff]
    %v5777 = vld [vmem:[#allocation10 + $0x28] sm:$0xff]
    %v5778 = vld [vmem:[#allocation10 + $0x30] sm:$0xff]
    %v5779 = vld [vmem:[#allocation10 + $0x38] sm:$0xff]
    %v5780 = vld [vmem:[#allocation21] sm:$0xff]
    %v5781 = vld [vmem:[#allocation21 + $0x8] sm:$0xff]
    %v5782 = vld [vmem:[#allocation21 + $0x10] sm:$0xff]
    %v5783 = vld [vmem:[#allocation21 + $0x18] sm:$0xff]
    %v5784 = vld [vmem:[#allocation11] sm:$0xff]
    %v5785 = vld [vmem:[#allocation11 + $0x8] sm:$0xff]
    %v5786 = vld [vmem:[#allocation11 + $0x10] sm:$0xff]
    %v5787 = vld [vmem:[#allocation11 + $0x18] sm:$0xff]
    %v5788 = vld [vmem:[#allocation11 + $0x20] sm:$0xff]
    %v5789 = vld [vmem:[#allocation11 + $0x28] sm:$0xff]
    %v5790 = vld [vmem:[#allocation11 + $0x30] sm:$0xff]
    %v5791 = vld [vmem:[#allocation11 + $0x38] sm:$0xff]
    %v5792 = vld [vmem:[#allocation23] sm:$0xff]
    %v5793 = vld [vmem:[#allocation23 + $0x8] sm:$0xff]
    %v5794 = vld [vmem:[#allocation23 + $0x10] sm:$0xff]
    %v5795 = vld [vmem:[#allocation23 + $0x18] sm:$0xff]
    %v5797 = vsel %vm392, %v5784, 0
    %v5800 = vsel %vm392, %v5785, 0
    %v5803 = vsel %vm392, %v5786, 0
    %v5806 = vsel %vm392, %v5787, 0
    %v5809 = vsel %vm392, %v5788, 0
    %v5812 = vsel %vm392, %v5789, 0
    %v5815 = vsel %vm392, %v5790, 0
    %v5818 = vsel %vm392, %v5791, 0
    %5820 = vmatprep.subr.mxu0 0.0
    %5821 = vmatpush1.msra.mxu0 0.0
    %5822 = vmatprep.subr.mxu0 0.0
    %5823 = vmatpush1.msra.mxu0 0.0
    %5824 = vmatprep.subr.mxu0 0.0
    %5825 = vmatpush1.msra.mxu0 0.0
    %5826 = vmatprep.subr.mxu0 0.0
    %5827 = vmatpush1.msra.mxu0 0.0
    %5828 = vmatprep.subr.mxu0 0.0
    %5829 = vmatpush1.msra.mxu0 0.0
    %5830 = vmatprep.subr.mxu0 0.0
    %5831 = vmatpush1.msra.mxu0 0.0
    %5832 = vmatprep.subr.mxu0 0.0
    %5833 = vmatpush1.msra.mxu0 0.0
    %5834 = vmatprep.subr.mxu0 0.0
    %5835 = vmatpush1.msra.mxu0 0.0
    %5836 = vmatprep.subr.mxu0 0.0
    %5837 = vmatpush1.msra.mxu0 0.0
    %5838 = vmatprep.subr.mxu0 0.0
    %5839 = vmatpush1.msra.mxu0 0.0
    %5840 = vmatprep.subr.mxu0 0.0
    %5841 = vmatpush1.msra.mxu0 0.0
    %5842 = vmatprep.subr.mxu0 0.0
    %5843 = vmatpush1.msra.mxu0 0.0
    %5844 = vmatprep.subr.mxu0 0.0
    %5845 = vmatpush1.msra.mxu0 %v5795
    %5846 = vmatprep.subr.mxu0 0.0
    %5847 = vmatpush1.msra.mxu0 %v5794
    %5848 = vmatprep.subr.mxu0 0.0
    %5849 = vmatpush1.msra.mxu0 %v5793
    %5850 = vmatprep.subr.mxu0 0.0
    %5851 = vmatpush1.msra.mxu0 %v5792
    %5852 = vmatprep.subr.mxu0 0.0
    %5853 = vmatpush2.msra.mxu0 0.0
    %5854 = vmatprep.subr.mxu0 0.0
    %5855 = vmatpush2.msra.mxu0 0.0
    %5856 = vmatprep.subr.mxu0 0.0
    %5857 = vmatpush2.msra.mxu0 0.0
    %5858 = vmatprep.subr.mxu0 0.0
    %5859 = vmatpush2.msra.mxu0 0.0
    %5860 = vmatprep.subr.mxu0 0.0
    %5861 = vmatpush2.msra.mxu0 0.0
    %5862 = vmatprep.subr.mxu0 0.0
    %5863 = vmatpush2.msra.mxu0 0.0
    %5864 = vmatprep.subr.mxu0 0.0
    %5865 = vmatpush2.msra.mxu0 0.0
    %5866 = vmatprep.subr.mxu0 0.0
    %5867 = vmatpush2.msra.mxu0 0.0
    %5868 = vmatprep.subr.mxu0 0.0
    %5869 = vmatpush2.msra.mxu0 0.0
    %5870 = vmatprep.subr.mxu0 0.0
    %5871 = vmatpush2.msra.mxu0 0.0
    %5872 = vmatprep.subr.mxu0 0.0
    %5873 = vmatpush2.msra.mxu0 0.0
    %5874 = vmatprep.subr.mxu0 0.0
    %5875 = vmatpush2.msra.mxu0 0.0
    %5876 = vmatprep.subr.mxu0 0.0
    %5877 = vmatpush2.msra.mxu0 0.0
    %5878 = vmatprep.subr.mxu0 0.0
    %5879 = vmatpush2.msra.mxu0 0.0
    %5880 = vmatprep.subr.mxu0 0.0
    %5881 = vmatpush2.msra.mxu0 0.0
    %5882 = vmatprep.subr.mxu0 0.0
    %5883 = vmatpush2.msra.mxu0 0.0
    %5884 = vmatprep.mubr.f32.mxu0 0.0
    %5885 = vmatmul.mubr.f32.gmra.mxu0 %v5797
    %v5886 = vpop.f32.mrf.mxu0
    %v5887 = vadd.f32 0.0, %v5886
    %v5888 = vpop.f32.mrf.mxu0
    %5889 = vmatprep.mubr.f32.mxu0 0.0
    %5890 = vmatmul.mubr.f32.gmra.mxu0 %v5800
    %v5891 = vpop.f32.mrf.mxu0
    %v5892 = vadd.f32 0.0, %v5891
    %v5893 = vpop.f32.mrf.mxu0
    %5894 = vmatprep.mubr.f32.mxu0 0.0
    %5895 = vmatmul.mubr.f32.gmra.mxu0 %v5803
    %v5896 = vpop.f32.mrf.mxu0
    %v5897 = vadd.f32 0.0, %v5896
    %v5898 = vpop.f32.mrf.mxu0
    %5899 = vmatprep.mubr.f32.mxu0 0.0
    %5900 = vmatmul.mubr.f32.gmra.mxu0 %v5806
    %v5901 = vpop.f32.mrf.mxu0
    %v5902 = vadd.f32 0.0, %v5901
    %v5903 = vpop.f32.mrf.mxu0
    %5904 = vmatprep.mubr.f32.mxu0 0.0
    %5905 = vmatmul.mubr.f32.gmra.mxu0 %v5809
    %v5906 = vpop.f32.mrf.mxu0
    %v5907 = vadd.f32 0.0, %v5906
    %v5908 = vpop.f32.mrf.mxu0
    %5909 = vmatprep.mubr.f32.mxu0 0.0
    %5910 = vmatmul.mubr.f32.gmra.mxu0 %v5812
    %v5911 = vpop.f32.mrf.mxu0
    %v5912 = vadd.f32 0.0, %v5911
    %v5913 = vpop.f32.mrf.mxu0
    %5914 = vmatprep.mubr.f32.mxu0 0.0
    %5915 = vmatmul.mubr.f32.gmra.mxu0 %v5815
    %v5916 = vpop.f32.mrf.mxu0
    %v5917 = vadd.f32 0.0, %v5916
    %v5918 = vpop.f32.mrf.mxu0
    %5919 = vmatprep.mubr.f32.mxu0 0.0
    %5920 = vmatmul.mubr.f32.gmra.mxu0 %v5818
    %v5921 = vpop.f32.mrf.mxu0
    %v5922 = vadd.f32 0.0, %v5921
    %v5923 = vpop.f32.mrf.mxu0
    %5924 = vdwg.mxu0
    %v5926 = vsel %vm392, %v5772, 0
    %v5929 = vsel %vm392, %v5773, 0
    %v5932 = vsel %vm392, %v5774, 0
    %v5935 = vsel %vm392, %v5775, 0
    %v5938 = vsel %vm392, %v5776, 0
    %v5941 = vsel %vm392, %v5777, 0
    %v5944 = vsel %vm392, %v5778, 0
    %v5947 = vsel %vm392, %v5779, 0
    %5949 = vmatprep.subr.mxu0 0.0
    %5950 = vmatpush1.msra.mxu0 0.0
    %5951 = vmatprep.subr.mxu0 0.0
    %5952 = vmatpush1.msra.mxu0 0.0
    %5953 = vmatprep.subr.mxu0 0.0
    %5954 = vmatpush1.msra.mxu0 0.0
    %5955 = vmatprep.subr.mxu0 0.0
    %5956 = vmatpush1.msra.mxu0 0.0
    %5957 = vmatprep.subr.mxu0 0.0
    %5958 = vmatpush1.msra.mxu0 0.0
    %5959 = vmatprep.subr.mxu0 0.0
    %5960 = vmatpush1.msra.mxu0 0.0
    %5961 = vmatprep.subr.mxu0 0.0
    %5962 = vmatpush1.msra.mxu0 0.0
    %5963 = vmatprep.subr.mxu0 0.0
    %5964 = vmatpush1.msra.mxu0 0.0
    %5965 = vmatprep.subr.mxu0 0.0
    %5966 = vmatpush1.msra.mxu0 0.0
    %5967 = vmatprep.subr.mxu0 0.0
    %5968 = vmatpush1.msra.mxu0 0.0
    %5969 = vmatprep.subr.mxu0 0.0
    %5970 = vmatpush1.msra.mxu0 0.0
    %5971 = vmatprep.subr.mxu0 0.0
    %5972 = vmatpush1.msra.mxu0 0.0
    %5973 = vmatprep.subr.mxu0 0.0
    %5974 = vmatpush1.msra.mxu0 %v5783
    %5975 = vmatprep.subr.mxu0 0.0
    %5976 = vmatpush1.msra.mxu0 %v5782
    %5977 = vmatprep.subr.mxu0 0.0
    %5978 = vmatpush1.msra.mxu0 %v5781
    %5979 = vmatprep.subr.mxu0 0.0
    %5980 = vmatpush1.msra.mxu0 %v5780
    %5981 = vmatprep.subr.mxu0 0.0
    %5982 = vmatpush2.msra.mxu0 0.0
    %5983 = vmatprep.subr.mxu0 0.0
    %5984 = vmatpush2.msra.mxu0 0.0
    %5985 = vmatprep.subr.mxu0 0.0
    %5986 = vmatpush2.msra.mxu0 0.0
    %5987 = vmatprep.subr.mxu0 0.0
    %5988 = vmatpush2.msra.mxu0 0.0
    %5989 = vmatprep.subr.mxu0 0.0
    %5990 = vmatpush2.msra.mxu0 0.0
    %5991 = vmatprep.subr.mxu0 0.0
    %5992 = vmatpush2.msra.mxu0 0.0
    %5993 = vmatprep.subr.mxu0 0.0
    %5994 = vmatpush2.msra.mxu0 0.0
    %5995 = vmatprep.subr.mxu0 0.0
    %5996 = vmatpush2.msra.mxu0 0.0
    %5997 = vmatprep.subr.mxu0 0.0
    %5998 = vmatpush2.msra.mxu0 0.0
    %5999 = vmatprep.subr.mxu0 0.0
    %6000 = vmatpush2.msra.mxu0 0.0
    %6001 = vmatprep.subr.mxu0 0.0
    %6002 = vmatpush2.msra.mxu0 0.0
    %6003 = vmatprep.subr.mxu0 0.0
    %6004 = vmatpush2.msra.mxu0 0.0
    %6005 = vmatprep.subr.mxu0 0.0
    %6006 = vmatpush2.msra.mxu0 0.0
    %6007 = vmatprep.subr.mxu0 0.0
    %6008 = vmatpush2.msra.mxu0 0.0
    %6009 = vmatprep.subr.mxu0 0.0
    %6010 = vmatpush2.msra.mxu0 0.0
    %6011 = vmatprep.subr.mxu0 0.0
    %6012 = vmatpush2.msra.mxu0 0.0
    %6013 = vmatprep.mubr.f32.mxu0 0.0
    %6014 = vmatmul.mubr.f32.gmra.mxu0 %v5926
    %v6015 = vpop.f32.mrf.mxu0
    %v6016 = vadd.f32 %v5887, %v6015
    %v6017 = vpop.f32.mrf.mxu0
    %6018 = vmatprep.mubr.f32.mxu0 0.0
    %6019 = vmatmul.mubr.f32.gmra.mxu0 %v5929
    %v6020 = vpop.f32.mrf.mxu0
    %v6021 = vadd.f32 %v5892, %v6020
    %v6022 = vpop.f32.mrf.mxu0
    %6023 = vmatprep.mubr.f32.mxu0 0.0
    %6024 = vmatmul.mubr.f32.gmra.mxu0 %v5932
    %v6025 = vpop.f32.mrf.mxu0
    %v6026 = vadd.f32 %v5897, %v6025
    %v6027 = vpop.f32.mrf.mxu0
    %6028 = vmatprep.mubr.f32.mxu0 0.0
    %6029 = vmatmul.mubr.f32.gmra.mxu0 %v5935
    %v6030 = vpop.f32.mrf.mxu0
    %v6031 = vadd.f32 %v5902, %v6030
    %v6032 = vpop.f32.mrf.mxu0
    %6033 = vmatprep.mubr.f32.mxu0 0.0
    %6034 = vmatmul.mubr.f32.gmra.mxu0 %v5938
    %v6035 = vpop.f32.mrf.mxu0
    %v6036 = vadd.f32 %v5907, %v6035
    %v6037 = vpop.f32.mrf.mxu0
    %6038 = vmatprep.mubr.f32.mxu0 0.0
    %6039 = vmatmul.mubr.f32.gmra.mxu0 %v5941
    %v6040 = vpop.f32.mrf.mxu0
    %v6041 = vadd.f32 %v5912, %v6040
    %v6042 = vpop.f32.mrf.mxu0
    %6043 = vmatprep.mubr.f32.mxu0 0.0
    %6044 = vmatmul.mubr.f32.gmra.mxu0 %v5944
    %v6045 = vpop.f32.mrf.mxu0
    %v6046 = vadd.f32 %v5917, %v6045
    %v6047 = vpop.f32.mrf.mxu0
    %6048 = vmatprep.mubr.f32.mxu0 0.0
    %6049 = vmatmul.mubr.f32.gmra.mxu0 %v5947
    %v6050 = vpop.f32.mrf.mxu0
    %v6051 = vadd.f32 %v5922, %v6050
    %v6052 = vpop.f32.mrf.mxu0
    %6053 = vdwg.mxu0
    %v6054 = vld [vmem:[%s9] sm:$0x1]
    %v6056 = vlaneseq
    %v6057 = vshrl.u32 %v6056, 7
    %v6058 = vsub.s32 0, %v6057
    %v6059 = vrot.slane %v6054, %v6058
    %v6061 = vadd.f32 %v6016, %v6059
    %v6062 = vadd.f32 %v6021, %v6059
    %v6063 = vadd.f32 %v6026, %v6059
    %v6064 = vadd.f32 %v6031, %v6059
    %v6065 = vadd.f32 %v6036, %v6059
    %v6066 = vadd.f32 %v6041, %v6059
    %v6067 = vadd.f32 %v6046, %v6059
    %v6068 = vadd.f32 %v6051, %v6059
    %6069 = vst [vmem:[#allocation24] sm:$0xff] %v6061
    %6070 = vst [vmem:[#allocation24 + $0x8] sm:$0xff] %v6062
    %6071 = vst [vmem:[#allocation24 + $0x10] sm:$0xff] %v6063
    %6072 = vst [vmem:[#allocation24 + $0x18] sm:$0xff] %v6064
    %6073 = vst [vmem:[#allocation24 + $0x20] sm:$0xff] %v6065
    %6074 = vst [vmem:[#allocation24 + $0x28] sm:$0xff] %v6066
    %6075 = vst [vmem:[#allocation24 + $0x30] sm:$0xff] %v6067
    %6076 = vst [vmem:[#allocation24 + $0x38] sm:$0xff] %v6068
    // Predicated region
    $region70: #{tpu_custom_call.1} parent=1 // pred_check
      _
    $region71: #{tpu_custom_call.1} parent=1 // pred_check_branch
      %6078 = sbr.rel (0) target = $region73
    $region72: #{tpu_custom_call.1} parent=1 // pred_region
      %s6080 = ssub.s32 1024, 1024
      %6081 = vsyncadd [#allocation14], %s6080
      %s6082 = sshll.u32 [#allocation24], 4
      %s6083 = int_to_ptr.vmem [resolvable:$true] %s6082
      %6088 = dma.vmem_to_hbm [thread:$0]  %s6083, 1024, %s10, [#allocation14], 128, 128, 8
    $region73: #{tpu_custom_call.1} parent=1 // pred_fallthru
      _
    // Predicated region
    $region74: #{tpu_custom_call.1} parent=1 // pred_check
      _
    $region75: #{tpu_custom_call.1} parent=1 // pred_check_branch
      %6090 = sbr.rel (0) target = $region77
    $region76: #{tpu_custom_call.1} parent=1 // pred_region
      %6091 = dma.done [#allocation14], 1024
    $region77: #{tpu_custom_call.1} parent=1 // pred_fallthru
      _
    %6092 = vsyncpa [#allocation13], 1
    %6093 = vsyncpa [#allocation16], 1
    %6094 = vsyncpa [#allocation19], 1
    %6095 = vsyncpa [#allocation22], 1
    %6096 = vsyncpa [#allocation14], 1

</llo_original>
